<compile_context>
chip_gen: v7x
topology: tpu7x:2x2x1
jax: 0.10.0
libtpu: 0.0.40
codegen_flags: <defaults>
</compile_context>

<pallas_src>
import functools
import math

import jax
import jax.numpy as jnp
from jax.experimental import pallas as pl
from jax.experimental.pallas import tpu as pltpu

_VMEM_LIMIT = 32 * 1024 * 1024  # safe on v5e/v6e (128 MiB) and v7x (64 MiB/TC)


# ----------------------------------------------------------------------------
# Helpers
# ----------------------------------------------------------------------------
def _pick_tm(n, max_tm=256):
    """Row-tile: multiple of 8 that divides n (else full extent); prefers >=2 steps."""
    if n <= 8 or n % 8 != 0:
        return n
    tm = min(max_tm, n)
    tm -= tm % 8
    while tm > 8 and n % tm != 0:
        tm -= 8
    if n % tm != 0:
        return n
    if n // tm < 2:                      # give both TensorCores (v7x) a step
        half = n // 2
        if half % 8 == 0:
            tm = half
    return tm


def _erf_f32(x):
    """Abramowitz & Stegun 7.1.26 erf approximation, |abs error| < 1.5e-7 (f32)."""
    a1, a2, a3, a4, a5 = (0.254829592, -0.284496736, 1.421413741,
                          -1.453152027, 1.061405429)
    p = 0.3275911
    ax = jnp.abs(x)
    t = 1.0 / (1.0 + p * ax)
    poly = ((((a5 * t + a4) * t + a3) * t + a2) * t + a1) * t
    y = 1.0 - poly * jnp.exp(-ax * ax)
    return jnp.where(x < 0, -y, y)


def _layer_norm_f32(x, w, b, eps):
    mu = jnp.mean(x, axis=-1, keepdims=True)
    xc = x - mu
    var = jnp.mean(xc * xc, axis=-1, keepdims=True)
    return (xc * jax.lax.rsqrt(var + eps)) * w + b


# ----------------------------------------------------------------------------
# Kernel 1: pre-norm self-attention block (LN1 + QKV + MHA + out-proj + residual)
# ----------------------------------------------------------------------------
def _attn_block_kernel(x_ref, m_ref, lnw_ref, lnb_ref,
                       wqkv_ref, bqkv_ref, wo_ref, bo_ref, o_ref,
                       *, n_head, eps):
    x = x_ref[0].astype(jnp.float32)                       # (T, d)
    T, d = x.shape
    dh = d // n_head
    scale = 1.0 / math.sqrt(dh)
    in_dt = x_ref.dtype

    h = _layer_norm_f32(x, lnw_ref[...], lnb_ref[...], eps)        # LN1, (T, d)

    # Fused QKV projection (one GEMM, weights VMEM-resident).
    qkv = jnp.dot(h.astype(in_dt), wqkv_ref[...],
                  preferred_element_type=jnp.float32) + bqkv_ref[...]   # (T, 3d)

    keymask = m_ref[0] != 0                                 # (1, T), broadcast over queries
    acc = jnp.zeros((T, d), jnp.float32)
    # Per-head loop (unrolled at trace time); concat(o_h) @ Wo == sum_h o_h @ Wo[h-rows],
    # which avoids in-kernel concatenates / reshapes.
    for hh in range(n_head):
        q = qkv[:, hh * dh:(hh + 1) * dh] * scale           # scale folded into q
        k = qkv[:, d + hh * dh: d + (hh + 1) * dh]
        v = qkv[:, 2 * d + hh * dh: 2 * d + (hh + 1) * dh]
        s = jax.lax.dot_general(q, k, (((1,), (1,)), ((), ())),
                                preferred_element_type=jnp.float32)     # (T, T)
        s = jnp.where(keymask, jnp.float32(-1e30), s)        # NaN-safe masked fill
        mx = jnp.max(s, axis=-1, keepdims=True)
        e = jnp.exp(s - mx)
        p = e * pl.reciprocal(jnp.sum(e, axis=-1, keepdims=True), approx=True)
        # TODO(synk): attention-weight dropout is training-only; eval = identity.
        o_h = jnp.dot(p.astype(in_dt), v.astype(in_dt),
                      preferred_element_type=jnp.float32)                # (T, dh)
        acc = acc + jnp.dot(o_h.astype(in_dt), wo_ref[hh * dh:(hh + 1) * dh, :],
                            preferred_element_type=jnp.float32)
    attn = acc + bo_ref[...]
    o_ref[0] = (x + attn).astype(o_ref.dtype)                # residual


def self_attn_block(x, mask_b1t, ln_w, ln_b, wqkv, bqkv, wo, bo, *, n_head, eps=1e-5):
    B, T, d = x.shape
    kern = functools.partial(_attn_block_kernel, n_head=n_head, eps=eps)
    return pl.pallas_call(
        kern,
        out_shape=jax.ShapeDtypeStruct((B, T, d), x.dtype),
        grid_spec=pltpu.PrefetchScalarGridSpec(
            num_scalar_prefetch=0,
            grid=(B,),
            in_specs=[
                pl.BlockSpec((1, T, d), lambda b: (b, 0, 0)),
                pl.BlockSpec((1, 1, T), lambda b: (b, 0, 0)),
                pl.BlockSpec((1, d), lambda b: (0, 0)),
                pl.BlockSpec((1, d), lambda b: (0, 0)),
                pl.BlockSpec((d, 3 * d), lambda b: (0, 0)),
                pl.BlockSpec((1, 3 * d), lambda b: (0, 0)),
                pl.BlockSpec((d, d), lambda b: (0, 0)),
                pl.BlockSpec((1, d), lambda b: (0, 0)),
            ],
            out_specs=pl.BlockSpec((1, T, d), lambda b: (b, 0, 0)),
        ),
        compiler_params=pltpu.CompilerParams(
            dimension_semantics=("parallel",),
            vmem_limit_bytes=_VMEM_LIMIT),
    )(x, mask_b1t, ln_w.reshape(1, d), ln_b.reshape(1, d),
      wqkv, bqkv.reshape(1, 3 * d), wo, bo.reshape(1, d))


# ----------------------------------------------------------------------------
# Kernel 2: FFN block (LN2 + Linear + ReLU + Linear + residual), row-tiled
# ----------------------------------------------------------------------------
def _ffn_block_kernel(x_ref, lnw_ref, lnb_ref, w1_ref, b1_ref, w2_ref, b2_ref,
                      o_ref, *, eps):
    x = x_ref[...].astype(jnp.float32)                       # (tm, d)
    in_dt = x_ref.dtype
    h = _layer_norm_f32(x, lnw_ref[...], lnb_ref[...], eps)
    h1 = jnp.dot(h.astype(in_dt), w1_ref[...],
                 preferred_element_type=jnp.float32) + b1_ref[...]
    h1 = jnp.maximum(h1, 0.0)                                # ReLU (PyTorch default)
    h2 = jnp.dot(h1.astype(in_dt), w2_ref[...],
                 preferred_element_type=jnp.float32) + b2_ref[...]
    o_ref[...] = (x + h2).astype(o_ref.dtype)                # residual


def ffn_block(x, ln_w, ln_b, w1, b1, w2, b2, *, eps=1e-5, max_tm=256):
    B, T, d = x.shape
    N = B * T
    dff = w1.shape[1]
    x2 = x.reshape(N, d)
    tm = _pick_tm(N, max_tm)
    kern = functools.partial(_ffn_block_kernel, eps=eps)
    y = pl.pallas_call(
        kern,
        out_shape=jax.ShapeDtypeStruct((N, d), x.dtype),
        grid_spec=pltpu.PrefetchScalarGridSpec(
            num_scalar_prefetch=0,
            grid=(N // tm,),
            in_specs=[
                pl.BlockSpec((tm, d), lambda i: (i, 0)),
                pl.BlockSpec((1, d), lambda i: (0, 0)),
                pl.BlockSpec((1, d), lambda i: (0, 0)),
                pl.BlockSpec((d, dff), lambda i: (0, 0)),
                pl.BlockSpec((1, dff), lambda i: (0, 0)),
                pl.BlockSpec((dff, d), lambda i: (0, 0)),
                pl.BlockSpec((1, d), lambda i: (0, 0)),
            ],
            out_specs=pl.BlockSpec((tm, d), lambda i: (i, 0)),
        ),
        compiler_params=pltpu.CompilerParams(
            dimension_semantics=("parallel",),
            vmem_limit_bytes=_VMEM_LIMIT),
    )(x2, ln_w.reshape(1, d), ln_b.reshape(1, d), w1, b1.reshape(1, dff),
      w2, b2.reshape(1, d))
    return y.reshape(B, T, d)


# ----------------------------------------------------------------------------
# Kernel 3: cross attention + sigmoid-gated fusion epilogue
# ----------------------------------------------------------------------------
def _cross_attn_gate_kernel(u_ref, it_ref, m_ref, wq_ref, bq_ref, wkv_ref, bkv_ref,
                            wo_ref, bo_ref, alpha_ref, o_ref, *, n_head):
    u = u_ref[0].astype(jnp.float32)                         # (Tq, d)
    it = it_ref[0]                                           # (Tk, d)
    Tq, d = u.shape
    dh = d // n_head
    scale = 1.0 / math.sqrt(dh)
    in_dt = u_ref.dtype

    qall = jnp.dot(u.astype(in_dt), wq_ref[...],
                   preferred_element_type=jnp.float32) + bq_ref[...]     # (Tq, d)
    kv = jnp.dot(it, wkv_ref[...],
                 preferred_element_type=jnp.float32) + bkv_ref[...]      # (Tk, 2d)

    keymask = m_ref[0] != 0                                  # (1, Tk)
    acc = jnp.zeros((Tq, d), jnp.float32)
    for hh in range(n_head):
        q = qall[:, hh * dh:(hh + 1) * dh] * scale
        k = kv[:, hh * dh:(hh + 1) * dh]
        v = kv[:, d + hh * dh: d + (hh + 1) * dh]
        s = jax.lax.dot_general(q, k, (((1,), (1,)), ((), ())),
                                preferred_element_type=jnp.float32)      # (Tq, Tk)
        s = jnp.where(keymask, jnp.float32(-1e30), s)
        mx = jnp.max(s, axis=-1, keepdims=True)
        e = jnp.exp(s - mx)
        p = e * pl.reciprocal(jnp.sum(e, axis=-1, keepdims=True), approx=True)
        o_h = jnp.dot(p.astype(in_dt), v.astype(in_dt),
                      preferred_element_type=jnp.float32)
        acc = acc + jnp.dot(o_h.astype(in_dt), wo_ref[hh * dh:(hh + 1) * dh, :],
                            preferred_element_type=jnp.float32)
    cross = acc + bo_ref[...]
    a = alpha_ref[...]                                       # (1, 1), broadcast
    o_ref[0] = (a * u + (1.0 - a) * cross).astype(o_ref.dtype)


def cross_attn_gate(user, item, item_mask_b1t, cp, alpha, *, n_head):
    B, Tq, d = user.shape
    Tk = item.shape[1]
    kern = functools.partial(_cross_attn_gate_kernel, n_head=n_head)
    return pl.pallas_call(
        kern,
        out_shape=jax.ShapeDtypeStruct((B, Tq, d), user.dtype),
        grid_spec=pltpu.PrefetchScalarGridSpec(
            num_scalar_prefetch=0,
            grid=(B,),
            in_specs=[
                pl.BlockSpec((1, Tq, d), lambda b: (b, 0, 0)),
                pl.BlockSpec((1, Tk, d), lambda b: (b, 0, 0)),
                pl.BlockSpec((1, 1, Tk), lambda b: (b, 0, 0)),
                pl.BlockSpec((d, d), lambda b: (0, 0)),
                pl.BlockSpec((1, d), lambda b: (0, 0)),
                pl.BlockSpec((d, 2 * d), lambda b: (0, 0)),
                pl.BlockSpec((1, 2 * d), lambda b: (0, 0)),
                pl.BlockSpec((d, d), lambda b: (0, 0)),
                pl.BlockSpec((1, d), lambda b: (0, 0)),
                pl.BlockSpec((1, 1), lambda b: (0, 0)),
            ],
            out_specs=pl.BlockSpec((1, Tq, d), lambda b: (b, 0, 0)),
        ),
        compiler_params=pltpu.CompilerParams(
            dimension_semantics=("parallel",),
            vmem_limit_bytes=_VMEM_LIMIT),
    )(user, item, item_mask_b1t, cp["wq"], cp["bq"].reshape(1, d),
      cp["wkv"], cp["bkv"].reshape(1, 2 * d), cp["wo"], cp["bo"].reshape(1, d),
      alpha.reshape(1, 1))


# ----------------------------------------------------------------------------
# Kernel 4: AttnPool1D + LayerNorm + residual MLP tail (one kernel)
# ----------------------------------------------------------------------------
def _pool_tail_kernel(x_ref, m_ref, q_ref, nw_ref, nb_ref,
                      w1_ref, b1_ref, w2_ref, b2_ref, o_ref, *, eps):
    x = x_ref[0]                                             # (T, d)
    T, d = x.shape
    in_dt = x_ref.dtype
    qv = q_ref[...]                                          # (1, d)
    scale = 1.0 / math.sqrt(d)

    # AttnPool1D
    s = jax.lax.dot_general(qv.astype(in_dt), x, (((1,), (1,)), ((), ())),
                            preferred_element_type=jnp.float32) * scale  # (1, T)
    s = jnp.where(m_ref[0] != 0, jnp.float32(-1e30), s)
    mx = jnp.max(s, axis=-1, keepdims=True)
    e = jnp.exp(s - mx)
    w = e * pl.reciprocal(jnp.sum(e, axis=-1, keepdims=True), approx=True)
    # TODO(synk): pooling-weight dropout is training-only; eval = identity.
    pooled = jnp.dot(w.astype(in_dt), x, preferred_element_type=jnp.float32)  # (1, d)

    # LayerNorm
    normed = _layer_norm_f32(pooled, nw_ref[...], nb_ref[...], eps)

    # Residual MLP with exact-erf GELU (erf via in-kernel polynomial, EUP exp)
    h = jnp.dot(normed.astype(in_dt), w1_ref[...],
                preferred_element_type=jnp.float32) + b1_ref[...]         # (1, dff)
    h = 0.5 * h * (1.0 + _erf_f32(h * jnp.float32(0.7071067811865476)))
    out = jnp.dot(h.astype(in_dt), w2_ref[...],
                  preferred_element_type=jnp.float32) + b2_ref[...]       # (1, d)
    o_ref[0] = (normed + out).astype(o_ref.dtype)


def pool_norm_mlp(fused, user_mask_b1t, query, norm_w, norm_b, w1, b1, w2, b2,
                  *, eps=1e-5):
    B, T, d = fused.shape
    dff = w1.shape[1]
    kern = functools.partial(_pool_tail_kernel, eps=eps)
    out = pl.pallas_call(
        kern,
        out_shape=jax.ShapeDtypeStruct((B, 1, d), fused.dtype),
        grid_spec=pltpu.PrefetchScalarGridSpec(
            num_scalar_prefetch=0,
            grid=(B,),
            in_specs=[
                pl.BlockSpec((1, T, d), lambda b: (b, 0, 0)),
                pl.BlockSpec((1, 1, T), lambda b: (b, 0, 0)),
                pl.BlockSpec((1, d), lambda b: (0, 0)),
                pl.BlockSpec((1, d), lambda b: (0, 0)),
                pl.BlockSpec((1, d), lambda b: (0, 0)),
                pl.BlockSpec((d, dff), lambda b: (0, 0)),
                pl.BlockSpec((1, dff), lambda b: (0, 0)),
                pl.BlockSpec((dff, d), lambda b: (0, 0)),
                pl.BlockSpec((1, d), lambda b: (0, 0)),
            ],
            out_specs=pl.BlockSpec((1, 1, d), lambda b: (b, 0, 0)),
        ),
        compiler_params=pltpu.CompilerParams(
            dimension_semantics=("parallel",),
            vmem_limit_bytes=_VMEM_LIMIT),
    )(fused, user_mask_b1t, query.reshape(1, d), norm_w.reshape(1, d),
      norm_b.reshape(1, d), w1, b1.reshape(1, dff), w2, b2.reshape(1, d))
    return out.reshape(B, d)


# ----------------------------------------------------------------------------
# Full RobustTextCrossExpert forward
# ----------------------------------------------------------------------------
def transformer_layer(p, x, mask_b1t, n_head):
    x = self_attn_block(x, mask_b1t, p["ln1_w"], p["ln1_b"], p["wqkv"], p["bqkv"],
                        p["wo"], p["bo"], n_head=n_head)
    x = ffn_block(x, p["ln2_w"], p["ln2_b"], p["w1"], p["b1"], p["w2"], p["b2"])
    return x


def robust_text_cross_expert(params, user_vecs, user_mask, item_vecs, item_mask,
                             *, n_head):
    B, Tu, d = user_vecs.shape
    Tk = item_vecs.shape[1]
    um = user_mask.astype(jnp.int32).reshape(B, 1, Tu)
    im = item_mask.astype(jnp.int32).reshape(B, 1, Tk)

    uv, iv = user_vecs, item_vecs
    for p in params["self_user"]:
        uv = transformer_layer(p, uv, um, n_head)
    for p in params["self_item"]:
        iv = transformer_layer(p, iv, im, n_head)

    alpha = jax.nn.sigmoid(params["gate"])                   # scalar, done in XLA
    fused = cross_attn_gate(uv, iv, im, params["cross"], alpha, n_head=n_head)

    return pool_norm_mlp(fused, um, params["pool_query"].reshape(1, d),
                         params["norm_w"], params["norm_b"],
                         params["mlp_w1"], params["mlp_b1"],
                         params["mlp_w2"], params["mlp_b2"])


# ----------------------------------------------------------------------------
# Pure-JAX reference (same math, no Pallas) for validation
# ----------------------------------------------------------------------------
def _reference_forward(params, user_vecs, user_mask, item_vecs, item_mask, *, n_head):
    def ln(x, w, b, eps=1e-5):
        mu = x.mean(-1, keepdims=True)
        var = ((x - mu) ** 2).mean(-1, keepdims=True)
        return (x - mu) / jnp.sqrt(var + eps) * w + b

    def mha(x_q, x_kv, wq, bq, wk, bk, wv, bv, wo, bo, kpm):
        B, Tq, d = x_q.shape
        Tk = x_kv.shape[1]
        dh = d // n_head
        q = (x_q @ wq + bq).reshape(B, Tq, n_head, dh).transpose(0, 2, 1, 3)
        k = (x_kv @ wk + bk).reshape(B, Tk, n_head, dh).transpose(0, 2, 1, 3)
        v = (x_kv @ wv + bv).reshape(B, Tk, n_head, dh).transpose(0, 2, 1, 3)
        s = jnp.einsum("bhqd,bhkd->bhqk", q, k) / math.sqrt(dh)
        s = jnp.where(kpm[:, None, None, :], -1e30, s)
        w = jax.nn.softmax(s, axis=-1)
        o = jnp.einsum("bhqk,bhkd->bhqd", w, v).transpose(0, 2, 1, 3).reshape(B, Tq, d)
        return o @ wo + bo

    def tlayer(p, x, kpm):
        d = x.shape[-1]
        wqkv, bqkv = p["wqkv"], p["bqkv"]
        h = ln(x, p["ln1_w"], p["ln1_b"])
        x = x + mha(h, h, wqkv[:, :d], bqkv[:d], wqkv[:, d:2 * d], bqkv[d:2 * d],
                    wqkv[:, 2 * d:], bqkv[2 * d:], p["wo"], p["bo"], kpm)
        h2 = ln(x, p["ln2_w"], p["ln2_b"])
        return x + (jnp.maximum(h2 @ p["w1"] + p["b1"], 0.0) @ p["w2"] + p["b2"])

    uv, iv = user_vecs, item_vecs
    for p in params["self_user"]:
        uv = tlayer(p, uv, user_mask)
    for p in params["self_item"]:
        iv = tlayer(p, iv, item_mask)

    c = params["cross"]
    d = uv.shape[-1]
    cross = mha(uv, iv, c["wq"], c["bq"], c["wkv"][:, :d], c["bkv"][:d],
                c["wkv"][:, d:], c["bkv"][d:], c["wo"], c["bo"], item_mask)
    alpha = jax.nn.sigmoid(params["gate"])
    fused = alpha * uv + (1.0 - alpha) * cross

    sc = jnp.einsum("d,btd->bt", params["pool_query"].reshape(-1), fused) / math.sqrt(d)
    sc = jnp.where(user_mask, -1e30, sc)
    w = jax.nn.softmax(sc, axis=-1)
    pooled = jnp.einsum("bt,btd->bd", w, fused)
    normed = ln(pooled, params["norm_w"], params["norm_b"])
    h = jax.nn.gelu(normed @ params["mlp_w1"] + params["mlp_b1"], approximate=False)
    return normed + (h @ params["mlp_w2"] + params["mlp_b2"])


# ----------------------------------------------------------------------------
# Parameter init + test harness
# ----------------------------------------------------------------------------
def init_params(key, d, n_layer, dff):
    def lin(k, fi, fo, scale=0.02):
        kw, kb = jax.random.split(k)
        return (jax.random.normal(kw, (fi, fo), jnp.float32) * scale,
                jax.random.normal(kb, (fo,), jnp.float32) * scale)

    def ln_init(k):
        kw, kb = jax.random.split(k)
        return (1.0 + 0.05 * jax.random.normal(kw, (d,), jnp.float32),
                0.05 * jax.random.normal(kb, (d,), jnp.float32))

    def layer_params(k):
        ks = jax.random.split(k, 6)
        ln1_w, ln1_b = ln_init(ks[0])
        ln2_w, ln2_b = ln_init(ks[1])
        wqkv, bqkv = lin(ks[2], d, 3 * d)
        wo, bo = lin(ks[3], d, d)
        w1, b1 = lin(ks[4], d, dff)
        w2, b2 = lin(ks[5], dff, d)
        return dict(ln1_w=ln1_w, ln1_b=ln1_b, ln2_w=ln2_w, ln2_b=ln2_b,
                    wqkv=wqkv, bqkv=bqkv, wo=wo, bo=bo,
                    w1=w1, b1=b1, w2=w2, b2=b2)

    def cross_params(k):
        ks = jax.random.split(k, 3)
        wq, bq = lin(ks[0], d, d)
        wkv, bkv = lin(ks[1], d, 2 * d)
        wo, bo = lin(ks[2], d, d)
        return dict(wq=wq, bq=bq, wkv=wkv, bkv=bkv, wo=wo, bo=bo)

    keys = jax.random.split(key, 2 * n_layer + 5)
    nw, nb = (1.0 + 0.05 * jax.random.normal(keys[-1], (d,), jnp.float32),
              jnp.zeros((d,), jnp.float32))
    mlp_w1, mlp_b1 = lin(keys[2 * n_layer + 2], d, dff)
    mlp_w2, mlp_b2 = lin(keys[2 * n_layer + 3], dff, d)
    return dict(
        self_user=[layer_params(keys[i]) for i in range(n_layer)],
        self_item=[layer_params(keys[n_layer + i]) for i in range(n_layer)],
        cross=cross_params(keys[2 * n_layer]),
        gate=jnp.array([0.5], jnp.float32),
        pool_query=jax.random.normal(keys[2 * n_layer + 1], (1, 1, d),
                                     jnp.float32) * d ** -0.5,
        norm_w=nw, norm_b=nb,
        mlp_w1=mlp_w1, mlp_b1=mlp_b1, mlp_w2=mlp_w2, mlp_b2=mlp_b2)


if __name__ == "__main__":
    # Small shapes consistent with the module (d a multiple of 128 keeps every
    # matmul / store lane-dense).
    B, T_USER, T_ITEM, D, N_HEAD, N_LAYER = 2, 8, 8, 128, 4, 2
    DFF = 4 * D

    key = jax.random.PRNGKey(0)
    kp, ku, ki = jax.random.split(key, 3)
    params = init_params(kp, D, N_LAYER, DFF)

    user_vecs = jax.random.normal(ku, (B, T_USER, D), jnp.float32)
    item_vecs = jax.random.normal(ki, (B, T_ITEM, D), jnp.float32)
    # True = masked out (padding); keep every row partially valid.
    user_mask = jnp.arange(T_USER)[None, :] >= jnp.array([[7], [6]])   # (B, T_USER)
    item_mask = jnp.arange(T_ITEM)[None, :] >= jnp.array([[8], [5]])   # (B, T_ITEM)

    fwd = jax.jit(functools.partial(robust_text_cross_expert, n_head=N_HEAD))
    out = fwd(params, user_vecs, user_mask, item_vecs, item_mask)
    out = jax.block_until_ready(out)

    ref = _reference_forward(params, user_vecs, user_mask, item_vecs, item_mask,
                             n_head=N_HEAD)
    assert out.shape == (B, D)
    assert bool(jnp.all(jnp.isfinite(out)))
    # Tolerance covers the EUP approximate-reciprocal softmax normalization and
    # the in-kernel erf polynomial (both << 1e-3 relative).
    assert bool(jnp.allclose(out, ref, atol=5e-3, rtol=5e-3)), \
        float(jnp.max(jnp.abs(out - ref)))

    print("KERNEL_OK")
</pallas_src>

<mosaic_0001>
module attributes {stable_mosaic.version = 11 : i64} {
  func.func @_ffn_block_kernel(%arg0: i32, %arg1: memref<8x128xf32, #tpu.memory_space<vmem>>, %arg2: memref<1x128xf32, #tpu.memory_space<vmem>>, %arg3: memref<1x128xf32, #tpu.memory_space<vmem>>, %arg4: memref<128x512xf32, #tpu.memory_space<vmem>>, %arg5: memref<1x512xf32, #tpu.memory_space<vmem>>, %arg6: memref<512x128xf32, #tpu.memory_space<vmem>>, %arg7: memref<1x128xf32, #tpu.memory_space<vmem>>, %arg8: memref<8x128xf32, #tpu.memory_space<vmem>>) attributes {dimension_semantics = [#tpu.dimension_semantics<parallel>], iteration_bounds = array<i64: 2>, scalar_prefetch = 0 : i64, scratch_operands = 0 : i64, tpu.core_type = #tpu.core_type<tc>, window_params = [{transform_indices = @transform_0, window_bounds = array<i64: 8, 128>}, {pipeline_mode = #tpu.pipeline_mode<synchronous>, transform_indices = @transform_1, window_bounds = array<i64: 1, 128>}, {pipeline_mode = #tpu.pipeline_mode<synchronous>, transform_indices = @transform_2, window_bounds = array<i64: 1, 128>}, {pipeline_mode = #tpu.pipeline_mode<synchronous>, transform_indices = @transform_3, window_bounds = array<i64: 128, 512>}, {pipeline_mode = #tpu.pipeline_mode<synchronous>, transform_indices = @transform_4, window_bounds = array<i64: 1, 512>}, {pipeline_mode = #tpu.pipeline_mode<synchronous>, transform_indices = @transform_5, window_bounds = array<i64: 512, 128>}, {pipeline_mode = #tpu.pipeline_mode<synchronous>, transform_indices = @transform_6, window_bounds = array<i64: 1, 128>}, {transform_indices = @transform_7, window_bounds = array<i64: 8, 128>}]} {
    %c0 = arith.constant 0 : index
    %c0_0 = arith.constant 0 : index
    %0 = vector.load %arg1[%c0, %c0_0] : memref<8x128xf32, #tpu.memory_space<vmem>>, vector<8x128xf32>
    %c0_1 = arith.constant 0 : index
    %c0_2 = arith.constant 0 : index
    %1 = vector.load %arg2[%c0_1, %c0_2] : memref<1x128xf32, #tpu.memory_space<vmem>>, vector<1x128xf32>
    %c0_3 = arith.constant 0 : index
    %c0_4 = arith.constant 0 : index
    %2 = vector.load %arg3[%c0_3, %c0_4] : memref<1x128xf32, #tpu.memory_space<vmem>>, vector<1x128xf32>
    %cst = arith.constant dense<0.000000e+00> : vector<8xf32>
    %3 = vector.multi_reduction <add>, %0, %cst [1] : vector<8x128xf32> to vector<8xf32>
    %4 = vector.shape_cast %3 : vector<8xf32> to vector<8x1xf32>
    %cst_5 = arith.constant 1.280000e+02 : f32
    %5 = vector.broadcast %cst_5 : f32 to vector<8x1xf32>
    %6 = arith.divf %4, %5 : vector<8x1xf32>
    %7 = vector.broadcast %6 : vector<8x1xf32> to vector<8x128xf32>
    %8 = arith.subf %0, %7 : vector<8x128xf32>
    %9 = arith.mulf %8, %8 : vector<8x128xf32>
    %cst_6 = arith.constant dense<0.000000e+00> : vector<8xf32>
    %10 = vector.multi_reduction <add>, %9, %cst_6 [1] : vector<8x128xf32> to vector<8xf32>
    %11 = vector.shape_cast %10 : vector<8xf32> to vector<8x1xf32>
    %cst_7 = arith.constant 1.280000e+02 : f32
    %12 = vector.broadcast %cst_7 : f32 to vector<8x1xf32>
    %13 = arith.divf %11, %12 : vector<8x1xf32>
    %cst_8 = arith.constant 9.99999974E-6 : f32
    %14 = vector.broadcast %cst_8 : f32 to vector<8x1xf32>
    %15 = arith.addf %13, %14 : vector<8x1xf32>
    %16 = math.rsqrt %15 : vector<8x1xf32>
    %17 = vector.broadcast %16 : vector<8x1xf32> to vector<8x128xf32>
    %18 = arith.mulf %8, %17 : vector<8x128xf32>
    %19 = vector.broadcast %1 : vector<1x128xf32> to vector<8x128xf32>
    %20 = arith.mulf %18, %19 : vector<8x128xf32>
    %21 = vector.broadcast %2 : vector<1x128xf32> to vector<8x128xf32>
    %22 = arith.addf %20, %21 : vector<8x128xf32>
    %c0_9 = arith.constant 0 : index
    %c0_10 = arith.constant 0 : index
    %23 = vector.load %arg4[%c0_9, %c0_10] : memref<128x512xf32, #tpu.memory_space<vmem>>, vector<128x512xf32>
    %cst_11 = arith.constant dense<0.000000e+00> : vector<8x512xf32>
    %24 = tpu.matmul %22, %23, %cst_11 {dimension_numbers = #tpu.dot_dimension_numbers<[1], [0], [0], [1], [0, 0, 1, 1], [], []>} : vector<8x128xf32>, vector<128x512xf32>, vector<8x512xf32> -> vector<8x512xf32>
    %c0_12 = arith.constant 0 : index
    %c0_13 = arith.constant 0 : index
    %25 = vector.load %arg5[%c0_12, %c0_13] : memref<1x512xf32, #tpu.memory_space<vmem>>, vector<1x512xf32>
    %26 = vector.broadcast %25 : vector<1x512xf32> to vector<8x512xf32>
    %27 = arith.addf %24, %26 : vector<8x512xf32>
    %cst_14 = arith.constant 0.000000e+00 : f32
    %28 = vector.broadcast %cst_14 : f32 to vector<8x512xf32>
    %29 = arith.maximumf %27, %28 : vector<8x512xf32>
    %c0_15 = arith.constant 0 : index
    %c0_16 = arith.constant 0 : index
    %30 = vector.load %arg6[%c0_15, %c0_16] : memref<512x128xf32, #tpu.memory_space<vmem>>, vector<512x128xf32>
    %cst_17 = arith.constant dense<0.000000e+00> : vector<8x128xf32>
    %31 = tpu.matmul %29, %30, %cst_17 {dimension_numbers = #tpu.dot_dimension_numbers<[1], [0], [0], [1], [0, 0, 1, 1], [], []>} : vector<8x512xf32>, vector<512x128xf32>, vector<8x128xf32> -> vector<8x128xf32>
    %c0_18 = arith.constant 0 : index
    %c0_19 = arith.constant 0 : index
    %32 = vector.load %arg7[%c0_18, %c0_19] : memref<1x128xf32, #tpu.memory_space<vmem>>, vector<1x128xf32>
    %33 = vector.broadcast %32 : vector<1x128xf32> to vector<8x128xf32>
    %34 = arith.addf %31, %33 : vector<8x128xf32>
    %35 = arith.addf %0, %34 : vector<8x128xf32>
    %c0_20 = arith.constant 0 : index
    %c0_21 = arith.constant 0 : index
    %36 = vector.load %arg8[%c0_20, %c0_21] : memref<8x128xf32, #tpu.memory_space<vmem>>, vector<8x128xf32>
    tpu.vector_store %arg8[%c0_20, %c0_21], %35 {strides = array<i32>} : memref<8x128xf32, #tpu.memory_space<vmem>>, vector<8x128xf32>,
    return
  }
  func.func @transform_0(%arg0: i32) -> (i32, i32) {
    %c0_i32 = arith.constant 0 : i32
    %c0_i32_0 = arith.constant 0 : i32
    return %arg0, %c0_i32 : i32, i32
  }
  func.func @transform_1(%arg0: i32) -> (i32, i32) {
    %c0_i32 = arith.constant 0 : i32
    %c0_i32_0 = arith.constant 0 : i32
    %c0_i32_1 = arith.constant 0 : i32
    return %c0_i32, %c0_i32_0 : i32, i32
  }
  func.func @transform_2(%arg0: i32) -> (i32, i32) {
    %c0_i32 = arith.constant 0 : i32
    %c0_i32_0 = arith.constant 0 : i32
    %c0_i32_1 = arith.constant 0 : i32
    return %c0_i32, %c0_i32_0 : i32, i32
  }
  func.func @transform_3(%arg0: i32) -> (i32, i32) {
    %c0_i32 = arith.constant 0 : i32
    %c0_i32_0 = arith.constant 0 : i32
    %c0_i32_1 = arith.constant 0 : i32
    return %c0_i32, %c0_i32_0 : i32, i32
  }
  func.func @transform_4(%arg0: i32) -> (i32, i32) {
    %c0_i32 = arith.constant 0 : i32
    %c0_i32_0 = arith.constant 0 : i32
    %c0_i32_1 = arith.constant 0 : i32
    return %c0_i32, %c0_i32_0 : i32, i32
  }
  func.func @transform_5(%arg0: i32) -> (i32, i32) {
    %c0_i32 = arith.constant 0 : i32
    %c0_i32_0 = arith.constant 0 : i32
    %c0_i32_1 = arith.constant 0 : i32
    return %c0_i32, %c0_i32_0 : i32, i32
  }
  func.func @transform_6(%arg0: i32) -> (i32, i32) {
    %c0_i32 = arith.constant 0 : i32
    %c0_i32_0 = arith.constant 0 : i32
    %c0_i32_1 = arith.constant 0 : i32
    return %c0_i32, %c0_i32_0 : i32, i32
  }
  func.func @transform_7(%arg0: i32) -> (i32, i32) {
    %c0_i32 = arith.constant 0 : i32
    %c0_i32_0 = arith.constant 0 : i32
    return %arg0, %c0_i32 : i32, i32
  }
}

module attributes {stable_mosaic.version = 11 : i64} {
  func.func @_attn_block_kernel(%arg0: i32, %arg1: memref<1x8x128xf32, #tpu.memory_space<vmem>>, %arg2: memref<1x1x8xi32, #tpu.memory_space<vmem>>, %arg3: memref<1x128xf32, #tpu.memory_space<vmem>>, %arg4: memref<1x128xf32, #tpu.memory_space<vmem>>, %arg5: memref<128x384xf32, #tpu.memory_space<vmem>>, %arg6: memref<1x384xf32, #tpu.memory_space<vmem>>, %arg7: memref<128x128xf32, #tpu.memory_space<vmem>>, %arg8: memref<1x128xf32, #tpu.memory_space<vmem>>, %arg9: memref<1x8x128xf32, #tpu.memory_space<vmem>>) attributes {dimension_semantics = [#tpu.dimension_semantics<parallel>], iteration_bounds = array<i64: 2>, scalar_prefetch = 0 : i64, scratch_operands = 0 : i64, tpu.core_type = #tpu.core_type<tc>, window_params = [{transform_indices = @transform_0, window_bounds = array<i64: 1, 8, 128>}, {transform_indices = @transform_1, window_bounds = array<i64: 1, 1, 8>}, {pipeline_mode = #tpu.pipeline_mode<synchronous>, transform_indices = @transform_2, window_bounds = array<i64: 1, 128>}, {pipeline_mode = #tpu.pipeline_mode<synchronous>, transform_indices = @transform_3, window_bounds = array<i64: 1, 128>}, {pipeline_mode = #tpu.pipeline_mode<synchronous>, transform_indices = @transform_4, window_bounds = array<i64: 128, 384>}, {pipeline_mode = #tpu.pipeline_mode<synchronous>, transform_indices = @transform_5, window_bounds = array<i64: 1, 384>}, {pipeline_mode = #tpu.pipeline_mode<synchronous>, transform_indices = @transform_6, window_bounds = array<i64: 128, 128>}, {pipeline_mode = #tpu.pipeline_mode<synchronous>, transform_indices = @transform_7, window_bounds = array<i64: 1, 128>}, {transform_indices = @transform_8, window_bounds = array<i64: 1, 8, 128>}]} {
    %c0 = arith.constant 0 : index
    %c0_0 = arith.constant 0 : index
    %c0_1 = arith.constant 0 : index
    %0 = vector.load %arg1[%c0, %c0_0, %c0_1] : memref<1x8x128xf32, #tpu.memory_space<vmem>>, vector<1x8x128xf32>
    %1 = vector.shape_cast %0 : vector<1x8x128xf32> to vector<8x128xf32>
    %c0_2 = arith.constant 0 : index
    %c0_3 = arith.constant 0 : index
    %2 = vector.load %arg3[%c0_2, %c0_3] : memref<1x128xf32, #tpu.memory_space<vmem>>, vector<1x128xf32>
    %c0_4 = arith.constant 0 : index
    %c0_5 = arith.constant 0 : index
    %3 = vector.load %arg4[%c0_4, %c0_5] : memref<1x128xf32, #tpu.memory_space<vmem>>, vector<1x128xf32>
    %cst = arith.constant dense<0.000000e+00> : vector<8xf32>
    %4 = vector.multi_reduction <add>, %1, %cst [1] : vector<8x128xf32> to vector<8xf32>
    %5 = vector.shape_cast %4 : vector<8xf32> to vector<8x1xf32>
    %cst_6 = arith.constant 1.280000e+02 : f32
    %6 = vector.broadcast %cst_6 : f32 to vector<8x1xf32>
    %7 = arith.divf %5, %6 : vector<8x1xf32>
    %8 = vector.broadcast %7 : vector<8x1xf32> to vector<8x128xf32>
    %9 = arith.subf %1, %8 : vector<8x128xf32>
    %10 = arith.mulf %9, %9 : vector<8x128xf32>
    %cst_7 = arith.constant dense<0.000000e+00> : vector<8xf32>
    %11 = vector.multi_reduction <add>, %10, %cst_7 [1] : vector<8x128xf32> to vector<8xf32>
    %12 = vector.shape_cast %11 : vector<8xf32> to vector<8x1xf32>
    %cst_8 = arith.constant 1.280000e+02 : f32
    %13 = vector.broadcast %cst_8 : f32 to vector<8x1xf32>
    %14 = arith.divf %12, %13 : vector<8x1xf32>
    %cst_9 = arith.constant 9.99999974E-6 : f32
    %15 = vector.broadcast %cst_9 : f32 to vector<8x1xf32>
    %16 = arith.addf %14, %15 : vector<8x1xf32>
    %17 = math.rsqrt %16 : vector<8x1xf32>
    %18 = vector.broadcast %17 : vector<8x1xf32> to vector<8x128xf32>
    %19 = arith.mulf %9, %18 : vector<8x128xf32>
    %20 = vector.broadcast %2 : vector<1x128xf32> to vector<8x128xf32>
    %21 = arith.mulf %19, %20 : vector<8x128xf32>
    %22 = vector.broadcast %3 : vector<1x128xf32> to vector<8x128xf32>
    %23 = arith.addf %21, %22 : vector<8x128xf32>
    %c0_10 = arith.constant 0 : index
    %c0_11 = arith.constant 0 : index
    %24 = vector.load %arg5[%c0_10, %c0_11] : memref<128x384xf32, #tpu.memory_space<vmem>>, vector<128x384xf32>
    %cst_12 = arith.constant dense<0.000000e+00> : vector<8x384xf32>
    %25 = tpu.matmul %23, %24, %cst_12 {dimension_numbers = #tpu.dot_dimension_numbers<[1], [0], [0], [1], [0, 0, 1, 1], [], []>} : vector<8x128xf32>, vector<128x384xf32>, vector<8x384xf32> -> vector<8x384xf32>
    %c0_13 = arith.constant 0 : index
    %c0_14 = arith.constant 0 : index
    %26 = vector.load %arg6[%c0_13, %c0_14] : memref<1x384xf32, #tpu.memory_space<vmem>>, vector<1x384xf32>
    %27 = vector.broadcast %26 : vector<1x384xf32> to vector<8x384xf32>
    %28 = arith.addf %25, %27 : vector<8x384xf32>
    %c0_15 = arith.constant 0 : index
    %c0_16 = arith.constant 0 : index
    %c0_17 = arith.constant 0 : index
    %29 = vector.load %arg2[%c0_15, %c0_16, %c0_17] : memref<1x1x8xi32, #tpu.memory_space<vmem>>, vector<1x1x8xi32>
    %30 = vector.shape_cast %29 : vector<1x1x8xi32> to vector<1x8xi32>
    %c0_i32 = arith.constant 0 : i32
    %31 = vector.broadcast %c0_i32 : i32 to vector<1x8xi32>
    %32 = arith.cmpi ne, %30, %31 : vector<1x8xi32>
    %cst_18 = arith.constant 0.000000e+00 : f32
    %33 = vector.broadcast %cst_18 : f32 to vector<8x128xf32>
    %34 = vector.extract_strided_slice %28 {offsets = [0, 0], sizes = [8, 32], strides = [1, 1]} : vector<8x384xf32> to vector<8x32xf32>
    %cst_19 = arith.constant 0.176776692 : f32
    %35 = vector.broadcast %cst_19 : f32 to vector<8x32xf32>
    %36 = arith.mulf %34, %35 : vector<8x32xf32>
    %37 = vector.extract_strided_slice %28 {offsets = [0, 128], sizes = [8, 32], strides = [1, 1]} : vector<8x384xf32> to vector<8x32xf32>
    %38 = vector.extract_strided_slice %28 {offsets = [0, 256], sizes = [8, 32], strides = [1, 1]} : vector<8x384xf32> to vector<8x32xf32>
    %cst_20 = arith.constant dense<0.000000e+00> : vector<8x8xf32>
    %39 = tpu.matmul %36, %37, %cst_20 {dimension_numbers = #tpu.dot_dimension_numbers<[1], [1], [0], [0], [0, 0, 1, 0], [], []>} : vector<8x32xf32>, vector<8x32xf32>, vector<8x8xf32> -> vector<8x8xf32>
    %cst_21 = arith.constant -1.000000e+30 : f32
    %40 = vector.shape_cast %32 : vector<1x8xi1> to vector<1x8xi1>
    %41 = vector.broadcast %40 : vector<1x8xi1> to vector<8x8xi1>
    %42 = vector.broadcast %cst_21 : f32 to vector<8x8xf32>
    %43 = arith.select %41, %42, %39 : vector<8x8xi1>, vector<8x8xf32>
    %cst_22 = arith.constant dense<0xFF800000> : vector<8xf32>
    %44 = vector.multi_reduction <maximumf>, %43, %cst_22 [1] : vector<8x8xf32> to vector<8xf32>
    %45 = vector.shape_cast %44 : vector<8xf32> to vector<8x1xf32>
    %46 = vector.broadcast %45 : vector<8x1xf32> to vector<8x8xf32>
    %47 = arith.subf %43, %46 : vector<8x8xf32>
    %48 = math.exp %47 : vector<8x8xf32>
    %cst_23 = arith.constant dense<0.000000e+00> : vector<8xf32>
    %49 = vector.multi_reduction <add>, %48, %cst_23 [1] : vector<8x8xf32> to vector<8xf32>
    %50 = vector.shape_cast %49 : vector<8xf32> to vector<8x1xf32>
    %51 = tpu.reciprocal %50 {approx = true} : vector<8x1xf32> -> vector<8x1xf32>
    %52 = vector.broadcast %51 : vector<8x1xf32> to vector<8x8xf32>
    %53 = arith.mulf %48, %52 : vector<8x8xf32>
    %cst_24 = arith.constant dense<0.000000e+00> : vector<8x32xf32>
    %54 = tpu.matmul %53, %38, %cst_24 {dimension_numbers = #tpu.dot_dimension_numbers<[1], [0], [0], [1], [0, 0, 1, 1], [], []>} : vector<8x8xf32>, vector<8x32xf32>, vector<8x32xf32> -> vector<8x32xf32>
    %c0_25 = arith.constant 0 : index
    %c0_26 = arith.constant 0 : index
    %55 = vector.load %arg7[%c0_25, %c0_26] : memref<128x128xf32, #tpu.memory_space<vmem>>, vector<32x128xf32>
    %cst_27 = arith.constant dense<0.000000e+00> : vector<8x128xf32>
    %56 = tpu.matmul %54, %55, %cst_27 {dimension_numbers = #tpu.dot_dimension_numbers<[1], [0], [0], [1], [0, 0, 1, 1], [], []>} : vector<8x32xf32>, vector<32x128xf32>, vector<8x128xf32> -> vector<8x128xf32>
    %57 = arith.addf %33, %56 : vector<8x128xf32>
    %58 = vector.extract_strided_slice %28 {offsets = [0, 32], sizes = [8, 32], strides = [1, 1]} : vector<8x384xf32> to vector<8x32xf32>
    %cst_28 = arith.constant 0.176776692 : f32
    %59 = vector.broadcast %cst_28 : f32 to vector<8x32xf32>
    %60 = arith.mulf %58, %59 : vector<8x32xf32>
    %61 = vector.extract_strided_slice %28 {offsets = [0, 160], sizes = [8, 32], strides = [1, 1]} : vector<8x384xf32> to vector<8x32xf32>
    %62 = vector.extract_strided_slice %28 {offsets = [0, 288], sizes = [8, 32], strides = [1, 1]} : vector<8x384xf32> to vector<8x32xf32>
    %cst_29 = arith.constant dense<0.000000e+00> : vector<8x8xf32>
    %63 = tpu.matmul %60, %61, %cst_29 {dimension_numbers = #tpu.dot_dimension_numbers<[1], [1], [0], [0], [0, 0, 1, 0], [], []>} : vector<8x32xf32>, vector<8x32xf32>, vector<8x8xf32> -> vector<8x8xf32>
    %cst_30 = arith.constant -1.000000e+30 : f32
    %64 = vector.shape_cast %32 : vector<1x8xi1> to vector<1x8xi1>
    %65 = vector.broadcast %64 : vector<1x8xi1> to vector<8x8xi1>
    %66 = vector.broadcast %cst_30 : f32 to vector<8x8xf32>
    %67 = arith.select %65, %66, %63 : vector<8x8xi1>, vector<8x8xf32>
    %cst_31 = arith.constant dense<0xFF800000> : vector<8xf32>
    %68 = vector.multi_reduction <maximumf>, %67, %cst_31 [1] : vector<8x8xf32> to vector<8xf32>
    %69 = vector.shape_cast %68 : vector<8xf32> to vector<8x1xf32>
    %70 = vector.broadcast %69 : vector<8x1xf32> to vector<8x8xf32>
    %71 = arith.subf %67, %70 : vector<8x8xf32>
    %72 = math.exp %71 : vector<8x8xf32>
    %cst_32 = arith.constant dense<0.000000e+00> : vector<8xf32>
    %73 = vector.multi_reduction <add>, %72, %cst_32 [1] : vector<8x8xf32> to vector<8xf32>
    %74 = vector.shape_cast %73 : vector<8xf32> to vector<8x1xf32>
    %75 = tpu.reciprocal %74 {approx = true} : vector<8x1xf32> -> vector<8x1xf32>
    %76 = vector.broadcast %75 : vector<8x1xf32> to vector<8x8xf32>
    %77 = arith.mulf %72, %76 : vector<8x8xf32>
    %cst_33 = arith.constant dense<0.000000e+00> : vector<8x32xf32>
    %78 = tpu.matmul %77, %62, %cst_33 {dimension_numbers = #tpu.dot_dimension_numbers<[1], [0], [0], [1], [0, 0, 1, 1], [], []>} : vector<8x8xf32>, vector<8x32xf32>, vector<8x32xf32> -> vector<8x32xf32>
    %c32 = arith.constant 32 : index
    %c0_34 = arith.constant 0 : index
    %79 = vector.load %arg7[%c32, %c0_34] : memref<128x128xf32, #tpu.memory_space<vmem>>, vector<32x128xf32>
    %cst_35 = arith.constant dense<0.000000e+00> : vector<8x128xf32>
    %80 = tpu.matmul %78, %79, %cst_35 {dimension_numbers = #tpu.dot_dimension_numbers<[1], [0], [0], [1], [0, 0, 1, 1], [], []>} : vector<8x32xf32>, vector<32x128xf32>, vector<8x128xf32> -> vector<8x128xf32>
    %81 = arith.addf %57, %80 : vector<8x128xf32>
    %82 = vector.extract_strided_slice %28 {offsets = [0, 64], sizes = [8, 32], strides = [1, 1]} : vector<8x384xf32> to vector<8x32xf32>
    %cst_36 = arith.constant 0.176776692 : f32
    %83 = vector.broadcast %cst_36 : f32 to vector<8x32xf32>
    %84 = arith.mulf %82, %83 : vector<8x32xf32>
    %85 = vector.extract_strided_slice %28 {offsets = [0, 192], sizes = [8, 32], strides = [1, 1]} : vector<8x384xf32> to vector<8x32xf32>
    %86 = vector.extract_strided_slice %28 {offsets = [0, 320], sizes = [8, 32], strides = [1, 1]} : vector<8x384xf32> to vector<8x32xf32>
    %cst_37 = arith.constant dense<0.000000e+00> : vector<8x8xf32>
    %87 = tpu.matmul %84, %85, %cst_37 {dimension_numbers = #tpu.dot_dimension_numbers<[1], [1], [0], [0], [0, 0, 1, 0], [], []>} : vector<8x32xf32>, vector<8x32xf32>, vector<8x8xf32> -> vector<8x8xf32>
    %cst_38 = arith.constant -1.000000e+30 : f32
    %88 = vector.shape_cast %32 : vector<1x8xi1> to vector<1x8xi1>
    %89 = vector.broadcast %88 : vector<1x8xi1> to vector<8x8xi1>
    %90 = vector.broadcast %cst_38 : f32 to vector<8x8xf32>
    %91 = arith.select %89, %90, %87 : vector<8x8xi1>, vector<8x8xf32>
    %cst_39 = arith.constant dense<0xFF800000> : vector<8xf32>
    %92 = vector.multi_reduction <maximumf>, %91, %cst_39 [1] : vector<8x8xf32> to vector<8xf32>
    %93 = vector.shape_cast %92 : vector<8xf32> to vector<8x1xf32>
    %94 = vector.broadcast %93 : vector<8x1xf32> to vector<8x8xf32>
    %95 = arith.subf %91, %94 : vector<8x8xf32>
    %96 = math.exp %95 : vector<8x8xf32>
    %cst_40 = arith.constant dense<0.000000e+00> : vector<8xf32>
    %97 = vector.multi_reduction <add>, %96, %cst_40 [1] : vector<8x8xf32> to vector<8xf32>
    %98 = vector.shape_cast %97 : vector<8xf32> to vector<8x1xf32>
    %99 = tpu.reciprocal %98 {approx = true} : vector<8x1xf32> -> vector<8x1xf32>
    %100 = vector.broadcast %99 : vector<8x1xf32> to vector<8x8xf32>
    %101 = arith.mulf %96, %100 : vector<8x8xf32>
    %cst_41 = arith.constant dense<0.000000e+00> : vector<8x32xf32>
    %102 = tpu.matmul %101, %86, %cst_41 {dimension_numbers = #tpu.dot_dimension_numbers<[1], [0], [0], [1], [0, 0, 1, 1], [], []>} : vector<8x8xf32>, vector<8x32xf32>, vector<8x32xf32> -> vector<8x32xf32>
    %c64 = arith.constant 64 : index
    %c0_42 = arith.constant 0 : index
    %103 = vector.load %arg7[%c64, %c0_42] : memref<128x128xf32, #tpu.memory_space<vmem>>, vector<32x128xf32>
    %cst_43 = arith.constant dense<0.000000e+00> : vector<8x128xf32>
    %104 = tpu.matmul %102, %103, %cst_43 {dimension_numbers = #tpu.dot_dimension_numbers<[1], [0], [0], [1], [0, 0, 1, 1], [], []>} : vector<8x32xf32>, vector<32x128xf32>, vector<8x128xf32> -> vector<8x128xf32>
    %105 = arith.addf %81, %104 : vector<8x128xf32>
    %106 = vector.extract_strided_slice %28 {offsets = [0, 96], sizes = [8, 32], strides = [1, 1]} : vector<8x384xf32> to vector<8x32xf32>
    %cst_44 = arith.constant 0.176776692 : f32
    %107 = vector.broadcast %cst_44 : f32 to vector<8x32xf32>
    %108 = arith.mulf %106, %107 : vector<8x32xf32>
    %109 = vector.extract_strided_slice %28 {offsets = [0, 224], sizes = [8, 32], strides = [1, 1]} : vector<8x384xf32> to vector<8x32xf32>
    %110 = vector.extract_strided_slice %28 {offsets = [0, 352], sizes = [8, 32], strides = [1, 1]} : vector<8x384xf32> to vector<8x32xf32>
    %cst_45 = arith.constant dense<0.000000e+00> : vector<8x8xf32>
    %111 = tpu.matmul %108, %109, %cst_45 {dimension_numbers = #tpu.dot_dimension_numbers<[1], [1], [0], [0], [0, 0, 1, 0], [], []>} : vector<8x32xf32>, vector<8x32xf32>, vector<8x8xf32> -> vector<8x8xf32>
    %cst_46 = arith.constant -1.000000e+30 : f32
    %112 = vector.shape_cast %32 : vector<1x8xi1> to vector<1x8xi1>
    %113 = vector.broadcast %112 : vector<1x8xi1> to vector<8x8xi1>
    %114 = vector.broadcast %cst_46 : f32 to vector<8x8xf32>
    %115 = arith.select %113, %114, %111 : vector<8x8xi1>, vector<8x8xf32>
    %cst_47 = arith.constant dense<0xFF800000> : vector<8xf32>
    %116 = vector.multi_reduction <maximumf>, %115, %cst_47 [1] : vector<8x8xf32> to vector<8xf32>
    %117 = vector.shape_cast %116 : vector<8xf32> to vector<8x1xf32>
    %118 = vector.broadcast %117 : vector<8x1xf32> to vector<8x8xf32>
    %119 = arith.subf %115, %118 : vector<8x8xf32>
    %120 = math.exp %119 : vector<8x8xf32>
    %cst_48 = arith.constant dense<0.000000e+00> : vector<8xf32>
    %121 = vector.multi_reduction <add>, %120, %cst_48 [1] : vector<8x8xf32> to vector<8xf32>
    %122 = vector.shape_cast %121 : vector<8xf32> to vector<8x1xf32>
    %123 = tpu.reciprocal %122 {approx = true} : vector<8x1xf32> -> vector<8x1xf32>
    %124 = vector.broadcast %123 : vector<8x1xf32> to vector<8x8xf32>
    %125 = arith.mulf %120, %124 : vector<8x8xf32>
    %cst_49 = arith.constant dense<0.000000e+00> : vector<8x32xf32>
    %126 = tpu.matmul %125, %110, %cst_49 {dimension_numbers = #tpu.dot_dimension_numbers<[1], [0], [0], [1], [0, 0, 1, 1], [], []>} : vector<8x8xf32>, vector<8x32xf32>, vector<8x32xf32> -> vector<8x32xf32>
    %c96 = arith.constant 96 : index
    %c0_50 = arith.constant 0 : index
    %127 = vector.load %arg7[%c96, %c0_50] : memref<128x128xf32, #tpu.memory_space<vmem>>, vector<32x128xf32>
    %cst_51 = arith.constant dense<0.000000e+00> : vector<8x128xf32>
    %128 = tpu.matmul %126, %127, %cst_51 {dimension_numbers = #tpu.dot_dimension_numbers<[1], [0], [0], [1], [0, 0, 1, 1], [], []>} : vector<8x32xf32>, vector<32x128xf32>, vector<8x128xf32> -> vector<8x128xf32>
    %129 = arith.addf %105, %128 : vector<8x128xf32>
    %c0_52 = arith.constant 0 : index
    %c0_53 = arith.constant 0 : index
    %130 = vector.load %arg8[%c0_52, %c0_53] : memref<1x128xf32, #tpu.memory_space<vmem>>, vector<1x128xf32>
    %131 = vector.broadcast %130 : vector<1x128xf32> to vector<8x128xf32>
    %132 = arith.addf %129, %131 : vector<8x128xf32>
    %133 = arith.addf %1, %132 : vector<8x128xf32>
    %c0_54 = arith.constant 0 : index
    %c0_55 = arith.constant 0 : index
    %c0_56 = arith.constant 0 : index
    %134 = vector.load %arg9[%c0_54, %c0_55, %c0_56] : memref<1x8x128xf32, #tpu.memory_space<vmem>>, vector<1x8x128xf32>
    %135 = vector.shape_cast %134 : vector<1x8x128xf32> to vector<8x128xf32>
    %136 = vector.shape_cast %133 : vector<8x128xf32> to vector<1x8x128xf32>
    tpu.vector_store %arg9[%c0_54, %c0_55, %c0_56], %136 {strides = array<i32>} : memref<1x8x128xf32, #tpu.memory_space<vmem>>, vector<1x8x128xf32>,
    return
  }
  func.func @transform_0(%arg0: i32) -> (i32, i32, i32) {
    %c0_i32 = arith.constant 0 : i32
    %c0_i32_0 = arith.constant 0 : i32
    %c0_i32_1 = arith.constant 0 : i32
    return %arg0, %c0_i32, %c0_i32_0 : i32, i32, i32
  }
  func.func @transform_1(%arg0: i32) -> (i32, i32, i32) {
    %c0_i32 = arith.constant 0 : i32
    %c0_i32_0 = arith.constant 0 : i32
    %c0_i32_1 = arith.constant 0 : i32
    return %arg0, %c0_i32, %c0_i32_0 : i32, i32, i32
  }
  func.func @transform_2(%arg0: i32) -> (i32, i32) {
    %c0_i32 = arith.constant 0 : i32
    %c0_i32_0 = arith.constant 0 : i32
    %c0_i32_1 = arith.constant 0 : i32
    return %c0_i32, %c0_i32_0 : i32, i32
  }
  func.func @transform_3(%arg0: i32) -> (i32, i32) {
    %c0_i32 = arith.constant 0 : i32
    %c0_i32_0 = arith.constant 0 : i32
    %c0_i32_1 = arith.constant 0 : i32
    return %c0_i32, %c0_i32_0 : i32, i32
  }
  func.func @transform_4(%arg0: i32) -> (i32, i32) {
    %c0_i32 = arith.constant 0 : i32
    %c0_i32_0 = arith.constant 0 : i32
    %c0_i32_1 = arith.constant 0 : i32
    return %c0_i32, %c0_i32_0 : i32, i32
  }
  func.func @transform_5(%arg0: i32) -> (i32, i32) {
    %c0_i32 = arith.constant 0 : i32
    %c0_i32_0 = arith.constant 0 : i32
    %c0_i32_1 = arith.constant 0 : i32
    return %c0_i32, %c0_i32_0 : i32, i32
  }
  func.func @transform_6(%arg0: i32) -> (i32, i32) {
    %c0_i32 = arith.constant 0 : i32
    %c0_i32_0 = arith.constant 0 : i32
    %c0_i32_1 = arith.constant 0 : i32
    return %c0_i32, %c0_i32_0 : i32, i32
  }
  func.func @transform_7(%arg0: i32) -> (i32, i32) {
    %c0_i32 = arith.constant 0 : i32
    %c0_i32_0 = arith.constant 0 : i32
    %c0_i32_1 = arith.constant 0 : i32
    return %c0_i32, %c0_i32_0 : i32, i32
  }
  func.func @transform_8(%arg0: i32) -> (i32, i32, i32) {
    %c0_i32 = arith.constant 0 : i32
    %c0_i32_0 = arith.constant 0 : i32
    %c0_i32_1 = arith.constant 0 : i32
    return %arg0, %c0_i32, %c0_i32_0 : i32, i32, i32
  }
}

module attributes {stable_mosaic.version = 11 : i64} {
  func.func @_ffn_block_kernel(%arg0: i32, %arg1: memref<8x128xf32, #tpu.memory_space<vmem>>, %arg2: memref<1x128xf32, #tpu.memory_space<vmem>>, %arg3: memref<1x128xf32, #tpu.memory_space<vmem>>, %arg4: memref<128x512xf32, #tpu.memory_space<vmem>>, %arg5: memref<1x512xf32, #tpu.memory_space<vmem>>, %arg6: memref<512x128xf32, #tpu.memory_space<vmem>>, %arg7: memref<1x128xf32, #tpu.memory_space<vmem>>, %arg8: memref<8x128xf32, #tpu.memory_space<vmem>>) attributes {dimension_semantics = [#tpu.dimension_semantics<parallel>], iteration_bounds = array<i64: 2>, scalar_prefetch = 0 : i64, scratch_operands = 0 : i64, tpu.core_type = #tpu.core_type<tc>, window_params = [{transform_indices = @transform_0, window_bounds = array<i64: 8, 128>}, {pipeline_mode = #tpu.pipeline_mode<synchronous>, transform_indices = @transform_1, window_bounds = array<i64: 1, 128>}, {pipeline_mode = #tpu.pipeline_mode<synchronous>, transform_indices = @transform_2, window_bounds = array<i64: 1, 128>}, {pipeline_mode = #tpu.pipeline_mode<synchronous>, transform_indices = @transform_3, window_bounds = array<i64: 128, 512>}, {pipeline_mode = #tpu.pipeline_mode<synchronous>, transform_indices = @transform_4, window_bounds = array<i64: 1, 512>}, {pipeline_mode = #tpu.pipeline_mode<synchronous>, transform_indices = @transform_5, window_bounds = array<i64: 512, 128>}, {pipeline_mode = #tpu.pipeline_mode<synchronous>, transform_indices = @transform_6, window_bounds = array<i64: 1, 128>}, {transform_indices = @transform_7, window_bounds = array<i64: 8, 128>}]} {
    %c0 = arith.constant 0 : index
    %c0_0 = arith.constant 0 : index
    %0 = vector.load %arg1[%c0, %c0_0] : memref<8x128xf32, #tpu.memory_space<vmem>>, vector<8x128xf32>
    %c0_1 = arith.constant 0 : index
    %c0_2 = arith.constant 0 : index
    %1 = vector.load %arg2[%c0_1, %c0_2] : memref<1x128xf32, #tpu.memory_space<vmem>>, vector<1x128xf32>
    %c0_3 = arith.constant 0 : index
    %c0_4 = arith.constant 0 : index
    %2 = vector.load %arg3[%c0_3, %c0_4] : memref<1x128xf32, #tpu.memory_space<vmem>>, vector<1x128xf32>
    %cst = arith.constant dense<0.000000e+00> : vector<8xf32>
    %3 = vector.multi_reduction <add>, %0, %cst [1] : vector<8x128xf32> to vector<8xf32>
    %4 = vector.shape_cast %3 : vector<8xf32> to vector<8x1xf32>
    %cst_5 = arith.constant 1.280000e+02 : f32
    %5 = vector.broadcast %cst_5 : f32 to vector<8x1xf32>
    %6 = arith.divf %4, %5 : vector<8x1xf32>
    %7 = vector.broadcast %6 : vector<8x1xf32> to vector<8x128xf32>
    %8 = arith.subf %0, %7 : vector<8x128xf32>
    %9 = arith.mulf %8, %8 : vector<8x128xf32>
    %cst_6 = arith.constant dense<0.000000e+00> : vector<8xf32>
    %10 = vector.multi_reduction <add>, %9, %cst_6 [1] : vector<8x128xf32> to vector<8xf32>
    %11 = vector.shape_cast %10 : vector<8xf32> to vector<8x1xf32>
    %cst_7 = arith.constant 1.280000e+02 : f32
    %12 = vector.broadcast %cst_7 : f32 to vector<8x1xf32>
    %13 = arith.divf %11, %12 : vector<8x1xf32>
    %cst_8 = arith.constant 9.99999974E-6 : f32
    %14 = vector.broadcast %cst_8 : f32 to vector<8x1xf32>
    %15 = arith.addf %13, %14 : vector<8x1xf32>
    %16 = math.rsqrt %15 : vector<8x1xf32>
    %17 = vector.broadcast %16 : vector<8x1xf32> to vector<8x128xf32>
    %18 = arith.mulf %8, %17 : vector<8x128xf32>
    %19 = vector.broadcast %1 : vector<1x128xf32> to vector<8x128xf32>
    %20 = arith.mulf %18, %19 : vector<8x128xf32>
    %21 = vector.broadcast %2 : vector<1x128xf32> to vector<8x128xf32>
    %22 = arith.addf %20, %21 : vector<8x128xf32>
    %c0_9 = arith.constant 0 : index
    %c0_10 = arith.constant 0 : index
    %23 = vector.load %arg4[%c0_9, %c0_10] : memref<128x512xf32, #tpu.memory_space<vmem>>, vector<128x512xf32>
    %cst_11 = arith.constant dense<0.000000e+00> : vector<8x512xf32>
    %24 = tpu.matmul %22, %23, %cst_11 {dimension_numbers = #tpu.dot_dimension_numbers<[1], [0], [0], [1], [0, 0, 1, 1], [], []>} : vector<8x128xf32>, vector<128x512xf32>, vector<8x512xf32> -> vector<8x512xf32>
    %c0_12 = arith.constant 0 : index
    %c0_13 = arith.constant 0 : index
    %25 = vector.load %arg5[%c0_12, %c0_13] : memref<1x512xf32, #tpu.memory_space<vmem>>, vector<1x512xf32>
    %26 = vector.broadcast %25 : vector<1x512xf32> to vector<8x512xf32>
    %27 = arith.addf %24, %26 : vector<8x512xf32>
    %cst_14 = arith.constant 0.000000e+00 : f32
    %28 = vector.broadcast %cst_14 : f32 to vector<8x512xf32>
    %29 = arith.maximumf %27, %28 : vector<8x512xf32>
    %c0_15 = arith.constant 0 : index
    %c0_16 = arith.constant 0 : index
    %30 = vector.load %arg6[%c0_15, %c0_16] : memref<512x128xf32, #tpu.memory_space<vmem>>, vector<512x128xf32>
    %cst_17 = arith.constant dense<0.000000e+00> : vector<8x128xf32>
    %31 = tpu.matmul %29, %30, %cst_17 {dimension_numbers = #tpu.dot_dimension_numbers<[1], [0], [0], [1], [0, 0, 1, 1], [], []>} : vector<8x512xf32>, vector<512x128xf32>, vector<8x128xf32> -> vector<8x128xf32>
    %c0_18 = arith.constant 0 : index
    %c0_19 = arith.constant 0 : index
    %32 = vector.load %arg7[%c0_18, %c0_19] : memref<1x128xf32, #tpu.memory_space<vmem>>, vector<1x128xf32>
    %33 = vector.broadcast %32 : vector<1x128xf32> to vector<8x128xf32>
    %34 = arith.addf %31, %33 : vector<8x128xf32>
    %35 = arith.addf %0, %34 : vector<8x128xf32>
    %c0_20 = arith.constant 0 : index
    %c0_21 = arith.constant 0 : index
    %36 = vector.load %arg8[%c0_20, %c0_21] : memref<8x128xf32, #tpu.memory_space<vmem>>, vector<8x128xf32>
    tpu.vector_store %arg8[%c0_20, %c0_21], %35 {strides = array<i32>} : memref<8x128xf32, #tpu.memory_space<vmem>>, vector<8x128xf32>,
    return
  }
  func.func @transform_0(%arg0: i32) -> (i32, i32) {
    %c0_i32 = arith.constant 0 : i32
    %c0_i32_0 = arith.constant 0 : i32
    return %arg0, %c0_i32 : i32, i32
  }
  func.func @transform_1(%arg0: i32) -> (i32, i32) {
    %c0_i32 = arith.constant 0 : i32
    %c0_i32_0 = arith.constant 0 : i32
    %c0_i32_1 = arith.constant 0 : i32
    return %c0_i32, %c0_i32_0 : i32, i32
  }
  func.func @transform_2(%arg0: i32) -> (i32, i32) {
    %c0_i32 = arith.constant 0 : i32
    %c0_i32_0 = arith.constant 0 : i32
    %c0_i32_1 = arith.constant 0 : i32
    return %c0_i32, %c0_i32_0 : i32, i32
  }
  func.func @transform_3(%arg0: i32) -> (i32, i32) {
    %c0_i32 = arith.constant 0 : i32
    %c0_i32_0 = arith.constant 0 : i32
    %c0_i32_1 = arith.constant 0 : i32
    return %c0_i32, %c0_i32_0 : i32, i32
  }
  func.func @transform_4(%arg0: i32) -> (i32, i32) {
    %c0_i32 = arith.constant 0 : i32
    %c0_i32_0 = arith.constant 0 : i32
    %c0_i32_1 = arith.constant 0 : i32
    return %c0_i32, %c0_i32_0 : i32, i32
  }
  func.func @transform_5(%arg0: i32) -> (i32, i32) {
    %c0_i32 = arith.constant 0 : i32
    %c0_i32_0 = arith.constant 0 : i32
    %c0_i32_1 = arith.constant 0 : i32
    return %c0_i32, %c0_i32_0 : i32, i32
  }
  func.func @transform_6(%arg0: i32) -> (i32, i32) {
    %c0_i32 = arith.constant 0 : i32
    %c0_i32_0 = arith.constant 0 : i32
    %c0_i32_1 = arith.constant 0 : i32
    return %c0_i32, %c0_i32_0 : i32, i32
  }
  func.func @transform_7(%arg0: i32) -> (i32, i32) {
    %c0_i32 = arith.constant 0 : i32
    %c0_i32_0 = arith.constant 0 : i32
    return %arg0, %c0_i32 : i32, i32
  }
}

module attributes {stable_mosaic.version = 11 : i64} {
  func.func @_attn_block_kernel(%arg0: i32, %arg1: memref<1x8x128xf32, #tpu.memory_space<vmem>>, %arg2: memref<1x1x8xi32, #tpu.memory_space<vmem>>, %arg3: memref<1x128xf32, #tpu.memory_space<vmem>>, %arg4: memref<1x128xf32, #tpu.memory_space<vmem>>, %arg5: memref<128x384xf32, #tpu.memory_space<vmem>>, %arg6: memref<1x384xf32, #tpu.memory_space<vmem>>, %arg7: memref<128x128xf32, #tpu.memory_space<vmem>>, %arg8: memref<1x128xf32, #tpu.memory_space<vmem>>, %arg9: memref<1x8x128xf32, #tpu.memory_space<vmem>>) attributes {dimension_semantics = [#tpu.dimension_semantics<parallel>], iteration_bounds = array<i64: 2>, scalar_prefetch = 0 : i64, scratch_operands = 0 : i64, tpu.core_type = #tpu.core_type<tc>, window_params = [{transform_indices = @transform_0, window_bounds = array<i64: 1, 8, 128>}, {transform_indices = @transform_1, window_bounds = array<i64: 1, 1, 8>}, {pipeline_mode = #tpu.pipeline_mode<synchronous>, transform_indices = @transform_2, window_bounds = array<i64: 1, 128>}, {pipeline_mode = #tpu.pipeline_mode<synchronous>, transform_indices = @transform_3, window_bounds = array<i64: 1, 128>}, {pipeline_mode = #tpu.pipeline_mode<synchronous>, transform_indices = @transform_4, window_bounds = array<i64: 128, 384>}, {pipeline_mode = #tpu.pipeline_mode<synchronous>, transform_indices = @transform_5, window_bounds = array<i64: 1, 384>}, {pipeline_mode = #tpu.pipeline_mode<synchronous>, transform_indices = @transform_6, window_bounds = array<i64: 128, 128>}, {pipeline_mode = #tpu.pipeline_mode<synchronous>, transform_indices = @transform_7, window_bounds = array<i64: 1, 128>}, {transform_indices = @transform_8, window_bounds = array<i64: 1, 8, 128>}]} {
    %c0 = arith.constant 0 : index
    %c0_0 = arith.constant 0 : index
    %c0_1 = arith.constant 0 : index
    %0 = vector.load %arg1[%c0, %c0_0, %c0_1] : memref<1x8x128xf32, #tpu.memory_space<vmem>>, vector<1x8x128xf32>
    %1 = vector.shape_cast %0 : vector<1x8x128xf32> to vector<8x128xf32>
    %c0_2 = arith.constant 0 : index
    %c0_3 = arith.constant 0 : index
    %2 = vector.load %arg3[%c0_2, %c0_3] : memref<1x128xf32, #tpu.memory_space<vmem>>, vector<1x128xf32>
    %c0_4 = arith.constant 0 : index
    %c0_5 = arith.constant 0 : index
    %3 = vector.load %arg4[%c0_4, %c0_5] : memref<1x128xf32, #tpu.memory_space<vmem>>, vector<1x128xf32>
    %cst = arith.constant dense<0.000000e+00> : vector<8xf32>
    %4 = vector.multi_reduction <add>, %1, %cst [1] : vector<8x128xf32> to vector<8xf32>
    %5 = vector.shape_cast %4 : vector<8xf32> to vector<8x1xf32>
    %cst_6 = arith.constant 1.280000e+02 : f32
    %6 = vector.broadcast %cst_6 : f32 to vector<8x1xf32>
    %7 = arith.divf %5, %6 : vector<8x1xf32>
    %8 = vector.broadcast %7 : vector<8x1xf32> to vector<8x128xf32>
    %9 = arith.subf %1, %8 : vector<8x128xf32>
    %10 = arith.mulf %9, %9 : vector<8x128xf32>
    %cst_7 = arith.constant dense<0.000000e+00> : vector<8xf32>
    %11 = vector.multi_reduction <add>, %10, %cst_7 [1] : vector<8x128xf32> to vector<8xf32>
    %12 = vector.shape_cast %11 : vector<8xf32> to vector<8x1xf32>
    %cst_8 = arith.constant 1.280000e+02 : f32
    %13 = vector.broadcast %cst_8 : f32 to vector<8x1xf32>
    %14 = arith.divf %12, %13 : vector<8x1xf32>
    %cst_9 = arith.constant 9.99999974E-6 : f32
    %15 = vector.broadcast %cst_9 : f32 to vector<8x1xf32>
    %16 = arith.addf %14, %15 : vector<8x1xf32>
    %17 = math.rsqrt %16 : vector<8x1xf32>
    %18 = vector.broadcast %17 : vector<8x1xf32> to vector<8x128xf32>
    %19 = arith.mulf %9, %18 : vector<8x128xf32>
    %20 = vector.broadcast %2 : vector<1x128xf32> to vector<8x128xf32>
    %21 = arith.mulf %19, %20 : vector<8x128xf32>
    %22 = vector.broadcast %3 : vector<1x128xf32> to vector<8x128xf32>
    %23 = arith.addf %21, %22 : vector<8x128xf32>
    %c0_10 = arith.constant 0 : index
    %c0_11 = arith.constant 0 : index
    %24 = vector.load %arg5[%c0_10, %c0_11] : memref<128x384xf32, #tpu.memory_space<vmem>>, vector<128x384xf32>
    %cst_12 = arith.constant dense<0.000000e+00> : vector<8x384xf32>
    %25 = tpu.matmul %23, %24, %cst_12 {dimension_numbers = #tpu.dot_dimension_numbers<[1], [0], [0], [1], [0, 0, 1, 1], [], []>} : vector<8x128xf32>, vector<128x384xf32>, vector<8x384xf32> -> vector<8x384xf32>
    %c0_13 = arith.constant 0 : index
    %c0_14 = arith.constant 0 : index
    %26 = vector.load %arg6[%c0_13, %c0_14] : memref<1x384xf32, #tpu.memory_space<vmem>>, vector<1x384xf32>
    %27 = vector.broadcast %26 : vector<1x384xf32> to vector<8x384xf32>
    %28 = arith.addf %25, %27 : vector<8x384xf32>
    %c0_15 = arith.constant 0 : index
    %c0_16 = arith.constant 0 : index
    %c0_17 = arith.constant 0 : index
    %29 = vector.load %arg2[%c0_15, %c0_16, %c0_17] : memref<1x1x8xi32, #tpu.memory_space<vmem>>, vector<1x1x8xi32>
    %30 = vector.shape_cast %29 : vector<1x1x8xi32> to vector<1x8xi32>
    %c0_i32 = arith.constant 0 : i32
    %31 = vector.broadcast %c0_i32 : i32 to vector<1x8xi32>
    %32 = arith.cmpi ne, %30, %31 : vector<1x8xi32>
    %cst_18 = arith.constant 0.000000e+00 : f32
    %33 = vector.broadcast %cst_18 : f32 to vector<8x128xf32>
    %34 = vector.extract_strided_slice %28 {offsets = [0, 0], sizes = [8, 32], strides = [1, 1]} : vector<8x384xf32> to vector<8x32xf32>
    %cst_19 = arith.constant 0.176776692 : f32
    %35 = vector.broadcast %cst_19 : f32 to vector<8x32xf32>
    %36 = arith.mulf %34, %35 : vector<8x32xf32>
    %37 = vector.extract_strided_slice %28 {offsets = [0, 128], sizes = [8, 32], strides = [1, 1]} : vector<8x384xf32> to vector<8x32xf32>
    %38 = vector.extract_strided_slice %28 {offsets = [0, 256], sizes = [8, 32], strides = [1, 1]} : vector<8x384xf32> to vector<8x32xf32>
    %cst_20 = arith.constant dense<0.000000e+00> : vector<8x8xf32>
    %39 = tpu.matmul %36, %37, %cst_20 {dimension_numbers = #tpu.dot_dimension_numbers<[1], [1], [0], [0], [0, 0, 1, 0], [], []>} : vector<8x32xf32>, vector<8x32xf32>, vector<8x8xf32> -> vector<8x8xf32>
    %cst_21 = arith.constant -1.000000e+30 : f32
    %40 = vector.shape_cast %32 : vector<1x8xi1> to vector<1x8xi1>
    %41 = vector.broadcast %40 : vector<1x8xi1> to vector<8x8xi1>
    %42 = vector.broadcast %cst_21 : f32 to vector<8x8xf32>
    %43 = arith.select %41, %42, %39 : vector<8x8xi1>, vector<8x8xf32>
    %cst_22 = arith.constant dense<0xFF800000> : vector<8xf32>
    %44 = vector.multi_reduction <maximumf>, %43, %cst_22 [1] : vector<8x8xf32> to vector<8xf32>
    %45 = vector.shape_cast %44 : vector<8xf32> to vector<8x1xf32>
    %46 = vector.broadcast %45 : vector<8x1xf32> to vector<8x8xf32>
    %47 = arith.subf %43, %46 : vector<8x8xf32>
    %48 = math.exp %47 : vector<8x8xf32>
    %cst_23 = arith.constant dense<0.000000e+00> : vector<8xf32>
    %49 = vector.multi_reduction <add>, %48, %cst_23 [1] : vector<8x8xf32> to vector<8xf32>
    %50 = vector.shape_cast %49 : vector<8xf32> to vector<8x1xf32>
    %51 = tpu.reciprocal %50 {approx = true} : vector<8x1xf32> -> vector<8x1xf32>
    %52 = vector.broadcast %51 : vector<8x1xf32> to vector<8x8xf32>
    %53 = arith.mulf %48, %52 : vector<8x8xf32>
    %cst_24 = arith.constant dense<0.000000e+00> : vector<8x32xf32>
    %54 = tpu.matmul %53, %38, %cst_24 {dimension_numbers = #tpu.dot_dimension_numbers<[1], [0], [0], [1], [0, 0, 1, 1], [], []>} : vector<8x8xf32>, vector<8x32xf32>, vector<8x32xf32> -> vector<8x32xf32>
    %c0_25 = arith.constant 0 : index
    %c0_26 = arith.constant 0 : index
    %55 = vector.load %arg7[%c0_25, %c0_26] : memref<128x128xf32, #tpu.memory_space<vmem>>, vector<32x128xf32>
    %cst_27 = arith.constant dense<0.000000e+00> : vector<8x128xf32>
    %56 = tpu.matmul %54, %55, %cst_27 {dimension_numbers = #tpu.dot_dimension_numbers<[1], [0], [0], [1], [0, 0, 1, 1], [], []>} : vector<8x32xf32>, vector<32x128xf32>, vector<8x128xf32> -> vector<8x128xf32>
    %57 = arith.addf %33, %56 : vector<8x128xf32>
    %58 = vector.extract_strided_slice %28 {offsets = [0, 32], sizes = [8, 32], strides = [1, 1]} : vector<8x384xf32> to vector<8x32xf32>
    %cst_28 = arith.constant 0.176776692 : f32
    %59 = vector.broadcast %cst_28 : f32 to vector<8x32xf32>
    %60 = arith.mulf %58, %59 : vector<8x32xf32>
    %61 = vector.extract_strided_slice %28 {offsets = [0, 160], sizes = [8, 32], strides = [1, 1]} : vector<8x384xf32> to vector<8x32xf32>
    %62 = vector.extract_strided_slice %28 {offsets = [0, 288], sizes = [8, 32], strides = [1, 1]} : vector<8x384xf32> to vector<8x32xf32>
    %cst_29 = arith.constant dense<0.000000e+00> : vector<8x8xf32>
    %63 = tpu.matmul %60, %61, %cst_29 {dimension_numbers = #tpu.dot_dimension_numbers<[1], [1], [0], [0], [0, 0, 1, 0], [], []>} : vector<8x32xf32>, vector<8x32xf32>, vector<8x8xf32> -> vector<8x8xf32>
    %cst_30 = arith.constant -1.000000e+30 : f32
    %64 = vector.shape_cast %32 : vector<1x8xi1> to vector<1x8xi1>
    %65 = vector.broadcast %64 : vector<1x8xi1> to vector<8x8xi1>
    %66 = vector.broadcast %cst_30 : f32 to vector<8x8xf32>
    %67 = arith.select %65, %66, %63 : vector<8x8xi1>, vector<8x8xf32>
    %cst_31 = arith.constant dense<0xFF800000> : vector<8xf32>
    %68 = vector.multi_reduction <maximumf>, %67, %cst_31 [1] : vector<8x8xf32> to vector<8xf32>
    %69 = vector.shape_cast %68 : vector<8xf32> to vector<8x1xf32>
    %70 = vector.broadcast %69 : vector<8x1xf32> to vector<8x8xf32>
    %71 = arith.subf %67, %70 : vector<8x8xf32>
    %72 = math.exp %71 : vector<8x8xf32>
    %cst_32 = arith.constant dense<0.000000e+00> : vector<8xf32>
    %73 = vector.multi_reduction <add>, %72, %cst_32 [1] : vector<8x8xf32> to vector<8xf32>
    %74 = vector.shape_cast %73 : vector<8xf32> to vector<8x1xf32>
    %75 = tpu.reciprocal %74 {approx = true} : vector<8x1xf32> -> vector<8x1xf32>
    %76 = vector.broadcast %75 : vector<8x1xf32> to vector<8x8xf32>
    %77 = arith.mulf %72, %76 : vector<8x8xf32>
    %cst_33 = arith.constant dense<0.000000e+00> : vector<8x32xf32>
    %78 = tpu.matmul %77, %62, %cst_33 {dimension_numbers = #tpu.dot_dimension_numbers<[1], [0], [0], [1], [0, 0, 1, 1], [], []>} : vector<8x8xf32>, vector<8x32xf32>, vector<8x32xf32> -> vector<8x32xf32>
    %c32 = arith.constant 32 : index
    %c0_34 = arith.constant 0 : index
    %79 = vector.load %arg7[%c32, %c0_34] : memref<128x128xf32, #tpu.memory_space<vmem>>, vector<32x128xf32>
    %cst_35 = arith.constant dense<0.000000e+00> : vector<8x128xf32>
    %80 = tpu.matmul %78, %79, %cst_35 {dimension_numbers = #tpu.dot_dimension_numbers<[1], [0], [0], [1], [0, 0, 1, 1], [], []>} : vector<8x32xf32>, vector<32x128xf32>, vector<8x128xf32> -> vector<8x128xf32>
    %81 = arith.addf %57, %80 : vector<8x128xf32>
    %82 = vector.extract_strided_slice %28 {offsets = [0, 64], sizes = [8, 32], strides = [1, 1]} : vector<8x384xf32> to vector<8x32xf32>
    %cst_36 = arith.constant 0.176776692 : f32
    %83 = vector.broadcast %cst_36 : f32 to vector<8x32xf32>
    %84 = arith.mulf %82, %83 : vector<8x32xf32>
    %85 = vector.extract_strided_slice %28 {offsets = [0, 192], sizes = [8, 32], strides = [1, 1]} : vector<8x384xf32> to vector<8x32xf32>
    %86 = vector.extract_strided_slice %28 {offsets = [0, 320], sizes = [8, 32], strides = [1, 1]} : vector<8x384xf32> to vector<8x32xf32>
    %cst_37 = arith.constant dense<0.000000e+00> : vector<8x8xf32>
    %87 = tpu.matmul %84, %85, %cst_37 {dimension_numbers = #tpu.dot_dimension_numbers<[1], [1], [0], [0], [0, 0, 1, 0], [], []>} : vector<8x32xf32>, vector<8x32xf32>, vector<8x8xf32> -> vector<8x8xf32>
    %cst_38 = arith.constant -1.000000e+30 : f32
    %88 = vector.shape_cast %32 : vector<1x8xi1> to vector<1x8xi1>
    %89 = vector.broadcast %88 : vector<1x8xi1> to vector<8x8xi1>
    %90 = vector.broadcast %cst_38 : f32 to vector<8x8xf32>
    %91 = arith.select %89, %90, %87 : vector<8x8xi1>, vector<8x8xf32>
    %cst_39 = arith.constant dense<0xFF800000> : vector<8xf32>
    %92 = vector.multi_reduction <maximumf>, %91, %cst_39 [1] : vector<8x8xf32> to vector<8xf32>
    %93 = vector.shape_cast %92 : vector<8xf32> to vector<8x1xf32>
    %94 = vector.broadcast %93 : vector<8x1xf32> to vector<8x8xf32>
    %95 = arith.subf %91, %94 : vector<8x8xf32>
    %96 = math.exp %95 : vector<8x8xf32>
    %cst_40 = arith.constant dense<0.000000e+00> : vector<8xf32>
    %97 = vector.multi_reduction <add>, %96, %cst_40 [1] : vector<8x8xf32> to vector<8xf32>
    %98 = vector.shape_cast %97 : vector<8xf32> to vector<8x1xf32>
    %99 = tpu.reciprocal %98 {approx = true} : vector<8x1xf32> -> vector<8x1xf32>
    %100 = vector.broadcast %99 : vector<8x1xf32> to vector<8x8xf32>
    %101 = arith.mulf %96, %100 : vector<8x8xf32>
    %cst_41 = arith.constant dense<0.000000e+00> : vector<8x32xf32>
    %102 = tpu.matmul %101, %86, %cst_41 {dimension_numbers = #tpu.dot_dimension_numbers<[1], [0], [0], [1], [0, 0, 1, 1], [], []>} : vector<8x8xf32>, vector<8x32xf32>, vector<8x32xf32> -> vector<8x32xf32>
    %c64 = arith.constant 64 : index
    %c0_42 = arith.constant 0 : index
    %103 = vector.load %arg7[%c64, %c0_42] : memref<128x128xf32, #tpu.memory_space<vmem>>, vector<32x128xf32>
    %cst_43 = arith.constant dense<0.000000e+00> : vector<8x128xf32>
    %104 = tpu.matmul %102, %103, %cst_43 {dimension_numbers = #tpu.dot_dimension_numbers<[1], [0], [0], [1], [0, 0, 1, 1], [], []>} : vector<8x32xf32>, vector<32x128xf32>, vector<8x128xf32> -> vector<8x128xf32>
    %105 = arith.addf %81, %104 : vector<8x128xf32>
    %106 = vector.extract_strided_slice %28 {offsets = [0, 96], sizes = [8, 32], strides = [1, 1]} : vector<8x384xf32> to vector<8x32xf32>
    %cst_44 = arith.constant 0.176776692 : f32
    %107 = vector.broadcast %cst_44 : f32 to vector<8x32xf32>
    %108 = arith.mulf %106, %107 : vector<8x32xf32>
    %109 = vector.extract_strided_slice %28 {offsets = [0, 224], sizes = [8, 32], strides = [1, 1]} : vector<8x384xf32> to vector<8x32xf32>
    %110 = vector.extract_strided_slice %28 {offsets = [0, 352], sizes = [8, 32], strides = [1, 1]} : vector<8x384xf32> to vector<8x32xf32>
    %cst_45 = arith.constant dense<0.000000e+00> : vector<8x8xf32>
    %111 = tpu.matmul %108, %109, %cst_45 {dimension_numbers = #tpu.dot_dimension_numbers<[1], [1], [0], [0], [0, 0, 1, 0], [], []>} : vector<8x32xf32>, vector<8x32xf32>, vector<8x8xf32> -> vector<8x8xf32>
    %cst_46 = arith.constant -1.000000e+30 : f32
    %112 = vector.shape_cast %32 : vector<1x8xi1> to vector<1x8xi1>
    %113 = vector.broadcast %112 : vector<1x8xi1> to vector<8x8xi1>
    %114 = vector.broadcast %cst_46 : f32 to vector<8x8xf32>
    %115 = arith.select %113, %114, %111 : vector<8x8xi1>, vector<8x8xf32>
    %cst_47 = arith.constant dense<0xFF800000> : vector<8xf32>
    %116 = vector.multi_reduction <maximumf>, %115, %cst_47 [1] : vector<8x8xf32> to vector<8xf32>
    %117 = vector.shape_cast %116 : vector<8xf32> to vector<8x1xf32>
    %118 = vector.broadcast %117 : vector<8x1xf32> to vector<8x8xf32>
    %119 = arith.subf %115, %118 : vector<8x8xf32>
    %120 = math.exp %119 : vector<8x8xf32>
    %cst_48 = arith.constant dense<0.000000e+00> : vector<8xf32>
    %121 = vector.multi_reduction <add>, %120, %cst_48 [1] : vector<8x8xf32> to vector<8xf32>
    %122 = vector.shape_cast %121 : vector<8xf32> to vector<8x1xf32>
    %123 = tpu.reciprocal %122 {approx = true} : vector<8x1xf32> -> vector<8x1xf32>
    %124 = vector.broadcast %123 : vector<8x1xf32> to vector<8x8xf32>
    %125 = arith.mulf %120, %124 : vector<8x8xf32>
    %cst_49 = arith.constant dense<0.000000e+00> : vector<8x32xf32>
    %126 = tpu.matmul %125, %110, %cst_49 {dimension_numbers = #tpu.dot_dimension_numbers<[1], [0], [0], [1], [0, 0, 1, 1], [], []>} : vector<8x8xf32>, vector<8x32xf32>, vector<8x32xf32> -> vector<8x32xf32>
    %c96 = arith.constant 96 : index
    %c0_50 = arith.constant 0 : index
    %127 = vector.load %arg7[%c96, %c0_50] : memref<128x128xf32, #tpu.memory_space<vmem>>, vector<32x128xf32>
    %cst_51 = arith.constant dense<0.000000e+00> : vector<8x128xf32>
    %128 = tpu.matmul %126, %127, %cst_51 {dimension_numbers = #tpu.dot_dimension_numbers<[1], [0], [0], [1], [0, 0, 1, 1], [], []>} : vector<8x32xf32>, vector<32x128xf32>, vector<8x128xf32> -> vector<8x128xf32>
    %129 = arith.addf %105, %128 : vector<8x128xf32>
    %c0_52 = arith.constant 0 : index
    %c0_53 = arith.constant 0 : index
    %130 = vector.load %arg8[%c0_52, %c0_53] : memref<1x128xf32, #tpu.memory_space<vmem>>, vector<1x128xf32>
    %131 = vector.broadcast %130 : vector<1x128xf32> to vector<8x128xf32>
    %132 = arith.addf %129, %131 : vector<8x128xf32>
    %133 = arith.addf %1, %132 : vector<8x128xf32>
    %c0_54 = arith.constant 0 : index
    %c0_55 = arith.constant 0 : index
    %c0_56 = arith.constant 0 : index
    %134 = vector.load %arg9[%c0_54, %c0_55, %c0_56] : memref<1x8x128xf32, #tpu.memory_space<vmem>>, vector<1x8x128xf32>
    %135 = vector.shape_cast %134 : vector<1x8x128xf32> to vector<8x128xf32>
    %136 = vector.shape_cast %133 : vector<8x128xf32> to vector<1x8x128xf32>
    tpu.vector_store %arg9[%c0_54, %c0_55, %c0_56], %136 {strides = array<i32>} : memref<1x8x128xf32, #tpu.memory_space<vmem>>, vector<1x8x128xf32>,
    return
  }
  func.func @transform_0(%arg0: i32) -> (i32, i32, i32) {
    %c0_i32 = arith.constant 0 : i32
    %c0_i32_0 = arith.constant 0 : i32
    %c0_i32_1 = arith.constant 0 : i32
    return %arg0, %c0_i32, %c0_i32_0 : i32, i32, i32
  }
  func.func @transform_1(%arg0: i32) -> (i32, i32, i32) {
    %c0_i32 = arith.constant 0 : i32
    %c0_i32_0 = arith.constant 0 : i32
    %c0_i32_1 = arith.constant 0 : i32
    return %arg0, %c0_i32, %c0_i32_0 : i32, i32, i32
  }
  func.func @transform_2(%arg0: i32) -> (i32, i32) {
    %c0_i32 = arith.constant 0 : i32
    %c0_i32_0 = arith.constant 0 : i32
    %c0_i32_1 = arith.constant 0 : i32
    return %c0_i32, %c0_i32_0 : i32, i32
  }
  func.func @transform_3(%arg0: i32) -> (i32, i32) {
    %c0_i32 = arith.constant 0 : i32
    %c0_i32_0 = arith.constant 0 : i32
    %c0_i32_1 = arith.constant 0 : i32
    return %c0_i32, %c0_i32_0 : i32, i32
  }
  func.func @transform_4(%arg0: i32) -> (i32, i32) {
    %c0_i32 = arith.constant 0 : i32
    %c0_i32_0 = arith.constant 0 : i32
    %c0_i32_1 = arith.constant 0 : i32
    return %c0_i32, %c0_i32_0 : i32, i32
  }
  func.func @transform_5(%arg0: i32) -> (i32, i32) {
    %c0_i32 = arith.constant 0 : i32
    %c0_i32_0 = arith.constant 0 : i32
    %c0_i32_1 = arith.constant 0 : i32
    return %c0_i32, %c0_i32_0 : i32, i32
  }
  func.func @transform_6(%arg0: i32) -> (i32, i32) {
    %c0_i32 = arith.constant 0 : i32
    %c0_i32_0 = arith.constant 0 : i32
    %c0_i32_1 = arith.constant 0 : i32
    return %c0_i32, %c0_i32_0 : i32, i32
  }
  func.func @transform_7(%arg0: i32) -> (i32, i32) {
    %c0_i32 = arith.constant 0 : i32
    %c0_i32_0 = arith.constant 0 : i32
    %c0_i32_1 = arith.constant 0 : i32
    return %c0_i32, %c0_i32_0 : i32, i32
  }
  func.func @transform_8(%arg0: i32) -> (i32, i32, i32) {
    %c0_i32 = arith.constant 0 : i32
    %c0_i32_0 = arith.constant 0 : i32
    %c0_i32_1 = arith.constant 0 : i32
    return %arg0, %c0_i32, %c0_i32_0 : i32, i32, i32
  }
}

module attributes {stable_mosaic.version = 11 : i64} {
  func.func @_cross_attn_gate_kernel(%arg0: i32, %arg1: memref<1x8x128xf32, #tpu.memory_space<vmem>>, %arg2: memref<1x8x128xf32, #tpu.memory_space<vmem>>, %arg3: memref<1x1x8xi32, #tpu.memory_space<vmem>>, %arg4: memref<128x128xf32, #tpu.memory_space<vmem>>, %arg5: memref<1x128xf32, #tpu.memory_space<vmem>>, %arg6: memref<128x256xf32, #tpu.memory_space<vmem>>, %arg7: memref<1x256xf32, #tpu.memory_space<vmem>>, %arg8: memref<128x128xf32, #tpu.memory_space<vmem>>, %arg9: memref<1x128xf32, #tpu.memory_space<vmem>>, %arg10: memref<1x1xf32, #tpu.memory_space<vmem>>, %arg11: memref<1x8x128xf32, #tpu.memory_space<vmem>>) attributes {dimension_semantics = [#tpu.dimension_semantics<parallel>], iteration_bounds = array<i64: 2>, scalar_prefetch = 0 : i64, scratch_operands = 0 : i64, tpu.core_type = #tpu.core_type<tc>, window_params = [{transform_indices = @transform_0, window_bounds = array<i64: 1, 8, 128>}, {transform_indices = @transform_1, window_bounds = array<i64: 1, 8, 128>}, {transform_indices = @transform_2, window_bounds = array<i64: 1, 1, 8>}, {pipeline_mode = #tpu.pipeline_mode<synchronous>, transform_indices = @transform_3, window_bounds = array<i64: 128, 128>}, {pipeline_mode = #tpu.pipeline_mode<synchronous>, transform_indices = @transform_4, window_bounds = array<i64: 1, 128>}, {pipeline_mode = #tpu.pipeline_mode<synchronous>, transform_indices = @transform_5, window_bounds = array<i64: 128, 256>}, {pipeline_mode = #tpu.pipeline_mode<synchronous>, transform_indices = @transform_6, window_bounds = array<i64: 1, 256>}, {pipeline_mode = #tpu.pipeline_mode<synchronous>, transform_indices = @transform_7, window_bounds = array<i64: 128, 128>}, {pipeline_mode = #tpu.pipeline_mode<synchronous>, transform_indices = @transform_8, window_bounds = array<i64: 1, 128>}, {pipeline_mode = #tpu.pipeline_mode<synchronous>, transform_indices = @transform_9, window_bounds = array<i64: 1, 1>}, {transform_indices = @transform_10, window_bounds = array<i64: 1, 8, 128>}]} {
    %c0 = arith.constant 0 : index
    %c0_0 = arith.constant 0 : index
    %c0_1 = arith.constant 0 : index
    %0 = vector.load %arg1[%c0, %c0_0, %c0_1] : memref<1x8x128xf32, #tpu.memory_space<vmem>>, vector<1x8x128xf32>
    %1 = vector.shape_cast %0 : vector<1x8x128xf32> to vector<8x128xf32>
    %c0_2 = arith.constant 0 : index
    %c0_3 = arith.constant 0 : index
    %c0_4 = arith.constant 0 : index
    %2 = vector.load %arg2[%c0_2, %c0_3, %c0_4] : memref<1x8x128xf32, #tpu.memory_space<vmem>>, vector<1x8x128xf32>
    %3 = vector.shape_cast %2 : vector<1x8x128xf32> to vector<8x128xf32>
    %c0_5 = arith.constant 0 : index
    %c0_6 = arith.constant 0 : index
    %4 = vector.load %arg4[%c0_5, %c0_6] : memref<128x128xf32, #tpu.memory_space<vmem>>, vector<128x128xf32>
    %cst = arith.constant dense<0.000000e+00> : vector<8x128xf32>
    %5 = tpu.matmul %1, %4, %cst {dimension_numbers = #tpu.dot_dimension_numbers<[1], [0], [0], [1], [0, 0, 1, 1], [], []>} : vector<8x128xf32>, vector<128x128xf32>, vector<8x128xf32> -> vector<8x128xf32>
    %c0_7 = arith.constant 0 : index
    %c0_8 = arith.constant 0 : index
    %6 = vector.load %arg5[%c0_7, %c0_8] : memref<1x128xf32, #tpu.memory_space<vmem>>, vector<1x128xf32>
    %7 = vector.broadcast %6 : vector<1x128xf32> to vector<8x128xf32>
    %8 = arith.addf %5, %7 : vector<8x128xf32>
    %c0_9 = arith.constant 0 : index
    %c0_10 = arith.constant 0 : index
    %9 = vector.load %arg6[%c0_9, %c0_10] : memref<128x256xf32, #tpu.memory_space<vmem>>, vector<128x256xf32>
    %cst_11 = arith.constant dense<0.000000e+00> : vector<8x256xf32>
    %10 = tpu.matmul %3, %9, %cst_11 {dimension_numbers = #tpu.dot_dimension_numbers<[1], [0], [0], [1], [0, 0, 1, 1], [], []>} : vector<8x128xf32>, vector<128x256xf32>, vector<8x256xf32> -> vector<8x256xf32>
    %c0_12 = arith.constant 0 : index
    %c0_13 = arith.constant 0 : index
    %11 = vector.load %arg7[%c0_12, %c0_13] : memref<1x256xf32, #tpu.memory_space<vmem>>, vector<1x256xf32>
    %12 = vector.broadcast %11 : vector<1x256xf32> to vector<8x256xf32>
    %13 = arith.addf %10, %12 : vector<8x256xf32>
    %c0_14 = arith.constant 0 : index
    %c0_15 = arith.constant 0 : index
    %c0_16 = arith.constant 0 : index
    %14 = vector.load %arg3[%c0_14, %c0_15, %c0_16] : memref<1x1x8xi32, #tpu.memory_space<vmem>>, vector<1x1x8xi32>
    %15 = vector.shape_cast %14 : vector<1x1x8xi32> to vector<1x8xi32>
    %c0_i32 = arith.constant 0 : i32
    %16 = vector.broadcast %c0_i32 : i32 to vector<1x8xi32>
    %17 = arith.cmpi ne, %15, %16 : vector<1x8xi32>
    %cst_17 = arith.constant 0.000000e+00 : f32
    %18 = vector.broadcast %cst_17 : f32 to vector<8x128xf32>
    %19 = vector.extract_strided_slice %8 {offsets = [0, 0], sizes = [8, 32], strides = [1, 1]} : vector<8x128xf32> to vector<8x32xf32>
    %cst_18 = arith.constant 0.176776692 : f32
    %20 = vector.broadcast %cst_18 : f32 to vector<8x32xf32>
    %21 = arith.mulf %19, %20 : vector<8x32xf32>
    %22 = vector.extract_strided_slice %13 {offsets = [0, 0], sizes = [8, 32], strides = [1, 1]} : vector<8x256xf32> to vector<8x32xf32>
    %23 = vector.extract_strided_slice %13 {offsets = [0, 128], sizes = [8, 32], strides = [1, 1]} : vector<8x256xf32> to vector<8x32xf32>
    %cst_19 = arith.constant dense<0.000000e+00> : vector<8x8xf32>
    %24 = tpu.matmul %21, %22, %cst_19 {dimension_numbers = #tpu.dot_dimension_numbers<[1], [1], [0], [0], [0, 0, 1, 0], [], []>} : vector<8x32xf32>, vector<8x32xf32>, vector<8x8xf32> -> vector<8x8xf32>
    %cst_20 = arith.constant -1.000000e+30 : f32
    %25 = vector.shape_cast %17 : vector<1x8xi1> to vector<1x8xi1>
    %26 = vector.broadcast %25 : vector<1x8xi1> to vector<8x8xi1>
    %27 = vector.broadcast %cst_20 : f32 to vector<8x8xf32>
    %28 = arith.select %26, %27, %24 : vector<8x8xi1>, vector<8x8xf32>
    %cst_21 = arith.constant dense<0xFF800000> : vector<8xf32>
    %29 = vector.multi_reduction <maximumf>, %28, %cst_21 [1] : vector<8x8xf32> to vector<8xf32>
    %30 = vector.shape_cast %29 : vector<8xf32> to vector<8x1xf32>
    %31 = vector.broadcast %30 : vector<8x1xf32> to vector<8x8xf32>
    %32 = arith.subf %28, %31 : vector<8x8xf32>
    %33 = math.exp %32 : vector<8x8xf32>
    %cst_22 = arith.constant dense<0.000000e+00> : vector<8xf32>
    %34 = vector.multi_reduction <add>, %33, %cst_22 [1] : vector<8x8xf32> to vector<8xf32>
    %35 = vector.shape_cast %34 : vector<8xf32> to vector<8x1xf32>
    %36 = tpu.reciprocal %35 {approx = true} : vector<8x1xf32> -> vector<8x1xf32>
    %37 = vector.broadcast %36 : vector<8x1xf32> to vector<8x8xf32>
    %38 = arith.mulf %33, %37 : vector<8x8xf32>
    %cst_23 = arith.constant dense<0.000000e+00> : vector<8x32xf32>
    %39 = tpu.matmul %38, %23, %cst_23 {dimension_numbers = #tpu.dot_dimension_numbers<[1], [0], [0], [1], [0, 0, 1, 1], [], []>} : vector<8x8xf32>, vector<8x32xf32>, vector<8x32xf32> -> vector<8x32xf32>
    %c0_24 = arith.constant 0 : index
    %c0_25 = arith.constant 0 : index
    %40 = vector.load %arg8[%c0_24, %c0_25] : memref<128x128xf32, #tpu.memory_space<vmem>>, vector<32x128xf32>
    %cst_26 = arith.constant dense<0.000000e+00> : vector<8x128xf32>
    %41 = tpu.matmul %39, %40, %cst_26 {dimension_numbers = #tpu.dot_dimension_numbers<[1], [0], [0], [1], [0, 0, 1, 1], [], []>} : vector<8x32xf32>, vector<32x128xf32>, vector<8x128xf32> -> vector<8x128xf32>
    %42 = arith.addf %18, %41 : vector<8x128xf32>
    %43 = vector.extract_strided_slice %8 {offsets = [0, 32], sizes = [8, 32], strides = [1, 1]} : vector<8x128xf32> to vector<8x32xf32>
    %cst_27 = arith.constant 0.176776692 : f32
    %44 = vector.broadcast %cst_27 : f32 to vector<8x32xf32>
    %45 = arith.mulf %43, %44 : vector<8x32xf32>
    %46 = vector.extract_strided_slice %13 {offsets = [0, 32], sizes = [8, 32], strides = [1, 1]} : vector<8x256xf32> to vector<8x32xf32>
    %47 = vector.extract_strided_slice %13 {offsets = [0, 160], sizes = [8, 32], strides = [1, 1]} : vector<8x256xf32> to vector<8x32xf32>
    %cst_28 = arith.constant dense<0.000000e+00> : vector<8x8xf32>
    %48 = tpu.matmul %45, %46, %cst_28 {dimension_numbers = #tpu.dot_dimension_numbers<[1], [1], [0], [0], [0, 0, 1, 0], [], []>} : vector<8x32xf32>, vector<8x32xf32>, vector<8x8xf32> -> vector<8x8xf32>
    %cst_29 = arith.constant -1.000000e+30 : f32
    %49 = vector.shape_cast %17 : vector<1x8xi1> to vector<1x8xi1>
    %50 = vector.broadcast %49 : vector<1x8xi1> to vector<8x8xi1>
    %51 = vector.broadcast %cst_29 : f32 to vector<8x8xf32>
    %52 = arith.select %50, %51, %48 : vector<8x8xi1>, vector<8x8xf32>
    %cst_30 = arith.constant dense<0xFF800000> : vector<8xf32>
    %53 = vector.multi_reduction <maximumf>, %52, %cst_30 [1] : vector<8x8xf32> to vector<8xf32>
    %54 = vector.shape_cast %53 : vector<8xf32> to vector<8x1xf32>
    %55 = vector.broadcast %54 : vector<8x1xf32> to vector<8x8xf32>
    %56 = arith.subf %52, %55 : vector<8x8xf32>
    %57 = math.exp %56 : vector<8x8xf32>
    %cst_31 = arith.constant dense<0.000000e+00> : vector<8xf32>
    %58 = vector.multi_reduction <add>, %57, %cst_31 [1] : vector<8x8xf32> to vector<8xf32>
    %59 = vector.shape_cast %58 : vector<8xf32> to vector<8x1xf32>
    %60 = tpu.reciprocal %59 {approx = true} : vector<8x1xf32> -> vector<8x1xf32>
    %61 = vector.broadcast %60 : vector<8x1xf32> to vector<8x8xf32>
    %62 = arith.mulf %57, %61 : vector<8x8xf32>
    %cst_32 = arith.constant dense<0.000000e+00> : vector<8x32xf32>
    %63 = tpu.matmul %62, %47, %cst_32 {dimension_numbers = #tpu.dot_dimension_numbers<[1], [0], [0], [1], [0, 0, 1, 1], [], []>} : vector<8x8xf32>, vector<8x32xf32>, vector<8x32xf32> -> vector<8x32xf32>
    %c32 = arith.constant 32 : index
    %c0_33 = arith.constant 0 : index
    %64 = vector.load %arg8[%c32, %c0_33] : memref<128x128xf32, #tpu.memory_space<vmem>>, vector<32x128xf32>
    %cst_34 = arith.constant dense<0.000000e+00> : vector<8x128xf32>
    %65 = tpu.matmul %63, %64, %cst_34 {dimension_numbers = #tpu.dot_dimension_numbers<[1], [0], [0], [1], [0, 0, 1, 1], [], []>} : vector<8x32xf32>, vector<32x128xf32>, vector<8x128xf32> -> vector<8x128xf32>
    %66 = arith.addf %42, %65 : vector<8x128xf32>
    %67 = vector.extract_strided_slice %8 {offsets = [0, 64], sizes = [8, 32], strides = [1, 1]} : vector<8x128xf32> to vector<8x32xf32>
    %cst_35 = arith.constant 0.176776692 : f32
    %68 = vector.broadcast %cst_35 : f32 to vector<8x32xf32>
    %69 = arith.mulf %67, %68 : vector<8x32xf32>
    %70 = vector.extract_strided_slice %13 {offsets = [0, 64], sizes = [8, 32], strides = [1, 1]} : vector<8x256xf32> to vector<8x32xf32>
    %71 = vector.extract_strided_slice %13 {offsets = [0, 192], sizes = [8, 32], strides = [1, 1]} : vector<8x256xf32> to vector<8x32xf32>
    %cst_36 = arith.constant dense<0.000000e+00> : vector<8x8xf32>
    %72 = tpu.matmul %69, %70, %cst_36 {dimension_numbers = #tpu.dot_dimension_numbers<[1], [1], [0], [0], [0, 0, 1, 0], [], []>} : vector<8x32xf32>, vector<8x32xf32>, vector<8x8xf32> -> vector<8x8xf32>
    %cst_37 = arith.constant -1.000000e+30 : f32
    %73 = vector.shape_cast %17 : vector<1x8xi1> to vector<1x8xi1>
    %74 = vector.broadcast %73 : vector<1x8xi1> to vector<8x8xi1>
    %75 = vector.broadcast %cst_37 : f32 to vector<8x8xf32>
    %76 = arith.select %74, %75, %72 : vector<8x8xi1>, vector<8x8xf32>
    %cst_38 = arith.constant dense<0xFF800000> : vector<8xf32>
    %77 = vector.multi_reduction <maximumf>, %76, %cst_38 [1] : vector<8x8xf32> to vector<8xf32>
    %78 = vector.shape_cast %77 : vector<8xf32> to vector<8x1xf32>
    %79 = vector.broadcast %78 : vector<8x1xf32> to vector<8x8xf32>
    %80 = arith.subf %76, %79 : vector<8x8xf32>
    %81 = math.exp %80 : vector<8x8xf32>
    %cst_39 = arith.constant dense<0.000000e+00> : vector<8xf32>
    %82 = vector.multi_reduction <add>, %81, %cst_39 [1] : vector<8x8xf32> to vector<8xf32>
    %83 = vector.shape_cast %82 : vector<8xf32> to vector<8x1xf32>
    %84 = tpu.reciprocal %83 {approx = true} : vector<8x1xf32> -> vector<8x1xf32>
    %85 = vector.broadcast %84 : vector<8x1xf32> to vector<8x8xf32>
    %86 = arith.mulf %81, %85 : vector<8x8xf32>
    %cst_40 = arith.constant dense<0.000000e+00> : vector<8x32xf32>
    %87 = tpu.matmul %86, %71, %cst_40 {dimension_numbers = #tpu.dot_dimension_numbers<[1], [0], [0], [1], [0, 0, 1, 1], [], []>} : vector<8x8xf32>, vector<8x32xf32>, vector<8x32xf32> -> vector<8x32xf32>
    %c64 = arith.constant 64 : index
    %c0_41 = arith.constant 0 : index
    %88 = vector.load %arg8[%c64, %c0_41] : memref<128x128xf32, #tpu.memory_space<vmem>>, vector<32x128xf32>
    %cst_42 = arith.constant dense<0.000000e+00> : vector<8x128xf32>
    %89 = tpu.matmul %87, %88, %cst_42 {dimension_numbers = #tpu.dot_dimension_numbers<[1], [0], [0], [1], [0, 0, 1, 1], [], []>} : vector<8x32xf32>, vector<32x128xf32>, vector<8x128xf32> -> vector<8x128xf32>
    %90 = arith.addf %66, %89 : vector<8x128xf32>
    %91 = vector.extract_strided_slice %8 {offsets = [0, 96], sizes = [8, 32], strides = [1, 1]} : vector<8x128xf32> to vector<8x32xf32>
    %cst_43 = arith.constant 0.176776692 : f32
    %92 = vector.broadcast %cst_43 : f32 to vector<8x32xf32>
    %93 = arith.mulf %91, %92 : vector<8x32xf32>
    %94 = vector.extract_strided_slice %13 {offsets = [0, 96], sizes = [8, 32], strides = [1, 1]} : vector<8x256xf32> to vector<8x32xf32>
    %95 = vector.extract_strided_slice %13 {offsets = [0, 224], sizes = [8, 32], strides = [1, 1]} : vector<8x256xf32> to vector<8x32xf32>
    %cst_44 = arith.constant dense<0.000000e+00> : vector<8x8xf32>
    %96 = tpu.matmul %93, %94, %cst_44 {dimension_numbers = #tpu.dot_dimension_numbers<[1], [1], [0], [0], [0, 0, 1, 0], [], []>} : vector<8x32xf32>, vector<8x32xf32>, vector<8x8xf32> -> vector<8x8xf32>
    %cst_45 = arith.constant -1.000000e+30 : f32
    %97 = vector.shape_cast %17 : vector<1x8xi1> to vector<1x8xi1>
    %98 = vector.broadcast %97 : vector<1x8xi1> to vector<8x8xi1>
    %99 = vector.broadcast %cst_45 : f32 to vector<8x8xf32>
    %100 = arith.select %98, %99, %96 : vector<8x8xi1>, vector<8x8xf32>
    %cst_46 = arith.constant dense<0xFF800000> : vector<8xf32>
    %101 = vector.multi_reduction <maximumf>, %100, %cst_46 [1] : vector<8x8xf32> to vector<8xf32>
    %102 = vector.shape_cast %101 : vector<8xf32> to vector<8x1xf32>
    %103 = vector.broadcast %102 : vector<8x1xf32> to vector<8x8xf32>
    %104 = arith.subf %100, %103 : vector<8x8xf32>
    %105 = math.exp %104 : vector<8x8xf32>
    %cst_47 = arith.constant dense<0.000000e+00> : vector<8xf32>
    %106 = vector.multi_reduction <add>, %105, %cst_47 [1] : vector<8x8xf32> to vector<8xf32>
    %107 = vector.shape_cast %106 : vector<8xf32> to vector<8x1xf32>
    %108 = tpu.reciprocal %107 {approx = true} : vector<8x1xf32> -> vector<8x1xf32>
    %109 = vector.broadcast %108 : vector<8x1xf32> to vector<8x8xf32>
    %110 = arith.mulf %105, %109 : vector<8x8xf32>
    %cst_48 = arith.constant dense<0.000000e+00> : vector<8x32xf32>
    %111 = tpu.matmul %110, %95, %cst_48 {dimension_numbers = #tpu.dot_dimension_numbers<[1], [0], [0], [1], [0, 0, 1, 1], [], []>} : vector<8x8xf32>, vector<8x32xf32>, vector<8x32xf32> -> vector<8x32xf32>
    %c96 = arith.constant 96 : index
    %c0_49 = arith.constant 0 : index
    %112 = vector.load %arg8[%c96, %c0_49] : memref<128x128xf32, #tpu.memory_space<vmem>>, vector<32x128xf32>
    %cst_50 = arith.constant dense<0.000000e+00> : vector<8x128xf32>
    %113 = tpu.matmul %111, %112, %cst_50 {dimension_numbers = #tpu.dot_dimension_numbers<[1], [0], [0], [1], [0, 0, 1, 1], [], []>} : vector<8x32xf32>, vector<32x128xf32>, vector<8x128xf32> -> vector<8x128xf32>
    %114 = arith.addf %90, %113 : vector<8x128xf32>
    %c0_51 = arith.constant 0 : index
    %c0_52 = arith.constant 0 : index
    %115 = vector.load %arg9[%c0_51, %c0_52] : memref<1x128xf32, #tpu.memory_space<vmem>>, vector<1x128xf32>
    %116 = vector.broadcast %115 : vector<1x128xf32> to vector<8x128xf32>
    %117 = arith.addf %114, %116 : vector<8x128xf32>
    %c0_53 = arith.constant 0 : index
    %c0_54 = arith.constant 0 : index
    %118 = vector.load %arg10[%c0_53, %c0_54] : memref<1x1xf32, #tpu.memory_space<vmem>>, vector<1x1xf32>
    %119 = vector.broadcast %118 : vector<1x1xf32> to vector<8x128xf32>
    %120 = arith.mulf %119, %1 : vector<8x128xf32>
    %cst_55 = arith.constant 1.000000e+00 : f32
    %121 = vector.broadcast %cst_55 : f32 to vector<1x1xf32>
    %122 = arith.subf %121, %118 : vector<1x1xf32>
    %123 = vector.broadcast %122 : vector<1x1xf32> to vector<8x128xf32>
    %124 = arith.mulf %123, %117 : vector<8x128xf32>
    %125 = arith.addf %120, %124 : vector<8x128xf32>
    %c0_56 = arith.constant 0 : index
    %c0_57 = arith.constant 0 : index
    %c0_58 = arith.constant 0 : index
    %126 = vector.load %arg11[%c0_56, %c0_57, %c0_58] : memref<1x8x128xf32, #tpu.memory_space<vmem>>, vector<1x8x128xf32>
    %127 = vector.shape_cast %126 : vector<1x8x128xf32> to vector<8x128xf32>
    %128 = vector.shape_cast %125 : vector<8x128xf32> to vector<1x8x128xf32>
    tpu.vector_store %arg11[%c0_56, %c0_57, %c0_58], %128 {strides = array<i32>} : memref<1x8x128xf32, #tpu.memory_space<vmem>>, vector<1x8x128xf32>,
    return
  }
  func.func @transform_0(%arg0: i32) -> (i32, i32, i32) {
    %c0_i32 = arith.constant 0 : i32
    %c0_i32_0 = arith.constant 0 : i32
    %c0_i32_1 = arith.constant 0 : i32
    return %arg0, %c0_i32, %c0_i32_0 : i32, i32, i32
  }
  func.func @transform_1(%arg0: i32) -> (i32, i32, i32) {
    %c0_i32 = arith.constant 0 : i32
    %c0_i32_0 = arith.constant 0 : i32
    %c0_i32_1 = arith.constant 0 : i32
    return %arg0, %c0_i32, %c0_i32_0 : i32, i32, i32
  }
  func.func @transform_2(%arg0: i32) -> (i32, i32, i32) {
    %c0_i32 = arith.constant 0 : i32
    %c0_i32_0 = arith.constant 0 : i32
    %c0_i32_1 = arith.constant 0 : i32
    return %arg0, %c0_i32, %c0_i32_0 : i32, i32, i32
  }
  func.func @transform_3(%arg0: i32) -> (i32, i32) {
    %c0_i32 = arith.constant 0 : i32
    %c0_i32_0 = arith.constant 0 : i32
    %c0_i32_1 = arith.constant 0 : i32
    return %c0_i32, %c0_i32_0 : i32, i32
  }
  func.func @transform_4(%arg0: i32) -> (i32, i32) {
    %c0_i32 = arith.constant 0 : i32
    %c0_i32_0 = arith.constant 0 : i32
    %c0_i32_1 = arith.constant 0 : i32
    return %c0_i32, %c0_i32_0 : i32, i32
  }
  func.func @transform_5(%arg0: i32) -> (i32, i32) {
    %c0_i32 = arith.constant 0 : i32
    %c0_i32_0 = arith.constant 0 : i32
    %c0_i32_1 = arith.constant 0 : i32
    return %c0_i32, %c0_i32_0 : i32, i32
  }
  func.func @transform_6(%arg0: i32) -> (i32, i32) {
    %c0_i32 = arith.constant 0 : i32
    %c0_i32_0 = arith.constant 0 : i32
    %c0_i32_1 = arith.constant 0 : i32
    return %c0_i32, %c0_i32_0 : i32, i32
  }
  func.func @transform_7(%arg0: i32) -> (i32, i32) {
    %c0_i32 = arith.constant 0 : i32
    %c0_i32_0 = arith.constant 0 : i32
    %c0_i32_1 = arith.constant 0 : i32
    return %c0_i32, %c0_i32_0 : i32, i32
  }
  func.func @transform_8(%arg0: i32) -> (i32, i32) {
    %c0_i32 = arith.constant 0 : i32
    %c0_i32_0 = arith.constant 0 : i32
    %c0_i32_1 = arith.constant 0 : i32
    return %c0_i32, %c0_i32_0 : i32, i32
  }
  func.func @transform_9(%arg0: i32) -> (i32, i32) {
    %c0_i32 = arith.constant 0 : i32
    %c0_i32_0 = arith.constant 0 : i32
    %c0_i32_1 = arith.constant 0 : i32
    return %c0_i32, %c0_i32_0 : i32, i32
  }
  func.func @transform_10(%arg0: i32) -> (i32, i32, i32) {
    %c0_i32 = arith.constant 0 : i32
    %c0_i32_0 = arith.constant 0 : i32
    %c0_i32_1 = arith.constant 0 : i32
    return %arg0, %c0_i32, %c0_i32_0 : i32, i32, i32
  }
}

module attributes {stable_mosaic.version = 11 : i64} {
  func.func @_pool_tail_kernel(%arg0: i32, %arg1: memref<1x8x128xf32, #tpu.memory_space<vmem>>, %arg2: memref<1x1x8xi32, #tpu.memory_space<vmem>>, %arg3: memref<1x128xf32, #tpu.memory_space<vmem>>, %arg4: memref<1x128xf32, #tpu.memory_space<vmem>>, %arg5: memref<1x128xf32, #tpu.memory_space<vmem>>, %arg6: memref<128x512xf32, #tpu.memory_space<vmem>>, %arg7: memref<1x512xf32, #tpu.memory_space<vmem>>, %arg8: memref<512x128xf32, #tpu.memory_space<vmem>>, %arg9: memref<1x128xf32, #tpu.memory_space<vmem>>, %arg10: memref<1x1x128xf32, #tpu.memory_space<vmem>>) attributes {dimension_semantics = [#tpu.dimension_semantics<parallel>], iteration_bounds = array<i64: 2>, scalar_prefetch = 0 : i64, scratch_operands = 0 : i64, tpu.core_type = #tpu.core_type<tc>, window_params = [{transform_indices = @transform_0, window_bounds = array<i64: 1, 8, 128>}, {transform_indices = @transform_1, window_bounds = array<i64: 1, 1, 8>}, {pipeline_mode = #tpu.pipeline_mode<synchronous>, transform_indices = @transform_2, window_bounds = array<i64: 1, 128>}, {pipeline_mode = #tpu.pipeline_mode<synchronous>, transform_indices = @transform_3, window_bounds = array<i64: 1, 128>}, {pipeline_mode = #tpu.pipeline_mode<synchronous>, transform_indices = @transform_4, window_bounds = array<i64: 1, 128>}, {pipeline_mode = #tpu.pipeline_mode<synchronous>, transform_indices = @transform_5, window_bounds = array<i64: 128, 512>}, {pipeline_mode = #tpu.pipeline_mode<synchronous>, transform_indices = @transform_6, window_bounds = array<i64: 1, 512>}, {pipeline_mode = #tpu.pipeline_mode<synchronous>, transform_indices = @transform_7, window_bounds = array<i64: 512, 128>}, {pipeline_mode = #tpu.pipeline_mode<synchronous>, transform_indices = @transform_8, window_bounds = array<i64: 1, 128>}, {transform_indices = @transform_9, window_bounds = array<i64: 1, 1, 128>}]} {
    %c0 = arith.constant 0 : index
    %c0_0 = arith.constant 0 : index
    %c0_1 = arith.constant 0 : index
    %0 = vector.load %arg1[%c0, %c0_0, %c0_1] : memref<1x8x128xf32, #tpu.memory_space<vmem>>, vector<1x8x128xf32>
    %1 = vector.shape_cast %0 : vector<1x8x128xf32> to vector<8x128xf32>
    %c0_2 = arith.constant 0 : index
    %c0_3 = arith.constant 0 : index
    %2 = vector.load %arg3[%c0_2, %c0_3] : memref<1x128xf32, #tpu.memory_space<vmem>>, vector<1x128xf32>
    %cst = arith.constant dense<0.000000e+00> : vector<1x8xf32>
    %3 = tpu.matmul %2, %1, %cst {dimension_numbers = #tpu.dot_dimension_numbers<[1], [1], [0], [0], [0, 0, 1, 0], [], []>} : vector<1x128xf32>, vector<8x128xf32>, vector<1x8xf32> -> vector<1x8xf32>
    %cst_4 = arith.constant 0.0883883461 : f32
    %4 = vector.broadcast %cst_4 : f32 to vector<1x8xf32>
    %5 = arith.mulf %3, %4 : vector<1x8xf32>
    %c0_5 = arith.constant 0 : index
    %c0_6 = arith.constant 0 : index
    %c0_7 = arith.constant 0 : index
    %6 = vector.load %arg2[%c0_5, %c0_6, %c0_7] : memref<1x1x8xi32, #tpu.memory_space<vmem>>, vector<1x1x8xi32>
    %7 = vector.shape_cast %6 : vector<1x1x8xi32> to vector<1x8xi32>
    %c0_i32 = arith.constant 0 : i32
    %8 = vector.broadcast %c0_i32 : i32 to vector<1x8xi32>
    %9 = arith.cmpi ne, %7, %8 : vector<1x8xi32>
    %cst_8 = arith.constant -1.000000e+30 : f32
    %10 = vector.broadcast %cst_8 : f32 to vector<1x8xf32>
    %11 = arith.select %9, %10, %5 : vector<1x8xi1>, vector<1x8xf32>
    %cst_9 = arith.constant dense<0xFF800000> : vector<1xf32>
    %12 = vector.multi_reduction <maximumf>, %11, %cst_9 [1] : vector<1x8xf32> to vector<1xf32>
    %13 = vector.shape_cast %12 : vector<1xf32> to vector<1x1xf32>
    %14 = vector.broadcast %13 : vector<1x1xf32> to vector<1x8xf32>
    %15 = arith.subf %11, %14 : vector<1x8xf32>
    %16 = math.exp %15 : vector<1x8xf32>
    %cst_10 = arith.constant dense<0.000000e+00> : vector<1xf32>
    %17 = vector.multi_reduction <add>, %16, %cst_10 [1] : vector<1x8xf32> to vector<1xf32>
    %18 = vector.shape_cast %17 : vector<1xf32> to vector<1x1xf32>
    %19 = tpu.reciprocal %18 {approx = true} : vector<1x1xf32> -> vector<1x1xf32>
    %20 = vector.broadcast %19 : vector<1x1xf32> to vector<1x8xf32>
    %21 = arith.mulf %16, %20 : vector<1x8xf32>
    %cst_11 = arith.constant dense<0.000000e+00> : vector<1x128xf32>
    %22 = tpu.matmul %21, %1, %cst_11 {dimension_numbers = #tpu.dot_dimension_numbers<[1], [0], [0], [1], [0, 0, 1, 1], [], []>} : vector<1x8xf32>, vector<8x128xf32>, vector<1x128xf32> -> vector<1x128xf32>
    %c0_12 = arith.constant 0 : index
    %c0_13 = arith.constant 0 : index
    %23 = vector.load %arg4[%c0_12, %c0_13] : memref<1x128xf32, #tpu.memory_space<vmem>>, vector<1x128xf32>
    %c0_14 = arith.constant 0 : index
    %c0_15 = arith.constant 0 : index
    %24 = vector.load %arg5[%c0_14, %c0_15] : memref<1x128xf32, #tpu.memory_space<vmem>>, vector<1x128xf32>
    %cst_16 = arith.constant dense<0.000000e+00> : vector<1xf32>
    %25 = vector.multi_reduction <add>, %22, %cst_16 [1] : vector<1x128xf32> to vector<1xf32>
    %26 = vector.shape_cast %25 : vector<1xf32> to vector<1x1xf32>
    %cst_17 = arith.constant 1.280000e+02 : f32
    %27 = vector.broadcast %cst_17 : f32 to vector<1x1xf32>
    %28 = arith.divf %26, %27 : vector<1x1xf32>
    %29 = vector.broadcast %28 : vector<1x1xf32> to vector<1x128xf32>
    %30 = arith.subf %22, %29 : vector<1x128xf32>
    %31 = arith.mulf %30, %30 : vector<1x128xf32>
    %cst_18 = arith.constant dense<0.000000e+00> : vector<1xf32>
    %32 = vector.multi_reduction <add>, %31, %cst_18 [1] : vector<1x128xf32> to vector<1xf32>
    %33 = vector.shape_cast %32 : vector<1xf32> to vector<1x1xf32>
    %cst_19 = arith.constant 1.280000e+02 : f32
    %34 = vector.broadcast %cst_19 : f32 to vector<1x1xf32>
    %35 = arith.divf %33, %34 : vector<1x1xf32>
    %cst_20 = arith.constant 9.99999974E-6 : f32
    %36 = vector.broadcast %cst_20 : f32 to vector<1x1xf32>
    %37 = arith.addf %35, %36 : vector<1x1xf32>
    %38 = math.rsqrt %37 : vector<1x1xf32>
    %39 = vector.broadcast %38 : vector<1x1xf32> to vector<1x128xf32>
    %40 = arith.mulf %30, %39 : vector<1x128xf32>
    %41 = arith.mulf %40, %23 : vector<1x128xf32>
    %42 = arith.addf %41, %24 : vector<1x128xf32>
    %c0_21 = arith.constant 0 : index
    %c0_22 = arith.constant 0 : index
    %43 = vector.load %arg6[%c0_21, %c0_22] : memref<128x512xf32, #tpu.memory_space<vmem>>, vector<128x512xf32>
    %cst_23 = arith.constant dense<0.000000e+00> : vector<1x512xf32>
    %44 = tpu.matmul %42, %43, %cst_23 {dimension_numbers = #tpu.dot_dimension_numbers<[1], [0], [0], [1], [0, 0, 1, 1], [], []>} : vector<1x128xf32>, vector<128x512xf32>, vector<1x512xf32> -> vector<1x512xf32>
    %c0_24 = arith.constant 0 : index
    %c0_25 = arith.constant 0 : index
    %45 = vector.load %arg7[%c0_24, %c0_25] : memref<1x512xf32, #tpu.memory_space<vmem>>, vector<1x512xf32>
    %46 = arith.addf %44, %45 : vector<1x512xf32>
    %cst_26 = arith.constant 5.000000e-01 : f32
    %47 = vector.broadcast %cst_26 : f32 to vector<1x512xf32>
    %48 = arith.mulf %47, %46 : vector<1x512xf32>
    %cst_27 = arith.constant 0.707106769 : f32
    %49 = vector.broadcast %cst_27 : f32 to vector<1x512xf32>
    %50 = arith.mulf %46, %49 : vector<1x512xf32>
    %51 = math.absf %50 : vector<1x512xf32>
    %cst_28 = arith.constant 0.327591091 : f32
    %52 = vector.broadcast %cst_28 : f32 to vector<1x512xf32>
    %53 = arith.mulf %52, %51 : vector<1x512xf32>
    %cst_29 = arith.constant 1.000000e+00 : f32
    %54 = vector.broadcast %cst_29 : f32 to vector<1x512xf32>
    %55 = arith.addf %54, %53 : vector<1x512xf32>
    %cst_30 = arith.constant 1.000000e+00 : f32
    %56 = vector.broadcast %cst_30 : f32 to vector<1x512xf32>
    %57 = arith.divf %56, %55 : vector<1x512xf32>
    %cst_31 = arith.constant 1.06140542 : f32
    %58 = vector.broadcast %cst_31 : f32 to vector<1x512xf32>
    %59 = arith.mulf %58, %57 : vector<1x512xf32>
    %cst_32 = arith.constant -1.45315206 : f32
    %60 = vector.broadcast %cst_32 : f32 to vector<1x512xf32>
    %61 = arith.addf %59, %60 : vector<1x512xf32>
    %62 = arith.mulf %61, %57 : vector<1x512xf32>
    %cst_33 = arith.constant 1.42141378 : f32
    %63 = vector.broadcast %cst_33 : f32 to vector<1x512xf32>
    %64 = arith.addf %62, %63 : vector<1x512xf32>
    %65 = arith.mulf %64, %57 : vector<1x512xf32>
    %cst_34 = arith.constant -0.284496725 : f32
    %66 = vector.broadcast %cst_34 : f32 to vector<1x512xf32>
    %67 = arith.addf %65, %66 : vector<1x512xf32>
    %68 = arith.mulf %67, %57 : vector<1x512xf32>
    %cst_35 = arith.constant 0.254829586 : f32
    %69 = vector.broadcast %cst_35 : f32 to vector<1x512xf32>
    %70 = arith.addf %68, %69 : vector<1x512xf32>
    %71 = arith.mulf %70, %57 : vector<1x512xf32>
    %cst_36 = arith.constant 0.000000e+00 : f32
    %72 = vector.broadcast %cst_36 : f32 to vector<1x512xf32>
    %73 = arith.subf %72, %51 : vector<1x512xf32>
    %74 = arith.mulf %73, %51 : vector<1x512xf32>
    %75 = math.exp %74 : vector<1x512xf32>
    %76 = arith.mulf %71, %75 : vector<1x512xf32>
    %cst_37 = arith.constant 1.000000e+00 : f32
    %77 = vector.broadcast %cst_37 : f32 to vector<1x512xf32>
    %78 = arith.subf %77, %76 : vector<1x512xf32>
    %cst_38 = arith.constant 0.000000e+00 : f32
    %79 = vector.broadcast %cst_38 : f32 to vector<1x512xf32>
    %80 = arith.cmpf olt, %50, %79 : vector<1x512xf32>
    %cst_39 = arith.constant 0.000000e+00 : f32
    %81 = vector.broadcast %cst_39 : f32 to vector<1x512xf32>
    %82 = arith.subf %81, %78 : vector<1x512xf32>
    %83 = arith.select %80, %82, %78 : vector<1x512xi1>, vector<1x512xf32>
    %cst_40 = arith.constant 1.000000e+00 : f32
    %84 = vector.broadcast %cst_40 : f32 to vector<1x512xf32>
    %85 = arith.addf %84, %83 : vector<1x512xf32>
    %86 = arith.mulf %48, %85 : vector<1x512xf32>
    %c0_41 = arith.constant 0 : index
    %c0_42 = arith.constant 0 : index
    %87 = vector.load %arg8[%c0_41, %c0_42] : memref<512x128xf32, #tpu.memory_space<vmem>>, vector<512x128xf32>
    %cst_43 = arith.constant dense<0.000000e+00> : vector<1x128xf32>
    %88 = tpu.matmul %86, %87, %cst_43 {dimension_numbers = #tpu.dot_dimension_numbers<[1], [0], [0], [1], [0, 0, 1, 1], [], []>} : vector<1x512xf32>, vector<512x128xf32>, vector<1x128xf32> -> vector<1x128xf32>
    %c0_44 = arith.constant 0 : index
    %c0_45 = arith.constant 0 : index
    %89 = vector.load %arg9[%c0_44, %c0_45] : memref<1x128xf32, #tpu.memory_space<vmem>>, vector<1x128xf32>
    %90 = arith.addf %88, %89 : vector<1x128xf32>
    %91 = arith.addf %42, %90 : vector<1x128xf32>
    %c0_46 = arith.constant 0 : index
    %c0_47 = arith.constant 0 : index
    %c0_48 = arith.constant 0 : index
    %92 = vector.load %arg10[%c0_46, %c0_47, %c0_48] : memref<1x1x128xf32, #tpu.memory_space<vmem>>, vector<1x1x128xf32>
    %93 = vector.shape_cast %92 : vector<1x1x128xf32> to vector<1x128xf32>
    %94 = vector.shape_cast %91 : vector<1x128xf32> to vector<1x1x128xf32>
    tpu.vector_store %arg10[%c0_46, %c0_47, %c0_48], %94 {strides = array<i32>} : memref<1x1x128xf32, #tpu.memory_space<vmem>>, vector<1x1x128xf32>,
    return
  }
  func.func @transform_0(%arg0: i32) -> (i32, i32, i32) {
    %c0_i32 = arith.constant 0 : i32
    %c0_i32_0 = arith.constant 0 : i32
    %c0_i32_1 = arith.constant 0 : i32
    return %arg0, %c0_i32, %c0_i32_0 : i32, i32, i32
  }
  func.func @transform_1(%arg0: i32) -> (i32, i32, i32) {
    %c0_i32 = arith.constant 0 : i32
    %c0_i32_0 = arith.constant 0 : i32
    %c0_i32_1 = arith.constant 0 : i32
    return %arg0, %c0_i32, %c0_i32_0 : i32, i32, i32
  }
  func.func @transform_2(%arg0: i32) -> (i32, i32) {
    %c0_i32 = arith.constant 0 : i32
    %c0_i32_0 = arith.constant 0 : i32
    %c0_i32_1 = arith.constant 0 : i32
    return %c0_i32, %c0_i32_0 : i32, i32
  }
  func.func @transform_3(%arg0: i32) -> (i32, i32) {
    %c0_i32 = arith.constant 0 : i32
    %c0_i32_0 = arith.constant 0 : i32
    %c0_i32_1 = arith.constant 0 : i32
    return %c0_i32, %c0_i32_0 : i32, i32
  }
  func.func @transform_4(%arg0: i32) -> (i32, i32) {
    %c0_i32 = arith.constant 0 : i32
    %c0_i32_0 = arith.constant 0 : i32
    %c0_i32_1 = arith.constant 0 : i32
    return %c0_i32, %c0_i32_0 : i32, i32
  }
  func.func @transform_5(%arg0: i32) -> (i32, i32) {
    %c0_i32 = arith.constant 0 : i32
    %c0_i32_0 = arith.constant 0 : i32
    %c0_i32_1 = arith.constant 0 : i32
    return %c0_i32, %c0_i32_0 : i32, i32
  }
  func.func @transform_6(%arg0: i32) -> (i32, i32) {
    %c0_i32 = arith.constant 0 : i32
    %c0_i32_0 = arith.constant 0 : i32
    %c0_i32_1 = arith.constant 0 : i32
    return %c0_i32, %c0_i32_0 : i32, i32
  }
  func.func @transform_7(%arg0: i32) -> (i32, i32) {
    %c0_i32 = arith.constant 0 : i32
    %c0_i32_0 = arith.constant 0 : i32
    %c0_i32_1 = arith.constant 0 : i32
    return %c0_i32, %c0_i32_0 : i32, i32
  }
  func.func @transform_8(%arg0: i32) -> (i32, i32) {
    %c0_i32 = arith.constant 0 : i32
    %c0_i32_0 = arith.constant 0 : i32
    %c0_i32_1 = arith.constant 0 : i32
    return %c0_i32, %c0_i32_0 : i32, i32
  }
  func.func @transform_9(%arg0: i32) -> (i32, i32, i32) {
    %c0_i32 = arith.constant 0 : i32
    %c0_i32_0 = arith.constant 0 : i32
    %c0_i32_1 = arith.constant 0 : i32
    return %arg0, %c0_i32, %c0_i32_0 : i32, i32, i32
  }
}

</mosaic_0001>

<llo_original>
// kernel: robust_text_cross_expert.15
$region0: #{robust_text_cross_expert.15}
  #allocation0 [shape = 'u32[]', space=smem, size = 0x4, offset = 0x4, fixed_abs, tag = 'smem constant byte address 0x4 - core index']
  #allocation1 [shape = 'u32[144,128]{1,0:T(1,128)}', space=vmem, size = 0x12000, scoped, tag = 'internal scratch']
  %s0 = inlined_call_operand.vmem [shape: f32[16,128], index: 0, kind: input, shape index: {}]
  %s1 = inlined_call_operand.vmem [shape: f32[1,128], index: 1, kind: input, shape index: {}]
  %s2 = inlined_call_operand.vmem [shape: f32[1,128], index: 2, kind: input, shape index: {}]
  %s3 = inlined_call_operand.vmem [shape: f32[128,512], index: 3, kind: input, shape index: {}]
  %s4 = inlined_call_operand.vmem [shape: f32[1,512], index: 4, kind: input, shape index: {}]
  %s5 = inlined_call_operand.hbm [shape: f32[512,128], index: 5, kind: input, shape index: {}]
  %s6 = inlined_call_operand.vmem [shape: f32[1,128], index: 6, kind: input, shape index: {}]
  %s7 = inlined_call_operand.vmem [shape: f32[16,128], index: 7, kind: output, shape index: {}]
  %s8 = sld [smem:[#allocation0]]
  $region65: #{robust_text_cross_expert.15} parent=0
    _
  %s10 = ssub.s32 1, %s8
  %s11 = scalar_select 0, %s10, %s8
  $region1: #{robust_text_cross_expert.15} parent=0
    #allocation2 [shape = 'u8[262144]{0}', space=vmem, size = 0x40000, scoped, tag = 'input window, operand 5, single buffered']
    #allocation3 [shape = 's32[2]{0}', space=sflag, size = 0x8, scoped, tag = 'scoped memory for robust_text_cross_expert.15']
    %12 = vsyncpa [#allocation3], 0
    loop: start=0, step=1, limit=4
    $region2: #{robust_text_cross_expert.15} parent=1 // loop_pre_header
      _
    $region3: #{robust_text_cross_expert.15} parent=1 // loop_header
      %s14 = sphi 0, %s18
      %p15 = scmp.ge.s32.totalorder %s14, 4
      %s24 = sphi 0, %s26
      %s27 = sphi 0, %s24
      %s28 = sphi 0, %s27
      %s44 = sphi 0, %s28
      %s48 = sphi 0, %s48
      %s50 = sphi 0, %s48
      %s51 = sphi 0, %s50
      %s65 = sphi 0, %s51
      %s69 = sphi 0, %s69
      %s71 = sphi 0, %s69
      %s72 = sphi 0, %s71
      %s86 = sphi 0, %s72
      %s90 = sphi 0, %s90
      %s92 = sphi 0, %s90
      %s93 = sphi 0, %s92
      %s107 = sphi 0, %s93
      %s111 = sphi 0, %s111
      %s113 = sphi 0, %s111
      %s114 = sphi 0, %s113
      %s128 = sphi 0, %s114
      %s132 = sphi 0, %s132
      %s134 = sphi 0, %s132
      %s135 = sphi 0, %s134
      %s149 = sphi 0, %s135
      %s153 = sphi 0, %s153
      %s155 = sphi 0, %s153
      %s156 = sphi 0, %s155
      %s170 = sphi 0, %s156
      %s176 = sphi 0, %s178
      %s179 = sphi 0, %s176
      %s180 = sphi 0, %s179
      %s196 = sphi 0, %s180
    $region4: #{robust_text_cross_expert.15} parent=1 // loop_header_branch
      %17 = sbr.rel (%p15) target = $region8
    $region5: #{robust_text_cross_expert.15} parent=1 // loop_body
      %s19 = ssub.s32 %s14, 1
      %s20 = ssub.s32 %s14, 2
      %s21 = sadd.s32 %s14, 1
      %s22 = ssub.s32 %s14, %s21
      %p23 = scmp.eq.s32.totalorder %s22, 0
      %s25 = sadd.s32 %s24, 1
      %s26 = scalar_select %p23, %s24, %s25
      %p29 = pneg %p23
      %p30 = scmp.eq.s32.totalorder %s14, 1
      %p31 = por %p29, %p30
      %p32 = scmp.ne.s32.totalorder %s24, %s27
      %p33 = scmp.eq.s32.totalorder %s14, 0
      %p34 = por %p32, %p33
      %p35 = scmp.ne.s32.totalorder %s24, %s27
      %p36 = scmp.eq.s32.totalorder %s19, 1
      %p37 = por %p35, %p36
      %p38 = scmp.ne.s32.totalorder %s27, %s28
      %p39 = scmp.eq.s32.totalorder %s19, 0
      %p40 = por %p38, %p39
      %p41 = scmp.ne.s32.totalorder %s27, %s28
      %p42 = scmp.eq.s32.totalorder %s20, 1
      %p43 = por %p41, %p42
      %p45 = scmp.ne.s32.totalorder %s28, %s44
      %p46 = scmp.eq.s32.totalorder %s20, 0
      %p47 = por %p45, %p46
      %s49 = sadd.s32 %s48, 1
      %p52 = scmp.eq.s32.totalorder %s14, 1
      %p53 = scmp.ne.s32.totalorder %s48, %s50
      %p54 = scmp.eq.s32.totalorder %s14, 0
      %p55 = por %p53, %p54
      %p56 = scmp.ne.s32.totalorder %s48, %s50
      %p57 = scmp.eq.s32.totalorder %s19, 1
      %p58 = por %p56, %p57
      %p59 = scmp.ne.s32.totalorder %s50, %s51
      %p60 = scmp.eq.s32.totalorder %s19, 0
      %p61 = por %p59, %p60
      %p62 = scmp.ne.s32.totalorder %s50, %s51
      %p63 = scmp.eq.s32.totalorder %s20, 1
      %p64 = por %p62, %p63
      %p66 = scmp.ne.s32.totalorder %s51, %s65
      %p67 = scmp.eq.s32.totalorder %s20, 0
      %p68 = por %p66, %p67
      %s70 = sadd.s32 %s69, 1
      %p73 = scmp.eq.s32.totalorder %s14, 1
      %p74 = scmp.ne.s32.totalorder %s69, %s71
      %p75 = scmp.eq.s32.totalorder %s14, 0
      %p76 = por %p74, %p75
      %p77 = scmp.ne.s32.totalorder %s69, %s71
      %p78 = scmp.eq.s32.totalorder %s19, 1
      %p79 = por %p77, %p78
      %p80 = scmp.ne.s32.totalorder %s71, %s72
      %p81 = scmp.eq.s32.totalorder %s19, 0
      %p82 = por %p80, %p81
      %p83 = scmp.ne.s32.totalorder %s71, %s72
      %p84 = scmp.eq.s32.totalorder %s20, 1
      %p85 = por %p83, %p84
      %p87 = scmp.ne.s32.totalorder %s72, %s86
      %p88 = scmp.eq.s32.totalorder %s20, 0
      %p89 = por %p87, %p88
      %s91 = sadd.s32 %s90, 1
      %p94 = scmp.eq.s32.totalorder %s14, 1
      %p95 = scmp.ne.s32.totalorder %s90, %s92
      %p96 = scmp.eq.s32.totalorder %s14, 0
      %p97 = por %p95, %p96
      %p98 = scmp.ne.s32.totalorder %s90, %s92
      %p99 = scmp.eq.s32.totalorder %s19, 1
      %p100 = por %p98, %p99
      %p101 = scmp.ne.s32.totalorder %s92, %s93
      %p102 = scmp.eq.s32.totalorder %s19, 0
      %p103 = por %p101, %p102
      %p104 = scmp.ne.s32.totalorder %s92, %s93
      %p105 = scmp.eq.s32.totalorder %s20, 1
      %p106 = por %p104, %p105
      %p108 = scmp.ne.s32.totalorder %s93, %s107
      %p109 = scmp.eq.s32.totalorder %s20, 0
      %p110 = por %p108, %p109
      %s112 = sadd.s32 %s111, 1
      %p115 = scmp.eq.s32.totalorder %s14, 1
      %p116 = scmp.ne.s32.totalorder %s111, %s113
      %p117 = scmp.eq.s32.totalorder %s14, 0
      %p118 = por %p116, %p117
      %p119 = scmp.ne.s32.totalorder %s111, %s113
      %p120 = scmp.eq.s32.totalorder %s19, 1
      %p121 = por %p119, %p120
      %p122 = scmp.ne.s32.totalorder %s113, %s114
      %p123 = scmp.eq.s32.totalorder %s19, 0
      %p124 = por %p122, %p123
      %p125 = scmp.ne.s32.totalorder %s113, %s114
      %p126 = scmp.eq.s32.totalorder %s20, 1
      %p127 = por %p125, %p126
      %p129 = scmp.ne.s32.totalorder %s114, %s128
      %p130 = scmp.eq.s32.totalorder %s20, 0
      %p131 = por %p129, %p130
      %s133 = sadd.s32 %s132, 1
      %p136 = scmp.eq.s32.totalorder %s14, 1
      %p137 = scmp.ne.s32.totalorder %s132, %s134
      %p138 = scmp.eq.s32.totalorder %s14, 0
      %p139 = por %p137, %p138
      %p140 = scmp.ne.s32.totalorder %s132, %s134
      %p141 = scmp.eq.s32.totalorder %s19, 1
      %p142 = por %p140, %p141
      %p143 = scmp.ne.s32.totalorder %s134, %s135
      %p144 = scmp.eq.s32.totalorder %s19, 0
      %p145 = por %p143, %p144
      %p146 = scmp.ne.s32.totalorder %s134, %s135
      %p147 = scmp.eq.s32.totalorder %s20, 1
      %p148 = por %p146, %p147
      %p150 = scmp.ne.s32.totalorder %s135, %s149
      %p151 = scmp.eq.s32.totalorder %s20, 0
      %p152 = por %p150, %p151
      %s154 = sadd.s32 %s153, 1
      %p157 = scmp.eq.s32.totalorder %s14, 1
      %p158 = scmp.ne.s32.totalorder %s153, %s155
      %p159 = scmp.eq.s32.totalorder %s14, 0
      %p160 = por %p158, %p159
      %p161 = scmp.ne.s32.totalorder %s153, %s155
      %p162 = scmp.eq.s32.totalorder %s19, 1
      %p163 = por %p161, %p162
      %p164 = scmp.ne.s32.totalorder %s155, %s156
      %p165 = scmp.eq.s32.totalorder %s19, 0
      %p166 = por %p164, %p165
      %p167 = scmp.ne.s32.totalorder %s155, %s156
      %p168 = scmp.eq.s32.totalorder %s20, 1
      %p169 = por %p167, %p168
      %p171 = scmp.ne.s32.totalorder %s156, %s170
      %p172 = scmp.eq.s32.totalorder %s20, 0
      %p173 = por %p171, %p172
      %s174 = ssub.s32 %s14, %s21
      %p175 = scmp.eq.s32.totalorder %s174, 0
      %s177 = sadd.s32 %s176, 1
      %s178 = scalar_select %p175, %s176, %s177
      %p181 = pneg %p175
      %p182 = scmp.eq.s32.totalorder %s14, 1
      %p183 = por %p181, %p182
      %p184 = scmp.ne.s32.totalorder %s176, %s179
      %p185 = scmp.eq.s32.totalorder %s14, 0
      %p186 = por %p184, %p185
      %p187 = scmp.ne.s32.totalorder %s176, %s179
      %p188 = scmp.eq.s32.totalorder %s19, 1
      %p189 = por %p187, %p188
      %p190 = scmp.ne.s32.totalorder %s179, %s180
      %p191 = scmp.eq.s32.totalorder %s19, 0
      %p192 = por %p190, %p191
      %p193 = scmp.ne.s32.totalorder %s179, %s180
      %p194 = scmp.eq.s32.totalorder %s20, 1
      %p195 = por %p193, %p194
      %p197 = scmp.ne.s32.totalorder %s180, %s196
      %p198 = scmp.eq.s32.totalorder %s20, 0
      %p199 = por %p197, %p198
      %p200 = scmp.le.s32.totalorder 1, %s14
      %p201 = scmp.lt.s32.totalorder %s14, 3
      %p202 = pnand %p200, %p201
      %p203 = pneg %p202
      // Predicated region
      $region9: #{robust_text_cross_expert.15} parent=5 // pred_check
        _
      $region10: #{robust_text_cross_expert.15} parent=5 // pred_check_branch
        %205 = sbr.rel (%p202) target = $region12
      $region11: #{robust_text_cross_expert.15} parent=5 // pred_region
        %s206 = ssub.s32 %s14, 1
        // Predicated region
        $region13: #{robust_text_cross_expert.15} parent=11 // pred_check
          %p207 = pneg %p61
        $region14: #{robust_text_cross_expert.15} parent=11 // pred_check_branch
          %209 = sbr.rel (%p207) target = $region16
        $region15: #{robust_text_cross_expert.15} parent=11 // pred_region
          _
        $region16: #{robust_text_cross_expert.15} parent=11 // pred_fallthru
          _
        // Predicated region
        $region17: #{robust_text_cross_expert.15} parent=11 // pred_check
          %p210 = pneg %p82
        $region18: #{robust_text_cross_expert.15} parent=11 // pred_check_branch
          %212 = sbr.rel (%p210) target = $region20
        $region19: #{robust_text_cross_expert.15} parent=11 // pred_region
          _
        $region20: #{robust_text_cross_expert.15} parent=11 // pred_fallthru
          _
        // Predicated region
        $region21: #{robust_text_cross_expert.15} parent=11 // pred_check
          %p213 = pneg %p103
        $region22: #{robust_text_cross_expert.15} parent=11 // pred_check_branch
          %215 = sbr.rel (%p213) target = $region24
        $region23: #{robust_text_cross_expert.15} parent=11 // pred_region
          _
        $region24: #{robust_text_cross_expert.15} parent=11 // pred_fallthru
          _
        // Predicated region
        $region25: #{robust_text_cross_expert.15} parent=11 // pred_check
          %p216 = pneg %p124
        $region26: #{robust_text_cross_expert.15} parent=11 // pred_check_branch
          %218 = sbr.rel (%p216) target = $region28
        $region27: #{robust_text_cross_expert.15} parent=11 // pred_region
          _
        $region28: #{robust_text_cross_expert.15} parent=11 // pred_fallthru
          _
        // Predicated region
        $region29: #{robust_text_cross_expert.15} parent=11 // pred_check
          %p219 = pneg %p145
        $region30: #{robust_text_cross_expert.15} parent=11 // pred_check_branch
          %221 = sbr.rel (%p219) target = $region32
        $region31: #{robust_text_cross_expert.15} parent=11 // pred_region
          %s223 = ssub.s32 8192, 8192
          %224 = vsyncadd [#allocation3], %s223
          %s225 = sshll.u32 [#allocation2], 4
          %s226 = int_to_ptr.vmem [resolvable:$true] %s225
          %231 = dma.hbm_to_vmem [thread:$0]  %s5, 8192, %s226, [#allocation3], 128, 128, 8
        $region32: #{robust_text_cross_expert.15} parent=11 // pred_fallthru
          _
        // Predicated region
        $region33: #{robust_text_cross_expert.15} parent=11 // pred_check
          %p232 = pneg %p166
        $region34: #{robust_text_cross_expert.15} parent=11 // pred_check_branch
          %234 = sbr.rel (%p232) target = $region36
        $region35: #{robust_text_cross_expert.15} parent=11 // pred_region
          _
        $region36: #{robust_text_cross_expert.15} parent=11 // pred_fallthru
          _
      $region12: #{robust_text_cross_expert.15} parent=5 // pred_fallthru
        _
      %p235 = scmp.lt.s32.totalorder %s14, 2
      // Predicated region
      $region37: #{robust_text_cross_expert.15} parent=5 // pred_check
        %p236 = pneg %p235
      $region38: #{robust_text_cross_expert.15} parent=5 // pred_check_branch
        %238 = sbr.rel (%p236) target = $region40
      $region39: #{robust_text_cross_expert.15} parent=5 // pred_region
        // Predicated region
        $region41: #{robust_text_cross_expert.15} parent=39 // pred_check
          %p239 = pneg %p34
        $region42: #{robust_text_cross_expert.15} parent=39 // pred_check_branch
          %241 = sbr.rel (%p239) target = $region44
        $region43: #{robust_text_cross_expert.15} parent=39 // pred_region
          %p242 = scmp.lt.s32.totalorder %s14, 1
          %s243 = scalar_select %p242, %s14, 1
          %s244 = smul.addr %s243, 8
          %s245 = scalar_lea.vmem %s0, %s244
        $region44: #{robust_text_cross_expert.15} parent=39 // pred_fallthru
          _
      $region40: #{robust_text_cross_expert.15} parent=5 // pred_fallthru
        _
      %p246 = scmp.le.s32.totalorder 1, %s14
      %p247 = scmp.lt.s32.totalorder %s14, 3
      %p248 = pnand %p246, %p247
      %p249 = pneg %p248
      // Predicated region
      $region45: #{robust_text_cross_expert.15} parent=5 // pred_check
        _
      $region46: #{robust_text_cross_expert.15} parent=5 // pred_check_branch
        %251 = sbr.rel (%p248) target = $region48
      $region47: #{robust_text_cross_expert.15} parent=5 // pred_region
        %s252 = ssub.s32 %s14, 1
        // Predicated region
        $region49: #{robust_text_cross_expert.15} parent=47 // pred_check
          %p253 = pneg %p145
        $region50: #{robust_text_cross_expert.15} parent=47 // pred_check_branch
          %255 = sbr.rel (%p253) target = $region52
        $region51: #{robust_text_cross_expert.15} parent=47 // pred_region
          %256 = dma.done [#allocation3], 8192
        $region52: #{robust_text_cross_expert.15} parent=47 // pred_fallthru
          _
        %p257 = scmp.lt.s32.totalorder %s19, 1
        %s258 = scalar_select %p257, %s19, 1
        %s259 = smul.addr %s258, 8
        %s260 = scalar_lea.vmem %s0, %s259
        %p261 = pneg %p40
        %p262 = pneg %p37
        %p263 = pneg %p61
        %p264 = pneg %p58
        %p265 = pneg %p82
        %p266 = pneg %p79
        %p267 = pneg %p103
        %p268 = pneg %p100
        %p269 = pneg %p124
        %p270 = pneg %p121
        %p271 = pneg %p145
        %p272 = pneg %p142
        %p273 = pneg %p166
        %p274 = pneg %p163
        %p275 = pneg %p192
        %p276 = pneg %p189
        %p277 = scmp.lt.s32.totalorder %s19, 1
        %s278 = scalar_select %p277, %s19, 1
        %s279 = smul.addr %s278, 8
        %s280 = scalar_lea.vmem %s7, %s279
        %p281 = scmp.lt.s32.totalorder %s19, 1
        %s282 = scalar_select %p281, %s19, 1
        %s283 = smul.addr %s282, 8
        %s284 = scalar_lea.vmem %s0, %s283
        %p285 = scmp.lt.s32.totalorder %s19, 1
        %s286 = scalar_select %p285, %s19, 1
        %s287 = smul.addr %s286, 8
        %s288 = scalar_lea.vmem %s7, %s287
        %v289 = vld [vmem:[%s284] sm:$0xff]
        %v290 = vld [vmem:[%s1] sm:$0x1]
        %v291 = vld [vmem:[%s2] sm:$0x1]
        %292 = vadd.xlane.f32.xlu0 %v289
        %v293 = vpop.xlane.xlu0 %292
        %v294 = vrcp.pop 128.0
        %v295 = vmul.f32 %v293, %v294
        %v296 = vsub.f32 %v289, %v295
        %v297 = vmul.f32 %v296, %v296
        %298 = vadd.xlane.f32.xlu0 %v297
        %v299 = vpop.xlane.xlu0 %298
        %v300 = vmul.f32 %v299, %v294
        %v301 = vadd.f32 %v300, 1e-05
        %v302 = vrsqrt.pop %v301
        %v303 = vmul.f32 %v296, %v302
        %v305 = vlaneseq
        %v306 = vshrl.u32 %v305, 7
        %v307 = vsub.s32 0, %v306
        %v308 = vrot.slane %v290, %v307
        %v310 = vmul.f32 %v303, %v308
        %v312 = vlaneseq
        %v313 = vshrl.u32 %v312, 7
        %v314 = vsub.s32 0, %v313
        %v315 = vrot.slane %v291, %v314
        %v317 = vadd.f32 %v310, %v315
        %v318 = vld [vmem:[%s3] sm:$0xff]
        %v319 = vld [vmem:[%s3 + $0x8] sm:$0xff]
        %v320 = vld [vmem:[%s3 + $0x10] sm:$0xff]
        %v321 = vld [vmem:[%s3 + $0x18] sm:$0xff]
        %v322 = vld [vmem:[%s3 + $0x20] sm:$0xff]
        %v323 = vld [vmem:[%s3 + $0x28] sm:$0xff]
        %v324 = vld [vmem:[%s3 + $0x30] sm:$0xff]
        %v325 = vld [vmem:[%s3 + $0x38] sm:$0xff]
        %v326 = vld [vmem:[%s3 + $0x40] sm:$0xff]
        %v327 = vld [vmem:[%s3 + $0x48] sm:$0xff]
        %v328 = vld [vmem:[%s3 + $0x50] sm:$0xff]
        %v329 = vld [vmem:[%s3 + $0x58] sm:$0xff]
        %v330 = vld [vmem:[%s3 + $0x60] sm:$0xff]
        %v331 = vld [vmem:[%s3 + $0x68] sm:$0xff]
        %v332 = vld [vmem:[%s3 + $0x70] sm:$0xff]
        %v333 = vld [vmem:[%s3 + $0x78] sm:$0xff]
        %v334 = vld [vmem:[%s3 + $0x80] sm:$0xff]
        %v335 = vld [vmem:[%s3 + $0x88] sm:$0xff]
        %v336 = vld [vmem:[%s3 + $0x90] sm:$0xff]
        %v337 = vld [vmem:[%s3 + $0x98] sm:$0xff]
        %v338 = vld [vmem:[%s3 + $0xa0] sm:$0xff]
        %v339 = vld [vmem:[%s3 + $0xa8] sm:$0xff]
        %v340 = vld [vmem:[%s3 + $0xb0] sm:$0xff]
        %v341 = vld [vmem:[%s3 + $0xb8] sm:$0xff]
        %v342 = vld [vmem:[%s3 + $0xc0] sm:$0xff]
        %v343 = vld [vmem:[%s3 + $0xc8] sm:$0xff]
        %v344 = vld [vmem:[%s3 + $0xd0] sm:$0xff]
        %v345 = vld [vmem:[%s3 + $0xd8] sm:$0xff]
        %v346 = vld [vmem:[%s3 + $0xe0] sm:$0xff]
        %v347 = vld [vmem:[%s3 + $0xe8] sm:$0xff]
        %v348 = vld [vmem:[%s3 + $0xf0] sm:$0xff]
        %v349 = vld [vmem:[%s3 + $0xf8] sm:$0xff]
        %v350 = vld [vmem:[%s3 + $0x100] sm:$0xff]
        %v351 = vld [vmem:[%s3 + $0x108] sm:$0xff]
        %v352 = vld [vmem:[%s3 + $0x110] sm:$0xff]
        %v353 = vld [vmem:[%s3 + $0x118] sm:$0xff]
        %v354 = vld [vmem:[%s3 + $0x120] sm:$0xff]
        %v355 = vld [vmem:[%s3 + $0x128] sm:$0xff]
        %v356 = vld [vmem:[%s3 + $0x130] sm:$0xff]
        %v357 = vld [vmem:[%s3 + $0x138] sm:$0xff]
        %v358 = vld [vmem:[%s3 + $0x140] sm:$0xff]
        %v359 = vld [vmem:[%s3 + $0x148] sm:$0xff]
        %v360 = vld [vmem:[%s3 + $0x150] sm:$0xff]
        %v361 = vld [vmem:[%s3 + $0x158] sm:$0xff]
        %v362 = vld [vmem:[%s3 + $0x160] sm:$0xff]
        %v363 = vld [vmem:[%s3 + $0x168] sm:$0xff]
        %v364 = vld [vmem:[%s3 + $0x170] sm:$0xff]
        %v365 = vld [vmem:[%s3 + $0x178] sm:$0xff]
        %v366 = vld [vmem:[%s3 + $0x180] sm:$0xff]
        %v367 = vld [vmem:[%s3 + $0x188] sm:$0xff]
        %v368 = vld [vmem:[%s3 + $0x190] sm:$0xff]
        %v369 = vld [vmem:[%s3 + $0x198] sm:$0xff]
        %v370 = vld [vmem:[%s3 + $0x1a0] sm:$0xff]
        %v371 = vld [vmem:[%s3 + $0x1a8] sm:$0xff]
        %v372 = vld [vmem:[%s3 + $0x1b0] sm:$0xff]
        %v373 = vld [vmem:[%s3 + $0x1b8] sm:$0xff]
        %v374 = vld [vmem:[%s3 + $0x1c0] sm:$0xff]
        %v375 = vld [vmem:[%s3 + $0x1c8] sm:$0xff]
        %v376 = vld [vmem:[%s3 + $0x1d0] sm:$0xff]
        %v377 = vld [vmem:[%s3 + $0x1d8] sm:$0xff]
        %v378 = vld [vmem:[%s3 + $0x1e0] sm:$0xff]
        %v379 = vld [vmem:[%s3 + $0x1e8] sm:$0xff]
        %v380 = vld [vmem:[%s3 + $0x1f0] sm:$0xff]
        %v381 = vld [vmem:[%s3 + $0x1f8] sm:$0xff]
        %v382 = vld [vmem:[%s4] sm:$0xf]
        %v384 = vlaneseq
        %v385 = vshrl.u32 %v384, 7
        %v386 = vsub.s32 0, %v385
        %v387 = vrot.slane %v382, %v386
        %v388 = vlaneseq
        %v389 = vshrl.u32 %v388, 7
        %v390 = vsub.s32 1, %v389
        %v391 = vrot.slane %v382, %v390
        %v392 = vlaneseq
        %v393 = vshrl.u32 %v392, 7
        %v394 = vsub.s32 2, %v393
        %v395 = vrot.slane %v382, %v394
        %v396 = vlaneseq
        %v397 = vshrl.u32 %v396, 7
        %v398 = vsub.s32 3, %v397
        %v399 = vrot.slane %v382, %v398
        %404 = vmatprep.subr.mxu0 %v319
        %405 = vmatpush1.msra.mxu0 %v318
        %406 = vmatprep.subr.mxu0 %v323
        %407 = vmatpush1.msra.mxu0 %v322
        %408 = vmatprep.subr.mxu0 %v327
        %409 = vmatpush1.msra.mxu0 %v326
        %410 = vmatprep.subr.mxu0 %v331
        %411 = vmatpush1.msra.mxu0 %v330
        %412 = vmatprep.subr.mxu0 %v335
        %413 = vmatpush1.msra.mxu0 %v334
        %414 = vmatprep.subr.mxu0 %v339
        %415 = vmatpush1.msra.mxu0 %v338
        %416 = vmatprep.subr.mxu0 %v343
        %417 = vmatpush1.msra.mxu0 %v342
        %418 = vmatprep.subr.mxu0 %v347
        %419 = vmatpush1.msra.mxu0 %v346
        %420 = vmatprep.subr.mxu0 %v351
        %421 = vmatpush1.msra.mxu0 %v350
        %422 = vmatprep.subr.mxu0 %v355
        %423 = vmatpush1.msra.mxu0 %v354
        %424 = vmatprep.subr.mxu0 %v359
        %425 = vmatpush1.msra.mxu0 %v358
        %426 = vmatprep.subr.mxu0 %v363
        %427 = vmatpush1.msra.mxu0 %v362
        %428 = vmatprep.subr.mxu0 %v367
        %429 = vmatpush1.msra.mxu0 %v366
        %430 = vmatprep.subr.mxu0 %v371
        %431 = vmatpush1.msra.mxu0 %v370
        %432 = vmatprep.subr.mxu0 %v375
        %433 = vmatpush1.msra.mxu0 %v374
        %434 = vmatprep.subr.mxu0 %v379
        %435 = vmatpush1.msra.mxu0 %v378
        %436 = vmatprep.subr.mxu0 0.0
        %437 = vmatpush1.msra.mxu0 0.0
        %438 = vmatprep.subr.mxu0 0.0
        %439 = vmatpush1.msra.mxu0 0.0
        %440 = vmatprep.subr.mxu0 0.0
        %441 = vmatpush1.msra.mxu0 0.0
        %442 = vmatprep.subr.mxu0 0.0
        %443 = vmatpush1.msra.mxu0 0.0
        %444 = vmatprep.subr.mxu0 0.0
        %445 = vmatpush1.msra.mxu0 0.0
        %446 = vmatprep.subr.mxu0 0.0
        %447 = vmatpush1.msra.mxu0 0.0
        %448 = vmatprep.subr.mxu0 0.0
        %449 = vmatpush1.msra.mxu0 0.0
        %450 = vmatprep.subr.mxu0 0.0
        %451 = vmatpush1.msra.mxu0 0.0
        %452 = vmatprep.subr.mxu0 0.0
        %453 = vmatpush1.msra.mxu0 0.0
        %454 = vmatprep.subr.mxu0 0.0
        %455 = vmatpush1.msra.mxu0 0.0
        %456 = vmatprep.subr.mxu0 0.0
        %457 = vmatpush1.msra.mxu0 0.0
        %458 = vmatprep.subr.mxu0 0.0
        %459 = vmatpush1.msra.mxu0 0.0
        %460 = vmatprep.subr.mxu0 0.0
        %461 = vmatpush1.msra.mxu0 0.0
        %462 = vmatprep.subr.mxu0 0.0
        %463 = vmatpush1.msra.mxu0 0.0
        %464 = vmatprep.subr.mxu0 0.0
        %465 = vmatpush1.msra.mxu0 0.0
        %466 = vmatprep.subr.mxu0 0.0
        %467 = vmatpush1.msra.mxu0 0.0
        %468 = vmatprep.mubr.f32.mxu0 0.0
        %469 = vmatmul.mubr.f32.gmra.mrb[0].mxu0 %v317
        %v470 = vpop.f32.mrb[0].mxu0
        %v471 = vadd.f32 %v387, %v470
        %v472 = vpop.f32.mrb[0].mxu0
        %v473 = vadd.f32 %v391, %v472
        %474 = vdwg.mxu0
        %475 = vmatprep.subr.mxu0 %v321
        %476 = vmatpush1.msra.mxu0 %v320
        %477 = vmatprep.subr.mxu0 %v325
        %478 = vmatpush1.msra.mxu0 %v324
        %479 = vmatprep.subr.mxu0 %v329
        %480 = vmatpush1.msra.mxu0 %v328
        %481 = vmatprep.subr.mxu0 %v333
        %482 = vmatpush1.msra.mxu0 %v332
        %483 = vmatprep.subr.mxu0 %v337
        %484 = vmatpush1.msra.mxu0 %v336
        %485 = vmatprep.subr.mxu0 %v341
        %486 = vmatpush1.msra.mxu0 %v340
        %487 = vmatprep.subr.mxu0 %v345
        %488 = vmatpush1.msra.mxu0 %v344
        %489 = vmatprep.subr.mxu0 %v349
        %490 = vmatpush1.msra.mxu0 %v348
        %491 = vmatprep.subr.mxu0 %v353
        %492 = vmatpush1.msra.mxu0 %v352
        %493 = vmatprep.subr.mxu0 %v357
        %494 = vmatpush1.msra.mxu0 %v356
        %495 = vmatprep.subr.mxu0 %v361
        %496 = vmatpush1.msra.mxu0 %v360
        %497 = vmatprep.subr.mxu0 %v365
        %498 = vmatpush1.msra.mxu0 %v364
        %499 = vmatprep.subr.mxu0 %v369
        %500 = vmatpush1.msra.mxu0 %v368
        %501 = vmatprep.subr.mxu0 %v373
        %502 = vmatpush1.msra.mxu0 %v372
        %503 = vmatprep.subr.mxu0 %v377
        %504 = vmatpush1.msra.mxu0 %v376
        %505 = vmatprep.subr.mxu0 %v381
        %506 = vmatpush1.msra.mxu0 %v380
        %507 = vmatprep.subr.mxu0 0.0
        %508 = vmatpush1.msra.mxu0 0.0
        %509 = vmatprep.subr.mxu0 0.0
        %510 = vmatpush1.msra.mxu0 0.0
        %511 = vmatprep.subr.mxu0 0.0
        %512 = vmatpush1.msra.mxu0 0.0
        %513 = vmatprep.subr.mxu0 0.0
        %514 = vmatpush1.msra.mxu0 0.0
        %515 = vmatprep.subr.mxu0 0.0
        %516 = vmatpush1.msra.mxu0 0.0
        %517 = vmatprep.subr.mxu0 0.0
        %518 = vmatpush1.msra.mxu0 0.0
        %519 = vmatprep.subr.mxu0 0.0
        %520 = vmatpush1.msra.mxu0 0.0
        %521 = vmatprep.subr.mxu0 0.0
        %522 = vmatpush1.msra.mxu0 0.0
        %523 = vmatprep.subr.mxu0 0.0
        %524 = vmatpush1.msra.mxu0 0.0
        %525 = vmatprep.subr.mxu0 0.0
        %526 = vmatpush1.msra.mxu0 0.0
        %527 = vmatprep.subr.mxu0 0.0
        %528 = vmatpush1.msra.mxu0 0.0
        %529 = vmatprep.subr.mxu0 0.0
        %530 = vmatpush1.msra.mxu0 0.0
        %531 = vmatprep.subr.mxu0 0.0
        %532 = vmatpush1.msra.mxu0 0.0
        %533 = vmatprep.subr.mxu0 0.0
        %534 = vmatpush1.msra.mxu0 0.0
        %535 = vmatprep.subr.mxu0 0.0
        %536 = vmatpush1.msra.mxu0 0.0
        %537 = vmatprep.subr.mxu0 0.0
        %538 = vmatpush1.msra.mxu0 0.0
        %539 = vmatprep.mubr.f32.mxu0 0.0
        %540 = vmatmul.mubr.f32.gmra.mrb[0].mxu0 %v317
        %v541 = vpop.f32.mrb[0].mxu0
        %v542 = vadd.f32 %v395, %v541
        %v543 = vpop.f32.mrb[0].mxu0
        %v544 = vadd.f32 %v399, %v543
        %545 = vdwg.mxu0
        %v546 = vmax.f32 %v471, 0.0
        %v547 = vmax.f32 %v473, 0.0
        %v548 = vmax.f32 %v542, 0.0
        %v549 = vmax.f32 %v544, 0.0
        %v550 = vld [vmem:[#allocation2] sm:$0xff]
        %v551 = vld [vmem:[#allocation2 + $0x8] sm:$0xff]
        %v552 = vld [vmem:[#allocation2 + $0x10] sm:$0xff]
        %v553 = vld [vmem:[#allocation2 + $0x18] sm:$0xff]
        %v554 = vld [vmem:[#allocation2 + $0x20] sm:$0xff]
        %v555 = vld [vmem:[#allocation2 + $0x28] sm:$0xff]
        %v556 = vld [vmem:[#allocation2 + $0x30] sm:$0xff]
        %v557 = vld [vmem:[#allocation2 + $0x38] sm:$0xff]
        %v558 = vld [vmem:[#allocation2 + $0x40] sm:$0xff]
        %v559 = vld [vmem:[#allocation2 + $0x48] sm:$0xff]
        %v560 = vld [vmem:[#allocation2 + $0x50] sm:$0xff]
        %v561 = vld [vmem:[#allocation2 + $0x58] sm:$0xff]
        %v562 = vld [vmem:[#allocation2 + $0x60] sm:$0xff]
        %v563 = vld [vmem:[#allocation2 + $0x68] sm:$0xff]
        %v564 = vld [vmem:[#allocation2 + $0x70] sm:$0xff]
        %v565 = vld [vmem:[#allocation2 + $0x78] sm:$0xff]
        %v566 = vld [vmem:[#allocation2 + $0x80] sm:$0xff]
        %v567 = vld [vmem:[#allocation2 + $0x88] sm:$0xff]
        %v568 = vld [vmem:[#allocation2 + $0x90] sm:$0xff]
        %v569 = vld [vmem:[#allocation2 + $0x98] sm:$0xff]
        %v570 = vld [vmem:[#allocation2 + $0xa0] sm:$0xff]
        %v571 = vld [vmem:[#allocation2 + $0xa8] sm:$0xff]
        %v572 = vld [vmem:[#allocation2 + $0xb0] sm:$0xff]
        %v573 = vld [vmem:[#allocation2 + $0xb8] sm:$0xff]
        %v574 = vld [vmem:[#allocation2 + $0xc0] sm:$0xff]
        %v575 = vld [vmem:[#allocation2 + $0xc8] sm:$0xff]
        %v576 = vld [vmem:[#allocation2 + $0xd0] sm:$0xff]
        %v577 = vld [vmem:[#allocation2 + $0xd8] sm:$0xff]
        %v578 = vld [vmem:[#allocation2 + $0xe0] sm:$0xff]
        %v579 = vld [vmem:[#allocation2 + $0xe8] sm:$0xff]
        %v580 = vld [vmem:[#allocation2 + $0xf0] sm:$0xff]
        %v581 = vld [vmem:[#allocation2 + $0xf8] sm:$0xff]
        %v582 = vld [vmem:[#allocation2 + $0x100] sm:$0xff]
        %v583 = vld [vmem:[#allocation2 + $0x108] sm:$0xff]
        %v584 = vld [vmem:[#allocation2 + $0x110] sm:$0xff]
        %v585 = vld [vmem:[#allocation2 + $0x118] sm:$0xff]
        %v586 = vld [vmem:[#allocation2 + $0x120] sm:$0xff]
        %v587 = vld [vmem:[#allocation2 + $0x128] sm:$0xff]
        %v588 = vld [vmem:[#allocation2 + $0x130] sm:$0xff]
        %v589 = vld [vmem:[#allocation2 + $0x138] sm:$0xff]
        %v590 = vld [vmem:[#allocation2 + $0x140] sm:$0xff]
        %v591 = vld [vmem:[#allocation2 + $0x148] sm:$0xff]
        %v592 = vld [vmem:[#allocation2 + $0x150] sm:$0xff]
        %v593 = vld [vmem:[#allocation2 + $0x158] sm:$0xff]
        %v594 = vld [vmem:[#allocation2 + $0x160] sm:$0xff]
        %v595 = vld [vmem:[#allocation2 + $0x168] sm:$0xff]
        %v596 = vld [vmem:[#allocation2 + $0x170] sm:$0xff]
        %v597 = vld [vmem:[#allocation2 + $0x178] sm:$0xff]
        %v598 = vld [vmem:[#allocation2 + $0x180] sm:$0xff]
        %v599 = vld [vmem:[#allocation2 + $0x188] sm:$0xff]
        %v600 = vld [vmem:[#allocation2 + $0x190] sm:$0xff]
        %v601 = vld [vmem:[#allocation2 + $0x198] sm:$0xff]
        %v602 = vld [vmem:[#allocation2 + $0x1a0] sm:$0xff]
        %v603 = vld [vmem:[#allocation2 + $0x1a8] sm:$0xff]
        %v604 = vld [vmem:[#allocation2 + $0x1b0] sm:$0xff]
        %v605 = vld [vmem:[#allocation2 + $0x1b8] sm:$0xff]
        %v606 = vld [vmem:[#allocation2 + $0x1c0] sm:$0xff]
        %v607 = vld [vmem:[#allocation2 + $0x1c8] sm:$0xff]
        %v608 = vld [vmem:[#allocation2 + $0x1d0] sm:$0xff]
        %v609 = vld [vmem:[#allocation2 + $0x1d8] sm:$0xff]
        %v610 = vld [vmem:[#allocation2 + $0x1e0] sm:$0xff]
        %v611 = vld [vmem:[#allocation2 + $0x1e8] sm:$0xff]
        %v612 = vld [vmem:[#allocation2 + $0x1f0] sm:$0xff]
        %v613 = vld [vmem:[#allocation2 + $0x1f8] sm:$0xff]
        %v614 = vld [vmem:[%s6] sm:$0x1]
        %v616 = vlaneseq
        %v617 = vshrl.u32 %v616, 7
        %v618 = vsub.s32 0, %v617
        %v619 = vrot.slane %v614, %v618
        %621 = vmatprep.subr.mxu0 0.0
        %622 = vmatpush1.msra.mxu0 %v550
        %623 = vmatprep.subr.mxu0 0.0
        %624 = vmatpush1.msra.mxu0 %v551
        %625 = vmatprep.subr.mxu0 0.0
        %626 = vmatpush1.msra.mxu0 %v552
        %627 = vmatprep.subr.mxu0 0.0
        %628 = vmatpush1.msra.mxu0 %v553
        %629 = vmatprep.subr.mxu0 0.0
        %630 = vmatpush1.msra.mxu0 %v554
        %631 = vmatprep.subr.mxu0 0.0
        %632 = vmatpush1.msra.mxu0 %v555
        %633 = vmatprep.subr.mxu0 0.0
        %634 = vmatpush1.msra.mxu0 %v556
        %635 = vmatprep.subr.mxu0 0.0
        %636 = vmatpush1.msra.mxu0 %v557
        %637 = vmatprep.subr.mxu0 0.0
        %638 = vmatpush1.msra.mxu0 %v558
        %639 = vmatprep.subr.mxu0 0.0
        %640 = vmatpush1.msra.mxu0 %v559
        %641 = vmatprep.subr.mxu0 0.0
        %642 = vmatpush1.msra.mxu0 %v560
        %643 = vmatprep.subr.mxu0 0.0
        %644 = vmatpush1.msra.mxu0 %v561
        %645 = vmatprep.subr.mxu0 0.0
        %646 = vmatpush1.msra.mxu0 %v562
        %647 = vmatprep.subr.mxu0 0.0
        %648 = vmatpush1.msra.mxu0 %v563
        %649 = vmatprep.subr.mxu0 0.0
        %650 = vmatpush1.msra.mxu0 %v564
        %651 = vmatprep.subr.mxu0 0.0
        %652 = vmatpush1.msra.mxu0 %v565
        %653 = vmatprep.subr.mxu0 0.0
        %654 = vmatpush1.msra.mxu0 %v566
        %655 = vmatprep.subr.mxu0 0.0
        %656 = vmatpush1.msra.mxu0 %v567
        %657 = vmatprep.subr.mxu0 0.0
        %658 = vmatpush1.msra.mxu0 %v568
        %659 = vmatprep.subr.mxu0 0.0
        %660 = vmatpush1.msra.mxu0 %v569
        %661 = vmatprep.subr.mxu0 0.0
        %662 = vmatpush1.msra.mxu0 %v570
        %663 = vmatprep.subr.mxu0 0.0
        %664 = vmatpush1.msra.mxu0 %v571
        %665 = vmatprep.subr.mxu0 0.0
        %666 = vmatpush1.msra.mxu0 %v572
        %667 = vmatprep.subr.mxu0 0.0
        %668 = vmatpush1.msra.mxu0 %v573
        %669 = vmatprep.subr.mxu0 0.0
        %670 = vmatpush1.msra.mxu0 %v574
        %671 = vmatprep.subr.mxu0 0.0
        %672 = vmatpush1.msra.mxu0 %v575
        %673 = vmatprep.subr.mxu0 0.0
        %674 = vmatpush1.msra.mxu0 %v576
        %675 = vmatprep.subr.mxu0 0.0
        %676 = vmatpush1.msra.mxu0 %v577
        %677 = vmatprep.subr.mxu0 0.0
        %678 = vmatpush1.msra.mxu0 %v578
        %679 = vmatprep.subr.mxu0 0.0
        %680 = vmatpush1.msra.mxu0 %v579
        %681 = vmatprep.subr.mxu0 0.0
        %682 = vmatpush1.msra.mxu0 %v580
        %683 = vmatprep.subr.mxu0 0.0
        %684 = vmatpush1.msra.mxu0 %v581
        %685 = vmatprep.mubr.f32.mxu0 %v547
        %686 = vmatmul.mubr.f32.gmra.mrb[0].mxu0 %v546
        %v687 = vpop.f32.mrb[0].mxu0
        %v688 = vadd.f32 %v619, %v687
        %v689 = vpop.f32.mrb[0].mxu0
        %690 = vdwg.mxu0
        %691 = vmatprep.subr.mxu0 0.0
        %692 = vmatpush1.msra.mxu0 %v582
        %693 = vmatprep.subr.mxu0 0.0
        %694 = vmatpush1.msra.mxu0 %v583
        %695 = vmatprep.subr.mxu0 0.0
        %696 = vmatpush1.msra.mxu0 %v584
        %697 = vmatprep.subr.mxu0 0.0
        %698 = vmatpush1.msra.mxu0 %v585
        %699 = vmatprep.subr.mxu0 0.0
        %700 = vmatpush1.msra.mxu0 %v586
        %701 = vmatprep.subr.mxu0 0.0
        %702 = vmatpush1.msra.mxu0 %v587
        %703 = vmatprep.subr.mxu0 0.0
        %704 = vmatpush1.msra.mxu0 %v588
        %705 = vmatprep.subr.mxu0 0.0
        %706 = vmatpush1.msra.mxu0 %v589
        %707 = vmatprep.subr.mxu0 0.0
        %708 = vmatpush1.msra.mxu0 %v590
        %709 = vmatprep.subr.mxu0 0.0
        %710 = vmatpush1.msra.mxu0 %v591
        %711 = vmatprep.subr.mxu0 0.0
        %712 = vmatpush1.msra.mxu0 %v592
        %713 = vmatprep.subr.mxu0 0.0
        %714 = vmatpush1.msra.mxu0 %v593
        %715 = vmatprep.subr.mxu0 0.0
        %716 = vmatpush1.msra.mxu0 %v594
        %717 = vmatprep.subr.mxu0 0.0
        %718 = vmatpush1.msra.mxu0 %v595
        %719 = vmatprep.subr.mxu0 0.0
        %720 = vmatpush1.msra.mxu0 %v596
        %721 = vmatprep.subr.mxu0 0.0
        %722 = vmatpush1.msra.mxu0 %v597
        %723 = vmatprep.subr.mxu0 0.0
        %724 = vmatpush1.msra.mxu0 %v598
        %725 = vmatprep.subr.mxu0 0.0
        %726 = vmatpush1.msra.mxu0 %v599
        %727 = vmatprep.subr.mxu0 0.0
        %728 = vmatpush1.msra.mxu0 %v600
        %729 = vmatprep.subr.mxu0 0.0
        %730 = vmatpush1.msra.mxu0 %v601
        %731 = vmatprep.subr.mxu0 0.0
        %732 = vmatpush1.msra.mxu0 %v602
        %733 = vmatprep.subr.mxu0 0.0
        %734 = vmatpush1.msra.mxu0 %v603
        %735 = vmatprep.subr.mxu0 0.0
        %736 = vmatpush1.msra.mxu0 %v604
        %737 = vmatprep.subr.mxu0 0.0
        %738 = vmatpush1.msra.mxu0 %v605
        %739 = vmatprep.subr.mxu0 0.0
        %740 = vmatpush1.msra.mxu0 %v606
        %741 = vmatprep.subr.mxu0 0.0
        %742 = vmatpush1.msra.mxu0 %v607
        %743 = vmatprep.subr.mxu0 0.0
        %744 = vmatpush1.msra.mxu0 %v608
        %745 = vmatprep.subr.mxu0 0.0
        %746 = vmatpush1.msra.mxu0 %v609
        %747 = vmatprep.subr.mxu0 0.0
        %748 = vmatpush1.msra.mxu0 %v610
        %749 = vmatprep.subr.mxu0 0.0
        %750 = vmatpush1.msra.mxu0 %v611
        %751 = vmatprep.subr.mxu0 0.0
        %752 = vmatpush1.msra.mxu0 %v612
        %753 = vmatprep.subr.mxu0 0.0
        %754 = vmatpush1.msra.mxu0 %v613
        %755 = vmatprep.mubr.f32.mxu0 %v549
        %756 = vmatmul.mubr.f32.gmra.mrb[0].mxu0 %v548
        %v757 = vpop.f32.mrb[0].mxu0
        %v758 = vadd.f32 %v688, %v757
        %v759 = vpop.f32.mrb[0].mxu0
        %760 = vdwg.mxu0
        %v761 = vadd.f32 %v289, %v758
        %762 = vst [vmem:[%s288] sm:$0xff] %v761
        %p763 = scmp.lt.s32.totalorder %s19, 1
        %s764 = scalar_select %p763, %s19, 1
        %s765 = smul.addr %s764, 8
        %s766 = scalar_lea.vmem %s7, %s765
        // Predicated region
        $region53: #{robust_text_cross_expert.15} parent=47 // pred_check
          %p767 = pneg %p189
        $region54: #{robust_text_cross_expert.15} parent=47 // pred_check_branch
          %769 = sbr.rel (%p767) target = $region56
        $region55: #{robust_text_cross_expert.15} parent=47 // pred_region
          _
        $region56: #{robust_text_cross_expert.15} parent=47 // pred_fallthru
          _
      $region48: #{robust_text_cross_expert.15} parent=5 // pred_fallthru
        _
      %p770 = scmp.le.s32.totalorder 2, %s14
      // Predicated region
      $region57: #{robust_text_cross_expert.15} parent=5 // pred_check
        %p771 = pneg %p770
      $region58: #{robust_text_cross_expert.15} parent=5 // pred_check_branch
        %773 = sbr.rel (%p771) target = $region60
      $region59: #{robust_text_cross_expert.15} parent=5 // pred_region
        %s774 = ssub.s32 %s14, 2
        // Predicated region
        $region61: #{robust_text_cross_expert.15} parent=59 // pred_check
          %p775 = pneg %p195
        $region62: #{robust_text_cross_expert.15} parent=59 // pred_check_branch
          %777 = sbr.rel (%p775) target = $region64
        $region63: #{robust_text_cross_expert.15} parent=59 // pred_region
          %p778 = scmp.lt.s32.totalorder %s20, 1
          %s779 = scalar_select %p778, %s20, 1
          %s780 = smul.addr %s779, 8
          %s781 = scalar_lea.vmem %s7, %s780
        $region64: #{robust_text_cross_expert.15} parent=59 // pred_fallthru
          _
      $region60: #{robust_text_cross_expert.15} parent=5 // pred_fallthru
        _
    $region6: #{robust_text_cross_expert.15} parent=1 // loop_footer
      %s18 = sadd.s32 1, %s14
    $region7: #{robust_text_cross_expert.15} parent=1 // loop_footer_branch
      %13 = sbr.rel target = $region3
    $region8: #{robust_text_cross_expert.15} parent=1 // loop_exit
      _
    %782 = vsyncpa [#allocation3], 1
    %s783 = scalar_lea.sflag [#allocation3], 1
    %784 = vsyncpa %s783, 1

// kernel: robust_text_cross_expert.17
$region0: #{robust_text_cross_expert.17}
  #allocation0 [shape = 'u32[]', space=smem, size = 0x4, offset = 0x4, fixed_abs, tag = 'smem constant byte address 0x4 - core index']
  #allocation1 [shape = 'u32[144,128]{1,0:T(1,128)}', space=vmem, size = 0x12000, scoped, tag = 'internal scratch']
  %s0 = inlined_call_operand.vmem [shape: f32[16,128], index: 0, kind: input, shape index: {}]
  %s1 = inlined_call_operand.vmem [shape: f32[1,128], index: 1, kind: input, shape index: {}]
  %s2 = inlined_call_operand.vmem [shape: f32[1,128], index: 2, kind: input, shape index: {}]
  %s3 = inlined_call_operand.vmem [shape: f32[128,512], index: 3, kind: input, shape index: {}]
  %s4 = inlined_call_operand.vmem [shape: f32[1,512], index: 4, kind: input, shape index: {}]
  %s5 = inlined_call_operand.vmem [shape: f32[512,128], index: 5, kind: input, shape index: {}]
  %s6 = inlined_call_operand.vmem [shape: f32[1,128], index: 6, kind: input, shape index: {}]
  %s7 = inlined_call_operand.vmem [shape: f32[16,128], index: 7, kind: output, shape index: {}]
  %s8 = sld [smem:[#allocation0]]
  $region61: #{robust_text_cross_expert.17} parent=0
    _
  %s10 = ssub.s32 1, %s8
  %s11 = scalar_select 0, %s10, %s8
  loop: start=0, step=1, limit=4
  $region2: #{robust_text_cross_expert.17} parent=0 // loop_pre_header
    _
  $region3: #{robust_text_cross_expert.17} parent=0 // loop_header
    %s13 = sphi 0, %s17
    %p14 = scmp.ge.s32.totalorder %s13, 4
    %s23 = sphi 0, %s25
    %s26 = sphi 0, %s23
    %s27 = sphi 0, %s26
    %s43 = sphi 0, %s27
    %s47 = sphi 0, %s47
    %s49 = sphi 0, %s47
    %s50 = sphi 0, %s49
    %s64 = sphi 0, %s50
    %s68 = sphi 0, %s68
    %s70 = sphi 0, %s68
    %s71 = sphi 0, %s70
    %s85 = sphi 0, %s71
    %s89 = sphi 0, %s89
    %s91 = sphi 0, %s89
    %s92 = sphi 0, %s91
    %s106 = sphi 0, %s92
    %s110 = sphi 0, %s110
    %s112 = sphi 0, %s110
    %s113 = sphi 0, %s112
    %s127 = sphi 0, %s113
    %s131 = sphi 0, %s131
    %s133 = sphi 0, %s131
    %s134 = sphi 0, %s133
    %s148 = sphi 0, %s134
    %s152 = sphi 0, %s152
    %s154 = sphi 0, %s152
    %s155 = sphi 0, %s154
    %s169 = sphi 0, %s155
    %s175 = sphi 0, %s177
    %s178 = sphi 0, %s175
    %s179 = sphi 0, %s178
    %s195 = sphi 0, %s179
  $region4: #{robust_text_cross_expert.17} parent=0 // loop_header_branch
    %16 = sbr.rel (%p14) target = $region8
  $region5: #{robust_text_cross_expert.17} parent=0 // loop_body
    %s18 = ssub.s32 %s13, 1
    %s19 = ssub.s32 %s13, 2
    %s20 = sadd.s32 %s13, 1
    %s21 = ssub.s32 %s13, %s20
    %p22 = scmp.eq.s32.totalorder %s21, 0
    %s24 = sadd.s32 %s23, 1
    %s25 = scalar_select %p22, %s23, %s24
    %p28 = pneg %p22
    %p29 = scmp.eq.s32.totalorder %s13, 1
    %p30 = por %p28, %p29
    %p31 = scmp.ne.s32.totalorder %s23, %s26
    %p32 = scmp.eq.s32.totalorder %s13, 0
    %p33 = por %p31, %p32
    %p34 = scmp.ne.s32.totalorder %s23, %s26
    %p35 = scmp.eq.s32.totalorder %s18, 1
    %p36 = por %p34, %p35
    %p37 = scmp.ne.s32.totalorder %s26, %s27
    %p38 = scmp.eq.s32.totalorder %s18, 0
    %p39 = por %p37, %p38
    %p40 = scmp.ne.s32.totalorder %s26, %s27
    %p41 = scmp.eq.s32.totalorder %s19, 1
    %p42 = por %p40, %p41
    %p44 = scmp.ne.s32.totalorder %s27, %s43
    %p45 = scmp.eq.s32.totalorder %s19, 0
    %p46 = por %p44, %p45
    %s48 = sadd.s32 %s47, 1
    %p51 = scmp.eq.s32.totalorder %s13, 1
    %p52 = scmp.ne.s32.totalorder %s47, %s49
    %p53 = scmp.eq.s32.totalorder %s13, 0
    %p54 = por %p52, %p53
    %p55 = scmp.ne.s32.totalorder %s47, %s49
    %p56 = scmp.eq.s32.totalorder %s18, 1
    %p57 = por %p55, %p56
    %p58 = scmp.ne.s32.totalorder %s49, %s50
    %p59 = scmp.eq.s32.totalorder %s18, 0
    %p60 = por %p58, %p59
    %p61 = scmp.ne.s32.totalorder %s49, %s50
    %p62 = scmp.eq.s32.totalorder %s19, 1
    %p63 = por %p61, %p62
    %p65 = scmp.ne.s32.totalorder %s50, %s64
    %p66 = scmp.eq.s32.totalorder %s19, 0
    %p67 = por %p65, %p66
    %s69 = sadd.s32 %s68, 1
    %p72 = scmp.eq.s32.totalorder %s13, 1
    %p73 = scmp.ne.s32.totalorder %s68, %s70
    %p74 = scmp.eq.s32.totalorder %s13, 0
    %p75 = por %p73, %p74
    %p76 = scmp.ne.s32.totalorder %s68, %s70
    %p77 = scmp.eq.s32.totalorder %s18, 1
    %p78 = por %p76, %p77
    %p79 = scmp.ne.s32.totalorder %s70, %s71
    %p80 = scmp.eq.s32.totalorder %s18, 0
    %p81 = por %p79, %p80
    %p82 = scmp.ne.s32.totalorder %s70, %s71
    %p83 = scmp.eq.s32.totalorder %s19, 1
    %p84 = por %p82, %p83
    %p86 = scmp.ne.s32.totalorder %s71, %s85
    %p87 = scmp.eq.s32.totalorder %s19, 0
    %p88 = por %p86, %p87
    %s90 = sadd.s32 %s89, 1
    %p93 = scmp.eq.s32.totalorder %s13, 1
    %p94 = scmp.ne.s32.totalorder %s89, %s91
    %p95 = scmp.eq.s32.totalorder %s13, 0
    %p96 = por %p94, %p95
    %p97 = scmp.ne.s32.totalorder %s89, %s91
    %p98 = scmp.eq.s32.totalorder %s18, 1
    %p99 = por %p97, %p98
    %p100 = scmp.ne.s32.totalorder %s91, %s92
    %p101 = scmp.eq.s32.totalorder %s18, 0
    %p102 = por %p100, %p101
    %p103 = scmp.ne.s32.totalorder %s91, %s92
    %p104 = scmp.eq.s32.totalorder %s19, 1
    %p105 = por %p103, %p104
    %p107 = scmp.ne.s32.totalorder %s92, %s106
    %p108 = scmp.eq.s32.totalorder %s19, 0
    %p109 = por %p107, %p108
    %s111 = sadd.s32 %s110, 1
    %p114 = scmp.eq.s32.totalorder %s13, 1
    %p115 = scmp.ne.s32.totalorder %s110, %s112
    %p116 = scmp.eq.s32.totalorder %s13, 0
    %p117 = por %p115, %p116
    %p118 = scmp.ne.s32.totalorder %s110, %s112
    %p119 = scmp.eq.s32.totalorder %s18, 1
    %p120 = por %p118, %p119
    %p121 = scmp.ne.s32.totalorder %s112, %s113
    %p122 = scmp.eq.s32.totalorder %s18, 0
    %p123 = por %p121, %p122
    %p124 = scmp.ne.s32.totalorder %s112, %s113
    %p125 = scmp.eq.s32.totalorder %s19, 1
    %p126 = por %p124, %p125
    %p128 = scmp.ne.s32.totalorder %s113, %s127
    %p129 = scmp.eq.s32.totalorder %s19, 0
    %p130 = por %p128, %p129
    %s132 = sadd.s32 %s131, 1
    %p135 = scmp.eq.s32.totalorder %s13, 1
    %p136 = scmp.ne.s32.totalorder %s131, %s133
    %p137 = scmp.eq.s32.totalorder %s13, 0
    %p138 = por %p136, %p137
    %p139 = scmp.ne.s32.totalorder %s131, %s133
    %p140 = scmp.eq.s32.totalorder %s18, 1
    %p141 = por %p139, %p140
    %p142 = scmp.ne.s32.totalorder %s133, %s134
    %p143 = scmp.eq.s32.totalorder %s18, 0
    %p144 = por %p142, %p143
    %p145 = scmp.ne.s32.totalorder %s133, %s134
    %p146 = scmp.eq.s32.totalorder %s19, 1
    %p147 = por %p145, %p146
    %p149 = scmp.ne.s32.totalorder %s134, %s148
    %p150 = scmp.eq.s32.totalorder %s19, 0
    %p151 = por %p149, %p150
    %s153 = sadd.s32 %s152, 1
    %p156 = scmp.eq.s32.totalorder %s13, 1
    %p157 = scmp.ne.s32.totalorder %s152, %s154
    %p158 = scmp.eq.s32.totalorder %s13, 0
    %p159 = por %p157, %p158
    %p160 = scmp.ne.s32.totalorder %s152, %s154
    %p161 = scmp.eq.s32.totalorder %s18, 1
    %p162 = por %p160, %p161
    %p163 = scmp.ne.s32.totalorder %s154, %s155
    %p164 = scmp.eq.s32.totalorder %s18, 0
    %p165 = por %p163, %p164
    %p166 = scmp.ne.s32.totalorder %s154, %s155
    %p167 = scmp.eq.s32.totalorder %s19, 1
    %p168 = por %p166, %p167
    %p170 = scmp.ne.s32.totalorder %s155, %s169
    %p171 = scmp.eq.s32.totalorder %s19, 0
    %p172 = por %p170, %p171
    %s173 = ssub.s32 %s13, %s20
    %p174 = scmp.eq.s32.totalorder %s173, 0
    %s176 = sadd.s32 %s175, 1
    %s177 = scalar_select %p174, %s175, %s176
    %p180 = pneg %p174
    %p181 = scmp.eq.s32.totalorder %s13, 1
    %p182 = por %p180, %p181
    %p183 = scmp.ne.s32.totalorder %s175, %s178
    %p184 = scmp.eq.s32.totalorder %s13, 0
    %p185 = por %p183, %p184
    %p186 = scmp.ne.s32.totalorder %s175, %s178
    %p187 = scmp.eq.s32.totalorder %s18, 1
    %p188 = por %p186, %p187
    %p189 = scmp.ne.s32.totalorder %s178, %s179
    %p190 = scmp.eq.s32.totalorder %s18, 0
    %p191 = por %p189, %p190
    %p192 = scmp.ne.s32.totalorder %s178, %s179
    %p193 = scmp.eq.s32.totalorder %s19, 1
    %p194 = por %p192, %p193
    %p196 = scmp.ne.s32.totalorder %s179, %s195
    %p197 = scmp.eq.s32.totalorder %s19, 0
    %p198 = por %p196, %p197
    %p199 = scmp.le.s32.totalorder 1, %s13
    %p200 = scmp.lt.s32.totalorder %s13, 3
    %p201 = pnand %p199, %p200
    %p202 = pneg %p201
    // Predicated region
    $region9: #{robust_text_cross_expert.17} parent=5 // pred_check
      _
    $region10: #{robust_text_cross_expert.17} parent=5 // pred_check_branch
      %204 = sbr.rel (%p201) target = $region12
    $region11: #{robust_text_cross_expert.17} parent=5 // pred_region
      %s205 = ssub.s32 %s13, 1
      // Predicated region
      $region13: #{robust_text_cross_expert.17} parent=11 // pred_check
        %p206 = pneg %p60
      $region14: #{robust_text_cross_expert.17} parent=11 // pred_check_branch
        %208 = sbr.rel (%p206) target = $region16
      $region15: #{robust_text_cross_expert.17} parent=11 // pred_region
        _
      $region16: #{robust_text_cross_expert.17} parent=11 // pred_fallthru
        _
      // Predicated region
      $region17: #{robust_text_cross_expert.17} parent=11 // pred_check
        %p209 = pneg %p81
      $region18: #{robust_text_cross_expert.17} parent=11 // pred_check_branch
        %211 = sbr.rel (%p209) target = $region20
      $region19: #{robust_text_cross_expert.17} parent=11 // pred_region
        _
      $region20: #{robust_text_cross_expert.17} parent=11 // pred_fallthru
        _
      // Predicated region
      $region21: #{robust_text_cross_expert.17} parent=11 // pred_check
        %p212 = pneg %p102
      $region22: #{robust_text_cross_expert.17} parent=11 // pred_check_branch
        %214 = sbr.rel (%p212) target = $region24
      $region23: #{robust_text_cross_expert.17} parent=11 // pred_region
        _
      $region24: #{robust_text_cross_expert.17} parent=11 // pred_fallthru
        _
      // Predicated region
      $region25: #{robust_text_cross_expert.17} parent=11 // pred_check
        %p215 = pneg %p123
      $region26: #{robust_text_cross_expert.17} parent=11 // pred_check_branch
        %217 = sbr.rel (%p215) target = $region28
      $region27: #{robust_text_cross_expert.17} parent=11 // pred_region
        _
      $region28: #{robust_text_cross_expert.17} parent=11 // pred_fallthru
        _
      // Predicated region
      $region29: #{robust_text_cross_expert.17} parent=11 // pred_check
        %p218 = pneg %p144
      $region30: #{robust_text_cross_expert.17} parent=11 // pred_check_branch
        %220 = sbr.rel (%p218) target = $region32
      $region31: #{robust_text_cross_expert.17} parent=11 // pred_region
        _
      $region32: #{robust_text_cross_expert.17} parent=11 // pred_fallthru
        _
      // Predicated region
      $region33: #{robust_text_cross_expert.17} parent=11 // pred_check
        %p221 = pneg %p165
      $region34: #{robust_text_cross_expert.17} parent=11 // pred_check_branch
        %223 = sbr.rel (%p221) target = $region36
      $region35: #{robust_text_cross_expert.17} parent=11 // pred_region
        _
      $region36: #{robust_text_cross_expert.17} parent=11 // pred_fallthru
        _
    $region12: #{robust_text_cross_expert.17} parent=5 // pred_fallthru
      _
    %p224 = scmp.lt.s32.totalorder %s13, 2
    // Predicated region
    $region37: #{robust_text_cross_expert.17} parent=5 // pred_check
      %p225 = pneg %p224
    $region38: #{robust_text_cross_expert.17} parent=5 // pred_check_branch
      %227 = sbr.rel (%p225) target = $region40
    $region39: #{robust_text_cross_expert.17} parent=5 // pred_region
      // Predicated region
      $region41: #{robust_text_cross_expert.17} parent=39 // pred_check
        %p228 = pneg %p33
      $region42: #{robust_text_cross_expert.17} parent=39 // pred_check_branch
        %230 = sbr.rel (%p228) target = $region44
      $region43: #{robust_text_cross_expert.17} parent=39 // pred_region
        %p231 = scmp.lt.s32.totalorder %s13, 1
        %s232 = scalar_select %p231, %s13, 1
        %s233 = smul.addr %s232, 8
        %s234 = scalar_lea.vmem %s0, %s233
      $region44: #{robust_text_cross_expert.17} parent=39 // pred_fallthru
        _
    $region40: #{robust_text_cross_expert.17} parent=5 // pred_fallthru
      _
    %p235 = scmp.le.s32.totalorder 1, %s13
    %p236 = scmp.lt.s32.totalorder %s13, 3
    %p237 = pnand %p235, %p236
    %p238 = pneg %p237
    // Predicated region
    $region45: #{robust_text_cross_expert.17} parent=5 // pred_check
      _
    $region46: #{robust_text_cross_expert.17} parent=5 // pred_check_branch
      %240 = sbr.rel (%p237) target = $region48
    $region47: #{robust_text_cross_expert.17} parent=5 // pred_region
      %s241 = ssub.s32 %s13, 1
      %p242 = scmp.lt.s32.totalorder %s18, 1
      %s243 = scalar_select %p242, %s18, 1
      %s244 = smul.addr %s243, 8
      %s245 = scalar_lea.vmem %s0, %s244
      %p246 = pneg %p39
      %p247 = pneg %p36
      %p248 = pneg %p60
      %p249 = pneg %p57
      %p250 = pneg %p81
      %p251 = pneg %p78
      %p252 = pneg %p102
      %p253 = pneg %p99
      %p254 = pneg %p123
      %p255 = pneg %p120
      %p256 = pneg %p144
      %p257 = pneg %p141
      %p258 = pneg %p165
      %p259 = pneg %p162
      %p260 = pneg %p191
      %p261 = pneg %p188
      %p262 = scmp.lt.s32.totalorder %s18, 1
      %s263 = scalar_select %p262, %s18, 1
      %s264 = smul.addr %s263, 8
      %s265 = scalar_lea.vmem %s7, %s264
      %p266 = scmp.lt.s32.totalorder %s18, 1
      %s267 = scalar_select %p266, %s18, 1
      %s268 = smul.addr %s267, 8
      %s269 = scalar_lea.vmem %s0, %s268
      %p270 = scmp.lt.s32.totalorder %s18, 1
      %s271 = scalar_select %p270, %s18, 1
      %s272 = smul.addr %s271, 8
      %s273 = scalar_lea.vmem %s7, %s272
      %v274 = vld [vmem:[%s269] sm:$0xff]
      %v275 = vld [vmem:[%s1] sm:$0x1]
      %v276 = vld [vmem:[%s2] sm:$0x1]
      %277 = vadd.xlane.f32.xlu0 %v274
      %v278 = vpop.xlane.xlu0 %277
      %v279 = vrcp.pop 128.0
      %v280 = vmul.f32 %v278, %v279
      %v281 = vsub.f32 %v274, %v280
      %v282 = vmul.f32 %v281, %v281
      %283 = vadd.xlane.f32.xlu0 %v282
      %v284 = vpop.xlane.xlu0 %283
      %v285 = vmul.f32 %v284, %v279
      %v286 = vadd.f32 %v285, 1e-05
      %v287 = vrsqrt.pop %v286
      %v288 = vmul.f32 %v281, %v287
      %v290 = vlaneseq
      %v291 = vshrl.u32 %v290, 7
      %v292 = vsub.s32 0, %v291
      %v293 = vrot.slane %v275, %v292
      %v295 = vmul.f32 %v288, %v293
      %v297 = vlaneseq
      %v298 = vshrl.u32 %v297, 7
      %v299 = vsub.s32 0, %v298
      %v300 = vrot.slane %v276, %v299
      %v302 = vadd.f32 %v295, %v300
      %v303 = vld [vmem:[%s3] sm:$0xff]
      %v304 = vld [vmem:[%s3 + $0x8] sm:$0xff]
      %v305 = vld [vmem:[%s3 + $0x10] sm:$0xff]
      %v306 = vld [vmem:[%s3 + $0x18] sm:$0xff]
      %v307 = vld [vmem:[%s3 + $0x20] sm:$0xff]
      %v308 = vld [vmem:[%s3 + $0x28] sm:$0xff]
      %v309 = vld [vmem:[%s3 + $0x30] sm:$0xff]
      %v310 = vld [vmem:[%s3 + $0x38] sm:$0xff]
      %v311 = vld [vmem:[%s3 + $0x40] sm:$0xff]
      %v312 = vld [vmem:[%s3 + $0x48] sm:$0xff]
      %v313 = vld [vmem:[%s3 + $0x50] sm:$0xff]
      %v314 = vld [vmem:[%s3 + $0x58] sm:$0xff]
      %v315 = vld [vmem:[%s3 + $0x60] sm:$0xff]
      %v316 = vld [vmem:[%s3 + $0x68] sm:$0xff]
      %v317 = vld [vmem:[%s3 + $0x70] sm:$0xff]
      %v318 = vld [vmem:[%s3 + $0x78] sm:$0xff]
      %v319 = vld [vmem:[%s3 + $0x80] sm:$0xff]
      %v320 = vld [vmem:[%s3 + $0x88] sm:$0xff]
      %v321 = vld [vmem:[%s3 + $0x90] sm:$0xff]
      %v322 = vld [vmem:[%s3 + $0x98] sm:$0xff]
      %v323 = vld [vmem:[%s3 + $0xa0] sm:$0xff]
      %v324 = vld [vmem:[%s3 + $0xa8] sm:$0xff]
      %v325 = vld [vmem:[%s3 + $0xb0] sm:$0xff]
      %v326 = vld [vmem:[%s3 + $0xb8] sm:$0xff]
      %v327 = vld [vmem:[%s3 + $0xc0] sm:$0xff]
      %v328 = vld [vmem:[%s3 + $0xc8] sm:$0xff]
      %v329 = vld [vmem:[%s3 + $0xd0] sm:$0xff]
      %v330 = vld [vmem:[%s3 + $0xd8] sm:$0xff]
      %v331 = vld [vmem:[%s3 + $0xe0] sm:$0xff]
      %v332 = vld [vmem:[%s3 + $0xe8] sm:$0xff]
      %v333 = vld [vmem:[%s3 + $0xf0] sm:$0xff]
      %v334 = vld [vmem:[%s3 + $0xf8] sm:$0xff]
      %v335 = vld [vmem:[%s3 + $0x100] sm:$0xff]
      %v336 = vld [vmem:[%s3 + $0x108] sm:$0xff]
      %v337 = vld [vmem:[%s3 + $0x110] sm:$0xff]
      %v338 = vld [vmem:[%s3 + $0x118] sm:$0xff]
      %v339 = vld [vmem:[%s3 + $0x120] sm:$0xff]
      %v340 = vld [vmem:[%s3 + $0x128] sm:$0xff]
      %v341 = vld [vmem:[%s3 + $0x130] sm:$0xff]
      %v342 = vld [vmem:[%s3 + $0x138] sm:$0xff]
      %v343 = vld [vmem:[%s3 + $0x140] sm:$0xff]
      %v344 = vld [vmem:[%s3 + $0x148] sm:$0xff]
      %v345 = vld [vmem:[%s3 + $0x150] sm:$0xff]
      %v346 = vld [vmem:[%s3 + $0x158] sm:$0xff]
      %v347 = vld [vmem:[%s3 + $0x160] sm:$0xff]
      %v348 = vld [vmem:[%s3 + $0x168] sm:$0xff]
      %v349 = vld [vmem:[%s3 + $0x170] sm:$0xff]
      %v350 = vld [vmem:[%s3 + $0x178] sm:$0xff]
      %v351 = vld [vmem:[%s3 + $0x180] sm:$0xff]
      %v352 = vld [vmem:[%s3 + $0x188] sm:$0xff]
      %v353 = vld [vmem:[%s3 + $0x190] sm:$0xff]
      %v354 = vld [vmem:[%s3 + $0x198] sm:$0xff]
      %v355 = vld [vmem:[%s3 + $0x1a0] sm:$0xff]
      %v356 = vld [vmem:[%s3 + $0x1a8] sm:$0xff]
      %v357 = vld [vmem:[%s3 + $0x1b0] sm:$0xff]
      %v358 = vld [vmem:[%s3 + $0x1b8] sm:$0xff]
      %v359 = vld [vmem:[%s3 + $0x1c0] sm:$0xff]
      %v360 = vld [vmem:[%s3 + $0x1c8] sm:$0xff]
      %v361 = vld [vmem:[%s3 + $0x1d0] sm:$0xff]
      %v362 = vld [vmem:[%s3 + $0x1d8] sm:$0xff]
      %v363 = vld [vmem:[%s3 + $0x1e0] sm:$0xff]
      %v364 = vld [vmem:[%s3 + $0x1e8] sm:$0xff]
      %v365 = vld [vmem:[%s3 + $0x1f0] sm:$0xff]
      %v366 = vld [vmem:[%s3 + $0x1f8] sm:$0xff]
      %v367 = vld [vmem:[%s4] sm:$0xf]
      %v369 = vlaneseq
      %v370 = vshrl.u32 %v369, 7
      %v371 = vsub.s32 0, %v370
      %v372 = vrot.slane %v367, %v371
      %v373 = vlaneseq
      %v374 = vshrl.u32 %v373, 7
      %v375 = vsub.s32 1, %v374
      %v376 = vrot.slane %v367, %v375
      %v377 = vlaneseq
      %v378 = vshrl.u32 %v377, 7
      %v379 = vsub.s32 2, %v378
      %v380 = vrot.slane %v367, %v379
      %v381 = vlaneseq
      %v382 = vshrl.u32 %v381, 7
      %v383 = vsub.s32 3, %v382
      %v384 = vrot.slane %v367, %v383
      %389 = vmatprep.subr.mxu0 %v304
      %390 = vmatpush1.msra.mxu0 %v303
      %391 = vmatprep.subr.mxu0 %v308
      %392 = vmatpush1.msra.mxu0 %v307
      %393 = vmatprep.subr.mxu0 %v312
      %394 = vmatpush1.msra.mxu0 %v311
      %395 = vmatprep.subr.mxu0 %v316
      %396 = vmatpush1.msra.mxu0 %v315
      %397 = vmatprep.subr.mxu0 %v320
      %398 = vmatpush1.msra.mxu0 %v319
      %399 = vmatprep.subr.mxu0 %v324
      %400 = vmatpush1.msra.mxu0 %v323
      %401 = vmatprep.subr.mxu0 %v328
      %402 = vmatpush1.msra.mxu0 %v327
      %403 = vmatprep.subr.mxu0 %v332
      %404 = vmatpush1.msra.mxu0 %v331
      %405 = vmatprep.subr.mxu0 %v336
      %406 = vmatpush1.msra.mxu0 %v335
      %407 = vmatprep.subr.mxu0 %v340
      %408 = vmatpush1.msra.mxu0 %v339
      %409 = vmatprep.subr.mxu0 %v344
      %410 = vmatpush1.msra.mxu0 %v343
      %411 = vmatprep.subr.mxu0 %v348
      %412 = vmatpush1.msra.mxu0 %v347
      %413 = vmatprep.subr.mxu0 %v352
      %414 = vmatpush1.msra.mxu0 %v351
      %415 = vmatprep.subr.mxu0 %v356
      %416 = vmatpush1.msra.mxu0 %v355
      %417 = vmatprep.subr.mxu0 %v360
      %418 = vmatpush1.msra.mxu0 %v359
      %419 = vmatprep.subr.mxu0 %v364
      %420 = vmatpush1.msra.mxu0 %v363
      %421 = vmatprep.subr.mxu0 0.0
      %422 = vmatpush1.msra.mxu0 0.0
      %423 = vmatprep.subr.mxu0 0.0
      %424 = vmatpush1.msra.mxu0 0.0
      %425 = vmatprep.subr.mxu0 0.0
      %426 = vmatpush1.msra.mxu0 0.0
      %427 = vmatprep.subr.mxu0 0.0
      %428 = vmatpush1.msra.mxu0 0.0
      %429 = vmatprep.subr.mxu0 0.0
      %430 = vmatpush1.msra.mxu0 0.0
      %431 = vmatprep.subr.mxu0 0.0
      %432 = vmatpush1.msra.mxu0 0.0
      %433 = vmatprep.subr.mxu0 0.0
      %434 = vmatpush1.msra.mxu0 0.0
      %435 = vmatprep.subr.mxu0 0.0
      %436 = vmatpush1.msra.mxu0 0.0
      %437 = vmatprep.subr.mxu0 0.0
      %438 = vmatpush1.msra.mxu0 0.0
      %439 = vmatprep.subr.mxu0 0.0
      %440 = vmatpush1.msra.mxu0 0.0
      %441 = vmatprep.subr.mxu0 0.0
      %442 = vmatpush1.msra.mxu0 0.0
      %443 = vmatprep.subr.mxu0 0.0
      %444 = vmatpush1.msra.mxu0 0.0
      %445 = vmatprep.subr.mxu0 0.0
      %446 = vmatpush1.msra.mxu0 0.0
      %447 = vmatprep.subr.mxu0 0.0
      %448 = vmatpush1.msra.mxu0 0.0
      %449 = vmatprep.subr.mxu0 0.0
      %450 = vmatpush1.msra.mxu0 0.0
      %451 = vmatprep.subr.mxu0 0.0
      %452 = vmatpush1.msra.mxu0 0.0
      %453 = vmatprep.mubr.f32.mxu0 0.0
      %454 = vmatmul.mubr.f32.gmra.mrb[0].mxu0 %v302
      %v455 = vpop.f32.mrb[0].mxu0
      %v456 = vadd.f32 %v372, %v455
      %v457 = vpop.f32.mrb[0].mxu0
      %v458 = vadd.f32 %v376, %v457
      %459 = vdwg.mxu0
      %460 = vmatprep.subr.mxu0 %v306
      %461 = vmatpush1.msra.mxu0 %v305
      %462 = vmatprep.subr.mxu0 %v310
      %463 = vmatpush1.msra.mxu0 %v309
      %464 = vmatprep.subr.mxu0 %v314
      %465 = vmatpush1.msra.mxu0 %v313
      %466 = vmatprep.subr.mxu0 %v318
      %467 = vmatpush1.msra.mxu0 %v317
      %468 = vmatprep.subr.mxu0 %v322
      %469 = vmatpush1.msra.mxu0 %v321
      %470 = vmatprep.subr.mxu0 %v326
      %471 = vmatpush1.msra.mxu0 %v325
      %472 = vmatprep.subr.mxu0 %v330
      %473 = vmatpush1.msra.mxu0 %v329
      %474 = vmatprep.subr.mxu0 %v334
      %475 = vmatpush1.msra.mxu0 %v333
      %476 = vmatprep.subr.mxu0 %v338
      %477 = vmatpush1.msra.mxu0 %v337
      %478 = vmatprep.subr.mxu0 %v342
      %479 = vmatpush1.msra.mxu0 %v341
      %480 = vmatprep.subr.mxu0 %v346
      %481 = vmatpush1.msra.mxu0 %v345
      %482 = vmatprep.subr.mxu0 %v350
      %483 = vmatpush1.msra.mxu0 %v349
      %484 = vmatprep.subr.mxu0 %v354
      %485 = vmatpush1.msra.mxu0 %v353
      %486 = vmatprep.subr.mxu0 %v358
      %487 = vmatpush1.msra.mxu0 %v357
      %488 = vmatprep.subr.mxu0 %v362
      %489 = vmatpush1.msra.mxu0 %v361
      %490 = vmatprep.subr.mxu0 %v366
      %491 = vmatpush1.msra.mxu0 %v365
      %492 = vmatprep.subr.mxu0 0.0
      %493 = vmatpush1.msra.mxu0 0.0
      %494 = vmatprep.subr.mxu0 0.0
      %495 = vmatpush1.msra.mxu0 0.0
      %496 = vmatprep.subr.mxu0 0.0
      %497 = vmatpush1.msra.mxu0 0.0
      %498 = vmatprep.subr.mxu0 0.0
      %499 = vmatpush1.msra.mxu0 0.0
      %500 = vmatprep.subr.mxu0 0.0
      %501 = vmatpush1.msra.mxu0 0.0
      %502 = vmatprep.subr.mxu0 0.0
      %503 = vmatpush1.msra.mxu0 0.0
      %504 = vmatprep.subr.mxu0 0.0
      %505 = vmatpush1.msra.mxu0 0.0
      %506 = vmatprep.subr.mxu0 0.0
      %507 = vmatpush1.msra.mxu0 0.0
      %508 = vmatprep.subr.mxu0 0.0
      %509 = vmatpush1.msra.mxu0 0.0
      %510 = vmatprep.subr.mxu0 0.0
      %511 = vmatpush1.msra.mxu0 0.0
      %512 = vmatprep.subr.mxu0 0.0
      %513 = vmatpush1.msra.mxu0 0.0
      %514 = vmatprep.subr.mxu0 0.0
      %515 = vmatpush1.msra.mxu0 0.0
      %516 = vmatprep.subr.mxu0 0.0
      %517 = vmatpush1.msra.mxu0 0.0
      %518 = vmatprep.subr.mxu0 0.0
      %519 = vmatpush1.msra.mxu0 0.0
      %520 = vmatprep.subr.mxu0 0.0
      %521 = vmatpush1.msra.mxu0 0.0
      %522 = vmatprep.subr.mxu0 0.0
      %523 = vmatpush1.msra.mxu0 0.0
      %524 = vmatprep.mubr.f32.mxu0 0.0
      %525 = vmatmul.mubr.f32.gmra.mrb[0].mxu0 %v302
      %v526 = vpop.f32.mrb[0].mxu0
      %v527 = vadd.f32 %v380, %v526
      %v528 = vpop.f32.mrb[0].mxu0
      %v529 = vadd.f32 %v384, %v528
      %530 = vdwg.mxu0
      %v531 = vmax.f32 %v456, 0.0
      %v532 = vmax.f32 %v458, 0.0
      %v533 = vmax.f32 %v527, 0.0
      %v534 = vmax.f32 %v529, 0.0
      %v535 = vld [vmem:[%s5] sm:$0xff]
      %v536 = vld [vmem:[%s5 + $0x8] sm:$0xff]
      %v537 = vld [vmem:[%s5 + $0x10] sm:$0xff]
      %v538 = vld [vmem:[%s5 + $0x18] sm:$0xff]
      %v539 = vld [vmem:[%s5 + $0x20] sm:$0xff]
      %v540 = vld [vmem:[%s5 + $0x28] sm:$0xff]
      %v541 = vld [vmem:[%s5 + $0x30] sm:$0xff]
      %v542 = vld [vmem:[%s5 + $0x38] sm:$0xff]
      %v543 = vld [vmem:[%s5 + $0x40] sm:$0xff]
      %v544 = vld [vmem:[%s5 + $0x48] sm:$0xff]
      %v545 = vld [vmem:[%s5 + $0x50] sm:$0xff]
      %v546 = vld [vmem:[%s5 + $0x58] sm:$0xff]
      %v547 = vld [vmem:[%s5 + $0x60] sm:$0xff]
      %v548 = vld [vmem:[%s5 + $0x68] sm:$0xff]
      %v549 = vld [vmem:[%s5 + $0x70] sm:$0xff]
      %v550 = vld [vmem:[%s5 + $0x78] sm:$0xff]
      %v551 = vld [vmem:[%s5 + $0x80] sm:$0xff]
      %v552 = vld [vmem:[%s5 + $0x88] sm:$0xff]
      %v553 = vld [vmem:[%s5 + $0x90] sm:$0xff]
      %v554 = vld [vmem:[%s5 + $0x98] sm:$0xff]
      %v555 = vld [vmem:[%s5 + $0xa0] sm:$0xff]
      %v556 = vld [vmem:[%s5 + $0xa8] sm:$0xff]
      %v557 = vld [vmem:[%s5 + $0xb0] sm:$0xff]
      %v558 = vld [vmem:[%s5 + $0xb8] sm:$0xff]
      %v559 = vld [vmem:[%s5 + $0xc0] sm:$0xff]
      %v560 = vld [vmem:[%s5 + $0xc8] sm:$0xff]
      %v561 = vld [vmem:[%s5 + $0xd0] sm:$0xff]
      %v562 = vld [vmem:[%s5 + $0xd8] sm:$0xff]
      %v563 = vld [vmem:[%s5 + $0xe0] sm:$0xff]
      %v564 = vld [vmem:[%s5 + $0xe8] sm:$0xff]
      %v565 = vld [vmem:[%s5 + $0xf0] sm:$0xff]
      %v566 = vld [vmem:[%s5 + $0xf8] sm:$0xff]
      %v567 = vld [vmem:[%s5 + $0x100] sm:$0xff]
      %v568 = vld [vmem:[%s5 + $0x108] sm:$0xff]
      %v569 = vld [vmem:[%s5 + $0x110] sm:$0xff]
      %v570 = vld [vmem:[%s5 + $0x118] sm:$0xff]
      %v571 = vld [vmem:[%s5 + $0x120] sm:$0xff]
      %v572 = vld [vmem:[%s5 + $0x128] sm:$0xff]
      %v573 = vld [vmem:[%s5 + $0x130] sm:$0xff]
      %v574 = vld [vmem:[%s5 + $0x138] sm:$0xff]
      %v575 = vld [vmem:[%s5 + $0x140] sm:$0xff]
      %v576 = vld [vmem:[%s5 + $0x148] sm:$0xff]
      %v577 = vld [vmem:[%s5 + $0x150] sm:$0xff]
      %v578 = vld [vmem:[%s5 + $0x158] sm:$0xff]
      %v579 = vld [vmem:[%s5 + $0x160] sm:$0xff]
      %v580 = vld [vmem:[%s5 + $0x168] sm:$0xff]
      %v581 = vld [vmem:[%s5 + $0x170] sm:$0xff]
      %v582 = vld [vmem:[%s5 + $0x178] sm:$0xff]
      %v583 = vld [vmem:[%s5 + $0x180] sm:$0xff]
      %v584 = vld [vmem:[%s5 + $0x188] sm:$0xff]
      %v585 = vld [vmem:[%s5 + $0x190] sm:$0xff]
      %v586 = vld [vmem:[%s5 + $0x198] sm:$0xff]
      %v587 = vld [vmem:[%s5 + $0x1a0] sm:$0xff]
      %v588 = vld [vmem:[%s5 + $0x1a8] sm:$0xff]
      %v589 = vld [vmem:[%s5 + $0x1b0] sm:$0xff]
      %v590 = vld [vmem:[%s5 + $0x1b8] sm:$0xff]
      %v591 = vld [vmem:[%s5 + $0x1c0] sm:$0xff]
      %v592 = vld [vmem:[%s5 + $0x1c8] sm:$0xff]
      %v593 = vld [vmem:[%s5 + $0x1d0] sm:$0xff]
      %v594 = vld [vmem:[%s5 + $0x1d8] sm:$0xff]
      %v595 = vld [vmem:[%s5 + $0x1e0] sm:$0xff]
      %v596 = vld [vmem:[%s5 + $0x1e8] sm:$0xff]
      %v597 = vld [vmem:[%s5 + $0x1f0] sm:$0xff]
      %v598 = vld [vmem:[%s5 + $0x1f8] sm:$0xff]
      %v599 = vld [vmem:[%s6] sm:$0x1]
      %v601 = vlaneseq
      %v602 = vshrl.u32 %v601, 7
      %v603 = vsub.s32 0, %v602
      %v604 = vrot.slane %v599, %v603
      %606 = vmatprep.subr.mxu0 0.0
      %607 = vmatpush1.msra.mxu0 %v535
      %608 = vmatprep.subr.mxu0 0.0
      %609 = vmatpush1.msra.mxu0 %v536
      %610 = vmatprep.subr.mxu0 0.0
      %611 = vmatpush1.msra.mxu0 %v537
      %612 = vmatprep.subr.mxu0 0.0
      %613 = vmatpush1.msra.mxu0 %v538
      %614 = vmatprep.subr.mxu0 0.0
      %615 = vmatpush1.msra.mxu0 %v539
      %616 = vmatprep.subr.mxu0 0.0
      %617 = vmatpush1.msra.mxu0 %v540
      %618 = vmatprep.subr.mxu0 0.0
      %619 = vmatpush1.msra.mxu0 %v541
      %620 = vmatprep.subr.mxu0 0.0
      %621 = vmatpush1.msra.mxu0 %v542
      %622 = vmatprep.subr.mxu0 0.0
      %623 = vmatpush1.msra.mxu0 %v543
      %624 = vmatprep.subr.mxu0 0.0
      %625 = vmatpush1.msra.mxu0 %v544
      %626 = vmatprep.subr.mxu0 0.0
      %627 = vmatpush1.msra.mxu0 %v545
      %628 = vmatprep.subr.mxu0 0.0
      %629 = vmatpush1.msra.mxu0 %v546
      %630 = vmatprep.subr.mxu0 0.0
      %631 = vmatpush1.msra.mxu0 %v547
      %632 = vmatprep.subr.mxu0 0.0
      %633 = vmatpush1.msra.mxu0 %v548
      %634 = vmatprep.subr.mxu0 0.0
      %635 = vmatpush1.msra.mxu0 %v549
      %636 = vmatprep.subr.mxu0 0.0
      %637 = vmatpush1.msra.mxu0 %v550
      %638 = vmatprep.subr.mxu0 0.0
      %639 = vmatpush1.msra.mxu0 %v551
      %640 = vmatprep.subr.mxu0 0.0
      %641 = vmatpush1.msra.mxu0 %v552
      %642 = vmatprep.subr.mxu0 0.0
      %643 = vmatpush1.msra.mxu0 %v553
      %644 = vmatprep.subr.mxu0 0.0
      %645 = vmatpush1.msra.mxu0 %v554
      %646 = vmatprep.subr.mxu0 0.0
      %647 = vmatpush1.msra.mxu0 %v555
      %648 = vmatprep.subr.mxu0 0.0
      %649 = vmatpush1.msra.mxu0 %v556
      %650 = vmatprep.subr.mxu0 0.0
      %651 = vmatpush1.msra.mxu0 %v557
      %652 = vmatprep.subr.mxu0 0.0
      %653 = vmatpush1.msra.mxu0 %v558
      %654 = vmatprep.subr.mxu0 0.0
      %655 = vmatpush1.msra.mxu0 %v559
      %656 = vmatprep.subr.mxu0 0.0
      %657 = vmatpush1.msra.mxu0 %v560
      %658 = vmatprep.subr.mxu0 0.0
      %659 = vmatpush1.msra.mxu0 %v561
      %660 = vmatprep.subr.mxu0 0.0
      %661 = vmatpush1.msra.mxu0 %v562
      %662 = vmatprep.subr.mxu0 0.0
      %663 = vmatpush1.msra.mxu0 %v563
      %664 = vmatprep.subr.mxu0 0.0
      %665 = vmatpush1.msra.mxu0 %v564
      %666 = vmatprep.subr.mxu0 0.0
      %667 = vmatpush1.msra.mxu0 %v565
      %668 = vmatprep.subr.mxu0 0.0
      %669 = vmatpush1.msra.mxu0 %v566
      %670 = vmatprep.mubr.f32.mxu0 %v532
      %671 = vmatmul.mubr.f32.gmra.mrb[0].mxu0 %v531
      %v672 = vpop.f32.mrb[0].mxu0
      %v673 = vadd.f32 %v604, %v672
      %v674 = vpop.f32.mrb[0].mxu0
      %675 = vdwg.mxu0
      %676 = vmatprep.subr.mxu0 0.0
      %677 = vmatpush1.msra.mxu0 %v567
      %678 = vmatprep.subr.mxu0 0.0
      %679 = vmatpush1.msra.mxu0 %v568
      %680 = vmatprep.subr.mxu0 0.0
      %681 = vmatpush1.msra.mxu0 %v569
      %682 = vmatprep.subr.mxu0 0.0
      %683 = vmatpush1.msra.mxu0 %v570
      %684 = vmatprep.subr.mxu0 0.0
      %685 = vmatpush1.msra.mxu0 %v571
      %686 = vmatprep.subr.mxu0 0.0
      %687 = vmatpush1.msra.mxu0 %v572
      %688 = vmatprep.subr.mxu0 0.0
      %689 = vmatpush1.msra.mxu0 %v573
      %690 = vmatprep.subr.mxu0 0.0
      %691 = vmatpush1.msra.mxu0 %v574
      %692 = vmatprep.subr.mxu0 0.0
      %693 = vmatpush1.msra.mxu0 %v575
      %694 = vmatprep.subr.mxu0 0.0
      %695 = vmatpush1.msra.mxu0 %v576
      %696 = vmatprep.subr.mxu0 0.0
      %697 = vmatpush1.msra.mxu0 %v577
      %698 = vmatprep.subr.mxu0 0.0
      %699 = vmatpush1.msra.mxu0 %v578
      %700 = vmatprep.subr.mxu0 0.0
      %701 = vmatpush1.msra.mxu0 %v579
      %702 = vmatprep.subr.mxu0 0.0
      %703 = vmatpush1.msra.mxu0 %v580
      %704 = vmatprep.subr.mxu0 0.0
      %705 = vmatpush1.msra.mxu0 %v581
      %706 = vmatprep.subr.mxu0 0.0
      %707 = vmatpush1.msra.mxu0 %v582
      %708 = vmatprep.subr.mxu0 0.0
      %709 = vmatpush1.msra.mxu0 %v583
      %710 = vmatprep.subr.mxu0 0.0
      %711 = vmatpush1.msra.mxu0 %v584
      %712 = vmatprep.subr.mxu0 0.0
      %713 = vmatpush1.msra.mxu0 %v585
      %714 = vmatprep.subr.mxu0 0.0
      %715 = vmatpush1.msra.mxu0 %v586
      %716 = vmatprep.subr.mxu0 0.0
      %717 = vmatpush1.msra.mxu0 %v587
      %718 = vmatprep.subr.mxu0 0.0
      %719 = vmatpush1.msra.mxu0 %v588
      %720 = vmatprep.subr.mxu0 0.0
      %721 = vmatpush1.msra.mxu0 %v589
      %722 = vmatprep.subr.mxu0 0.0
      %723 = vmatpush1.msra.mxu0 %v590
      %724 = vmatprep.subr.mxu0 0.0
      %725 = vmatpush1.msra.mxu0 %v591
      %726 = vmatprep.subr.mxu0 0.0
      %727 = vmatpush1.msra.mxu0 %v592
      %728 = vmatprep.subr.mxu0 0.0
      %729 = vmatpush1.msra.mxu0 %v593
      %730 = vmatprep.subr.mxu0 0.0
      %731 = vmatpush1.msra.mxu0 %v594
      %732 = vmatprep.subr.mxu0 0.0
      %733 = vmatpush1.msra.mxu0 %v595
      %734 = vmatprep.subr.mxu0 0.0
      %735 = vmatpush1.msra.mxu0 %v596
      %736 = vmatprep.subr.mxu0 0.0
      %737 = vmatpush1.msra.mxu0 %v597
      %738 = vmatprep.subr.mxu0 0.0
      %739 = vmatpush1.msra.mxu0 %v598
      %740 = vmatprep.mubr.f32.mxu0 %v534
      %741 = vmatmul.mubr.f32.gmra.mrb[0].mxu0 %v533
      %v742 = vpop.f32.mrb[0].mxu0
      %v743 = vadd.f32 %v673, %v742
      %v744 = vpop.f32.mrb[0].mxu0
      %745 = vdwg.mxu0
      %v746 = vadd.f32 %v274, %v743
      %747 = vst [vmem:[%s273] sm:$0xff] %v746
      %p748 = scmp.lt.s32.totalorder %s18, 1
      %s749 = scalar_select %p748, %s18, 1
      %s750 = smul.addr %s749, 8
      %s751 = scalar_lea.vmem %s7, %s750
      // Predicated region
      $region49: #{robust_text_cross_expert.17} parent=47 // pred_check
        %p752 = pneg %p188
      $region50: #{robust_text_cross_expert.17} parent=47 // pred_check_branch
        %754 = sbr.rel (%p752) target = $region52
      $region51: #{robust_text_cross_expert.17} parent=47 // pred_region
        _
      $region52: #{robust_text_cross_expert.17} parent=47 // pred_fallthru
        _
    $region48: #{robust_text_cross_expert.17} parent=5 // pred_fallthru
      _
    %p755 = scmp.le.s32.totalorder 2, %s13
    // Predicated region
    $region53: #{robust_text_cross_expert.17} parent=5 // pred_check
      %p756 = pneg %p755
    $region54: #{robust_text_cross_expert.17} parent=5 // pred_check_branch
      %758 = sbr.rel (%p756) target = $region56
    $region55: #{robust_text_cross_expert.17} parent=5 // pred_region
      %s759 = ssub.s32 %s13, 2
      // Predicated region
      $region57: #{robust_text_cross_expert.17} parent=55 // pred_check
        %p760 = pneg %p194
      $region58: #{robust_text_cross_expert.17} parent=55 // pred_check_branch
        %762 = sbr.rel (%p760) target = $region60
      $region59: #{robust_text_cross_expert.17} parent=55 // pred_region
        %p763 = scmp.lt.s32.totalorder %s19, 1
        %s764 = scalar_select %p763, %s19, 1
        %s765 = smul.addr %s764, 8
        %s766 = scalar_lea.vmem %s7, %s765
      $region60: #{robust_text_cross_expert.17} parent=55 // pred_fallthru
        _
    $region56: #{robust_text_cross_expert.17} parent=5 // pred_fallthru
      _
  $region6: #{robust_text_cross_expert.17} parent=0 // loop_footer
    %s17 = sadd.s32 1, %s13
  $region7: #{robust_text_cross_expert.17} parent=0 // loop_footer_branch
    %12 = sbr.rel target = $region3
  $region8: #{robust_text_cross_expert.17} parent=0 // loop_exit
    _

// kernel: robust_text_cross_expert.14
$region0: #{robust_text_cross_expert.14}
  #allocation0 [shape = 'u32[]', space=smem, size = 0x4, offset = 0x4, fixed_abs, tag = 'smem constant byte address 0x4 - core index']
  #allocation1 [shape = 'u32[144,128]{1,0:T(1,128)}', space=vmem, size = 0x12000, scoped, tag = 'internal scratch']
  %s0 = inlined_call_operand.vmem [shape: f32[2,8,128], index: 0, kind: input, shape index: {}]
  %s1 = inlined_call_operand.vmem [shape: s32[2,1,8], index: 1, kind: input, shape index: {}]
  %s2 = inlined_call_operand.vmem [shape: f32[1,128], index: 2, kind: input, shape index: {}]
  %s3 = inlined_call_operand.vmem [shape: f32[1,128], index: 3, kind: input, shape index: {}]
  %s4 = inlined_call_operand.hbm [shape: f32[128,384], index: 4, kind: input, shape index: {}]
  %s5 = inlined_call_operand.vmem [shape: f32[1,384], index: 5, kind: input, shape index: {}]
  %s6 = inlined_call_operand.vmem [shape: f32[128,128], index: 6, kind: input, shape index: {}]
  %s7 = inlined_call_operand.vmem [shape: f32[1,128], index: 7, kind: input, shape index: {}]
  %s8 = inlined_call_operand.vmem [shape: f32[2,8,128], index: 8, kind: output, shape index: {}]
  %s9 = sld [smem:[#allocation0]]
  $region69: #{robust_text_cross_expert.14} parent=0
    _
  %s11 = ssub.s32 1, %s9
  %s12 = scalar_select 0, %s11, %s9
  $region1: #{robust_text_cross_expert.14} parent=0
    #allocation2 [shape = 'u8[196608]{0}', space=vmem, size = 0x30000, scoped, tag = 'input window, operand 4, single buffered']
    #allocation3 [shape = 's32[2]{0}', space=sflag, size = 0x8, scoped, tag = 'scoped memory for robust_text_cross_expert.14']
    %13 = vsyncpa [#allocation3], 0
    loop: start=0, step=1, limit=4
    $region2: #{robust_text_cross_expert.14} parent=1 // loop_pre_header
      _
    $region3: #{robust_text_cross_expert.14} parent=1 // loop_header
      %s15 = sphi 0, %s19
      %p16 = scmp.ge.s32.totalorder %s15, 4
      %s25 = sphi 0, %s27
      %s28 = sphi 0, %s25
      %s29 = sphi 0, %s28
      %s45 = sphi 0, %s29
      %s51 = sphi 0, %s53
      %s54 = sphi 0, %s51
      %s55 = sphi 0, %s54
      %s71 = sphi 0, %s55
      %s75 = sphi 0, %s75
      %s77 = sphi 0, %s75
      %s78 = sphi 0, %s77
      %s92 = sphi 0, %s78
      %s96 = sphi 0, %s96
      %s98 = sphi 0, %s96
      %s99 = sphi 0, %s98
      %s113 = sphi 0, %s99
      %s117 = sphi 0, %s117
      %s119 = sphi 0, %s117
      %s120 = sphi 0, %s119
      %s134 = sphi 0, %s120
      %s138 = sphi 0, %s138
      %s140 = sphi 0, %s138
      %s141 = sphi 0, %s140
      %s155 = sphi 0, %s141
      %s159 = sphi 0, %s159
      %s161 = sphi 0, %s159
      %s162 = sphi 0, %s161
      %s176 = sphi 0, %s162
      %s180 = sphi 0, %s180
      %s182 = sphi 0, %s180
      %s183 = sphi 0, %s182
      %s197 = sphi 0, %s183
      %s203 = sphi 0, %s205
      %s206 = sphi 0, %s203
      %s207 = sphi 0, %s206
      %s223 = sphi 0, %s207
    $region4: #{robust_text_cross_expert.14} parent=1 // loop_header_branch
      %18 = sbr.rel (%p16) target = $region8
    $region5: #{robust_text_cross_expert.14} parent=1 // loop_body
      %s20 = ssub.s32 %s15, 1
      %s21 = ssub.s32 %s15, 2
      %s22 = sadd.s32 %s15, 1
      %s23 = ssub.s32 %s15, %s22
      %p24 = scmp.eq.s32.totalorder %s23, 0
      %s26 = sadd.s32 %s25, 1
      %s27 = scalar_select %p24, %s25, %s26
      %p30 = pneg %p24
      %p31 = scmp.eq.s32.totalorder %s15, 1
      %p32 = por %p30, %p31
      %p33 = scmp.ne.s32.totalorder %s25, %s28
      %p34 = scmp.eq.s32.totalorder %s15, 0
      %p35 = por %p33, %p34
      %p36 = scmp.ne.s32.totalorder %s25, %s28
      %p37 = scmp.eq.s32.totalorder %s20, 1
      %p38 = por %p36, %p37
      %p39 = scmp.ne.s32.totalorder %s28, %s29
      %p40 = scmp.eq.s32.totalorder %s20, 0
      %p41 = por %p39, %p40
      %p42 = scmp.ne.s32.totalorder %s28, %s29
      %p43 = scmp.eq.s32.totalorder %s21, 1
      %p44 = por %p42, %p43
      %p46 = scmp.ne.s32.totalorder %s29, %s45
      %p47 = scmp.eq.s32.totalorder %s21, 0
      %p48 = por %p46, %p47
      %s49 = ssub.s32 %s15, %s22
      %p50 = scmp.eq.s32.totalorder %s49, 0
      %s52 = sadd.s32 %s51, 1
      %s53 = scalar_select %p50, %s51, %s52
      %p56 = pneg %p50
      %p57 = scmp.eq.s32.totalorder %s15, 1
      %p58 = por %p56, %p57
      %p59 = scmp.ne.s32.totalorder %s51, %s54
      %p60 = scmp.eq.s32.totalorder %s15, 0
      %p61 = por %p59, %p60
      %p62 = scmp.ne.s32.totalorder %s51, %s54
      %p63 = scmp.eq.s32.totalorder %s20, 1
      %p64 = por %p62, %p63
      %p65 = scmp.ne.s32.totalorder %s54, %s55
      %p66 = scmp.eq.s32.totalorder %s20, 0
      %p67 = por %p65, %p66
      %p68 = scmp.ne.s32.totalorder %s54, %s55
      %p69 = scmp.eq.s32.totalorder %s21, 1
      %p70 = por %p68, %p69
      %p72 = scmp.ne.s32.totalorder %s55, %s71
      %p73 = scmp.eq.s32.totalorder %s21, 0
      %p74 = por %p72, %p73
      %s76 = sadd.s32 %s75, 1
      %p79 = scmp.eq.s32.totalorder %s15, 1
      %p80 = scmp.ne.s32.totalorder %s75, %s77
      %p81 = scmp.eq.s32.totalorder %s15, 0
      %p82 = por %p80, %p81
      %p83 = scmp.ne.s32.totalorder %s75, %s77
      %p84 = scmp.eq.s32.totalorder %s20, 1
      %p85 = por %p83, %p84
      %p86 = scmp.ne.s32.totalorder %s77, %s78
      %p87 = scmp.eq.s32.totalorder %s20, 0
      %p88 = por %p86, %p87
      %p89 = scmp.ne.s32.totalorder %s77, %s78
      %p90 = scmp.eq.s32.totalorder %s21, 1
      %p91 = por %p89, %p90
      %p93 = scmp.ne.s32.totalorder %s78, %s92
      %p94 = scmp.eq.s32.totalorder %s21, 0
      %p95 = por %p93, %p94
      %s97 = sadd.s32 %s96, 1
      %p100 = scmp.eq.s32.totalorder %s15, 1
      %p101 = scmp.ne.s32.totalorder %s96, %s98
      %p102 = scmp.eq.s32.totalorder %s15, 0
      %p103 = por %p101, %p102
      %p104 = scmp.ne.s32.totalorder %s96, %s98
      %p105 = scmp.eq.s32.totalorder %s20, 1
      %p106 = por %p104, %p105
      %p107 = scmp.ne.s32.totalorder %s98, %s99
      %p108 = scmp.eq.s32.totalorder %s20, 0
      %p109 = por %p107, %p108
      %p110 = scmp.ne.s32.totalorder %s98, %s99
      %p111 = scmp.eq.s32.totalorder %s21, 1
      %p112 = por %p110, %p111
      %p114 = scmp.ne.s32.totalorder %s99, %s113
      %p115 = scmp.eq.s32.totalorder %s21, 0
      %p116 = por %p114, %p115
      %s118 = sadd.s32 %s117, 1
      %p121 = scmp.eq.s32.totalorder %s15, 1
      %p122 = scmp.ne.s32.totalorder %s117, %s119
      %p123 = scmp.eq.s32.totalorder %s15, 0
      %p124 = por %p122, %p123
      %p125 = scmp.ne.s32.totalorder %s117, %s119
      %p126 = scmp.eq.s32.totalorder %s20, 1
      %p127 = por %p125, %p126
      %p128 = scmp.ne.s32.totalorder %s119, %s120
      %p129 = scmp.eq.s32.totalorder %s20, 0
      %p130 = por %p128, %p129
      %p131 = scmp.ne.s32.totalorder %s119, %s120
      %p132 = scmp.eq.s32.totalorder %s21, 1
      %p133 = por %p131, %p132
      %p135 = scmp.ne.s32.totalorder %s120, %s134
      %p136 = scmp.eq.s32.totalorder %s21, 0
      %p137 = por %p135, %p136
      %s139 = sadd.s32 %s138, 1
      %p142 = scmp.eq.s32.totalorder %s15, 1
      %p143 = scmp.ne.s32.totalorder %s138, %s140
      %p144 = scmp.eq.s32.totalorder %s15, 0
      %p145 = por %p143, %p144
      %p146 = scmp.ne.s32.totalorder %s138, %s140
      %p147 = scmp.eq.s32.totalorder %s20, 1
      %p148 = por %p146, %p147
      %p149 = scmp.ne.s32.totalorder %s140, %s141
      %p150 = scmp.eq.s32.totalorder %s20, 0
      %p151 = por %p149, %p150
      %p152 = scmp.ne.s32.totalorder %s140, %s141
      %p153 = scmp.eq.s32.totalorder %s21, 1
      %p154 = por %p152, %p153
      %p156 = scmp.ne.s32.totalorder %s141, %s155
      %p157 = scmp.eq.s32.totalorder %s21, 0
      %p158 = por %p156, %p157
      %s160 = sadd.s32 %s159, 1
      %p163 = scmp.eq.s32.totalorder %s15, 1
      %p164 = scmp.ne.s32.totalorder %s159, %s161
      %p165 = scmp.eq.s32.totalorder %s15, 0
      %p166 = por %p164, %p165
      %p167 = scmp.ne.s32.totalorder %s159, %s161
      %p168 = scmp.eq.s32.totalorder %s20, 1
      %p169 = por %p167, %p168
      %p170 = scmp.ne.s32.totalorder %s161, %s162
      %p171 = scmp.eq.s32.totalorder %s20, 0
      %p172 = por %p170, %p171
      %p173 = scmp.ne.s32.totalorder %s161, %s162
      %p174 = scmp.eq.s32.totalorder %s21, 1
      %p175 = por %p173, %p174
      %p177 = scmp.ne.s32.totalorder %s162, %s176
      %p178 = scmp.eq.s32.totalorder %s21, 0
      %p179 = por %p177, %p178
      %s181 = sadd.s32 %s180, 1
      %p184 = scmp.eq.s32.totalorder %s15, 1
      %p185 = scmp.ne.s32.totalorder %s180, %s182
      %p186 = scmp.eq.s32.totalorder %s15, 0
      %p187 = por %p185, %p186
      %p188 = scmp.ne.s32.totalorder %s180, %s182
      %p189 = scmp.eq.s32.totalorder %s20, 1
      %p190 = por %p188, %p189
      %p191 = scmp.ne.s32.totalorder %s182, %s183
      %p192 = scmp.eq.s32.totalorder %s20, 0
      %p193 = por %p191, %p192
      %p194 = scmp.ne.s32.totalorder %s182, %s183
      %p195 = scmp.eq.s32.totalorder %s21, 1
      %p196 = por %p194, %p195
      %p198 = scmp.ne.s32.totalorder %s183, %s197
      %p199 = scmp.eq.s32.totalorder %s21, 0
      %p200 = por %p198, %p199
      %s201 = ssub.s32 %s15, %s22
      %p202 = scmp.eq.s32.totalorder %s201, 0
      %s204 = sadd.s32 %s203, 1
      %s205 = scalar_select %p202, %s203, %s204
      %p208 = pneg %p202
      %p209 = scmp.eq.s32.totalorder %s15, 1
      %p210 = por %p208, %p209
      %p211 = scmp.ne.s32.totalorder %s203, %s206
      %p212 = scmp.eq.s32.totalorder %s15, 0
      %p213 = por %p211, %p212
      %p214 = scmp.ne.s32.totalorder %s203, %s206
      %p215 = scmp.eq.s32.totalorder %s20, 1
      %p216 = por %p214, %p215
      %p217 = scmp.ne.s32.totalorder %s206, %s207
      %p218 = scmp.eq.s32.totalorder %s20, 0
      %p219 = por %p217, %p218
      %p220 = scmp.ne.s32.totalorder %s206, %s207
      %p221 = scmp.eq.s32.totalorder %s21, 1
      %p222 = por %p220, %p221
      %p224 = scmp.ne.s32.totalorder %s207, %s223
      %p225 = scmp.eq.s32.totalorder %s21, 0
      %p226 = por %p224, %p225
      %p227 = scmp.le.s32.totalorder 1, %s15
      %p228 = scmp.lt.s32.totalorder %s15, 3
      %p229 = pnand %p227, %p228
      %p230 = pneg %p229
      // Predicated region
      $region9: #{robust_text_cross_expert.14} parent=5 // pred_check
        _
      $region10: #{robust_text_cross_expert.14} parent=5 // pred_check_branch
        %232 = sbr.rel (%p229) target = $region12
      $region11: #{robust_text_cross_expert.14} parent=5 // pred_region
        %s233 = ssub.s32 %s15, 1
        // Predicated region
        $region13: #{robust_text_cross_expert.14} parent=11 // pred_check
          %p234 = pneg %p88
        $region14: #{robust_text_cross_expert.14} parent=11 // pred_check_branch
          %236 = sbr.rel (%p234) target = $region16
        $region15: #{robust_text_cross_expert.14} parent=11 // pred_region
          _
        $region16: #{robust_text_cross_expert.14} parent=11 // pred_fallthru
          _
        // Predicated region
        $region17: #{robust_text_cross_expert.14} parent=11 // pred_check
          %p237 = pneg %p109
        $region18: #{robust_text_cross_expert.14} parent=11 // pred_check_branch
          %239 = sbr.rel (%p237) target = $region20
        $region19: #{robust_text_cross_expert.14} parent=11 // pred_region
          _
        $region20: #{robust_text_cross_expert.14} parent=11 // pred_fallthru
          _
        // Predicated region
        $region21: #{robust_text_cross_expert.14} parent=11 // pred_check
          %p240 = pneg %p130
        $region22: #{robust_text_cross_expert.14} parent=11 // pred_check_branch
          %242 = sbr.rel (%p240) target = $region24
        $region23: #{robust_text_cross_expert.14} parent=11 // pred_region
          %s244 = ssub.s32 6144, 6144
          %245 = vsyncadd [#allocation3], %s244
          %s246 = sshll.u32 [#allocation2], 4
          %s247 = int_to_ptr.vmem [resolvable:$true] %s246
          %252 = dma.hbm_to_vmem [thread:$0]  %s4, 6144, %s247, [#allocation3], 384, 384, 24
        $region24: #{robust_text_cross_expert.14} parent=11 // pred_fallthru
          _
        // Predicated region
        $region25: #{robust_text_cross_expert.14} parent=11 // pred_check
          %p253 = pneg %p151
        $region26: #{robust_text_cross_expert.14} parent=11 // pred_check_branch
          %255 = sbr.rel (%p253) target = $region28
        $region27: #{robust_text_cross_expert.14} parent=11 // pred_region
          _
        $region28: #{robust_text_cross_expert.14} parent=11 // pred_fallthru
          _
        // Predicated region
        $region29: #{robust_text_cross_expert.14} parent=11 // pred_check
          %p256 = pneg %p172
        $region30: #{robust_text_cross_expert.14} parent=11 // pred_check_branch
          %258 = sbr.rel (%p256) target = $region32
        $region31: #{robust_text_cross_expert.14} parent=11 // pred_region
          _
        $region32: #{robust_text_cross_expert.14} parent=11 // pred_fallthru
          _
        // Predicated region
        $region33: #{robust_text_cross_expert.14} parent=11 // pred_check
          %p259 = pneg %p193
        $region34: #{robust_text_cross_expert.14} parent=11 // pred_check_branch
          %261 = sbr.rel (%p259) target = $region36
        $region35: #{robust_text_cross_expert.14} parent=11 // pred_region
          _
        $region36: #{robust_text_cross_expert.14} parent=11 // pred_fallthru
          _
      $region12: #{robust_text_cross_expert.14} parent=5 // pred_fallthru
        _
      %p262 = scmp.lt.s32.totalorder %s15, 2
      // Predicated region
      $region37: #{robust_text_cross_expert.14} parent=5 // pred_check
        %p263 = pneg %p262
      $region38: #{robust_text_cross_expert.14} parent=5 // pred_check_branch
        %265 = sbr.rel (%p263) target = $region40
      $region39: #{robust_text_cross_expert.14} parent=5 // pred_region
        // Predicated region
        $region41: #{robust_text_cross_expert.14} parent=39 // pred_check
          %p266 = pneg %p35
        $region42: #{robust_text_cross_expert.14} parent=39 // pred_check_branch
          %268 = sbr.rel (%p266) target = $region44
        $region43: #{robust_text_cross_expert.14} parent=39 // pred_region
          %p269 = scmp.lt.s32.totalorder %s15, 1
          %s270 = scalar_select %p269, %s15, 1
          %s271 = smul.addr %s270, 8
          %s272 = scalar_lea.vmem %s0, %s271
        $region44: #{robust_text_cross_expert.14} parent=39 // pred_fallthru
          _
        // Predicated region
        $region45: #{robust_text_cross_expert.14} parent=39 // pred_check
          %p273 = pneg %p61
        $region46: #{robust_text_cross_expert.14} parent=39 // pred_check_branch
          %275 = sbr.rel (%p273) target = $region48
        $region47: #{robust_text_cross_expert.14} parent=39 // pred_region
          %p276 = scmp.lt.s32.totalorder %s15, 1
          %s277 = scalar_select %p276, %s15, 1
          %s278 = scalar_lea.vmem %s1, %s277
        $region48: #{robust_text_cross_expert.14} parent=39 // pred_fallthru
          _
      $region40: #{robust_text_cross_expert.14} parent=5 // pred_fallthru
        _
      %p279 = scmp.le.s32.totalorder 1, %s15
      %p280 = scmp.lt.s32.totalorder %s15, 3
      %p281 = pnand %p279, %p280
      %p282 = pneg %p281
      // Predicated region
      $region49: #{robust_text_cross_expert.14} parent=5 // pred_check
        _
      $region50: #{robust_text_cross_expert.14} parent=5 // pred_check_branch
        %284 = sbr.rel (%p281) target = $region52
      $region51: #{robust_text_cross_expert.14} parent=5 // pred_region
        %s285 = ssub.s32 %s15, 1
        // Predicated region
        $region53: #{robust_text_cross_expert.14} parent=51 // pred_check
          %p286 = pneg %p130
        $region54: #{robust_text_cross_expert.14} parent=51 // pred_check_branch
          %288 = sbr.rel (%p286) target = $region56
        $region55: #{robust_text_cross_expert.14} parent=51 // pred_region
          %289 = dma.done [#allocation3], 6144
        $region56: #{robust_text_cross_expert.14} parent=51 // pred_fallthru
          _
        %p290 = scmp.lt.s32.totalorder %s20, 1
        %s291 = scalar_select %p290, %s20, 1
        %s292 = smul.addr %s291, 8
        %s293 = scalar_lea.vmem %s0, %s292
        %p294 = pneg %p41
        %p295 = pneg %p38
        %p296 = scmp.lt.s32.totalorder %s20, 1
        %s297 = scalar_select %p296, %s20, 1
        %s298 = scalar_lea.vmem %s1, %s297
        %p299 = pneg %p67
        %p300 = pneg %p64
        %p301 = pneg %p88
        %p302 = pneg %p85
        %p303 = pneg %p109
        %p304 = pneg %p106
        %p305 = pneg %p130
        %p306 = pneg %p127
        %p307 = pneg %p151
        %p308 = pneg %p148
        %p309 = pneg %p172
        %p310 = pneg %p169
        %p311 = pneg %p193
        %p312 = pneg %p190
        %p313 = pneg %p219
        %p314 = pneg %p216
        %p315 = scmp.lt.s32.totalorder %s20, 1
        %s316 = scalar_select %p315, %s20, 1
        %s317 = smul.addr %s316, 8
        %s318 = scalar_lea.vmem %s8, %s317
        %p319 = scmp.lt.s32.totalorder %s20, 1
        %s320 = scalar_select %p319, %s20, 1
        %s321 = smul.addr %s320, 8
        %s322 = scalar_lea.vmem %s0, %s321
        %p323 = scmp.lt.s32.totalorder %s20, 1
        %s324 = scalar_select %p323, %s20, 1
        %s325 = scalar_lea.vmem %s1, %s324
        %p326 = scmp.lt.s32.totalorder %s20, 1
        %s327 = scalar_select %p326, %s20, 1
        %s328 = smul.addr %s327, 8
        %s329 = scalar_lea.vmem %s8, %s328
        %v330 = vld [vmem:[%s322] sm:$0xff]
        %v331 = vld [vmem:[%s2] sm:$0x1]
        %v332 = vld [vmem:[%s3] sm:$0x1]
        %333 = vadd.xlane.f32.xlu0 %v330
        %v334 = vpop.xlane.xlu0 %333
        %v335 = vrcp.pop 128.0
        %v336 = vmul.f32 %v334, %v335
        %v337 = vsub.f32 %v330, %v336
        %v338 = vmul.f32 %v337, %v337
        %339 = vadd.xlane.f32.xlu0 %v338
        %v340 = vpop.xlane.xlu0 %339
        %v341 = vmul.f32 %v340, %v335
        %v342 = vadd.f32 %v341, 1e-05
        %v343 = vrsqrt.pop %v342
        %v344 = vmul.f32 %v337, %v343
        %v346 = vlaneseq
        %v347 = vshrl.u32 %v346, 7
        %v348 = vsub.s32 0, %v347
        %v349 = vrot.slane %v331, %v348
        %v351 = vmul.f32 %v344, %v349
        %v353 = vlaneseq
        %v354 = vshrl.u32 %v353, 7
        %v355 = vsub.s32 0, %v354
        %v356 = vrot.slane %v332, %v355
        %v358 = vadd.f32 %v351, %v356
        %v359 = vld [vmem:[#allocation2] sm:$0xff]
        %v360 = vld [vmem:[#allocation2 + $0x8] sm:$0xff]
        %v361 = vld [vmem:[#allocation2 + $0x10] sm:$0xff]
        %v362 = vld [vmem:[#allocation2 + $0x18] sm:$0xff]
        %v363 = vld [vmem:[#allocation2 + $0x20] sm:$0xff]
        %v364 = vld [vmem:[#allocation2 + $0x28] sm:$0xff]
        %v365 = vld [vmem:[#allocation2 + $0x30] sm:$0xff]
        %v366 = vld [vmem:[#allocation2 + $0x38] sm:$0xff]
        %v367 = vld [vmem:[#allocation2 + $0x40] sm:$0xff]
        %v368 = vld [vmem:[#allocation2 + $0x48] sm:$0xff]
        %v369 = vld [vmem:[#allocation2 + $0x50] sm:$0xff]
        %v370 = vld [vmem:[#allocation2 + $0x58] sm:$0xff]
        %v371 = vld [vmem:[#allocation2 + $0x60] sm:$0xff]
        %v372 = vld [vmem:[#allocation2 + $0x68] sm:$0xff]
        %v373 = vld [vmem:[#allocation2 + $0x70] sm:$0xff]
        %v374 = vld [vmem:[#allocation2 + $0x78] sm:$0xff]
        %v375 = vld [vmem:[#allocation2 + $0x80] sm:$0xff]
        %v376 = vld [vmem:[#allocation2 + $0x88] sm:$0xff]
        %v377 = vld [vmem:[#allocation2 + $0x90] sm:$0xff]
        %v378 = vld [vmem:[#allocation2 + $0x98] sm:$0xff]
        %v379 = vld [vmem:[#allocation2 + $0xa0] sm:$0xff]
        %v380 = vld [vmem:[#allocation2 + $0xa8] sm:$0xff]
        %v381 = vld [vmem:[#allocation2 + $0xb0] sm:$0xff]
        %v382 = vld [vmem:[#allocation2 + $0xb8] sm:$0xff]
        %v383 = vld [vmem:[#allocation2 + $0xc0] sm:$0xff]
        %v384 = vld [vmem:[#allocation2 + $0xc8] sm:$0xff]
        %v385 = vld [vmem:[#allocation2 + $0xd0] sm:$0xff]
        %v386 = vld [vmem:[#allocation2 + $0xd8] sm:$0xff]
        %v387 = vld [vmem:[#allocation2 + $0xe0] sm:$0xff]
        %v388 = vld [vmem:[#allocation2 + $0xe8] sm:$0xff]
        %v389 = vld [vmem:[#allocation2 + $0xf0] sm:$0xff]
        %v390 = vld [vmem:[#allocation2 + $0xf8] sm:$0xff]
        %v391 = vld [vmem:[#allocation2 + $0x100] sm:$0xff]
        %v392 = vld [vmem:[#allocation2 + $0x108] sm:$0xff]
        %v393 = vld [vmem:[#allocation2 + $0x110] sm:$0xff]
        %v394 = vld [vmem:[#allocation2 + $0x118] sm:$0xff]
        %v395 = vld [vmem:[#allocation2 + $0x120] sm:$0xff]
        %v396 = vld [vmem:[#allocation2 + $0x128] sm:$0xff]
        %v397 = vld [vmem:[#allocation2 + $0x130] sm:$0xff]
        %v398 = vld [vmem:[#allocation2 + $0x138] sm:$0xff]
        %v399 = vld [vmem:[#allocation2 + $0x140] sm:$0xff]
        %v400 = vld [vmem:[#allocation2 + $0x148] sm:$0xff]
        %v401 = vld [vmem:[#allocation2 + $0x150] sm:$0xff]
        %v402 = vld [vmem:[#allocation2 + $0x158] sm:$0xff]
        %v403 = vld [vmem:[#allocation2 + $0x160] sm:$0xff]
        %v404 = vld [vmem:[#allocation2 + $0x168] sm:$0xff]
        %v405 = vld [vmem:[#allocation2 + $0x170] sm:$0xff]
        %v406 = vld [vmem:[#allocation2 + $0x178] sm:$0xff]
        %v407 = vld [vmem:[%s5] sm:$0x7]
        %v409 = vlaneseq
        %v410 = vshrl.u32 %v409, 7
        %v411 = vsub.s32 0, %v410
        %v412 = vrot.slane %v407, %v411
        %v413 = vlaneseq
        %v414 = vshrl.u32 %v413, 7
        %v415 = vsub.s32 1, %v414
        %v416 = vrot.slane %v407, %v415
        %v417 = vlaneseq
        %v418 = vshrl.u32 %v417, 7
        %v419 = vsub.s32 2, %v418
        %v420 = vrot.slane %v407, %v419
        %424 = vmatprep.subr.mxu0 %v360
        %425 = vmatpush1.msra.mxu0 %v359
        %426 = vmatprep.subr.mxu0 %v363
        %427 = vmatpush1.msra.mxu0 %v362
        %428 = vmatprep.subr.mxu0 %v366
        %429 = vmatpush1.msra.mxu0 %v365
        %430 = vmatprep.subr.mxu0 %v369
        %431 = vmatpush1.msra.mxu0 %v368
        %432 = vmatprep.subr.mxu0 %v372
        %433 = vmatpush1.msra.mxu0 %v371
        %434 = vmatprep.subr.mxu0 %v375
        %435 = vmatpush1.msra.mxu0 %v374
        %436 = vmatprep.subr.mxu0 %v378
        %437 = vmatpush1.msra.mxu0 %v377
        %438 = vmatprep.subr.mxu0 %v381
        %439 = vmatpush1.msra.mxu0 %v380
        %440 = vmatprep.subr.mxu0 %v384
        %441 = vmatpush1.msra.mxu0 %v383
        %442 = vmatprep.subr.mxu0 %v387
        %443 = vmatpush1.msra.mxu0 %v386
        %444 = vmatprep.subr.mxu0 %v390
        %445 = vmatpush1.msra.mxu0 %v389
        %446 = vmatprep.subr.mxu0 %v393
        %447 = vmatpush1.msra.mxu0 %v392
        %448 = vmatprep.subr.mxu0 %v396
        %449 = vmatpush1.msra.mxu0 %v395
        %450 = vmatprep.subr.mxu0 %v399
        %451 = vmatpush1.msra.mxu0 %v398
        %452 = vmatprep.subr.mxu0 %v402
        %453 = vmatpush1.msra.mxu0 %v401
        %454 = vmatprep.subr.mxu0 %v405
        %455 = vmatpush1.msra.mxu0 %v404
        %456 = vmatprep.subr.mxu0 0.0
        %457 = vmatpush1.msra.mxu0 0.0
        %458 = vmatprep.subr.mxu0 0.0
        %459 = vmatpush1.msra.mxu0 0.0
        %460 = vmatprep.subr.mxu0 0.0
        %461 = vmatpush1.msra.mxu0 0.0
        %462 = vmatprep.subr.mxu0 0.0
        %463 = vmatpush1.msra.mxu0 0.0
        %464 = vmatprep.subr.mxu0 0.0
        %465 = vmatpush1.msra.mxu0 0.0
        %466 = vmatprep.subr.mxu0 0.0
        %467 = vmatpush1.msra.mxu0 0.0
        %468 = vmatprep.subr.mxu0 0.0
        %469 = vmatpush1.msra.mxu0 0.0
        %470 = vmatprep.subr.mxu0 0.0
        %471 = vmatpush1.msra.mxu0 0.0
        %472 = vmatprep.subr.mxu0 0.0
        %473 = vmatpush1.msra.mxu0 0.0
        %474 = vmatprep.subr.mxu0 0.0
        %475 = vmatpush1.msra.mxu0 0.0
        %476 = vmatprep.subr.mxu0 0.0
        %477 = vmatpush1.msra.mxu0 0.0
        %478 = vmatprep.subr.mxu0 0.0
        %479 = vmatpush1.msra.mxu0 0.0
        %480 = vmatprep.subr.mxu0 0.0
        %481 = vmatpush1.msra.mxu0 0.0
        %482 = vmatprep.subr.mxu0 0.0
        %483 = vmatpush1.msra.mxu0 0.0
        %484 = vmatprep.subr.mxu0 0.0
        %485 = vmatpush1.msra.mxu0 0.0
        %486 = vmatprep.subr.mxu0 0.0
        %487 = vmatpush1.msra.mxu0 0.0
        %488 = vmatprep.mubr.f32.mxu0 0.0
        %489 = vmatmul.mubr.f32.gmra.mrb[0].mxu0 %v358
        %v490 = vpop.f32.mrb[0].mxu0
        %v491 = vadd.f32 %v412, %v490
        %v492 = vpop.f32.mrb[0].mxu0
        %v493 = vadd.f32 %v416, %v492
        %494 = vdwg.mxu0
        %495 = vmatprep.subr.mxu0 0.0
        %496 = vmatpush1.msra.mxu0 %v361
        %497 = vmatprep.subr.mxu0 0.0
        %498 = vmatpush1.msra.mxu0 %v364
        %499 = vmatprep.subr.mxu0 0.0
        %500 = vmatpush1.msra.mxu0 %v367
        %501 = vmatprep.subr.mxu0 0.0
        %502 = vmatpush1.msra.mxu0 %v370
        %503 = vmatprep.subr.mxu0 0.0
        %504 = vmatpush1.msra.mxu0 %v373
        %505 = vmatprep.subr.mxu0 0.0
        %506 = vmatpush1.msra.mxu0 %v376
        %507 = vmatprep.subr.mxu0 0.0
        %508 = vmatpush1.msra.mxu0 %v379
        %509 = vmatprep.subr.mxu0 0.0
        %510 = vmatpush1.msra.mxu0 %v382
        %511 = vmatprep.subr.mxu0 0.0
        %512 = vmatpush1.msra.mxu0 %v385
        %513 = vmatprep.subr.mxu0 0.0
        %514 = vmatpush1.msra.mxu0 %v388
        %515 = vmatprep.subr.mxu0 0.0
        %516 = vmatpush1.msra.mxu0 %v391
        %517 = vmatprep.subr.mxu0 0.0
        %518 = vmatpush1.msra.mxu0 %v394
        %519 = vmatprep.subr.mxu0 0.0
        %520 = vmatpush1.msra.mxu0 %v397
        %521 = vmatprep.subr.mxu0 0.0
        %522 = vmatpush1.msra.mxu0 %v400
        %523 = vmatprep.subr.mxu0 0.0
        %524 = vmatpush1.msra.mxu0 %v403
        %525 = vmatprep.subr.mxu0 0.0
        %526 = vmatpush1.msra.mxu0 %v406
        %527 = vmatprep.subr.mxu0 0.0
        %528 = vmatpush1.msra.mxu0 0.0
        %529 = vmatprep.subr.mxu0 0.0
        %530 = vmatpush1.msra.mxu0 0.0
        %531 = vmatprep.subr.mxu0 0.0
        %532 = vmatpush1.msra.mxu0 0.0
        %533 = vmatprep.subr.mxu0 0.0
        %534 = vmatpush1.msra.mxu0 0.0
        %535 = vmatprep.subr.mxu0 0.0
        %536 = vmatpush1.msra.mxu0 0.0
        %537 = vmatprep.subr.mxu0 0.0
        %538 = vmatpush1.msra.mxu0 0.0
        %539 = vmatprep.subr.mxu0 0.0
        %540 = vmatpush1.msra.mxu0 0.0
        %541 = vmatprep.subr.mxu0 0.0
        %542 = vmatpush1.msra.mxu0 0.0
        %543 = vmatprep.subr.mxu0 0.0
        %544 = vmatpush1.msra.mxu0 0.0
        %545 = vmatprep.subr.mxu0 0.0
        %546 = vmatpush1.msra.mxu0 0.0
        %547 = vmatprep.subr.mxu0 0.0
        %548 = vmatpush1.msra.mxu0 0.0
        %549 = vmatprep.subr.mxu0 0.0
        %550 = vmatpush1.msra.mxu0 0.0
        %551 = vmatprep.subr.mxu0 0.0
        %552 = vmatpush1.msra.mxu0 0.0
        %553 = vmatprep.subr.mxu0 0.0
        %554 = vmatpush1.msra.mxu0 0.0
        %555 = vmatprep.subr.mxu0 0.0
        %556 = vmatpush1.msra.mxu0 0.0
        %557 = vmatprep.subr.mxu0 0.0
        %558 = vmatpush1.msra.mxu0 0.0
        %559 = vmatprep.mubr.f32.mxu0 0.0
        %560 = vmatmul.mubr.f32.gmra.mrb[0].mxu0 %v358
        %v561 = vpop.f32.mrb[0].mxu0
        %v562 = vadd.f32 %v420, %v561
        %v563 = vpop.f32.mrb[0].mxu0
        %564 = vdwg.mxu0
        %v565 = vld [vmem:[%s325] sm:$0x1]
        %vm566 = vcmp.ne.s32.totalorder %v565, 0
        %v567 = vmul.f32 %v491, 0.17677669
        %vm568 = vcmask 261120
        %v570 = vsel %vm568, %v567, 0
        %v573 = vsel %vm568, %v493, 0
        %575 = vmatprep.subr.mxu0 0.0
        %576 = vmatpush1.xpose.msra.mxu0 %v573
        %577 = vmatprep.subr.mxu0 0.0
        %578 = vmatpush1.xpose.msra.mxu0 0.0
        %579 = vmatprep.subr.mxu0 0.0
        %580 = vmatpush1.xpose.msra.mxu0 0.0
        %581 = vmatprep.subr.mxu0 0.0
        %582 = vmatpush1.xpose.msra.mxu0 0.0
        %583 = vmatprep.subr.mxu0 0.0
        %584 = vmatpush1.xpose.msra.mxu0 0.0
        %585 = vmatprep.subr.mxu0 0.0
        %586 = vmatpush1.xpose.msra.mxu0 0.0
        %587 = vmatprep.subr.mxu0 0.0
        %588 = vmatpush1.xpose.msra.mxu0 0.0
        %589 = vmatprep.subr.mxu0 0.0
        %590 = vmatpush1.xpose.msra.mxu0 0.0
        %591 = vmatprep.subr.mxu0 0.0
        %592 = vmatpush1.xpose.msra.mxu0 0.0
        %593 = vmatprep.subr.mxu0 0.0
        %594 = vmatpush1.xpose.msra.mxu0 0.0
        %595 = vmatprep.subr.mxu0 0.0
        %596 = vmatpush1.xpose.msra.mxu0 0.0
        %597 = vmatprep.subr.mxu0 0.0
        %598 = vmatpush1.xpose.msra.mxu0 0.0
        %599 = vmatprep.subr.mxu0 0.0
        %600 = vmatpush1.xpose.msra.mxu0 0.0
        %601 = vmatprep.subr.mxu0 0.0
        %602 = vmatpush1.xpose.msra.mxu0 0.0
        %603 = vmatprep.subr.mxu0 0.0
        %604 = vmatpush1.xpose.msra.mxu0 0.0
        %605 = vmatprep.subr.mxu0 0.0
        %606 = vmatpush1.xpose.msra.mxu0 0.0
        %607 = vmatprep.subr.mxu0 0.0
        %608 = vmatpush1.xpose.msra.mxu0 0.0
        %609 = vmatprep.subr.mxu0 0.0
        %610 = vmatpush1.xpose.msra.mxu0 0.0
        %611 = vmatprep.subr.mxu0 0.0
        %612 = vmatpush1.xpose.msra.mxu0 0.0
        %613 = vmatprep.subr.mxu0 0.0
        %614 = vmatpush1.xpose.msra.mxu0 0.0
        %615 = vmatprep.subr.mxu0 0.0
        %616 = vmatpush1.xpose.msra.mxu0 0.0
        %617 = vmatprep.subr.mxu0 0.0
        %618 = vmatpush1.xpose.msra.mxu0 0.0
        %619 = vmatprep.subr.mxu0 0.0
        %620 = vmatpush1.xpose.msra.mxu0 0.0
        %621 = vmatprep.subr.mxu0 0.0
        %622 = vmatpush1.xpose.msra.mxu0 0.0
        %623 = vmatprep.subr.mxu0 0.0
        %624 = vmatpush1.xpose.msra.mxu0 0.0
        %625 = vmatprep.subr.mxu0 0.0
        %626 = vmatpush1.xpose.msra.mxu0 0.0
        %627 = vmatprep.subr.mxu0 0.0
        %628 = vmatpush1.xpose.msra.mxu0 0.0
        %629 = vmatprep.subr.mxu0 0.0
        %630 = vmatpush1.xpose.msra.mxu0 0.0
        %631 = vmatprep.subr.mxu0 0.0
        %632 = vmatpush1.xpose.msra.mxu0 0.0
        %633 = vmatprep.subr.mxu0 0.0
        %634 = vmatpush1.xpose.msra.mxu0 0.0
        %635 = vmatprep.subr.mxu0 0.0
        %636 = vmatpush1.xpose.msra.mxu0 0.0
        %637 = vmatprep.subr.mxu0 0.0
        %638 = vmatpush1.xpose.msra.mxu0 0.0
        %639 = vmatprep.mubr.f32.mxu0 0.0
        %640 = vmatmul.mubr.f32.gmra.mrb[0].mxu0 %v570
        %v641 = vpop.f32.mrb[0].mxu0
        %v642 = vadd.f32 0.0, %v641
        %v643 = vpop.f32.mrb[0].mxu0
        %644 = vdwg.mxu0
        %v645 = vsel %vm566, 1, 0
        %v646 = vlaneseq
        %v647 = vshrl.u32 %v646, 7
        %v648 = vsub.s32 0, %v647
        %v649 = vrot.slane %v645, %v648
        %vm650 = vcmp.eq.s32.totalorder %v649, 1
        %v651 = vsel %vm650, -1e+30, %v642
        %vm652 = vcmask 64512
        %v653 = vsel %vm652, %v651, -inf
        %654 = vmax.xlane.f32.xlu0 %v653
        %v655 = vpop.xlane.xlu0 %654
        %v656 = vsub.f32 %v651, %v655
        %v657 = vmul.f32 %v656, 1.442695
        %v658 = vpow.pop %v657
        %v659 = vsel %vm652, %v658, 0.0
        %660 = vadd.xlane.f32.xlu0 %v659
        %v661 = vpop.xlane.xlu0 %660
        %v662 = vrcp.pop %v661
        %v663 = vmul.f32 %v658, %v662
        %v665 = vsel %vm652, %v663, 0
        %667 = vmatprep.subr.mxu0 0.0
        %668 = vmatpush1.msra.mxu0 %v562
        %669 = vmatprep.subr.mxu0 0.0
        %670 = vmatpush1.msra.mxu0 0.0
        %671 = vmatprep.subr.mxu0 0.0
        %672 = vmatpush1.msra.mxu0 0.0
        %673 = vmatprep.subr.mxu0 0.0
        %674 = vmatpush1.msra.mxu0 0.0
        %675 = vmatprep.subr.mxu0 0.0
        %676 = vmatpush1.msra.mxu0 0.0
        %677 = vmatprep.subr.mxu0 0.0
        %678 = vmatpush1.msra.mxu0 0.0
        %679 = vmatprep.subr.mxu0 0.0
        %680 = vmatpush1.msra.mxu0 0.0
        %681 = vmatprep.subr.mxu0 0.0
        %682 = vmatpush1.msra.mxu0 0.0
        %683 = vmatprep.subr.mxu0 0.0
        %684 = vmatpush1.msra.mxu0 0.0
        %685 = vmatprep.subr.mxu0 0.0
        %686 = vmatpush1.msra.mxu0 0.0
        %687 = vmatprep.subr.mxu0 0.0
        %688 = vmatpush1.msra.mxu0 0.0
        %689 = vmatprep.subr.mxu0 0.0
        %690 = vmatpush1.msra.mxu0 0.0
        %691 = vmatprep.subr.mxu0 0.0
        %692 = vmatpush1.msra.mxu0 0.0
        %693 = vmatprep.subr.mxu0 0.0
        %694 = vmatpush1.msra.mxu0 0.0
        %695 = vmatprep.subr.mxu0 0.0
        %696 = vmatpush1.msra.mxu0 0.0
        %697 = vmatprep.subr.mxu0 0.0
        %698 = vmatpush1.msra.mxu0 0.0
        %699 = vmatprep.subr.mxu0 0.0
        %700 = vmatpush1.msra.mxu0 0.0
        %701 = vmatprep.subr.mxu0 0.0
        %702 = vmatpush1.msra.mxu0 0.0
        %703 = vmatprep.subr.mxu0 0.0
        %704 = vmatpush1.msra.mxu0 0.0
        %705 = vmatprep.subr.mxu0 0.0
        %706 = vmatpush1.msra.mxu0 0.0
        %707 = vmatprep.subr.mxu0 0.0
        %708 = vmatpush1.msra.mxu0 0.0
        %709 = vmatprep.subr.mxu0 0.0
        %710 = vmatpush1.msra.mxu0 0.0
        %711 = vmatprep.subr.mxu0 0.0
        %712 = vmatpush1.msra.mxu0 0.0
        %713 = vmatprep.subr.mxu0 0.0
        %714 = vmatpush1.msra.mxu0 0.0
        %715 = vmatprep.subr.mxu0 0.0
        %716 = vmatpush1.msra.mxu0 0.0
        %717 = vmatprep.subr.mxu0 0.0
        %718 = vmatpush1.msra.mxu0 0.0
        %719 = vmatprep.subr.mxu0 0.0
        %720 = vmatpush1.msra.mxu0 0.0
        %721 = vmatprep.subr.mxu0 0.0
        %722 = vmatpush1.msra.mxu0 0.0
        %723 = vmatprep.subr.mxu0 0.0
        %724 = vmatpush1.msra.mxu0 0.0
        %725 = vmatprep.subr.mxu0 0.0
        %726 = vmatpush1.msra.mxu0 0.0
        %727 = vmatprep.subr.mxu0 0.0
        %728 = vmatpush1.msra.mxu0 0.0
        %729 = vmatprep.subr.mxu0 0.0
        %730 = vmatpush1.msra.mxu0 0.0
        %731 = vmatprep.mubr.f32.mxu0 0.0
        %732 = vmatmul.mubr.f32.gmra.mrb[0].mxu0 %v665
        %v733 = vpop.f32.mrb[0].mxu0
        %v734 = vadd.f32 0.0, %v733
        %v735 = vpop.f32.mrb[0].mxu0
        %736 = vdwg.mxu0
        %v737 = vld [vmem:[%s6] sm:$0xff]
        %v738 = vld [vmem:[%s6 + $0x8] sm:$0xff]
        %v739 = vld [vmem:[%s6 + $0x10] sm:$0xff]
        %v740 = vld [vmem:[%s6 + $0x18] sm:$0xff]
        %741 = vrot.lane.b32.xlu0 %v567, 96
        %v742 = vpop.permute.xlu0 %741
        %743 = vrot.lane.b32.xlu0 %v493, 96
        %v744 = vpop.permute.xlu0 %743
        %v745 = vsel %vm568, %v742, 0
        %v747 = vsel %vm568, %v744, 0
        %749 = vmatprep.subr.mxu0 0.0
        %750 = vmatpush1.xpose.msra.mxu0 %v747
        %751 = vmatprep.subr.mxu0 0.0
        %752 = vmatpush1.xpose.msra.mxu0 0.0
        %753 = vmatprep.subr.mxu0 0.0
        %754 = vmatpush1.xpose.msra.mxu0 0.0
        %755 = vmatprep.subr.mxu0 0.0
        %756 = vmatpush1.xpose.msra.mxu0 0.0
        %757 = vmatprep.subr.mxu0 0.0
        %758 = vmatpush1.xpose.msra.mxu0 0.0
        %759 = vmatprep.subr.mxu0 0.0
        %760 = vmatpush1.xpose.msra.mxu0 0.0
        %761 = vmatprep.subr.mxu0 0.0
        %762 = vmatpush1.xpose.msra.mxu0 0.0
        %763 = vmatprep.subr.mxu0 0.0
        %764 = vmatpush1.xpose.msra.mxu0 0.0
        %765 = vmatprep.subr.mxu0 0.0
        %766 = vmatpush1.xpose.msra.mxu0 0.0
        %767 = vmatprep.subr.mxu0 0.0
        %768 = vmatpush1.xpose.msra.mxu0 0.0
        %769 = vmatprep.subr.mxu0 0.0
        %770 = vmatpush1.xpose.msra.mxu0 0.0
        %771 = vmatprep.subr.mxu0 0.0
        %772 = vmatpush1.xpose.msra.mxu0 0.0
        %773 = vmatprep.subr.mxu0 0.0
        %774 = vmatpush1.xpose.msra.mxu0 0.0
        %775 = vmatprep.subr.mxu0 0.0
        %776 = vmatpush1.xpose.msra.mxu0 0.0
        %777 = vmatprep.subr.mxu0 0.0
        %778 = vmatpush1.xpose.msra.mxu0 0.0
        %779 = vmatprep.subr.mxu0 0.0
        %780 = vmatpush1.xpose.msra.mxu0 0.0
        %781 = vmatprep.subr.mxu0 0.0
        %782 = vmatpush1.xpose.msra.mxu0 0.0
        %783 = vmatprep.subr.mxu0 0.0
        %784 = vmatpush1.xpose.msra.mxu0 0.0
        %785 = vmatprep.subr.mxu0 0.0
        %786 = vmatpush1.xpose.msra.mxu0 0.0
        %787 = vmatprep.subr.mxu0 0.0
        %788 = vmatpush1.xpose.msra.mxu0 0.0
        %789 = vmatprep.subr.mxu0 0.0
        %790 = vmatpush1.xpose.msra.mxu0 0.0
        %791 = vmatprep.subr.mxu0 0.0
        %792 = vmatpush1.xpose.msra.mxu0 0.0
        %793 = vmatprep.subr.mxu0 0.0
        %794 = vmatpush1.xpose.msra.mxu0 0.0
        %795 = vmatprep.subr.mxu0 0.0
        %796 = vmatpush1.xpose.msra.mxu0 0.0
        %797 = vmatprep.subr.mxu0 0.0
        %798 = vmatpush1.xpose.msra.mxu0 0.0
        %799 = vmatprep.subr.mxu0 0.0
        %800 = vmatpush1.xpose.msra.mxu0 0.0
        %801 = vmatprep.subr.mxu0 0.0
        %802 = vmatpush1.xpose.msra.mxu0 0.0
        %803 = vmatprep.subr.mxu0 0.0
        %804 = vmatpush1.xpose.msra.mxu0 0.0
        %805 = vmatprep.subr.mxu0 0.0
        %806 = vmatpush1.xpose.msra.mxu0 0.0
        %807 = vmatprep.subr.mxu0 0.0
        %808 = vmatpush1.xpose.msra.mxu0 0.0
        %809 = vmatprep.subr.mxu0 0.0
        %810 = vmatpush1.xpose.msra.mxu0 0.0
        %811 = vmatprep.subr.mxu0 0.0
        %812 = vmatpush1.xpose.msra.mxu0 0.0
        %813 = vmatprep.mubr.f32.mxu0 0.0
        %814 = vmatmul.mubr.f32.gmra.mrb[0].mxu0 %v745
        %v815 = vpop.f32.mrb[0].mxu0
        %v816 = vadd.f32 0.0, %v815
        %v817 = vpop.f32.mrb[0].mxu0
        %818 = vdwg.mxu0
        %v819 = vsel %vm650, -1e+30, %v816
        %v820 = vsel %vm652, %v819, -inf
        %821 = vmax.xlane.f32.xlu0 %v820
        %v822 = vpop.xlane.xlu0 %821
        %v823 = vsub.f32 %v819, %v822
        %v824 = vmul.f32 %v823, 1.442695
        %v825 = vpow.pop %v824
        %v826 = vsel %vm652, %v825, 0.0
        %827 = vadd.xlane.f32.xlu0 %v826
        %v828 = vpop.xlane.xlu0 %827
        %v829 = vrcp.pop %v828
        %v830 = vmul.f32 %v825, %v829
        %832 = vrot.lane.b32.xlu0 %v562, 96
        %v833 = vpop.permute.xlu0 %832
        %v836 = vsel %vm652, %v830, 0
        %838 = vmatprep.subr.mxu0 0.0
        %839 = vmatpush1.msra.mxu0 %v833
        %840 = vmatprep.subr.mxu0 0.0
        %841 = vmatpush1.msra.mxu0 0.0
        %842 = vmatprep.subr.mxu0 0.0
        %843 = vmatpush1.msra.mxu0 0.0
        %844 = vmatprep.subr.mxu0 0.0
        %845 = vmatpush1.msra.mxu0 0.0
        %846 = vmatprep.subr.mxu0 0.0
        %847 = vmatpush1.msra.mxu0 0.0
        %848 = vmatprep.subr.mxu0 0.0
        %849 = vmatpush1.msra.mxu0 0.0
        %850 = vmatprep.subr.mxu0 0.0
        %851 = vmatpush1.msra.mxu0 0.0
        %852 = vmatprep.subr.mxu0 0.0
        %853 = vmatpush1.msra.mxu0 0.0
        %854 = vmatprep.subr.mxu0 0.0
        %855 = vmatpush1.msra.mxu0 0.0
        %856 = vmatprep.subr.mxu0 0.0
        %857 = vmatpush1.msra.mxu0 0.0
        %858 = vmatprep.subr.mxu0 0.0
        %859 = vmatpush1.msra.mxu0 0.0
        %860 = vmatprep.subr.mxu0 0.0
        %861 = vmatpush1.msra.mxu0 0.0
        %862 = vmatprep.subr.mxu0 0.0
        %863 = vmatpush1.msra.mxu0 0.0
        %864 = vmatprep.subr.mxu0 0.0
        %865 = vmatpush1.msra.mxu0 0.0
        %866 = vmatprep.subr.mxu0 0.0
        %867 = vmatpush1.msra.mxu0 0.0
        %868 = vmatprep.subr.mxu0 0.0
        %869 = vmatpush1.msra.mxu0 0.0
        %870 = vmatprep.subr.mxu0 0.0
        %871 = vmatpush1.msra.mxu0 0.0
        %872 = vmatprep.subr.mxu0 0.0
        %873 = vmatpush1.msra.mxu0 0.0
        %874 = vmatprep.subr.mxu0 0.0
        %875 = vmatpush1.msra.mxu0 0.0
        %876 = vmatprep.subr.mxu0 0.0
        %877 = vmatpush1.msra.mxu0 0.0
        %878 = vmatprep.subr.mxu0 0.0
        %879 = vmatpush1.msra.mxu0 0.0
        %880 = vmatprep.subr.mxu0 0.0
        %881 = vmatpush1.msra.mxu0 0.0
        %882 = vmatprep.subr.mxu0 0.0
        %883 = vmatpush1.msra.mxu0 0.0
        %884 = vmatprep.subr.mxu0 0.0
        %885 = vmatpush1.msra.mxu0 0.0
        %886 = vmatprep.subr.mxu0 0.0
        %887 = vmatpush1.msra.mxu0 0.0
        %888 = vmatprep.subr.mxu0 0.0
        %889 = vmatpush1.msra.mxu0 0.0
        %890 = vmatprep.subr.mxu0 0.0
        %891 = vmatpush1.msra.mxu0 0.0
        %892 = vmatprep.subr.mxu0 0.0
        %893 = vmatpush1.msra.mxu0 0.0
        %894 = vmatprep.subr.mxu0 0.0
        %895 = vmatpush1.msra.mxu0 0.0
        %896 = vmatprep.subr.mxu0 0.0
        %897 = vmatpush1.msra.mxu0 0.0
        %898 = vmatprep.subr.mxu0 0.0
        %899 = vmatpush1.msra.mxu0 0.0
        %900 = vmatprep.subr.mxu0 0.0
        %901 = vmatpush1.msra.mxu0 0.0
        %902 = vmatprep.mubr.f32.mxu0 0.0
        %903 = vmatmul.mubr.f32.gmra.mrb[0].mxu0 %v836
        %v904 = vpop.f32.mrb[0].mxu0
        %v905 = vadd.f32 0.0, %v904
        %v906 = vpop.f32.mrb[0].mxu0
        %907 = vdwg.mxu0
        %v908 = vld [vmem:[%s6 + $0x20] sm:$0xff]
        %v909 = vld [vmem:[%s6 + $0x28] sm:$0xff]
        %v910 = vld [vmem:[%s6 + $0x30] sm:$0xff]
        %v911 = vld [vmem:[%s6 + $0x38] sm:$0xff]
        %v913 = vsel %vm568, %v905, 0
        %915 = vmatprep.subr.mxu0 0.0
        %916 = vmatpush1.msra.mxu0 %v908
        %917 = vmatprep.subr.mxu0 0.0
        %918 = vmatpush1.msra.mxu0 %v909
        %919 = vmatprep.subr.mxu0 0.0
        %920 = vmatpush1.msra.mxu0 %v910
        %921 = vmatprep.subr.mxu0 0.0
        %922 = vmatpush1.msra.mxu0 %v911
        %923 = vmatprep.subr.mxu0 0.0
        %924 = vmatpush1.msra.mxu0 0.0
        %925 = vmatprep.subr.mxu0 0.0
        %926 = vmatpush1.msra.mxu0 0.0
        %927 = vmatprep.subr.mxu0 0.0
        %928 = vmatpush1.msra.mxu0 0.0
        %929 = vmatprep.subr.mxu0 0.0
        %930 = vmatpush1.msra.mxu0 0.0
        %931 = vmatprep.subr.mxu0 0.0
        %932 = vmatpush1.msra.mxu0 0.0
        %933 = vmatprep.subr.mxu0 0.0
        %934 = vmatpush1.msra.mxu0 0.0
        %935 = vmatprep.subr.mxu0 0.0
        %936 = vmatpush1.msra.mxu0 0.0
        %937 = vmatprep.subr.mxu0 0.0
        %938 = vmatpush1.msra.mxu0 0.0
        %939 = vmatprep.subr.mxu0 0.0
        %940 = vmatpush1.msra.mxu0 0.0
        %941 = vmatprep.subr.mxu0 0.0
        %942 = vmatpush1.msra.mxu0 0.0
        %943 = vmatprep.subr.mxu0 0.0
        %944 = vmatpush1.msra.mxu0 0.0
        %945 = vmatprep.subr.mxu0 0.0
        %946 = vmatpush1.msra.mxu0 0.0
        %947 = vmatprep.subr.mxu0 0.0
        %948 = vmatpush1.msra.mxu0 0.0
        %949 = vmatprep.subr.mxu0 0.0
        %950 = vmatpush1.msra.mxu0 0.0
        %951 = vmatprep.subr.mxu0 0.0
        %952 = vmatpush1.msra.mxu0 0.0
        %953 = vmatprep.subr.mxu0 0.0
        %954 = vmatpush1.msra.mxu0 0.0
        %955 = vmatprep.subr.mxu0 0.0
        %956 = vmatpush1.msra.mxu0 0.0
        %957 = vmatprep.subr.mxu0 0.0
        %958 = vmatpush1.msra.mxu0 0.0
        %959 = vmatprep.subr.mxu0 0.0
        %960 = vmatpush1.msra.mxu0 0.0
        %961 = vmatprep.subr.mxu0 0.0
        %962 = vmatpush1.msra.mxu0 0.0
        %963 = vmatprep.subr.mxu0 0.0
        %964 = vmatpush1.msra.mxu0 0.0
        %965 = vmatprep.subr.mxu0 0.0
        %966 = vmatpush1.msra.mxu0 0.0
        %967 = vmatprep.subr.mxu0 0.0
        %968 = vmatpush1.msra.mxu0 0.0
        %969 = vmatprep.subr.mxu0 0.0
        %970 = vmatpush1.msra.mxu0 0.0
        %971 = vmatprep.subr.mxu0 0.0
        %972 = vmatpush1.msra.mxu0 0.0
        %973 = vmatprep.subr.mxu0 0.0
        %974 = vmatpush1.msra.mxu0 0.0
        %975 = vmatprep.subr.mxu0 0.0
        %976 = vmatpush1.msra.mxu0 0.0
        %977 = vmatprep.subr.mxu0 0.0
        %978 = vmatpush1.msra.mxu0 0.0
        %979 = vmatprep.mubr.f32.mxu0 0.0
        %980 = vmatmul.mubr.f32.gmra.mrb[0].mxu0 %v913
        %v981 = vpop.f32.mrb[0].mxu0
        %v982 = vadd.f32 0.0, %v981
        %v983 = vpop.f32.mrb[0].mxu0
        %984 = vdwg.mxu0
        %v986 = vsel %vm568, %v734, 0
        %988 = vmatprep.subr.mxu0 0.0
        %989 = vmatpush1.msra.mxu0 %v737
        %990 = vmatprep.subr.mxu0 0.0
        %991 = vmatpush1.msra.mxu0 %v738
        %992 = vmatprep.subr.mxu0 0.0
        %993 = vmatpush1.msra.mxu0 %v739
        %994 = vmatprep.subr.mxu0 0.0
        %995 = vmatpush1.msra.mxu0 %v740
        %996 = vmatprep.subr.mxu0 0.0
        %997 = vmatpush1.msra.mxu0 0.0
        %998 = vmatprep.subr.mxu0 0.0
        %999 = vmatpush1.msra.mxu0 0.0
        %1000 = vmatprep.subr.mxu0 0.0
        %1001 = vmatpush1.msra.mxu0 0.0
        %1002 = vmatprep.subr.mxu0 0.0
        %1003 = vmatpush1.msra.mxu0 0.0
        %1004 = vmatprep.subr.mxu0 0.0
        %1005 = vmatpush1.msra.mxu0 0.0
        %1006 = vmatprep.subr.mxu0 0.0
        %1007 = vmatpush1.msra.mxu0 0.0
        %1008 = vmatprep.subr.mxu0 0.0
        %1009 = vmatpush1.msra.mxu0 0.0
        %1010 = vmatprep.subr.mxu0 0.0
        %1011 = vmatpush1.msra.mxu0 0.0
        %1012 = vmatprep.subr.mxu0 0.0
        %1013 = vmatpush1.msra.mxu0 0.0
        %1014 = vmatprep.subr.mxu0 0.0
        %1015 = vmatpush1.msra.mxu0 0.0
        %1016 = vmatprep.subr.mxu0 0.0
        %1017 = vmatpush1.msra.mxu0 0.0
        %1018 = vmatprep.subr.mxu0 0.0
        %1019 = vmatpush1.msra.mxu0 0.0
        %1020 = vmatprep.subr.mxu0 0.0
        %1021 = vmatpush1.msra.mxu0 0.0
        %1022 = vmatprep.subr.mxu0 0.0
        %1023 = vmatpush1.msra.mxu0 0.0
        %1024 = vmatprep.subr.mxu0 0.0
        %1025 = vmatpush1.msra.mxu0 0.0
        %1026 = vmatprep.subr.mxu0 0.0
        %1027 = vmatpush1.msra.mxu0 0.0
        %1028 = vmatprep.subr.mxu0 0.0
        %1029 = vmatpush1.msra.mxu0 0.0
        %1030 = vmatprep.subr.mxu0 0.0
        %1031 = vmatpush1.msra.mxu0 0.0
        %1032 = vmatprep.subr.mxu0 0.0
        %1033 = vmatpush1.msra.mxu0 0.0
        %1034 = vmatprep.subr.mxu0 0.0
        %1035 = vmatpush1.msra.mxu0 0.0
        %1036 = vmatprep.subr.mxu0 0.0
        %1037 = vmatpush1.msra.mxu0 0.0
        %1038 = vmatprep.subr.mxu0 0.0
        %1039 = vmatpush1.msra.mxu0 0.0
        %1040 = vmatprep.subr.mxu0 0.0
        %1041 = vmatpush1.msra.mxu0 0.0
        %1042 = vmatprep.subr.mxu0 0.0
        %1043 = vmatpush1.msra.mxu0 0.0
        %1044 = vmatprep.subr.mxu0 0.0
        %1045 = vmatpush1.msra.mxu0 0.0
        %1046 = vmatprep.subr.mxu0 0.0
        %1047 = vmatpush1.msra.mxu0 0.0
        %1048 = vmatprep.subr.mxu0 0.0
        %1049 = vmatpush1.msra.mxu0 0.0
        %1050 = vmatprep.subr.mxu0 0.0
        %1051 = vmatpush1.msra.mxu0 0.0
        %1052 = vmatprep.mubr.f32.mxu0 0.0
        %1053 = vmatmul.mubr.f32.gmra.mrb[0].mxu0 %v986
        %v1054 = vpop.f32.mrb[0].mxu0
        %v1055 = vadd.f32 %v982, %v1054
        %v1056 = vpop.f32.mrb[0].mxu0
        %1057 = vdwg.mxu0
        %1058 = vrot.lane.b32.xlu0 %v567, 64
        %v1059 = vpop.permute.xlu0 %1058
        %1060 = vrot.lane.b32.xlu0 %v493, 64
        %v1061 = vpop.permute.xlu0 %1060
        %v1062 = vsel %vm568, %v1059, 0
        %v1064 = vsel %vm568, %v1061, 0
        %1066 = vmatprep.subr.mxu0 0.0
        %1067 = vmatpush1.xpose.msra.mxu0 %v1064
        %1068 = vmatprep.subr.mxu0 0.0
        %1069 = vmatpush1.xpose.msra.mxu0 0.0
        %1070 = vmatprep.subr.mxu0 0.0
        %1071 = vmatpush1.xpose.msra.mxu0 0.0
        %1072 = vmatprep.subr.mxu0 0.0
        %1073 = vmatpush1.xpose.msra.mxu0 0.0
        %1074 = vmatprep.subr.mxu0 0.0
        %1075 = vmatpush1.xpose.msra.mxu0 0.0
        %1076 = vmatprep.subr.mxu0 0.0
        %1077 = vmatpush1.xpose.msra.mxu0 0.0
        %1078 = vmatprep.subr.mxu0 0.0
        %1079 = vmatpush1.xpose.msra.mxu0 0.0
        %1080 = vmatprep.subr.mxu0 0.0
        %1081 = vmatpush1.xpose.msra.mxu0 0.0
        %1082 = vmatprep.subr.mxu0 0.0
        %1083 = vmatpush1.xpose.msra.mxu0 0.0
        %1084 = vmatprep.subr.mxu0 0.0
        %1085 = vmatpush1.xpose.msra.mxu0 0.0
        %1086 = vmatprep.subr.mxu0 0.0
        %1087 = vmatpush1.xpose.msra.mxu0 0.0
        %1088 = vmatprep.subr.mxu0 0.0
        %1089 = vmatpush1.xpose.msra.mxu0 0.0
        %1090 = vmatprep.subr.mxu0 0.0
        %1091 = vmatpush1.xpose.msra.mxu0 0.0
        %1092 = vmatprep.subr.mxu0 0.0
        %1093 = vmatpush1.xpose.msra.mxu0 0.0
        %1094 = vmatprep.subr.mxu0 0.0
        %1095 = vmatpush1.xpose.msra.mxu0 0.0
        %1096 = vmatprep.subr.mxu0 0.0
        %1097 = vmatpush1.xpose.msra.mxu0 0.0
        %1098 = vmatprep.subr.mxu0 0.0
        %1099 = vmatpush1.xpose.msra.mxu0 0.0
        %1100 = vmatprep.subr.mxu0 0.0
        %1101 = vmatpush1.xpose.msra.mxu0 0.0
        %1102 = vmatprep.subr.mxu0 0.0
        %1103 = vmatpush1.xpose.msra.mxu0 0.0
        %1104 = vmatprep.subr.mxu0 0.0
        %1105 = vmatpush1.xpose.msra.mxu0 0.0
        %1106 = vmatprep.subr.mxu0 0.0
        %1107 = vmatpush1.xpose.msra.mxu0 0.0
        %1108 = vmatprep.subr.mxu0 0.0
        %1109 = vmatpush1.xpose.msra.mxu0 0.0
        %1110 = vmatprep.subr.mxu0 0.0
        %1111 = vmatpush1.xpose.msra.mxu0 0.0
        %1112 = vmatprep.subr.mxu0 0.0
        %1113 = vmatpush1.xpose.msra.mxu0 0.0
        %1114 = vmatprep.subr.mxu0 0.0
        %1115 = vmatpush1.xpose.msra.mxu0 0.0
        %1116 = vmatprep.subr.mxu0 0.0
        %1117 = vmatpush1.xpose.msra.mxu0 0.0
        %1118 = vmatprep.subr.mxu0 0.0
        %1119 = vmatpush1.xpose.msra.mxu0 0.0
        %1120 = vmatprep.subr.mxu0 0.0
        %1121 = vmatpush1.xpose.msra.mxu0 0.0
        %1122 = vmatprep.subr.mxu0 0.0
        %1123 = vmatpush1.xpose.msra.mxu0 0.0
        %1124 = vmatprep.subr.mxu0 0.0
        %1125 = vmatpush1.xpose.msra.mxu0 0.0
        %1126 = vmatprep.subr.mxu0 0.0
        %1127 = vmatpush1.xpose.msra.mxu0 0.0
        %1128 = vmatprep.subr.mxu0 0.0
        %1129 = vmatpush1.xpose.msra.mxu0 0.0
        %1130 = vmatprep.mubr.f32.mxu0 0.0
        %1131 = vmatmul.mubr.f32.gmra.mrb[0].mxu0 %v1062
        %v1132 = vpop.f32.mrb[0].mxu0
        %v1133 = vadd.f32 0.0, %v1132
        %v1134 = vpop.f32.mrb[0].mxu0
        %1135 = vdwg.mxu0
        %v1136 = vsel %vm650, -1e+30, %v1133
        %v1137 = vsel %vm652, %v1136, -inf
        %1138 = vmax.xlane.f32.xlu0 %v1137
        %v1139 = vpop.xlane.xlu0 %1138
        %v1140 = vsub.f32 %v1136, %v1139
        %v1141 = vmul.f32 %v1140, 1.442695
        %v1142 = vpow.pop %v1141
        %v1143 = vsel %vm652, %v1142, 0.0
        %1144 = vadd.xlane.f32.xlu0 %v1143
        %v1145 = vpop.xlane.xlu0 %1144
        %v1146 = vrcp.pop %v1145
        %v1147 = vmul.f32 %v1142, %v1146
        %1148 = vrot.lane.b32.xlu0 %v562, 64
        %v1149 = vpop.permute.xlu0 %1148
        %v1152 = vsel %vm652, %v1147, 0
        %1154 = vmatprep.subr.mxu0 0.0
        %1155 = vmatpush1.msra.mxu0 %v1149
        %1156 = vmatprep.subr.mxu0 0.0
        %1157 = vmatpush1.msra.mxu0 0.0
        %1158 = vmatprep.subr.mxu0 0.0
        %1159 = vmatpush1.msra.mxu0 0.0
        %1160 = vmatprep.subr.mxu0 0.0
        %1161 = vmatpush1.msra.mxu0 0.0
        %1162 = vmatprep.subr.mxu0 0.0
        %1163 = vmatpush1.msra.mxu0 0.0
        %1164 = vmatprep.subr.mxu0 0.0
        %1165 = vmatpush1.msra.mxu0 0.0
        %1166 = vmatprep.subr.mxu0 0.0
        %1167 = vmatpush1.msra.mxu0 0.0
        %1168 = vmatprep.subr.mxu0 0.0
        %1169 = vmatpush1.msra.mxu0 0.0
        %1170 = vmatprep.subr.mxu0 0.0
        %1171 = vmatpush1.msra.mxu0 0.0
        %1172 = vmatprep.subr.mxu0 0.0
        %1173 = vmatpush1.msra.mxu0 0.0
        %1174 = vmatprep.subr.mxu0 0.0
        %1175 = vmatpush1.msra.mxu0 0.0
        %1176 = vmatprep.subr.mxu0 0.0
        %1177 = vmatpush1.msra.mxu0 0.0
        %1178 = vmatprep.subr.mxu0 0.0
        %1179 = vmatpush1.msra.mxu0 0.0
        %1180 = vmatprep.subr.mxu0 0.0
        %1181 = vmatpush1.msra.mxu0 0.0
        %1182 = vmatprep.subr.mxu0 0.0
        %1183 = vmatpush1.msra.mxu0 0.0
        %1184 = vmatprep.subr.mxu0 0.0
        %1185 = vmatpush1.msra.mxu0 0.0
        %1186 = vmatprep.subr.mxu0 0.0
        %1187 = vmatpush1.msra.mxu0 0.0
        %1188 = vmatprep.subr.mxu0 0.0
        %1189 = vmatpush1.msra.mxu0 0.0
        %1190 = vmatprep.subr.mxu0 0.0
        %1191 = vmatpush1.msra.mxu0 0.0
        %1192 = vmatprep.subr.mxu0 0.0
        %1193 = vmatpush1.msra.mxu0 0.0
        %1194 = vmatprep.subr.mxu0 0.0
        %1195 = vmatpush1.msra.mxu0 0.0
        %1196 = vmatprep.subr.mxu0 0.0
        %1197 = vmatpush1.msra.mxu0 0.0
        %1198 = vmatprep.subr.mxu0 0.0
        %1199 = vmatpush1.msra.mxu0 0.0
        %1200 = vmatprep.subr.mxu0 0.0
        %1201 = vmatpush1.msra.mxu0 0.0
        %1202 = vmatprep.subr.mxu0 0.0
        %1203 = vmatpush1.msra.mxu0 0.0
        %1204 = vmatprep.subr.mxu0 0.0
        %1205 = vmatpush1.msra.mxu0 0.0
        %1206 = vmatprep.subr.mxu0 0.0
        %1207 = vmatpush1.msra.mxu0 0.0
        %1208 = vmatprep.subr.mxu0 0.0
        %1209 = vmatpush1.msra.mxu0 0.0
        %1210 = vmatprep.subr.mxu0 0.0
        %1211 = vmatpush1.msra.mxu0 0.0
        %1212 = vmatprep.subr.mxu0 0.0
        %1213 = vmatpush1.msra.mxu0 0.0
        %1214 = vmatprep.subr.mxu0 0.0
        %1215 = vmatpush1.msra.mxu0 0.0
        %1216 = vmatprep.subr.mxu0 0.0
        %1217 = vmatpush1.msra.mxu0 0.0
        %1218 = vmatprep.mubr.f32.mxu0 0.0
        %1219 = vmatmul.mubr.f32.gmra.mrb[0].mxu0 %v1152
        %v1220 = vpop.f32.mrb[0].mxu0
        %v1221 = vadd.f32 0.0, %v1220
        %v1222 = vpop.f32.mrb[0].mxu0
        %1223 = vdwg.mxu0
        %v1224 = vld [vmem:[%s6 + $0x40] sm:$0xff]
        %v1225 = vld [vmem:[%s6 + $0x48] sm:$0xff]
        %v1226 = vld [vmem:[%s6 + $0x50] sm:$0xff]
        %v1227 = vld [vmem:[%s6 + $0x58] sm:$0xff]
        %v1229 = vsel %vm568, %v1221, 0
        %1231 = vmatprep.subr.mxu0 0.0
        %1232 = vmatpush1.msra.mxu0 %v1224
        %1233 = vmatprep.subr.mxu0 0.0
        %1234 = vmatpush1.msra.mxu0 %v1225
        %1235 = vmatprep.subr.mxu0 0.0
        %1236 = vmatpush1.msra.mxu0 %v1226
        %1237 = vmatprep.subr.mxu0 0.0
        %1238 = vmatpush1.msra.mxu0 %v1227
        %1239 = vmatprep.subr.mxu0 0.0
        %1240 = vmatpush1.msra.mxu0 0.0
        %1241 = vmatprep.subr.mxu0 0.0
        %1242 = vmatpush1.msra.mxu0 0.0
        %1243 = vmatprep.subr.mxu0 0.0
        %1244 = vmatpush1.msra.mxu0 0.0
        %1245 = vmatprep.subr.mxu0 0.0
        %1246 = vmatpush1.msra.mxu0 0.0
        %1247 = vmatprep.subr.mxu0 0.0
        %1248 = vmatpush1.msra.mxu0 0.0
        %1249 = vmatprep.subr.mxu0 0.0
        %1250 = vmatpush1.msra.mxu0 0.0
        %1251 = vmatprep.subr.mxu0 0.0
        %1252 = vmatpush1.msra.mxu0 0.0
        %1253 = vmatprep.subr.mxu0 0.0
        %1254 = vmatpush1.msra.mxu0 0.0
        %1255 = vmatprep.subr.mxu0 0.0
        %1256 = vmatpush1.msra.mxu0 0.0
        %1257 = vmatprep.subr.mxu0 0.0
        %1258 = vmatpush1.msra.mxu0 0.0
        %1259 = vmatprep.subr.mxu0 0.0
        %1260 = vmatpush1.msra.mxu0 0.0
        %1261 = vmatprep.subr.mxu0 0.0
        %1262 = vmatpush1.msra.mxu0 0.0
        %1263 = vmatprep.subr.mxu0 0.0
        %1264 = vmatpush1.msra.mxu0 0.0
        %1265 = vmatprep.subr.mxu0 0.0
        %1266 = vmatpush1.msra.mxu0 0.0
        %1267 = vmatprep.subr.mxu0 0.0
        %1268 = vmatpush1.msra.mxu0 0.0
        %1269 = vmatprep.subr.mxu0 0.0
        %1270 = vmatpush1.msra.mxu0 0.0
        %1271 = vmatprep.subr.mxu0 0.0
        %1272 = vmatpush1.msra.mxu0 0.0
        %1273 = vmatprep.subr.mxu0 0.0
        %1274 = vmatpush1.msra.mxu0 0.0
        %1275 = vmatprep.subr.mxu0 0.0
        %1276 = vmatpush1.msra.mxu0 0.0
        %1277 = vmatprep.subr.mxu0 0.0
        %1278 = vmatpush1.msra.mxu0 0.0
        %1279 = vmatprep.subr.mxu0 0.0
        %1280 = vmatpush1.msra.mxu0 0.0
        %1281 = vmatprep.subr.mxu0 0.0
        %1282 = vmatpush1.msra.mxu0 0.0
        %1283 = vmatprep.subr.mxu0 0.0
        %1284 = vmatpush1.msra.mxu0 0.0
        %1285 = vmatprep.subr.mxu0 0.0
        %1286 = vmatpush1.msra.mxu0 0.0
        %1287 = vmatprep.subr.mxu0 0.0
        %1288 = vmatpush1.msra.mxu0 0.0
        %1289 = vmatprep.subr.mxu0 0.0
        %1290 = vmatpush1.msra.mxu0 0.0
        %1291 = vmatprep.subr.mxu0 0.0
        %1292 = vmatpush1.msra.mxu0 0.0
        %1293 = vmatprep.subr.mxu0 0.0
        %1294 = vmatpush1.msra.mxu0 0.0
        %1295 = vmatprep.mubr.f32.mxu0 0.0
        %1296 = vmatmul.mubr.f32.gmra.mrb[0].mxu0 %v1229
        %v1297 = vpop.f32.mrb[0].mxu0
        %v1298 = vadd.f32 0.0, %v1297
        %v1299 = vpop.f32.mrb[0].mxu0
        %1300 = vdwg.mxu0
        %v1301 = vadd.f32 %v1055, %v1298
        %1302 = vrot.lane.b32.xlu0 %v567, 32
        %v1303 = vpop.permute.xlu0 %1302
        %1304 = vrot.lane.b32.xlu0 %v493, 32
        %v1305 = vpop.permute.xlu0 %1304
        %v1306 = vsel %vm568, %v1303, 0
        %v1308 = vsel %vm568, %v1305, 0
        %1310 = vmatprep.subr.mxu0 0.0
        %1311 = vmatpush1.xpose.msra.mxu0 %v1308
        %1312 = vmatprep.subr.mxu0 0.0
        %1313 = vmatpush1.xpose.msra.mxu0 0.0
        %1314 = vmatprep.subr.mxu0 0.0
        %1315 = vmatpush1.xpose.msra.mxu0 0.0
        %1316 = vmatprep.subr.mxu0 0.0
        %1317 = vmatpush1.xpose.msra.mxu0 0.0
        %1318 = vmatprep.subr.mxu0 0.0
        %1319 = vmatpush1.xpose.msra.mxu0 0.0
        %1320 = vmatprep.subr.mxu0 0.0
        %1321 = vmatpush1.xpose.msra.mxu0 0.0
        %1322 = vmatprep.subr.mxu0 0.0
        %1323 = vmatpush1.xpose.msra.mxu0 0.0
        %1324 = vmatprep.subr.mxu0 0.0
        %1325 = vmatpush1.xpose.msra.mxu0 0.0
        %1326 = vmatprep.subr.mxu0 0.0
        %1327 = vmatpush1.xpose.msra.mxu0 0.0
        %1328 = vmatprep.subr.mxu0 0.0
        %1329 = vmatpush1.xpose.msra.mxu0 0.0
        %1330 = vmatprep.subr.mxu0 0.0
        %1331 = vmatpush1.xpose.msra.mxu0 0.0
        %1332 = vmatprep.subr.mxu0 0.0
        %1333 = vmatpush1.xpose.msra.mxu0 0.0
        %1334 = vmatprep.subr.mxu0 0.0
        %1335 = vmatpush1.xpose.msra.mxu0 0.0
        %1336 = vmatprep.subr.mxu0 0.0
        %1337 = vmatpush1.xpose.msra.mxu0 0.0
        %1338 = vmatprep.subr.mxu0 0.0
        %1339 = vmatpush1.xpose.msra.mxu0 0.0
        %1340 = vmatprep.subr.mxu0 0.0
        %1341 = vmatpush1.xpose.msra.mxu0 0.0
        %1342 = vmatprep.subr.mxu0 0.0
        %1343 = vmatpush1.xpose.msra.mxu0 0.0
        %1344 = vmatprep.subr.mxu0 0.0
        %1345 = vmatpush1.xpose.msra.mxu0 0.0
        %1346 = vmatprep.subr.mxu0 0.0
        %1347 = vmatpush1.xpose.msra.mxu0 0.0
        %1348 = vmatprep.subr.mxu0 0.0
        %1349 = vmatpush1.xpose.msra.mxu0 0.0
        %1350 = vmatprep.subr.mxu0 0.0
        %1351 = vmatpush1.xpose.msra.mxu0 0.0
        %1352 = vmatprep.subr.mxu0 0.0
        %1353 = vmatpush1.xpose.msra.mxu0 0.0
        %1354 = vmatprep.subr.mxu0 0.0
        %1355 = vmatpush1.xpose.msra.mxu0 0.0
        %1356 = vmatprep.subr.mxu0 0.0
        %1357 = vmatpush1.xpose.msra.mxu0 0.0
        %1358 = vmatprep.subr.mxu0 0.0
        %1359 = vmatpush1.xpose.msra.mxu0 0.0
        %1360 = vmatprep.subr.mxu0 0.0
        %1361 = vmatpush1.xpose.msra.mxu0 0.0
        %1362 = vmatprep.subr.mxu0 0.0
        %1363 = vmatpush1.xpose.msra.mxu0 0.0
        %1364 = vmatprep.subr.mxu0 0.0
        %1365 = vmatpush1.xpose.msra.mxu0 0.0
        %1366 = vmatprep.subr.mxu0 0.0
        %1367 = vmatpush1.xpose.msra.mxu0 0.0
        %1368 = vmatprep.subr.mxu0 0.0
        %1369 = vmatpush1.xpose.msra.mxu0 0.0
        %1370 = vmatprep.subr.mxu0 0.0
        %1371 = vmatpush1.xpose.msra.mxu0 0.0
        %1372 = vmatprep.subr.mxu0 0.0
        %1373 = vmatpush1.xpose.msra.mxu0 0.0
        %1374 = vmatprep.mubr.f32.mxu0 0.0
        %1375 = vmatmul.mubr.f32.gmra.mrb[0].mxu0 %v1306
        %v1376 = vpop.f32.mrb[0].mxu0
        %v1377 = vadd.f32 0.0, %v1376
        %v1378 = vpop.f32.mrb[0].mxu0
        %1379 = vdwg.mxu0
        %v1380 = vsel %vm650, -1e+30, %v1377
        %v1381 = vsel %vm652, %v1380, -inf
        %1382 = vmax.xlane.f32.xlu0 %v1381
        %v1383 = vpop.xlane.xlu0 %1382
        %v1384 = vsub.f32 %v1380, %v1383
        %v1385 = vmul.f32 %v1384, 1.442695
        %v1386 = vpow.pop %v1385
        %v1387 = vsel %vm652, %v1386, 0.0
        %1388 = vadd.xlane.f32.xlu0 %v1387
        %v1389 = vpop.xlane.xlu0 %1388
        %v1390 = vrcp.pop %v1389
        %v1391 = vmul.f32 %v1386, %v1390
        %1392 = vrot.lane.b32.xlu0 %v562, 32
        %v1393 = vpop.permute.xlu0 %1392
        %v1396 = vsel %vm652, %v1391, 0
        %1398 = vmatprep.subr.mxu0 0.0
        %1399 = vmatpush1.msra.mxu0 %v1393
        %1400 = vmatprep.subr.mxu0 0.0
        %1401 = vmatpush1.msra.mxu0 0.0
        %1402 = vmatprep.subr.mxu0 0.0
        %1403 = vmatpush1.msra.mxu0 0.0
        %1404 = vmatprep.subr.mxu0 0.0
        %1405 = vmatpush1.msra.mxu0 0.0
        %1406 = vmatprep.subr.mxu0 0.0
        %1407 = vmatpush1.msra.mxu0 0.0
        %1408 = vmatprep.subr.mxu0 0.0
        %1409 = vmatpush1.msra.mxu0 0.0
        %1410 = vmatprep.subr.mxu0 0.0
        %1411 = vmatpush1.msra.mxu0 0.0
        %1412 = vmatprep.subr.mxu0 0.0
        %1413 = vmatpush1.msra.mxu0 0.0
        %1414 = vmatprep.subr.mxu0 0.0
        %1415 = vmatpush1.msra.mxu0 0.0
        %1416 = vmatprep.subr.mxu0 0.0
        %1417 = vmatpush1.msra.mxu0 0.0
        %1418 = vmatprep.subr.mxu0 0.0
        %1419 = vmatpush1.msra.mxu0 0.0
        %1420 = vmatprep.subr.mxu0 0.0
        %1421 = vmatpush1.msra.mxu0 0.0
        %1422 = vmatprep.subr.mxu0 0.0
        %1423 = vmatpush1.msra.mxu0 0.0
        %1424 = vmatprep.subr.mxu0 0.0
        %1425 = vmatpush1.msra.mxu0 0.0
        %1426 = vmatprep.subr.mxu0 0.0
        %1427 = vmatpush1.msra.mxu0 0.0
        %1428 = vmatprep.subr.mxu0 0.0
        %1429 = vmatpush1.msra.mxu0 0.0
        %1430 = vmatprep.subr.mxu0 0.0
        %1431 = vmatpush1.msra.mxu0 0.0
        %1432 = vmatprep.subr.mxu0 0.0
        %1433 = vmatpush1.msra.mxu0 0.0
        %1434 = vmatprep.subr.mxu0 0.0
        %1435 = vmatpush1.msra.mxu0 0.0
        %1436 = vmatprep.subr.mxu0 0.0
        %1437 = vmatpush1.msra.mxu0 0.0
        %1438 = vmatprep.subr.mxu0 0.0
        %1439 = vmatpush1.msra.mxu0 0.0
        %1440 = vmatprep.subr.mxu0 0.0
        %1441 = vmatpush1.msra.mxu0 0.0
        %1442 = vmatprep.subr.mxu0 0.0
        %1443 = vmatpush1.msra.mxu0 0.0
        %1444 = vmatprep.subr.mxu0 0.0
        %1445 = vmatpush1.msra.mxu0 0.0
        %1446 = vmatprep.subr.mxu0 0.0
        %1447 = vmatpush1.msra.mxu0 0.0
        %1448 = vmatprep.subr.mxu0 0.0
        %1449 = vmatpush1.msra.mxu0 0.0
        %1450 = vmatprep.subr.mxu0 0.0
        %1451 = vmatpush1.msra.mxu0 0.0
        %1452 = vmatprep.subr.mxu0 0.0
        %1453 = vmatpush1.msra.mxu0 0.0
        %1454 = vmatprep.subr.mxu0 0.0
        %1455 = vmatpush1.msra.mxu0 0.0
        %1456 = vmatprep.subr.mxu0 0.0
        %1457 = vmatpush1.msra.mxu0 0.0
        %1458 = vmatprep.subr.mxu0 0.0
        %1459 = vmatpush1.msra.mxu0 0.0
        %1460 = vmatprep.subr.mxu0 0.0
        %1461 = vmatpush1.msra.mxu0 0.0
        %1462 = vmatprep.mubr.f32.mxu0 0.0
        %1463 = vmatmul.mubr.f32.gmra.mrb[0].mxu0 %v1396
        %v1464 = vpop.f32.mrb[0].mxu0
        %v1465 = vadd.f32 0.0, %v1464
        %v1466 = vpop.f32.mrb[0].mxu0
        %1467 = vdwg.mxu0
        %v1468 = vld [vmem:[%s6 + $0x60] sm:$0xff]
        %v1469 = vld [vmem:[%s6 + $0x68] sm:$0xff]
        %v1470 = vld [vmem:[%s6 + $0x70] sm:$0xff]
        %v1471 = vld [vmem:[%s6 + $0x78] sm:$0xff]
        %v1473 = vsel %vm568, %v1465, 0
        %1475 = vmatprep.subr.mxu0 0.0
        %1476 = vmatpush1.msra.mxu0 %v1468
        %1477 = vmatprep.subr.mxu0 0.0
        %1478 = vmatpush1.msra.mxu0 %v1469
        %1479 = vmatprep.subr.mxu0 0.0
        %1480 = vmatpush1.msra.mxu0 %v1470
        %1481 = vmatprep.subr.mxu0 0.0
        %1482 = vmatpush1.msra.mxu0 %v1471
        %1483 = vmatprep.subr.mxu0 0.0
        %1484 = vmatpush1.msra.mxu0 0.0
        %1485 = vmatprep.subr.mxu0 0.0
        %1486 = vmatpush1.msra.mxu0 0.0
        %1487 = vmatprep.subr.mxu0 0.0
        %1488 = vmatpush1.msra.mxu0 0.0
        %1489 = vmatprep.subr.mxu0 0.0
        %1490 = vmatpush1.msra.mxu0 0.0
        %1491 = vmatprep.subr.mxu0 0.0
        %1492 = vmatpush1.msra.mxu0 0.0
        %1493 = vmatprep.subr.mxu0 0.0
        %1494 = vmatpush1.msra.mxu0 0.0
        %1495 = vmatprep.subr.mxu0 0.0
        %1496 = vmatpush1.msra.mxu0 0.0
        %1497 = vmatprep.subr.mxu0 0.0
        %1498 = vmatpush1.msra.mxu0 0.0
        %1499 = vmatprep.subr.mxu0 0.0
        %1500 = vmatpush1.msra.mxu0 0.0
        %1501 = vmatprep.subr.mxu0 0.0
        %1502 = vmatpush1.msra.mxu0 0.0
        %1503 = vmatprep.subr.mxu0 0.0
        %1504 = vmatpush1.msra.mxu0 0.0
        %1505 = vmatprep.subr.mxu0 0.0
        %1506 = vmatpush1.msra.mxu0 0.0
        %1507 = vmatprep.subr.mxu0 0.0
        %1508 = vmatpush1.msra.mxu0 0.0
        %1509 = vmatprep.subr.mxu0 0.0
        %1510 = vmatpush1.msra.mxu0 0.0
        %1511 = vmatprep.subr.mxu0 0.0
        %1512 = vmatpush1.msra.mxu0 0.0
        %1513 = vmatprep.subr.mxu0 0.0
        %1514 = vmatpush1.msra.mxu0 0.0
        %1515 = vmatprep.subr.mxu0 0.0
        %1516 = vmatpush1.msra.mxu0 0.0
        %1517 = vmatprep.subr.mxu0 0.0
        %1518 = vmatpush1.msra.mxu0 0.0
        %1519 = vmatprep.subr.mxu0 0.0
        %1520 = vmatpush1.msra.mxu0 0.0
        %1521 = vmatprep.subr.mxu0 0.0
        %1522 = vmatpush1.msra.mxu0 0.0
        %1523 = vmatprep.subr.mxu0 0.0
        %1524 = vmatpush1.msra.mxu0 0.0
        %1525 = vmatprep.subr.mxu0 0.0
        %1526 = vmatpush1.msra.mxu0 0.0
        %1527 = vmatprep.subr.mxu0 0.0
        %1528 = vmatpush1.msra.mxu0 0.0
        %1529 = vmatprep.subr.mxu0 0.0
        %1530 = vmatpush1.msra.mxu0 0.0
        %1531 = vmatprep.subr.mxu0 0.0
        %1532 = vmatpush1.msra.mxu0 0.0
        %1533 = vmatprep.subr.mxu0 0.0
        %1534 = vmatpush1.msra.mxu0 0.0
        %1535 = vmatprep.subr.mxu0 0.0
        %1536 = vmatpush1.msra.mxu0 0.0
        %1537 = vmatprep.subr.mxu0 0.0
        %1538 = vmatpush1.msra.mxu0 0.0
        %1539 = vmatprep.mubr.f32.mxu0 0.0
        %1540 = vmatmul.mubr.f32.gmra.mrb[0].mxu0 %v1473
        %v1541 = vpop.f32.mrb[0].mxu0
        %v1542 = vadd.f32 0.0, %v1541
        %v1543 = vpop.f32.mrb[0].mxu0
        %1544 = vdwg.mxu0
        %v1545 = vadd.f32 %v1301, %v1542
        %v1546 = vld [vmem:[%s7] sm:$0x1]
        %v1548 = vlaneseq
        %v1549 = vshrl.u32 %v1548, 7
        %v1550 = vsub.s32 0, %v1549
        %v1551 = vrot.slane %v1546, %v1550
        %v1553 = vadd.f32 %v1545, %v1551
        %v1554 = vadd.f32 %v330, %v1553
        %1555 = vst [vmem:[%s329] sm:$0xff] %v1554
        %p1556 = scmp.lt.s32.totalorder %s20, 1
        %s1557 = scalar_select %p1556, %s20, 1
        %s1558 = smul.addr %s1557, 8
        %s1559 = scalar_lea.vmem %s8, %s1558
        // Predicated region
        $region57: #{robust_text_cross_expert.14} parent=51 // pred_check
          %p1560 = pneg %p216
        $region58: #{robust_text_cross_expert.14} parent=51 // pred_check_branch
          %1562 = sbr.rel (%p1560) target = $region60
        $region59: #{robust_text_cross_expert.14} parent=51 // pred_region
          _
        $region60: #{robust_text_cross_expert.14} parent=51 // pred_fallthru
          _
      $region52: #{robust_text_cross_expert.14} parent=5 // pred_fallthru
        _
      %p1563 = scmp.le.s32.totalorder 2, %s15
      // Predicated region
      $region61: #{robust_text_cross_expert.14} parent=5 // pred_check
        %p1564 = pneg %p1563
      $region62: #{robust_text_cross_expert.14} parent=5 // pred_check_branch
        %1566 = sbr.rel (%p1564) target = $region64
      $region63: #{robust_text_cross_expert.14} parent=5 // pred_region
        %s1567 = ssub.s32 %s15, 2
        // Predicated region
        $region65: #{robust_text_cross_expert.14} parent=63 // pred_check
          %p1568 = pneg %p222
        $region66: #{robust_text_cross_expert.14} parent=63 // pred_check_branch
          %1570 = sbr.rel (%p1568) target = $region68
        $region67: #{robust_text_cross_expert.14} parent=63 // pred_region
          %p1571 = scmp.lt.s32.totalorder %s21, 1
          %s1572 = scalar_select %p1571, %s21, 1
          %s1573 = smul.addr %s1572, 8
          %s1574 = scalar_lea.vmem %s8, %s1573
        $region68: #{robust_text_cross_expert.14} parent=63 // pred_fallthru
          _
      $region64: #{robust_text_cross_expert.14} parent=5 // pred_fallthru
        _
    $region6: #{robust_text_cross_expert.14} parent=1 // loop_footer
      %s19 = sadd.s32 1, %s15
    $region7: #{robust_text_cross_expert.14} parent=1 // loop_footer_branch
      %14 = sbr.rel target = $region3
    $region8: #{robust_text_cross_expert.14} parent=1 // loop_exit
      _
    %1575 = vsyncpa [#allocation3], 1
    %s1576 = scalar_lea.sflag [#allocation3], 1
    %1577 = vsyncpa %s1576, 1

// kernel: robust_text_cross_expert.16
$region0: #{robust_text_cross_expert.16}
  #allocation0 [shape = 'u32[]', space=smem, size = 0x4, offset = 0x4, fixed_abs, tag = 'smem constant byte address 0x4 - core index']
  #allocation1 [shape = 'u32[144,128]{1,0:T(1,128)}', space=vmem, size = 0x12000, scoped, tag = 'internal scratch']
  %s0 = inlined_call_operand.vmem [shape: f32[2,8,128], index: 0, kind: input, shape index: {}]
  %s1 = inlined_call_operand.vmem [shape: s32[2,1,8], index: 1, kind: input, shape index: {}]
  %s2 = inlined_call_operand.vmem [shape: f32[1,128], index: 2, kind: input, shape index: {}]
  %s3 = inlined_call_operand.vmem [shape: f32[1,128], index: 3, kind: input, shape index: {}]
  %s4 = inlined_call_operand.vmem [shape: f32[128,384], index: 4, kind: input, shape index: {}]
  %s5 = inlined_call_operand.vmem [shape: f32[1,384], index: 5, kind: input, shape index: {}]
  %s6 = inlined_call_operand.vmem [shape: f32[128,128], index: 6, kind: input, shape index: {}]
  %s7 = inlined_call_operand.vmem [shape: f32[1,128], index: 7, kind: input, shape index: {}]
  %s8 = inlined_call_operand.vmem [shape: f32[2,8,128], index: 8, kind: output, shape index: {}]
  %s9 = sld [smem:[#allocation0]]
  $region65: #{robust_text_cross_expert.16} parent=0
    _
  %s11 = ssub.s32 1, %s9
  %s12 = scalar_select 0, %s11, %s9
  loop: start=0, step=1, limit=4
  $region2: #{robust_text_cross_expert.16} parent=0 // loop_pre_header
    _
  $region3: #{robust_text_cross_expert.16} parent=0 // loop_header
    %s14 = sphi 0, %s18
    %p15 = scmp.ge.s32.totalorder %s14, 4
    %s24 = sphi 0, %s26
    %s27 = sphi 0, %s24
    %s28 = sphi 0, %s27
    %s44 = sphi 0, %s28
    %s50 = sphi 0, %s52
    %s53 = sphi 0, %s50
    %s54 = sphi 0, %s53
    %s70 = sphi 0, %s54
    %s74 = sphi 0, %s74
    %s76 = sphi 0, %s74
    %s77 = sphi 0, %s76
    %s91 = sphi 0, %s77
    %s95 = sphi 0, %s95
    %s97 = sphi 0, %s95
    %s98 = sphi 0, %s97
    %s112 = sphi 0, %s98
    %s116 = sphi 0, %s116
    %s118 = sphi 0, %s116
    %s119 = sphi 0, %s118
    %s133 = sphi 0, %s119
    %s137 = sphi 0, %s137
    %s139 = sphi 0, %s137
    %s140 = sphi 0, %s139
    %s154 = sphi 0, %s140
    %s158 = sphi 0, %s158
    %s160 = sphi 0, %s158
    %s161 = sphi 0, %s160
    %s175 = sphi 0, %s161
    %s179 = sphi 0, %s179
    %s181 = sphi 0, %s179
    %s182 = sphi 0, %s181
    %s196 = sphi 0, %s182
    %s202 = sphi 0, %s204
    %s205 = sphi 0, %s202
    %s206 = sphi 0, %s205
    %s222 = sphi 0, %s206
  $region4: #{robust_text_cross_expert.16} parent=0 // loop_header_branch
    %17 = sbr.rel (%p15) target = $region8
  $region5: #{robust_text_cross_expert.16} parent=0 // loop_body
    %s19 = ssub.s32 %s14, 1
    %s20 = ssub.s32 %s14, 2
    %s21 = sadd.s32 %s14, 1
    %s22 = ssub.s32 %s14, %s21
    %p23 = scmp.eq.s32.totalorder %s22, 0
    %s25 = sadd.s32 %s24, 1
    %s26 = scalar_select %p23, %s24, %s25
    %p29 = pneg %p23
    %p30 = scmp.eq.s32.totalorder %s14, 1
    %p31 = por %p29, %p30
    %p32 = scmp.ne.s32.totalorder %s24, %s27
    %p33 = scmp.eq.s32.totalorder %s14, 0
    %p34 = por %p32, %p33
    %p35 = scmp.ne.s32.totalorder %s24, %s27
    %p36 = scmp.eq.s32.totalorder %s19, 1
    %p37 = por %p35, %p36
    %p38 = scmp.ne.s32.totalorder %s27, %s28
    %p39 = scmp.eq.s32.totalorder %s19, 0
    %p40 = por %p38, %p39
    %p41 = scmp.ne.s32.totalorder %s27, %s28
    %p42 = scmp.eq.s32.totalorder %s20, 1
    %p43 = por %p41, %p42
    %p45 = scmp.ne.s32.totalorder %s28, %s44
    %p46 = scmp.eq.s32.totalorder %s20, 0
    %p47 = por %p45, %p46
    %s48 = ssub.s32 %s14, %s21
    %p49 = scmp.eq.s32.totalorder %s48, 0
    %s51 = sadd.s32 %s50, 1
    %s52 = scalar_select %p49, %s50, %s51
    %p55 = pneg %p49
    %p56 = scmp.eq.s32.totalorder %s14, 1
    %p57 = por %p55, %p56
    %p58 = scmp.ne.s32.totalorder %s50, %s53
    %p59 = scmp.eq.s32.totalorder %s14, 0
    %p60 = por %p58, %p59
    %p61 = scmp.ne.s32.totalorder %s50, %s53
    %p62 = scmp.eq.s32.totalorder %s19, 1
    %p63 = por %p61, %p62
    %p64 = scmp.ne.s32.totalorder %s53, %s54
    %p65 = scmp.eq.s32.totalorder %s19, 0
    %p66 = por %p64, %p65
    %p67 = scmp.ne.s32.totalorder %s53, %s54
    %p68 = scmp.eq.s32.totalorder %s20, 1
    %p69 = por %p67, %p68
    %p71 = scmp.ne.s32.totalorder %s54, %s70
    %p72 = scmp.eq.s32.totalorder %s20, 0
    %p73 = por %p71, %p72
    %s75 = sadd.s32 %s74, 1
    %p78 = scmp.eq.s32.totalorder %s14, 1
    %p79 = scmp.ne.s32.totalorder %s74, %s76
    %p80 = scmp.eq.s32.totalorder %s14, 0
    %p81 = por %p79, %p80
    %p82 = scmp.ne.s32.totalorder %s74, %s76
    %p83 = scmp.eq.s32.totalorder %s19, 1
    %p84 = por %p82, %p83
    %p85 = scmp.ne.s32.totalorder %s76, %s77
    %p86 = scmp.eq.s32.totalorder %s19, 0
    %p87 = por %p85, %p86
    %p88 = scmp.ne.s32.totalorder %s76, %s77
    %p89 = scmp.eq.s32.totalorder %s20, 1
    %p90 = por %p88, %p89
    %p92 = scmp.ne.s32.totalorder %s77, %s91
    %p93 = scmp.eq.s32.totalorder %s20, 0
    %p94 = por %p92, %p93
    %s96 = sadd.s32 %s95, 1
    %p99 = scmp.eq.s32.totalorder %s14, 1
    %p100 = scmp.ne.s32.totalorder %s95, %s97
    %p101 = scmp.eq.s32.totalorder %s14, 0
    %p102 = por %p100, %p101
    %p103 = scmp.ne.s32.totalorder %s95, %s97
    %p104 = scmp.eq.s32.totalorder %s19, 1
    %p105 = por %p103, %p104
    %p106 = scmp.ne.s32.totalorder %s97, %s98
    %p107 = scmp.eq.s32.totalorder %s19, 0
    %p108 = por %p106, %p107
    %p109 = scmp.ne.s32.totalorder %s97, %s98
    %p110 = scmp.eq.s32.totalorder %s20, 1
    %p111 = por %p109, %p110
    %p113 = scmp.ne.s32.totalorder %s98, %s112
    %p114 = scmp.eq.s32.totalorder %s20, 0
    %p115 = por %p113, %p114
    %s117 = sadd.s32 %s116, 1
    %p120 = scmp.eq.s32.totalorder %s14, 1
    %p121 = scmp.ne.s32.totalorder %s116, %s118
    %p122 = scmp.eq.s32.totalorder %s14, 0
    %p123 = por %p121, %p122
    %p124 = scmp.ne.s32.totalorder %s116, %s118
    %p125 = scmp.eq.s32.totalorder %s19, 1
    %p126 = por %p124, %p125
    %p127 = scmp.ne.s32.totalorder %s118, %s119
    %p128 = scmp.eq.s32.totalorder %s19, 0
    %p129 = por %p127, %p128
    %p130 = scmp.ne.s32.totalorder %s118, %s119
    %p131 = scmp.eq.s32.totalorder %s20, 1
    %p132 = por %p130, %p131
    %p134 = scmp.ne.s32.totalorder %s119, %s133
    %p135 = scmp.eq.s32.totalorder %s20, 0
    %p136 = por %p134, %p135
    %s138 = sadd.s32 %s137, 1
    %p141 = scmp.eq.s32.totalorder %s14, 1
    %p142 = scmp.ne.s32.totalorder %s137, %s139
    %p143 = scmp.eq.s32.totalorder %s14, 0
    %p144 = por %p142, %p143
    %p145 = scmp.ne.s32.totalorder %s137, %s139
    %p146 = scmp.eq.s32.totalorder %s19, 1
    %p147 = por %p145, %p146
    %p148 = scmp.ne.s32.totalorder %s139, %s140
    %p149 = scmp.eq.s32.totalorder %s19, 0
    %p150 = por %p148, %p149
    %p151 = scmp.ne.s32.totalorder %s139, %s140
    %p152 = scmp.eq.s32.totalorder %s20, 1
    %p153 = por %p151, %p152
    %p155 = scmp.ne.s32.totalorder %s140, %s154
    %p156 = scmp.eq.s32.totalorder %s20, 0
    %p157 = por %p155, %p156
    %s159 = sadd.s32 %s158, 1
    %p162 = scmp.eq.s32.totalorder %s14, 1
    %p163 = scmp.ne.s32.totalorder %s158, %s160
    %p164 = scmp.eq.s32.totalorder %s14, 0
    %p165 = por %p163, %p164
    %p166 = scmp.ne.s32.totalorder %s158, %s160
    %p167 = scmp.eq.s32.totalorder %s19, 1
    %p168 = por %p166, %p167
    %p169 = scmp.ne.s32.totalorder %s160, %s161
    %p170 = scmp.eq.s32.totalorder %s19, 0
    %p171 = por %p169, %p170
    %p172 = scmp.ne.s32.totalorder %s160, %s161
    %p173 = scmp.eq.s32.totalorder %s20, 1
    %p174 = por %p172, %p173
    %p176 = scmp.ne.s32.totalorder %s161, %s175
    %p177 = scmp.eq.s32.totalorder %s20, 0
    %p178 = por %p176, %p177
    %s180 = sadd.s32 %s179, 1
    %p183 = scmp.eq.s32.totalorder %s14, 1
    %p184 = scmp.ne.s32.totalorder %s179, %s181
    %p185 = scmp.eq.s32.totalorder %s14, 0
    %p186 = por %p184, %p185
    %p187 = scmp.ne.s32.totalorder %s179, %s181
    %p188 = scmp.eq.s32.totalorder %s19, 1
    %p189 = por %p187, %p188
    %p190 = scmp.ne.s32.totalorder %s181, %s182
    %p191 = scmp.eq.s32.totalorder %s19, 0
    %p192 = por %p190, %p191
    %p193 = scmp.ne.s32.totalorder %s181, %s182
    %p194 = scmp.eq.s32.totalorder %s20, 1
    %p195 = por %p193, %p194
    %p197 = scmp.ne.s32.totalorder %s182, %s196
    %p198 = scmp.eq.s32.totalorder %s20, 0
    %p199 = por %p197, %p198
    %s200 = ssub.s32 %s14, %s21
    %p201 = scmp.eq.s32.totalorder %s200, 0
    %s203 = sadd.s32 %s202, 1
    %s204 = scalar_select %p201, %s202, %s203
    %p207 = pneg %p201
    %p208 = scmp.eq.s32.totalorder %s14, 1
    %p209 = por %p207, %p208
    %p210 = scmp.ne.s32.totalorder %s202, %s205
    %p211 = scmp.eq.s32.totalorder %s14, 0
    %p212 = por %p210, %p211
    %p213 = scmp.ne.s32.totalorder %s202, %s205
    %p214 = scmp.eq.s32.totalorder %s19, 1
    %p215 = por %p213, %p214
    %p216 = scmp.ne.s32.totalorder %s205, %s206
    %p217 = scmp.eq.s32.totalorder %s19, 0
    %p218 = por %p216, %p217
    %p219 = scmp.ne.s32.totalorder %s205, %s206
    %p220 = scmp.eq.s32.totalorder %s20, 1
    %p221 = por %p219, %p220
    %p223 = scmp.ne.s32.totalorder %s206, %s222
    %p224 = scmp.eq.s32.totalorder %s20, 0
    %p225 = por %p223, %p224
    %p226 = scmp.le.s32.totalorder 1, %s14
    %p227 = scmp.lt.s32.totalorder %s14, 3
    %p228 = pnand %p226, %p227
    %p229 = pneg %p228
    // Predicated region
    $region9: #{robust_text_cross_expert.16} parent=5 // pred_check
      _
    $region10: #{robust_text_cross_expert.16} parent=5 // pred_check_branch
      %231 = sbr.rel (%p228) target = $region12
    $region11: #{robust_text_cross_expert.16} parent=5 // pred_region
      %s232 = ssub.s32 %s14, 1
      // Predicated region
      $region13: #{robust_text_cross_expert.16} parent=11 // pred_check
        %p233 = pneg %p87
      $region14: #{robust_text_cross_expert.16} parent=11 // pred_check_branch
        %235 = sbr.rel (%p233) target = $region16
      $region15: #{robust_text_cross_expert.16} parent=11 // pred_region
        _
      $region16: #{robust_text_cross_expert.16} parent=11 // pred_fallthru
        _
      // Predicated region
      $region17: #{robust_text_cross_expert.16} parent=11 // pred_check
        %p236 = pneg %p108
      $region18: #{robust_text_cross_expert.16} parent=11 // pred_check_branch
        %238 = sbr.rel (%p236) target = $region20
      $region19: #{robust_text_cross_expert.16} parent=11 // pred_region
        _
      $region20: #{robust_text_cross_expert.16} parent=11 // pred_fallthru
        _
      // Predicated region
      $region21: #{robust_text_cross_expert.16} parent=11 // pred_check
        %p239 = pneg %p129
      $region22: #{robust_text_cross_expert.16} parent=11 // pred_check_branch
        %241 = sbr.rel (%p239) target = $region24
      $region23: #{robust_text_cross_expert.16} parent=11 // pred_region
        _
      $region24: #{robust_text_cross_expert.16} parent=11 // pred_fallthru
        _
      // Predicated region
      $region25: #{robust_text_cross_expert.16} parent=11 // pred_check
        %p242 = pneg %p150
      $region26: #{robust_text_cross_expert.16} parent=11 // pred_check_branch
        %244 = sbr.rel (%p242) target = $region28
      $region27: #{robust_text_cross_expert.16} parent=11 // pred_region
        _
      $region28: #{robust_text_cross_expert.16} parent=11 // pred_fallthru
        _
      // Predicated region
      $region29: #{robust_text_cross_expert.16} parent=11 // pred_check
        %p245 = pneg %p171
      $region30: #{robust_text_cross_expert.16} parent=11 // pred_check_branch
        %247 = sbr.rel (%p245) target = $region32
      $region31: #{robust_text_cross_expert.16} parent=11 // pred_region
        _
      $region32: #{robust_text_cross_expert.16} parent=11 // pred_fallthru
        _
      // Predicated region
      $region33: #{robust_text_cross_expert.16} parent=11 // pred_check
        %p248 = pneg %p192
      $region34: #{robust_text_cross_expert.16} parent=11 // pred_check_branch
        %250 = sbr.rel (%p248) target = $region36
      $region35: #{robust_text_cross_expert.16} parent=11 // pred_region
        _
      $region36: #{robust_text_cross_expert.16} parent=11 // pred_fallthru
        _
    $region12: #{robust_text_cross_expert.16} parent=5 // pred_fallthru
      _
    %p251 = scmp.lt.s32.totalorder %s14, 2
    // Predicated region
    $region37: #{robust_text_cross_expert.16} parent=5 // pred_check
      %p252 = pneg %p251
    $region38: #{robust_text_cross_expert.16} parent=5 // pred_check_branch
      %254 = sbr.rel (%p252) target = $region40
    $region39: #{robust_text_cross_expert.16} parent=5 // pred_region
      // Predicated region
      $region41: #{robust_text_cross_expert.16} parent=39 // pred_check
        %p255 = pneg %p34
      $region42: #{robust_text_cross_expert.16} parent=39 // pred_check_branch
        %257 = sbr.rel (%p255) target = $region44
      $region43: #{robust_text_cross_expert.16} parent=39 // pred_region
        %p258 = scmp.lt.s32.totalorder %s14, 1
        %s259 = scalar_select %p258, %s14, 1
        %s260 = smul.addr %s259, 8
        %s261 = scalar_lea.vmem %s0, %s260
      $region44: #{robust_text_cross_expert.16} parent=39 // pred_fallthru
        _
      // Predicated region
      $region45: #{robust_text_cross_expert.16} parent=39 // pred_check
        %p262 = pneg %p60
      $region46: #{robust_text_cross_expert.16} parent=39 // pred_check_branch
        %264 = sbr.rel (%p262) target = $region48
      $region47: #{robust_text_cross_expert.16} parent=39 // pred_region
        %p265 = scmp.lt.s32.totalorder %s14, 1
        %s266 = scalar_select %p265, %s14, 1
        %s267 = scalar_lea.vmem %s1, %s266
      $region48: #{robust_text_cross_expert.16} parent=39 // pred_fallthru
        _
    $region40: #{robust_text_cross_expert.16} parent=5 // pred_fallthru
      _
    %p268 = scmp.le.s32.totalorder 1, %s14
    %p269 = scmp.lt.s32.totalorder %s14, 3
    %p270 = pnand %p268, %p269
    %p271 = pneg %p270
    // Predicated region
    $region49: #{robust_text_cross_expert.16} parent=5 // pred_check
      _
    $region50: #{robust_text_cross_expert.16} parent=5 // pred_check_branch
      %273 = sbr.rel (%p270) target = $region52
    $region51: #{robust_text_cross_expert.16} parent=5 // pred_region
      %s274 = ssub.s32 %s14, 1
      %p275 = scmp.lt.s32.totalorder %s19, 1
      %s276 = scalar_select %p275, %s19, 1
      %s277 = smul.addr %s276, 8
      %s278 = scalar_lea.vmem %s0, %s277
      %p279 = pneg %p40
      %p280 = pneg %p37
      %p281 = scmp.lt.s32.totalorder %s19, 1
      %s282 = scalar_select %p281, %s19, 1
      %s283 = scalar_lea.vmem %s1, %s282
      %p284 = pneg %p66
      %p285 = pneg %p63
      %p286 = pneg %p87
      %p287 = pneg %p84
      %p288 = pneg %p108
      %p289 = pneg %p105
      %p290 = pneg %p129
      %p291 = pneg %p126
      %p292 = pneg %p150
      %p293 = pneg %p147
      %p294 = pneg %p171
      %p295 = pneg %p168
      %p296 = pneg %p192
      %p297 = pneg %p189
      %p298 = pneg %p218
      %p299 = pneg %p215
      %p300 = scmp.lt.s32.totalorder %s19, 1
      %s301 = scalar_select %p300, %s19, 1
      %s302 = smul.addr %s301, 8
      %s303 = scalar_lea.vmem %s8, %s302
      %p304 = scmp.lt.s32.totalorder %s19, 1
      %s305 = scalar_select %p304, %s19, 1
      %s306 = smul.addr %s305, 8
      %s307 = scalar_lea.vmem %s0, %s306
      %p308 = scmp.lt.s32.totalorder %s19, 1
      %s309 = scalar_select %p308, %s19, 1
      %s310 = scalar_lea.vmem %s1, %s309
      %p311 = scmp.lt.s32.totalorder %s19, 1
      %s312 = scalar_select %p311, %s19, 1
      %s313 = smul.addr %s312, 8
      %s314 = scalar_lea.vmem %s8, %s313
      %v315 = vld [vmem:[%s307] sm:$0xff]
      %v316 = vld [vmem:[%s2] sm:$0x1]
      %v317 = vld [vmem:[%s3] sm:$0x1]
      %318 = vadd.xlane.f32.xlu0 %v315
      %v319 = vpop.xlane.xlu0 %318
      %v320 = vrcp.pop 128.0
      %v321 = vmul.f32 %v319, %v320
      %v322 = vsub.f32 %v315, %v321
      %v323 = vmul.f32 %v322, %v322
      %324 = vadd.xlane.f32.xlu0 %v323
      %v325 = vpop.xlane.xlu0 %324
      %v326 = vmul.f32 %v325, %v320
      %v327 = vadd.f32 %v326, 1e-05
      %v328 = vrsqrt.pop %v327
      %v329 = vmul.f32 %v322, %v328
      %v331 = vlaneseq
      %v332 = vshrl.u32 %v331, 7
      %v333 = vsub.s32 0, %v332
      %v334 = vrot.slane %v316, %v333
      %v336 = vmul.f32 %v329, %v334
      %v338 = vlaneseq
      %v339 = vshrl.u32 %v338, 7
      %v340 = vsub.s32 0, %v339
      %v341 = vrot.slane %v317, %v340
      %v343 = vadd.f32 %v336, %v341
      %v344 = vld [vmem:[%s4] sm:$0xff]
      %v345 = vld [vmem:[%s4 + $0x8] sm:$0xff]
      %v346 = vld [vmem:[%s4 + $0x10] sm:$0xff]
      %v347 = vld [vmem:[%s4 + $0x18] sm:$0xff]
      %v348 = vld [vmem:[%s4 + $0x20] sm:$0xff]
      %v349 = vld [vmem:[%s4 + $0x28] sm:$0xff]
      %v350 = vld [vmem:[%s4 + $0x30] sm:$0xff]
      %v351 = vld [vmem:[%s4 + $0x38] sm:$0xff]
      %v352 = vld [vmem:[%s4 + $0x40] sm:$0xff]
      %v353 = vld [vmem:[%s4 + $0x48] sm:$0xff]
      %v354 = vld [vmem:[%s4 + $0x50] sm:$0xff]
      %v355 = vld [vmem:[%s4 + $0x58] sm:$0xff]
      %v356 = vld [vmem:[%s4 + $0x60] sm:$0xff]
      %v357 = vld [vmem:[%s4 + $0x68] sm:$0xff]
      %v358 = vld [vmem:[%s4 + $0x70] sm:$0xff]
      %v359 = vld [vmem:[%s4 + $0x78] sm:$0xff]
      %v360 = vld [vmem:[%s4 + $0x80] sm:$0xff]
      %v361 = vld [vmem:[%s4 + $0x88] sm:$0xff]
      %v362 = vld [vmem:[%s4 + $0x90] sm:$0xff]
      %v363 = vld [vmem:[%s4 + $0x98] sm:$0xff]
      %v364 = vld [vmem:[%s4 + $0xa0] sm:$0xff]
      %v365 = vld [vmem:[%s4 + $0xa8] sm:$0xff]
      %v366 = vld [vmem:[%s4 + $0xb0] sm:$0xff]
      %v367 = vld [vmem:[%s4 + $0xb8] sm:$0xff]
      %v368 = vld [vmem:[%s4 + $0xc0] sm:$0xff]
      %v369 = vld [vmem:[%s4 + $0xc8] sm:$0xff]
      %v370 = vld [vmem:[%s4 + $0xd0] sm:$0xff]
      %v371 = vld [vmem:[%s4 + $0xd8] sm:$0xff]
      %v372 = vld [vmem:[%s4 + $0xe0] sm:$0xff]
      %v373 = vld [vmem:[%s4 + $0xe8] sm:$0xff]
      %v374 = vld [vmem:[%s4 + $0xf0] sm:$0xff]
      %v375 = vld [vmem:[%s4 + $0xf8] sm:$0xff]
      %v376 = vld [vmem:[%s4 + $0x100] sm:$0xff]
      %v377 = vld [vmem:[%s4 + $0x108] sm:$0xff]
      %v378 = vld [vmem:[%s4 + $0x110] sm:$0xff]
      %v379 = vld [vmem:[%s4 + $0x118] sm:$0xff]
      %v380 = vld [vmem:[%s4 + $0x120] sm:$0xff]
      %v381 = vld [vmem:[%s4 + $0x128] sm:$0xff]
      %v382 = vld [vmem:[%s4 + $0x130] sm:$0xff]
      %v383 = vld [vmem:[%s4 + $0x138] sm:$0xff]
      %v384 = vld [vmem:[%s4 + $0x140] sm:$0xff]
      %v385 = vld [vmem:[%s4 + $0x148] sm:$0xff]
      %v386 = vld [vmem:[%s4 + $0x150] sm:$0xff]
      %v387 = vld [vmem:[%s4 + $0x158] sm:$0xff]
      %v388 = vld [vmem:[%s4 + $0x160] sm:$0xff]
      %v389 = vld [vmem:[%s4 + $0x168] sm:$0xff]
      %v390 = vld [vmem:[%s4 + $0x170] sm:$0xff]
      %v391 = vld [vmem:[%s4 + $0x178] sm:$0xff]
      %v392 = vld [vmem:[%s5] sm:$0x7]
      %v394 = vlaneseq
      %v395 = vshrl.u32 %v394, 7
      %v396 = vsub.s32 0, %v395
      %v397 = vrot.slane %v392, %v396
      %v398 = vlaneseq
      %v399 = vshrl.u32 %v398, 7
      %v400 = vsub.s32 1, %v399
      %v401 = vrot.slane %v392, %v400
      %v402 = vlaneseq
      %v403 = vshrl.u32 %v402, 7
      %v404 = vsub.s32 2, %v403
      %v405 = vrot.slane %v392, %v404
      %409 = vmatprep.subr.mxu0 %v345
      %410 = vmatpush1.msra.mxu0 %v344
      %411 = vmatprep.subr.mxu0 %v348
      %412 = vmatpush1.msra.mxu0 %v347
      %413 = vmatprep.subr.mxu0 %v351
      %414 = vmatpush1.msra.mxu0 %v350
      %415 = vmatprep.subr.mxu0 %v354
      %416 = vmatpush1.msra.mxu0 %v353
      %417 = vmatprep.subr.mxu0 %v357
      %418 = vmatpush1.msra.mxu0 %v356
      %419 = vmatprep.subr.mxu0 %v360
      %420 = vmatpush1.msra.mxu0 %v359
      %421 = vmatprep.subr.mxu0 %v363
      %422 = vmatpush1.msra.mxu0 %v362
      %423 = vmatprep.subr.mxu0 %v366
      %424 = vmatpush1.msra.mxu0 %v365
      %425 = vmatprep.subr.mxu0 %v369
      %426 = vmatpush1.msra.mxu0 %v368
      %427 = vmatprep.subr.mxu0 %v372
      %428 = vmatpush1.msra.mxu0 %v371
      %429 = vmatprep.subr.mxu0 %v375
      %430 = vmatpush1.msra.mxu0 %v374
      %431 = vmatprep.subr.mxu0 %v378
      %432 = vmatpush1.msra.mxu0 %v377
      %433 = vmatprep.subr.mxu0 %v381
      %434 = vmatpush1.msra.mxu0 %v380
      %435 = vmatprep.subr.mxu0 %v384
      %436 = vmatpush1.msra.mxu0 %v383
      %437 = vmatprep.subr.mxu0 %v387
      %438 = vmatpush1.msra.mxu0 %v386
      %439 = vmatprep.subr.mxu0 %v390
      %440 = vmatpush1.msra.mxu0 %v389
      %441 = vmatprep.subr.mxu0 0.0
      %442 = vmatpush1.msra.mxu0 0.0
      %443 = vmatprep.subr.mxu0 0.0
      %444 = vmatpush1.msra.mxu0 0.0
      %445 = vmatprep.subr.mxu0 0.0
      %446 = vmatpush1.msra.mxu0 0.0
      %447 = vmatprep.subr.mxu0 0.0
      %448 = vmatpush1.msra.mxu0 0.0
      %449 = vmatprep.subr.mxu0 0.0
      %450 = vmatpush1.msra.mxu0 0.0
      %451 = vmatprep.subr.mxu0 0.0
      %452 = vmatpush1.msra.mxu0 0.0
      %453 = vmatprep.subr.mxu0 0.0
      %454 = vmatpush1.msra.mxu0 0.0
      %455 = vmatprep.subr.mxu0 0.0
      %456 = vmatpush1.msra.mxu0 0.0
      %457 = vmatprep.subr.mxu0 0.0
      %458 = vmatpush1.msra.mxu0 0.0
      %459 = vmatprep.subr.mxu0 0.0
      %460 = vmatpush1.msra.mxu0 0.0
      %461 = vmatprep.subr.mxu0 0.0
      %462 = vmatpush1.msra.mxu0 0.0
      %463 = vmatprep.subr.mxu0 0.0
      %464 = vmatpush1.msra.mxu0 0.0
      %465 = vmatprep.subr.mxu0 0.0
      %466 = vmatpush1.msra.mxu0 0.0
      %467 = vmatprep.subr.mxu0 0.0
      %468 = vmatpush1.msra.mxu0 0.0
      %469 = vmatprep.subr.mxu0 0.0
      %470 = vmatpush1.msra.mxu0 0.0
      %471 = vmatprep.subr.mxu0 0.0
      %472 = vmatpush1.msra.mxu0 0.0
      %473 = vmatprep.mubr.f32.mxu0 0.0
      %474 = vmatmul.mubr.f32.gmra.mrb[0].mxu0 %v343
      %v475 = vpop.f32.mrb[0].mxu0
      %v476 = vadd.f32 %v397, %v475
      %v477 = vpop.f32.mrb[0].mxu0
      %v478 = vadd.f32 %v401, %v477
      %479 = vdwg.mxu0
      %480 = vmatprep.subr.mxu0 0.0
      %481 = vmatpush1.msra.mxu0 %v346
      %482 = vmatprep.subr.mxu0 0.0
      %483 = vmatpush1.msra.mxu0 %v349
      %484 = vmatprep.subr.mxu0 0.0
      %485 = vmatpush1.msra.mxu0 %v352
      %486 = vmatprep.subr.mxu0 0.0
      %487 = vmatpush1.msra.mxu0 %v355
      %488 = vmatprep.subr.mxu0 0.0
      %489 = vmatpush1.msra.mxu0 %v358
      %490 = vmatprep.subr.mxu0 0.0
      %491 = vmatpush1.msra.mxu0 %v361
      %492 = vmatprep.subr.mxu0 0.0
      %493 = vmatpush1.msra.mxu0 %v364
      %494 = vmatprep.subr.mxu0 0.0
      %495 = vmatpush1.msra.mxu0 %v367
      %496 = vmatprep.subr.mxu0 0.0
      %497 = vmatpush1.msra.mxu0 %v370
      %498 = vmatprep.subr.mxu0 0.0
      %499 = vmatpush1.msra.mxu0 %v373
      %500 = vmatprep.subr.mxu0 0.0
      %501 = vmatpush1.msra.mxu0 %v376
      %502 = vmatprep.subr.mxu0 0.0
      %503 = vmatpush1.msra.mxu0 %v379
      %504 = vmatprep.subr.mxu0 0.0
      %505 = vmatpush1.msra.mxu0 %v382
      %506 = vmatprep.subr.mxu0 0.0
      %507 = vmatpush1.msra.mxu0 %v385
      %508 = vmatprep.subr.mxu0 0.0
      %509 = vmatpush1.msra.mxu0 %v388
      %510 = vmatprep.subr.mxu0 0.0
      %511 = vmatpush1.msra.mxu0 %v391
      %512 = vmatprep.subr.mxu0 0.0
      %513 = vmatpush1.msra.mxu0 0.0
      %514 = vmatprep.subr.mxu0 0.0
      %515 = vmatpush1.msra.mxu0 0.0
      %516 = vmatprep.subr.mxu0 0.0
      %517 = vmatpush1.msra.mxu0 0.0
      %518 = vmatprep.subr.mxu0 0.0
      %519 = vmatpush1.msra.mxu0 0.0
      %520 = vmatprep.subr.mxu0 0.0
      %521 = vmatpush1.msra.mxu0 0.0
      %522 = vmatprep.subr.mxu0 0.0
      %523 = vmatpush1.msra.mxu0 0.0
      %524 = vmatprep.subr.mxu0 0.0
      %525 = vmatpush1.msra.mxu0 0.0
      %526 = vmatprep.subr.mxu0 0.0
      %527 = vmatpush1.msra.mxu0 0.0
      %528 = vmatprep.subr.mxu0 0.0
      %529 = vmatpush1.msra.mxu0 0.0
      %530 = vmatprep.subr.mxu0 0.0
      %531 = vmatpush1.msra.mxu0 0.0
      %532 = vmatprep.subr.mxu0 0.0
      %533 = vmatpush1.msra.mxu0 0.0
      %534 = vmatprep.subr.mxu0 0.0
      %535 = vmatpush1.msra.mxu0 0.0
      %536 = vmatprep.subr.mxu0 0.0
      %537 = vmatpush1.msra.mxu0 0.0
      %538 = vmatprep.subr.mxu0 0.0
      %539 = vmatpush1.msra.mxu0 0.0
      %540 = vmatprep.subr.mxu0 0.0
      %541 = vmatpush1.msra.mxu0 0.0
      %542 = vmatprep.subr.mxu0 0.0
      %543 = vmatpush1.msra.mxu0 0.0
      %544 = vmatprep.mubr.f32.mxu0 0.0
      %545 = vmatmul.mubr.f32.gmra.mrb[0].mxu0 %v343
      %v546 = vpop.f32.mrb[0].mxu0
      %v547 = vadd.f32 %v405, %v546
      %v548 = vpop.f32.mrb[0].mxu0
      %549 = vdwg.mxu0
      %v550 = vld [vmem:[%s310] sm:$0x1]
      %vm551 = vcmp.ne.s32.totalorder %v550, 0
      %v552 = vmul.f32 %v476, 0.17677669
      %vm553 = vcmask 261120
      %v555 = vsel %vm553, %v552, 0
      %v558 = vsel %vm553, %v478, 0
      %560 = vmatprep.subr.mxu0 0.0
      %561 = vmatpush1.xpose.msra.mxu0 %v558
      %562 = vmatprep.subr.mxu0 0.0
      %563 = vmatpush1.xpose.msra.mxu0 0.0
      %564 = vmatprep.subr.mxu0 0.0
      %565 = vmatpush1.xpose.msra.mxu0 0.0
      %566 = vmatprep.subr.mxu0 0.0
      %567 = vmatpush1.xpose.msra.mxu0 0.0
      %568 = vmatprep.subr.mxu0 0.0
      %569 = vmatpush1.xpose.msra.mxu0 0.0
      %570 = vmatprep.subr.mxu0 0.0
      %571 = vmatpush1.xpose.msra.mxu0 0.0
      %572 = vmatprep.subr.mxu0 0.0
      %573 = vmatpush1.xpose.msra.mxu0 0.0
      %574 = vmatprep.subr.mxu0 0.0
      %575 = vmatpush1.xpose.msra.mxu0 0.0
      %576 = vmatprep.subr.mxu0 0.0
      %577 = vmatpush1.xpose.msra.mxu0 0.0
      %578 = vmatprep.subr.mxu0 0.0
      %579 = vmatpush1.xpose.msra.mxu0 0.0
      %580 = vmatprep.subr.mxu0 0.0
      %581 = vmatpush1.xpose.msra.mxu0 0.0
      %582 = vmatprep.subr.mxu0 0.0
      %583 = vmatpush1.xpose.msra.mxu0 0.0
      %584 = vmatprep.subr.mxu0 0.0
      %585 = vmatpush1.xpose.msra.mxu0 0.0
      %586 = vmatprep.subr.mxu0 0.0
      %587 = vmatpush1.xpose.msra.mxu0 0.0
      %588 = vmatprep.subr.mxu0 0.0
      %589 = vmatpush1.xpose.msra.mxu0 0.0
      %590 = vmatprep.subr.mxu0 0.0
      %591 = vmatpush1.xpose.msra.mxu0 0.0
      %592 = vmatprep.subr.mxu0 0.0
      %593 = vmatpush1.xpose.msra.mxu0 0.0
      %594 = vmatprep.subr.mxu0 0.0
      %595 = vmatpush1.xpose.msra.mxu0 0.0
      %596 = vmatprep.subr.mxu0 0.0
      %597 = vmatpush1.xpose.msra.mxu0 0.0
      %598 = vmatprep.subr.mxu0 0.0
      %599 = vmatpush1.xpose.msra.mxu0 0.0
      %600 = vmatprep.subr.mxu0 0.0
      %601 = vmatpush1.xpose.msra.mxu0 0.0
      %602 = vmatprep.subr.mxu0 0.0
      %603 = vmatpush1.xpose.msra.mxu0 0.0
      %604 = vmatprep.subr.mxu0 0.0
      %605 = vmatpush1.xpose.msra.mxu0 0.0
      %606 = vmatprep.subr.mxu0 0.0
      %607 = vmatpush1.xpose.msra.mxu0 0.0
      %608 = vmatprep.subr.mxu0 0.0
      %609 = vmatpush1.xpose.msra.mxu0 0.0
      %610 = vmatprep.subr.mxu0 0.0
      %611 = vmatpush1.xpose.msra.mxu0 0.0
      %612 = vmatprep.subr.mxu0 0.0
      %613 = vmatpush1.xpose.msra.mxu0 0.0
      %614 = vmatprep.subr.mxu0 0.0
      %615 = vmatpush1.xpose.msra.mxu0 0.0
      %616 = vmatprep.subr.mxu0 0.0
      %617 = vmatpush1.xpose.msra.mxu0 0.0
      %618 = vmatprep.subr.mxu0 0.0
      %619 = vmatpush1.xpose.msra.mxu0 0.0
      %620 = vmatprep.subr.mxu0 0.0
      %621 = vmatpush1.xpose.msra.mxu0 0.0
      %622 = vmatprep.subr.mxu0 0.0
      %623 = vmatpush1.xpose.msra.mxu0 0.0
      %624 = vmatprep.mubr.f32.mxu0 0.0
      %625 = vmatmul.mubr.f32.gmra.mrb[0].mxu0 %v555
      %v626 = vpop.f32.mrb[0].mxu0
      %v627 = vadd.f32 0.0, %v626
      %v628 = vpop.f32.mrb[0].mxu0
      %629 = vdwg.mxu0
      %v630 = vsel %vm551, 1, 0
      %v631 = vlaneseq
      %v632 = vshrl.u32 %v631, 7
      %v633 = vsub.s32 0, %v632
      %v634 = vrot.slane %v630, %v633
      %vm635 = vcmp.eq.s32.totalorder %v634, 1
      %v636 = vsel %vm635, -1e+30, %v627
      %vm637 = vcmask 64512
      %v638 = vsel %vm637, %v636, -inf
      %639 = vmax.xlane.f32.xlu0 %v638
      %v640 = vpop.xlane.xlu0 %639
      %v641 = vsub.f32 %v636, %v640
      %v642 = vmul.f32 %v641, 1.442695
      %v643 = vpow.pop %v642
      %v644 = vsel %vm637, %v643, 0.0
      %645 = vadd.xlane.f32.xlu0 %v644
      %v646 = vpop.xlane.xlu0 %645
      %v647 = vrcp.pop %v646
      %v648 = vmul.f32 %v643, %v647
      %v650 = vsel %vm637, %v648, 0
      %652 = vmatprep.subr.mxu0 0.0
      %653 = vmatpush1.msra.mxu0 %v547
      %654 = vmatprep.subr.mxu0 0.0
      %655 = vmatpush1.msra.mxu0 0.0
      %656 = vmatprep.subr.mxu0 0.0
      %657 = vmatpush1.msra.mxu0 0.0
      %658 = vmatprep.subr.mxu0 0.0
      %659 = vmatpush1.msra.mxu0 0.0
      %660 = vmatprep.subr.mxu0 0.0
      %661 = vmatpush1.msra.mxu0 0.0
      %662 = vmatprep.subr.mxu0 0.0
      %663 = vmatpush1.msra.mxu0 0.0
      %664 = vmatprep.subr.mxu0 0.0
      %665 = vmatpush1.msra.mxu0 0.0
      %666 = vmatprep.subr.mxu0 0.0
      %667 = vmatpush1.msra.mxu0 0.0
      %668 = vmatprep.subr.mxu0 0.0
      %669 = vmatpush1.msra.mxu0 0.0
      %670 = vmatprep.subr.mxu0 0.0
      %671 = vmatpush1.msra.mxu0 0.0
      %672 = vmatprep.subr.mxu0 0.0
      %673 = vmatpush1.msra.mxu0 0.0
      %674 = vmatprep.subr.mxu0 0.0
      %675 = vmatpush1.msra.mxu0 0.0
      %676 = vmatprep.subr.mxu0 0.0
      %677 = vmatpush1.msra.mxu0 0.0
      %678 = vmatprep.subr.mxu0 0.0
      %679 = vmatpush1.msra.mxu0 0.0
      %680 = vmatprep.subr.mxu0 0.0
      %681 = vmatpush1.msra.mxu0 0.0
      %682 = vmatprep.subr.mxu0 0.0
      %683 = vmatpush1.msra.mxu0 0.0
      %684 = vmatprep.subr.mxu0 0.0
      %685 = vmatpush1.msra.mxu0 0.0
      %686 = vmatprep.subr.mxu0 0.0
      %687 = vmatpush1.msra.mxu0 0.0
      %688 = vmatprep.subr.mxu0 0.0
      %689 = vmatpush1.msra.mxu0 0.0
      %690 = vmatprep.subr.mxu0 0.0
      %691 = vmatpush1.msra.mxu0 0.0
      %692 = vmatprep.subr.mxu0 0.0
      %693 = vmatpush1.msra.mxu0 0.0
      %694 = vmatprep.subr.mxu0 0.0
      %695 = vmatpush1.msra.mxu0 0.0
      %696 = vmatprep.subr.mxu0 0.0
      %697 = vmatpush1.msra.mxu0 0.0
      %698 = vmatprep.subr.mxu0 0.0
      %699 = vmatpush1.msra.mxu0 0.0
      %700 = vmatprep.subr.mxu0 0.0
      %701 = vmatpush1.msra.mxu0 0.0
      %702 = vmatprep.subr.mxu0 0.0
      %703 = vmatpush1.msra.mxu0 0.0
      %704 = vmatprep.subr.mxu0 0.0
      %705 = vmatpush1.msra.mxu0 0.0
      %706 = vmatprep.subr.mxu0 0.0
      %707 = vmatpush1.msra.mxu0 0.0
      %708 = vmatprep.subr.mxu0 0.0
      %709 = vmatpush1.msra.mxu0 0.0
      %710 = vmatprep.subr.mxu0 0.0
      %711 = vmatpush1.msra.mxu0 0.0
      %712 = vmatprep.subr.mxu0 0.0
      %713 = vmatpush1.msra.mxu0 0.0
      %714 = vmatprep.subr.mxu0 0.0
      %715 = vmatpush1.msra.mxu0 0.0
      %716 = vmatprep.mubr.f32.mxu0 0.0
      %717 = vmatmul.mubr.f32.gmra.mrb[0].mxu0 %v650
      %v718 = vpop.f32.mrb[0].mxu0
      %v719 = vadd.f32 0.0, %v718
      %v720 = vpop.f32.mrb[0].mxu0
      %721 = vdwg.mxu0
      %v722 = vld [vmem:[%s6] sm:$0xff]
      %v723 = vld [vmem:[%s6 + $0x8] sm:$0xff]
      %v724 = vld [vmem:[%s6 + $0x10] sm:$0xff]
      %v725 = vld [vmem:[%s6 + $0x18] sm:$0xff]
      %726 = vrot.lane.b32.xlu0 %v552, 96
      %v727 = vpop.permute.xlu0 %726
      %728 = vrot.lane.b32.xlu0 %v478, 96
      %v729 = vpop.permute.xlu0 %728
      %v730 = vsel %vm553, %v727, 0
      %v732 = vsel %vm553, %v729, 0
      %734 = vmatprep.subr.mxu0 0.0
      %735 = vmatpush1.xpose.msra.mxu0 %v732
      %736 = vmatprep.subr.mxu0 0.0
      %737 = vmatpush1.xpose.msra.mxu0 0.0
      %738 = vmatprep.subr.mxu0 0.0
      %739 = vmatpush1.xpose.msra.mxu0 0.0
      %740 = vmatprep.subr.mxu0 0.0
      %741 = vmatpush1.xpose.msra.mxu0 0.0
      %742 = vmatprep.subr.mxu0 0.0
      %743 = vmatpush1.xpose.msra.mxu0 0.0
      %744 = vmatprep.subr.mxu0 0.0
      %745 = vmatpush1.xpose.msra.mxu0 0.0
      %746 = vmatprep.subr.mxu0 0.0
      %747 = vmatpush1.xpose.msra.mxu0 0.0
      %748 = vmatprep.subr.mxu0 0.0
      %749 = vmatpush1.xpose.msra.mxu0 0.0
      %750 = vmatprep.subr.mxu0 0.0
      %751 = vmatpush1.xpose.msra.mxu0 0.0
      %752 = vmatprep.subr.mxu0 0.0
      %753 = vmatpush1.xpose.msra.mxu0 0.0
      %754 = vmatprep.subr.mxu0 0.0
      %755 = vmatpush1.xpose.msra.mxu0 0.0
      %756 = vmatprep.subr.mxu0 0.0
      %757 = vmatpush1.xpose.msra.mxu0 0.0
      %758 = vmatprep.subr.mxu0 0.0
      %759 = vmatpush1.xpose.msra.mxu0 0.0
      %760 = vmatprep.subr.mxu0 0.0
      %761 = vmatpush1.xpose.msra.mxu0 0.0
      %762 = vmatprep.subr.mxu0 0.0
      %763 = vmatpush1.xpose.msra.mxu0 0.0
      %764 = vmatprep.subr.mxu0 0.0
      %765 = vmatpush1.xpose.msra.mxu0 0.0
      %766 = vmatprep.subr.mxu0 0.0
      %767 = vmatpush1.xpose.msra.mxu0 0.0
      %768 = vmatprep.subr.mxu0 0.0
      %769 = vmatpush1.xpose.msra.mxu0 0.0
      %770 = vmatprep.subr.mxu0 0.0
      %771 = vmatpush1.xpose.msra.mxu0 0.0
      %772 = vmatprep.subr.mxu0 0.0
      %773 = vmatpush1.xpose.msra.mxu0 0.0
      %774 = vmatprep.subr.mxu0 0.0
      %775 = vmatpush1.xpose.msra.mxu0 0.0
      %776 = vmatprep.subr.mxu0 0.0
      %777 = vmatpush1.xpose.msra.mxu0 0.0
      %778 = vmatprep.subr.mxu0 0.0
      %779 = vmatpush1.xpose.msra.mxu0 0.0
      %780 = vmatprep.subr.mxu0 0.0
      %781 = vmatpush1.xpose.msra.mxu0 0.0
      %782 = vmatprep.subr.mxu0 0.0
      %783 = vmatpush1.xpose.msra.mxu0 0.0
      %784 = vmatprep.subr.mxu0 0.0
      %785 = vmatpush1.xpose.msra.mxu0 0.0
      %786 = vmatprep.subr.mxu0 0.0
      %787 = vmatpush1.xpose.msra.mxu0 0.0
      %788 = vmatprep.subr.mxu0 0.0
      %789 = vmatpush1.xpose.msra.mxu0 0.0
      %790 = vmatprep.subr.mxu0 0.0
      %791 = vmatpush1.xpose.msra.mxu0 0.0
      %792 = vmatprep.subr.mxu0 0.0
      %793 = vmatpush1.xpose.msra.mxu0 0.0
      %794 = vmatprep.subr.mxu0 0.0
      %795 = vmatpush1.xpose.msra.mxu0 0.0
      %796 = vmatprep.subr.mxu0 0.0
      %797 = vmatpush1.xpose.msra.mxu0 0.0
      %798 = vmatprep.mubr.f32.mxu0 0.0
      %799 = vmatmul.mubr.f32.gmra.mrb[0].mxu0 %v730
      %v800 = vpop.f32.mrb[0].mxu0
      %v801 = vadd.f32 0.0, %v800
      %v802 = vpop.f32.mrb[0].mxu0
      %803 = vdwg.mxu0
      %v804 = vsel %vm635, -1e+30, %v801
      %v805 = vsel %vm637, %v804, -inf
      %806 = vmax.xlane.f32.xlu0 %v805
      %v807 = vpop.xlane.xlu0 %806
      %v808 = vsub.f32 %v804, %v807
      %v809 = vmul.f32 %v808, 1.442695
      %v810 = vpow.pop %v809
      %v811 = vsel %vm637, %v810, 0.0
      %812 = vadd.xlane.f32.xlu0 %v811
      %v813 = vpop.xlane.xlu0 %812
      %v814 = vrcp.pop %v813
      %v815 = vmul.f32 %v810, %v814
      %817 = vrot.lane.b32.xlu0 %v547, 96
      %v818 = vpop.permute.xlu0 %817
      %v821 = vsel %vm637, %v815, 0
      %823 = vmatprep.subr.mxu0 0.0
      %824 = vmatpush1.msra.mxu0 %v818
      %825 = vmatprep.subr.mxu0 0.0
      %826 = vmatpush1.msra.mxu0 0.0
      %827 = vmatprep.subr.mxu0 0.0
      %828 = vmatpush1.msra.mxu0 0.0
      %829 = vmatprep.subr.mxu0 0.0
      %830 = vmatpush1.msra.mxu0 0.0
      %831 = vmatprep.subr.mxu0 0.0
      %832 = vmatpush1.msra.mxu0 0.0
      %833 = vmatprep.subr.mxu0 0.0
      %834 = vmatpush1.msra.mxu0 0.0
      %835 = vmatprep.subr.mxu0 0.0
      %836 = vmatpush1.msra.mxu0 0.0
      %837 = vmatprep.subr.mxu0 0.0
      %838 = vmatpush1.msra.mxu0 0.0
      %839 = vmatprep.subr.mxu0 0.0
      %840 = vmatpush1.msra.mxu0 0.0
      %841 = vmatprep.subr.mxu0 0.0
      %842 = vmatpush1.msra.mxu0 0.0
      %843 = vmatprep.subr.mxu0 0.0
      %844 = vmatpush1.msra.mxu0 0.0
      %845 = vmatprep.subr.mxu0 0.0
      %846 = vmatpush1.msra.mxu0 0.0
      %847 = vmatprep.subr.mxu0 0.0
      %848 = vmatpush1.msra.mxu0 0.0
      %849 = vmatprep.subr.mxu0 0.0
      %850 = vmatpush1.msra.mxu0 0.0
      %851 = vmatprep.subr.mxu0 0.0
      %852 = vmatpush1.msra.mxu0 0.0
      %853 = vmatprep.subr.mxu0 0.0
      %854 = vmatpush1.msra.mxu0 0.0
      %855 = vmatprep.subr.mxu0 0.0
      %856 = vmatpush1.msra.mxu0 0.0
      %857 = vmatprep.subr.mxu0 0.0
      %858 = vmatpush1.msra.mxu0 0.0
      %859 = vmatprep.subr.mxu0 0.0
      %860 = vmatpush1.msra.mxu0 0.0
      %861 = vmatprep.subr.mxu0 0.0
      %862 = vmatpush1.msra.mxu0 0.0
      %863 = vmatprep.subr.mxu0 0.0
      %864 = vmatpush1.msra.mxu0 0.0
      %865 = vmatprep.subr.mxu0 0.0
      %866 = vmatpush1.msra.mxu0 0.0
      %867 = vmatprep.subr.mxu0 0.0
      %868 = vmatpush1.msra.mxu0 0.0
      %869 = vmatprep.subr.mxu0 0.0
      %870 = vmatpush1.msra.mxu0 0.0
      %871 = vmatprep.subr.mxu0 0.0
      %872 = vmatpush1.msra.mxu0 0.0
      %873 = vmatprep.subr.mxu0 0.0
      %874 = vmatpush1.msra.mxu0 0.0
      %875 = vmatprep.subr.mxu0 0.0
      %876 = vmatpush1.msra.mxu0 0.0
      %877 = vmatprep.subr.mxu0 0.0
      %878 = vmatpush1.msra.mxu0 0.0
      %879 = vmatprep.subr.mxu0 0.0
      %880 = vmatpush1.msra.mxu0 0.0
      %881 = vmatprep.subr.mxu0 0.0
      %882 = vmatpush1.msra.mxu0 0.0
      %883 = vmatprep.subr.mxu0 0.0
      %884 = vmatpush1.msra.mxu0 0.0
      %885 = vmatprep.subr.mxu0 0.0
      %886 = vmatpush1.msra.mxu0 0.0
      %887 = vmatprep.mubr.f32.mxu0 0.0
      %888 = vmatmul.mubr.f32.gmra.mrb[0].mxu0 %v821
      %v889 = vpop.f32.mrb[0].mxu0
      %v890 = vadd.f32 0.0, %v889
      %v891 = vpop.f32.mrb[0].mxu0
      %892 = vdwg.mxu0
      %v893 = vld [vmem:[%s6 + $0x20] sm:$0xff]
      %v894 = vld [vmem:[%s6 + $0x28] sm:$0xff]
      %v895 = vld [vmem:[%s6 + $0x30] sm:$0xff]
      %v896 = vld [vmem:[%s6 + $0x38] sm:$0xff]
      %v898 = vsel %vm553, %v890, 0
      %900 = vmatprep.subr.mxu0 0.0
      %901 = vmatpush1.msra.mxu0 %v893
      %902 = vmatprep.subr.mxu0 0.0
      %903 = vmatpush1.msra.mxu0 %v894
      %904 = vmatprep.subr.mxu0 0.0
      %905 = vmatpush1.msra.mxu0 %v895
      %906 = vmatprep.subr.mxu0 0.0
      %907 = vmatpush1.msra.mxu0 %v896
      %908 = vmatprep.subr.mxu0 0.0
      %909 = vmatpush1.msra.mxu0 0.0
      %910 = vmatprep.subr.mxu0 0.0
      %911 = vmatpush1.msra.mxu0 0.0
      %912 = vmatprep.subr.mxu0 0.0
      %913 = vmatpush1.msra.mxu0 0.0
      %914 = vmatprep.subr.mxu0 0.0
      %915 = vmatpush1.msra.mxu0 0.0
      %916 = vmatprep.subr.mxu0 0.0
      %917 = vmatpush1.msra.mxu0 0.0
      %918 = vmatprep.subr.mxu0 0.0
      %919 = vmatpush1.msra.mxu0 0.0
      %920 = vmatprep.subr.mxu0 0.0
      %921 = vmatpush1.msra.mxu0 0.0
      %922 = vmatprep.subr.mxu0 0.0
      %923 = vmatpush1.msra.mxu0 0.0
      %924 = vmatprep.subr.mxu0 0.0
      %925 = vmatpush1.msra.mxu0 0.0
      %926 = vmatprep.subr.mxu0 0.0
      %927 = vmatpush1.msra.mxu0 0.0
      %928 = vmatprep.subr.mxu0 0.0
      %929 = vmatpush1.msra.mxu0 0.0
      %930 = vmatprep.subr.mxu0 0.0
      %931 = vmatpush1.msra.mxu0 0.0
      %932 = vmatprep.subr.mxu0 0.0
      %933 = vmatpush1.msra.mxu0 0.0
      %934 = vmatprep.subr.mxu0 0.0
      %935 = vmatpush1.msra.mxu0 0.0
      %936 = vmatprep.subr.mxu0 0.0
      %937 = vmatpush1.msra.mxu0 0.0
      %938 = vmatprep.subr.mxu0 0.0
      %939 = vmatpush1.msra.mxu0 0.0
      %940 = vmatprep.subr.mxu0 0.0
      %941 = vmatpush1.msra.mxu0 0.0
      %942 = vmatprep.subr.mxu0 0.0
      %943 = vmatpush1.msra.mxu0 0.0
      %944 = vmatprep.subr.mxu0 0.0
      %945 = vmatpush1.msra.mxu0 0.0
      %946 = vmatprep.subr.mxu0 0.0
      %947 = vmatpush1.msra.mxu0 0.0
      %948 = vmatprep.subr.mxu0 0.0
      %949 = vmatpush1.msra.mxu0 0.0
      %950 = vmatprep.subr.mxu0 0.0
      %951 = vmatpush1.msra.mxu0 0.0
      %952 = vmatprep.subr.mxu0 0.0
      %953 = vmatpush1.msra.mxu0 0.0
      %954 = vmatprep.subr.mxu0 0.0
      %955 = vmatpush1.msra.mxu0 0.0
      %956 = vmatprep.subr.mxu0 0.0
      %957 = vmatpush1.msra.mxu0 0.0
      %958 = vmatprep.subr.mxu0 0.0
      %959 = vmatpush1.msra.mxu0 0.0
      %960 = vmatprep.subr.mxu0 0.0
      %961 = vmatpush1.msra.mxu0 0.0
      %962 = vmatprep.subr.mxu0 0.0
      %963 = vmatpush1.msra.mxu0 0.0
      %964 = vmatprep.mubr.f32.mxu0 0.0
      %965 = vmatmul.mubr.f32.gmra.mrb[0].mxu0 %v898
      %v966 = vpop.f32.mrb[0].mxu0
      %v967 = vadd.f32 0.0, %v966
      %v968 = vpop.f32.mrb[0].mxu0
      %969 = vdwg.mxu0
      %v971 = vsel %vm553, %v719, 0
      %973 = vmatprep.subr.mxu0 0.0
      %974 = vmatpush1.msra.mxu0 %v722
      %975 = vmatprep.subr.mxu0 0.0
      %976 = vmatpush1.msra.mxu0 %v723
      %977 = vmatprep.subr.mxu0 0.0
      %978 = vmatpush1.msra.mxu0 %v724
      %979 = vmatprep.subr.mxu0 0.0
      %980 = vmatpush1.msra.mxu0 %v725
      %981 = vmatprep.subr.mxu0 0.0
      %982 = vmatpush1.msra.mxu0 0.0
      %983 = vmatprep.subr.mxu0 0.0
      %984 = vmatpush1.msra.mxu0 0.0
      %985 = vmatprep.subr.mxu0 0.0
      %986 = vmatpush1.msra.mxu0 0.0
      %987 = vmatprep.subr.mxu0 0.0
      %988 = vmatpush1.msra.mxu0 0.0
      %989 = vmatprep.subr.mxu0 0.0
      %990 = vmatpush1.msra.mxu0 0.0
      %991 = vmatprep.subr.mxu0 0.0
      %992 = vmatpush1.msra.mxu0 0.0
      %993 = vmatprep.subr.mxu0 0.0
      %994 = vmatpush1.msra.mxu0 0.0
      %995 = vmatprep.subr.mxu0 0.0
      %996 = vmatpush1.msra.mxu0 0.0
      %997 = vmatprep.subr.mxu0 0.0
      %998 = vmatpush1.msra.mxu0 0.0
      %999 = vmatprep.subr.mxu0 0.0
      %1000 = vmatpush1.msra.mxu0 0.0
      %1001 = vmatprep.subr.mxu0 0.0
      %1002 = vmatpush1.msra.mxu0 0.0
      %1003 = vmatprep.subr.mxu0 0.0
      %1004 = vmatpush1.msra.mxu0 0.0
      %1005 = vmatprep.subr.mxu0 0.0
      %1006 = vmatpush1.msra.mxu0 0.0
      %1007 = vmatprep.subr.mxu0 0.0
      %1008 = vmatpush1.msra.mxu0 0.0
      %1009 = vmatprep.subr.mxu0 0.0
      %1010 = vmatpush1.msra.mxu0 0.0
      %1011 = vmatprep.subr.mxu0 0.0
      %1012 = vmatpush1.msra.mxu0 0.0
      %1013 = vmatprep.subr.mxu0 0.0
      %1014 = vmatpush1.msra.mxu0 0.0
      %1015 = vmatprep.subr.mxu0 0.0
      %1016 = vmatpush1.msra.mxu0 0.0
      %1017 = vmatprep.subr.mxu0 0.0
      %1018 = vmatpush1.msra.mxu0 0.0
      %1019 = vmatprep.subr.mxu0 0.0
      %1020 = vmatpush1.msra.mxu0 0.0
      %1021 = vmatprep.subr.mxu0 0.0
      %1022 = vmatpush1.msra.mxu0 0.0
      %1023 = vmatprep.subr.mxu0 0.0
      %1024 = vmatpush1.msra.mxu0 0.0
      %1025 = vmatprep.subr.mxu0 0.0
      %1026 = vmatpush1.msra.mxu0 0.0
      %1027 = vmatprep.subr.mxu0 0.0
      %1028 = vmatpush1.msra.mxu0 0.0
      %1029 = vmatprep.subr.mxu0 0.0
      %1030 = vmatpush1.msra.mxu0 0.0
      %1031 = vmatprep.subr.mxu0 0.0
      %1032 = vmatpush1.msra.mxu0 0.0
      %1033 = vmatprep.subr.mxu0 0.0
      %1034 = vmatpush1.msra.mxu0 0.0
      %1035 = vmatprep.subr.mxu0 0.0
      %1036 = vmatpush1.msra.mxu0 0.0
      %1037 = vmatprep.mubr.f32.mxu0 0.0
      %1038 = vmatmul.mubr.f32.gmra.mrb[0].mxu0 %v971
      %v1039 = vpop.f32.mrb[0].mxu0
      %v1040 = vadd.f32 %v967, %v1039
      %v1041 = vpop.f32.mrb[0].mxu0
      %1042 = vdwg.mxu0
      %1043 = vrot.lane.b32.xlu0 %v552, 64
      %v1044 = vpop.permute.xlu0 %1043
      %1045 = vrot.lane.b32.xlu0 %v478, 64
      %v1046 = vpop.permute.xlu0 %1045
      %v1047 = vsel %vm553, %v1044, 0
      %v1049 = vsel %vm553, %v1046, 0
      %1051 = vmatprep.subr.mxu0 0.0
      %1052 = vmatpush1.xpose.msra.mxu0 %v1049
      %1053 = vmatprep.subr.mxu0 0.0
      %1054 = vmatpush1.xpose.msra.mxu0 0.0
      %1055 = vmatprep.subr.mxu0 0.0
      %1056 = vmatpush1.xpose.msra.mxu0 0.0
      %1057 = vmatprep.subr.mxu0 0.0
      %1058 = vmatpush1.xpose.msra.mxu0 0.0
      %1059 = vmatprep.subr.mxu0 0.0
      %1060 = vmatpush1.xpose.msra.mxu0 0.0
      %1061 = vmatprep.subr.mxu0 0.0
      %1062 = vmatpush1.xpose.msra.mxu0 0.0
      %1063 = vmatprep.subr.mxu0 0.0
      %1064 = vmatpush1.xpose.msra.mxu0 0.0
      %1065 = vmatprep.subr.mxu0 0.0
      %1066 = vmatpush1.xpose.msra.mxu0 0.0
      %1067 = vmatprep.subr.mxu0 0.0
      %1068 = vmatpush1.xpose.msra.mxu0 0.0
      %1069 = vmatprep.subr.mxu0 0.0
      %1070 = vmatpush1.xpose.msra.mxu0 0.0
      %1071 = vmatprep.subr.mxu0 0.0
      %1072 = vmatpush1.xpose.msra.mxu0 0.0
      %1073 = vmatprep.subr.mxu0 0.0
      %1074 = vmatpush1.xpose.msra.mxu0 0.0
      %1075 = vmatprep.subr.mxu0 0.0
      %1076 = vmatpush1.xpose.msra.mxu0 0.0
      %1077 = vmatprep.subr.mxu0 0.0
      %1078 = vmatpush1.xpose.msra.mxu0 0.0
      %1079 = vmatprep.subr.mxu0 0.0
      %1080 = vmatpush1.xpose.msra.mxu0 0.0
      %1081 = vmatprep.subr.mxu0 0.0
      %1082 = vmatpush1.xpose.msra.mxu0 0.0
      %1083 = vmatprep.subr.mxu0 0.0
      %1084 = vmatpush1.xpose.msra.mxu0 0.0
      %1085 = vmatprep.subr.mxu0 0.0
      %1086 = vmatpush1.xpose.msra.mxu0 0.0
      %1087 = vmatprep.subr.mxu0 0.0
      %1088 = vmatpush1.xpose.msra.mxu0 0.0
      %1089 = vmatprep.subr.mxu0 0.0
      %1090 = vmatpush1.xpose.msra.mxu0 0.0
      %1091 = vmatprep.subr.mxu0 0.0
      %1092 = vmatpush1.xpose.msra.mxu0 0.0
      %1093 = vmatprep.subr.mxu0 0.0
      %1094 = vmatpush1.xpose.msra.mxu0 0.0
      %1095 = vmatprep.subr.mxu0 0.0
      %1096 = vmatpush1.xpose.msra.mxu0 0.0
      %1097 = vmatprep.subr.mxu0 0.0
      %1098 = vmatpush1.xpose.msra.mxu0 0.0
      %1099 = vmatprep.subr.mxu0 0.0
      %1100 = vmatpush1.xpose.msra.mxu0 0.0
      %1101 = vmatprep.subr.mxu0 0.0
      %1102 = vmatpush1.xpose.msra.mxu0 0.0
      %1103 = vmatprep.subr.mxu0 0.0
      %1104 = vmatpush1.xpose.msra.mxu0 0.0
      %1105 = vmatprep.subr.mxu0 0.0
      %1106 = vmatpush1.xpose.msra.mxu0 0.0
      %1107 = vmatprep.subr.mxu0 0.0
      %1108 = vmatpush1.xpose.msra.mxu0 0.0
      %1109 = vmatprep.subr.mxu0 0.0
      %1110 = vmatpush1.xpose.msra.mxu0 0.0
      %1111 = vmatprep.subr.mxu0 0.0
      %1112 = vmatpush1.xpose.msra.mxu0 0.0
      %1113 = vmatprep.subr.mxu0 0.0
      %1114 = vmatpush1.xpose.msra.mxu0 0.0
      %1115 = vmatprep.mubr.f32.mxu0 0.0
      %1116 = vmatmul.mubr.f32.gmra.mrb[0].mxu0 %v1047
      %v1117 = vpop.f32.mrb[0].mxu0
      %v1118 = vadd.f32 0.0, %v1117
      %v1119 = vpop.f32.mrb[0].mxu0
      %1120 = vdwg.mxu0
      %v1121 = vsel %vm635, -1e+30, %v1118
      %v1122 = vsel %vm637, %v1121, -inf
      %1123 = vmax.xlane.f32.xlu0 %v1122
      %v1124 = vpop.xlane.xlu0 %1123
      %v1125 = vsub.f32 %v1121, %v1124
      %v1126 = vmul.f32 %v1125, 1.442695
      %v1127 = vpow.pop %v1126
      %v1128 = vsel %vm637, %v1127, 0.0
      %1129 = vadd.xlane.f32.xlu0 %v1128
      %v1130 = vpop.xlane.xlu0 %1129
      %v1131 = vrcp.pop %v1130
      %v1132 = vmul.f32 %v1127, %v1131
      %1133 = vrot.lane.b32.xlu0 %v547, 64
      %v1134 = vpop.permute.xlu0 %1133
      %v1137 = vsel %vm637, %v1132, 0
      %1139 = vmatprep.subr.mxu0 0.0
      %1140 = vmatpush1.msra.mxu0 %v1134
      %1141 = vmatprep.subr.mxu0 0.0
      %1142 = vmatpush1.msra.mxu0 0.0
      %1143 = vmatprep.subr.mxu0 0.0
      %1144 = vmatpush1.msra.mxu0 0.0
      %1145 = vmatprep.subr.mxu0 0.0
      %1146 = vmatpush1.msra.mxu0 0.0
      %1147 = vmatprep.subr.mxu0 0.0
      %1148 = vmatpush1.msra.mxu0 0.0
      %1149 = vmatprep.subr.mxu0 0.0
      %1150 = vmatpush1.msra.mxu0 0.0
      %1151 = vmatprep.subr.mxu0 0.0
      %1152 = vmatpush1.msra.mxu0 0.0
      %1153 = vmatprep.subr.mxu0 0.0
      %1154 = vmatpush1.msra.mxu0 0.0
      %1155 = vmatprep.subr.mxu0 0.0
      %1156 = vmatpush1.msra.mxu0 0.0
      %1157 = vmatprep.subr.mxu0 0.0
      %1158 = vmatpush1.msra.mxu0 0.0
      %1159 = vmatprep.subr.mxu0 0.0
      %1160 = vmatpush1.msra.mxu0 0.0
      %1161 = vmatprep.subr.mxu0 0.0
      %1162 = vmatpush1.msra.mxu0 0.0
      %1163 = vmatprep.subr.mxu0 0.0
      %1164 = vmatpush1.msra.mxu0 0.0
      %1165 = vmatprep.subr.mxu0 0.0
      %1166 = vmatpush1.msra.mxu0 0.0
      %1167 = vmatprep.subr.mxu0 0.0
      %1168 = vmatpush1.msra.mxu0 0.0
      %1169 = vmatprep.subr.mxu0 0.0
      %1170 = vmatpush1.msra.mxu0 0.0
      %1171 = vmatprep.subr.mxu0 0.0
      %1172 = vmatpush1.msra.mxu0 0.0
      %1173 = vmatprep.subr.mxu0 0.0
      %1174 = vmatpush1.msra.mxu0 0.0
      %1175 = vmatprep.subr.mxu0 0.0
      %1176 = vmatpush1.msra.mxu0 0.0
      %1177 = vmatprep.subr.mxu0 0.0
      %1178 = vmatpush1.msra.mxu0 0.0
      %1179 = vmatprep.subr.mxu0 0.0
      %1180 = vmatpush1.msra.mxu0 0.0
      %1181 = vmatprep.subr.mxu0 0.0
      %1182 = vmatpush1.msra.mxu0 0.0
      %1183 = vmatprep.subr.mxu0 0.0
      %1184 = vmatpush1.msra.mxu0 0.0
      %1185 = vmatprep.subr.mxu0 0.0
      %1186 = vmatpush1.msra.mxu0 0.0
      %1187 = vmatprep.subr.mxu0 0.0
      %1188 = vmatpush1.msra.mxu0 0.0
      %1189 = vmatprep.subr.mxu0 0.0
      %1190 = vmatpush1.msra.mxu0 0.0
      %1191 = vmatprep.subr.mxu0 0.0
      %1192 = vmatpush1.msra.mxu0 0.0
      %1193 = vmatprep.subr.mxu0 0.0
      %1194 = vmatpush1.msra.mxu0 0.0
      %1195 = vmatprep.subr.mxu0 0.0
      %1196 = vmatpush1.msra.mxu0 0.0
      %1197 = vmatprep.subr.mxu0 0.0
      %1198 = vmatpush1.msra.mxu0 0.0
      %1199 = vmatprep.subr.mxu0 0.0
      %1200 = vmatpush1.msra.mxu0 0.0
      %1201 = vmatprep.subr.mxu0 0.0
      %1202 = vmatpush1.msra.mxu0 0.0
      %1203 = vmatprep.mubr.f32.mxu0 0.0
      %1204 = vmatmul.mubr.f32.gmra.mrb[0].mxu0 %v1137
      %v1205 = vpop.f32.mrb[0].mxu0
      %v1206 = vadd.f32 0.0, %v1205
      %v1207 = vpop.f32.mrb[0].mxu0
      %1208 = vdwg.mxu0
      %v1209 = vld [vmem:[%s6 + $0x40] sm:$0xff]
      %v1210 = vld [vmem:[%s6 + $0x48] sm:$0xff]
      %v1211 = vld [vmem:[%s6 + $0x50] sm:$0xff]
      %v1212 = vld [vmem:[%s6 + $0x58] sm:$0xff]
      %v1214 = vsel %vm553, %v1206, 0
      %1216 = vmatprep.subr.mxu0 0.0
      %1217 = vmatpush1.msra.mxu0 %v1209
      %1218 = vmatprep.subr.mxu0 0.0
      %1219 = vmatpush1.msra.mxu0 %v1210
      %1220 = vmatprep.subr.mxu0 0.0
      %1221 = vmatpush1.msra.mxu0 %v1211
      %1222 = vmatprep.subr.mxu0 0.0
      %1223 = vmatpush1.msra.mxu0 %v1212
      %1224 = vmatprep.subr.mxu0 0.0
      %1225 = vmatpush1.msra.mxu0 0.0
      %1226 = vmatprep.subr.mxu0 0.0
      %1227 = vmatpush1.msra.mxu0 0.0
      %1228 = vmatprep.subr.mxu0 0.0
      %1229 = vmatpush1.msra.mxu0 0.0
      %1230 = vmatprep.subr.mxu0 0.0
      %1231 = vmatpush1.msra.mxu0 0.0
      %1232 = vmatprep.subr.mxu0 0.0
      %1233 = vmatpush1.msra.mxu0 0.0
      %1234 = vmatprep.subr.mxu0 0.0
      %1235 = vmatpush1.msra.mxu0 0.0
      %1236 = vmatprep.subr.mxu0 0.0
      %1237 = vmatpush1.msra.mxu0 0.0
      %1238 = vmatprep.subr.mxu0 0.0
      %1239 = vmatpush1.msra.mxu0 0.0
      %1240 = vmatprep.subr.mxu0 0.0
      %1241 = vmatpush1.msra.mxu0 0.0
      %1242 = vmatprep.subr.mxu0 0.0
      %1243 = vmatpush1.msra.mxu0 0.0
      %1244 = vmatprep.subr.mxu0 0.0
      %1245 = vmatpush1.msra.mxu0 0.0
      %1246 = vmatprep.subr.mxu0 0.0
      %1247 = vmatpush1.msra.mxu0 0.0
      %1248 = vmatprep.subr.mxu0 0.0
      %1249 = vmatpush1.msra.mxu0 0.0
      %1250 = vmatprep.subr.mxu0 0.0
      %1251 = vmatpush1.msra.mxu0 0.0
      %1252 = vmatprep.subr.mxu0 0.0
      %1253 = vmatpush1.msra.mxu0 0.0
      %1254 = vmatprep.subr.mxu0 0.0
      %1255 = vmatpush1.msra.mxu0 0.0
      %1256 = vmatprep.subr.mxu0 0.0
      %1257 = vmatpush1.msra.mxu0 0.0
      %1258 = vmatprep.subr.mxu0 0.0
      %1259 = vmatpush1.msra.mxu0 0.0
      %1260 = vmatprep.subr.mxu0 0.0
      %1261 = vmatpush1.msra.mxu0 0.0
      %1262 = vmatprep.subr.mxu0 0.0
      %1263 = vmatpush1.msra.mxu0 0.0
      %1264 = vmatprep.subr.mxu0 0.0
      %1265 = vmatpush1.msra.mxu0 0.0
      %1266 = vmatprep.subr.mxu0 0.0
      %1267 = vmatpush1.msra.mxu0 0.0
      %1268 = vmatprep.subr.mxu0 0.0
      %1269 = vmatpush1.msra.mxu0 0.0
      %1270 = vmatprep.subr.mxu0 0.0
      %1271 = vmatpush1.msra.mxu0 0.0
      %1272 = vmatprep.subr.mxu0 0.0
      %1273 = vmatpush1.msra.mxu0 0.0
      %1274 = vmatprep.subr.mxu0 0.0
      %1275 = vmatpush1.msra.mxu0 0.0
      %1276 = vmatprep.subr.mxu0 0.0
      %1277 = vmatpush1.msra.mxu0 0.0
      %1278 = vmatprep.subr.mxu0 0.0
      %1279 = vmatpush1.msra.mxu0 0.0
      %1280 = vmatprep.mubr.f32.mxu0 0.0
      %1281 = vmatmul.mubr.f32.gmra.mrb[0].mxu0 %v1214
      %v1282 = vpop.f32.mrb[0].mxu0
      %v1283 = vadd.f32 0.0, %v1282
      %v1284 = vpop.f32.mrb[0].mxu0
      %1285 = vdwg.mxu0
      %v1286 = vadd.f32 %v1040, %v1283
      %1287 = vrot.lane.b32.xlu0 %v552, 32
      %v1288 = vpop.permute.xlu0 %1287
      %1289 = vrot.lane.b32.xlu0 %v478, 32
      %v1290 = vpop.permute.xlu0 %1289
      %v1291 = vsel %vm553, %v1288, 0
      %v1293 = vsel %vm553, %v1290, 0
      %1295 = vmatprep.subr.mxu0 0.0
      %1296 = vmatpush1.xpose.msra.mxu0 %v1293
      %1297 = vmatprep.subr.mxu0 0.0
      %1298 = vmatpush1.xpose.msra.mxu0 0.0
      %1299 = vmatprep.subr.mxu0 0.0
      %1300 = vmatpush1.xpose.msra.mxu0 0.0
      %1301 = vmatprep.subr.mxu0 0.0
      %1302 = vmatpush1.xpose.msra.mxu0 0.0
      %1303 = vmatprep.subr.mxu0 0.0
      %1304 = vmatpush1.xpose.msra.mxu0 0.0
      %1305 = vmatprep.subr.mxu0 0.0
      %1306 = vmatpush1.xpose.msra.mxu0 0.0
      %1307 = vmatprep.subr.mxu0 0.0
      %1308 = vmatpush1.xpose.msra.mxu0 0.0
      %1309 = vmatprep.subr.mxu0 0.0
      %1310 = vmatpush1.xpose.msra.mxu0 0.0
      %1311 = vmatprep.subr.mxu0 0.0
      %1312 = vmatpush1.xpose.msra.mxu0 0.0
      %1313 = vmatprep.subr.mxu0 0.0
      %1314 = vmatpush1.xpose.msra.mxu0 0.0
      %1315 = vmatprep.subr.mxu0 0.0
      %1316 = vmatpush1.xpose.msra.mxu0 0.0
      %1317 = vmatprep.subr.mxu0 0.0
      %1318 = vmatpush1.xpose.msra.mxu0 0.0
      %1319 = vmatprep.subr.mxu0 0.0
      %1320 = vmatpush1.xpose.msra.mxu0 0.0
      %1321 = vmatprep.subr.mxu0 0.0
      %1322 = vmatpush1.xpose.msra.mxu0 0.0
      %1323 = vmatprep.subr.mxu0 0.0
      %1324 = vmatpush1.xpose.msra.mxu0 0.0
      %1325 = vmatprep.subr.mxu0 0.0
      %1326 = vmatpush1.xpose.msra.mxu0 0.0
      %1327 = vmatprep.subr.mxu0 0.0
      %1328 = vmatpush1.xpose.msra.mxu0 0.0
      %1329 = vmatprep.subr.mxu0 0.0
      %1330 = vmatpush1.xpose.msra.mxu0 0.0
      %1331 = vmatprep.subr.mxu0 0.0
      %1332 = vmatpush1.xpose.msra.mxu0 0.0
      %1333 = vmatprep.subr.mxu0 0.0
      %1334 = vmatpush1.xpose.msra.mxu0 0.0
      %1335 = vmatprep.subr.mxu0 0.0
      %1336 = vmatpush1.xpose.msra.mxu0 0.0
      %1337 = vmatprep.subr.mxu0 0.0
      %1338 = vmatpush1.xpose.msra.mxu0 0.0
      %1339 = vmatprep.subr.mxu0 0.0
      %1340 = vmatpush1.xpose.msra.mxu0 0.0
      %1341 = vmatprep.subr.mxu0 0.0
      %1342 = vmatpush1.xpose.msra.mxu0 0.0
      %1343 = vmatprep.subr.mxu0 0.0
      %1344 = vmatpush1.xpose.msra.mxu0 0.0
      %1345 = vmatprep.subr.mxu0 0.0
      %1346 = vmatpush1.xpose.msra.mxu0 0.0
      %1347 = vmatprep.subr.mxu0 0.0
      %1348 = vmatpush1.xpose.msra.mxu0 0.0
      %1349 = vmatprep.subr.mxu0 0.0
      %1350 = vmatpush1.xpose.msra.mxu0 0.0
      %1351 = vmatprep.subr.mxu0 0.0
      %1352 = vmatpush1.xpose.msra.mxu0 0.0
      %1353 = vmatprep.subr.mxu0 0.0
      %1354 = vmatpush1.xpose.msra.mxu0 0.0
      %1355 = vmatprep.subr.mxu0 0.0
      %1356 = vmatpush1.xpose.msra.mxu0 0.0
      %1357 = vmatprep.subr.mxu0 0.0
      %1358 = vmatpush1.xpose.msra.mxu0 0.0
      %1359 = vmatprep.mubr.f32.mxu0 0.0
      %1360 = vmatmul.mubr.f32.gmra.mrb[0].mxu0 %v1291
      %v1361 = vpop.f32.mrb[0].mxu0
      %v1362 = vadd.f32 0.0, %v1361
      %v1363 = vpop.f32.mrb[0].mxu0
      %1364 = vdwg.mxu0
      %v1365 = vsel %vm635, -1e+30, %v1362
      %v1366 = vsel %vm637, %v1365, -inf
      %1367 = vmax.xlane.f32.xlu0 %v1366
      %v1368 = vpop.xlane.xlu0 %1367
      %v1369 = vsub.f32 %v1365, %v1368
      %v1370 = vmul.f32 %v1369, 1.442695
      %v1371 = vpow.pop %v1370
      %v1372 = vsel %vm637, %v1371, 0.0
      %1373 = vadd.xlane.f32.xlu0 %v1372
      %v1374 = vpop.xlane.xlu0 %1373
      %v1375 = vrcp.pop %v1374
      %v1376 = vmul.f32 %v1371, %v1375
      %1377 = vrot.lane.b32.xlu0 %v547, 32
      %v1378 = vpop.permute.xlu0 %1377
      %v1381 = vsel %vm637, %v1376, 0
      %1383 = vmatprep.subr.mxu0 0.0
      %1384 = vmatpush1.msra.mxu0 %v1378
      %1385 = vmatprep.subr.mxu0 0.0
      %1386 = vmatpush1.msra.mxu0 0.0
      %1387 = vmatprep.subr.mxu0 0.0
      %1388 = vmatpush1.msra.mxu0 0.0
      %1389 = vmatprep.subr.mxu0 0.0
      %1390 = vmatpush1.msra.mxu0 0.0
      %1391 = vmatprep.subr.mxu0 0.0
      %1392 = vmatpush1.msra.mxu0 0.0
      %1393 = vmatprep.subr.mxu0 0.0
      %1394 = vmatpush1.msra.mxu0 0.0
      %1395 = vmatprep.subr.mxu0 0.0
      %1396 = vmatpush1.msra.mxu0 0.0
      %1397 = vmatprep.subr.mxu0 0.0
      %1398 = vmatpush1.msra.mxu0 0.0
      %1399 = vmatprep.subr.mxu0 0.0
      %1400 = vmatpush1.msra.mxu0 0.0
      %1401 = vmatprep.subr.mxu0 0.0
      %1402 = vmatpush1.msra.mxu0 0.0
      %1403 = vmatprep.subr.mxu0 0.0
      %1404 = vmatpush1.msra.mxu0 0.0
      %1405 = vmatprep.subr.mxu0 0.0
      %1406 = vmatpush1.msra.mxu0 0.0
      %1407 = vmatprep.subr.mxu0 0.0
      %1408 = vmatpush1.msra.mxu0 0.0
      %1409 = vmatprep.subr.mxu0 0.0
      %1410 = vmatpush1.msra.mxu0 0.0
      %1411 = vmatprep.subr.mxu0 0.0
      %1412 = vmatpush1.msra.mxu0 0.0
      %1413 = vmatprep.subr.mxu0 0.0
      %1414 = vmatpush1.msra.mxu0 0.0
      %1415 = vmatprep.subr.mxu0 0.0
      %1416 = vmatpush1.msra.mxu0 0.0
      %1417 = vmatprep.subr.mxu0 0.0
      %1418 = vmatpush1.msra.mxu0 0.0
      %1419 = vmatprep.subr.mxu0 0.0
      %1420 = vmatpush1.msra.mxu0 0.0
      %1421 = vmatprep.subr.mxu0 0.0
      %1422 = vmatpush1.msra.mxu0 0.0
      %1423 = vmatprep.subr.mxu0 0.0
      %1424 = vmatpush1.msra.mxu0 0.0
      %1425 = vmatprep.subr.mxu0 0.0
      %1426 = vmatpush1.msra.mxu0 0.0
      %1427 = vmatprep.subr.mxu0 0.0
      %1428 = vmatpush1.msra.mxu0 0.0
      %1429 = vmatprep.subr.mxu0 0.0
      %1430 = vmatpush1.msra.mxu0 0.0
      %1431 = vmatprep.subr.mxu0 0.0
      %1432 = vmatpush1.msra.mxu0 0.0
      %1433 = vmatprep.subr.mxu0 0.0
      %1434 = vmatpush1.msra.mxu0 0.0
      %1435 = vmatprep.subr.mxu0 0.0
      %1436 = vmatpush1.msra.mxu0 0.0
      %1437 = vmatprep.subr.mxu0 0.0
      %1438 = vmatpush1.msra.mxu0 0.0
      %1439 = vmatprep.subr.mxu0 0.0
      %1440 = vmatpush1.msra.mxu0 0.0
      %1441 = vmatprep.subr.mxu0 0.0
      %1442 = vmatpush1.msra.mxu0 0.0
      %1443 = vmatprep.subr.mxu0 0.0
      %1444 = vmatpush1.msra.mxu0 0.0
      %1445 = vmatprep.subr.mxu0 0.0
      %1446 = vmatpush1.msra.mxu0 0.0
      %1447 = vmatprep.mubr.f32.mxu0 0.0
      %1448 = vmatmul.mubr.f32.gmra.mrb[0].mxu0 %v1381
      %v1449 = vpop.f32.mrb[0].mxu0
      %v1450 = vadd.f32 0.0, %v1449
      %v1451 = vpop.f32.mrb[0].mxu0
      %1452 = vdwg.mxu0
      %v1453 = vld [vmem:[%s6 + $0x60] sm:$0xff]
      %v1454 = vld [vmem:[%s6 + $0x68] sm:$0xff]
      %v1455 = vld [vmem:[%s6 + $0x70] sm:$0xff]
      %v1456 = vld [vmem:[%s6 + $0x78] sm:$0xff]
      %v1458 = vsel %vm553, %v1450, 0
      %1460 = vmatprep.subr.mxu0 0.0
      %1461 = vmatpush1.msra.mxu0 %v1453
      %1462 = vmatprep.subr.mxu0 0.0
      %1463 = vmatpush1.msra.mxu0 %v1454
      %1464 = vmatprep.subr.mxu0 0.0
      %1465 = vmatpush1.msra.mxu0 %v1455
      %1466 = vmatprep.subr.mxu0 0.0
      %1467 = vmatpush1.msra.mxu0 %v1456
      %1468 = vmatprep.subr.mxu0 0.0
      %1469 = vmatpush1.msra.mxu0 0.0
      %1470 = vmatprep.subr.mxu0 0.0
      %1471 = vmatpush1.msra.mxu0 0.0
      %1472 = vmatprep.subr.mxu0 0.0
      %1473 = vmatpush1.msra.mxu0 0.0
      %1474 = vmatprep.subr.mxu0 0.0
      %1475 = vmatpush1.msra.mxu0 0.0
      %1476 = vmatprep.subr.mxu0 0.0
      %1477 = vmatpush1.msra.mxu0 0.0
      %1478 = vmatprep.subr.mxu0 0.0
      %1479 = vmatpush1.msra.mxu0 0.0
      %1480 = vmatprep.subr.mxu0 0.0
      %1481 = vmatpush1.msra.mxu0 0.0
      %1482 = vmatprep.subr.mxu0 0.0
      %1483 = vmatpush1.msra.mxu0 0.0
      %1484 = vmatprep.subr.mxu0 0.0
      %1485 = vmatpush1.msra.mxu0 0.0
      %1486 = vmatprep.subr.mxu0 0.0
      %1487 = vmatpush1.msra.mxu0 0.0
      %1488 = vmatprep.subr.mxu0 0.0
      %1489 = vmatpush1.msra.mxu0 0.0
      %1490 = vmatprep.subr.mxu0 0.0
      %1491 = vmatpush1.msra.mxu0 0.0
      %1492 = vmatprep.subr.mxu0 0.0
      %1493 = vmatpush1.msra.mxu0 0.0
      %1494 = vmatprep.subr.mxu0 0.0
      %1495 = vmatpush1.msra.mxu0 0.0
      %1496 = vmatprep.subr.mxu0 0.0
      %1497 = vmatpush1.msra.mxu0 0.0
      %1498 = vmatprep.subr.mxu0 0.0
      %1499 = vmatpush1.msra.mxu0 0.0
      %1500 = vmatprep.subr.mxu0 0.0
      %1501 = vmatpush1.msra.mxu0 0.0
      %1502 = vmatprep.subr.mxu0 0.0
      %1503 = vmatpush1.msra.mxu0 0.0
      %1504 = vmatprep.subr.mxu0 0.0
      %1505 = vmatpush1.msra.mxu0 0.0
      %1506 = vmatprep.subr.mxu0 0.0
      %1507 = vmatpush1.msra.mxu0 0.0
      %1508 = vmatprep.subr.mxu0 0.0
      %1509 = vmatpush1.msra.mxu0 0.0
      %1510 = vmatprep.subr.mxu0 0.0
      %1511 = vmatpush1.msra.mxu0 0.0
      %1512 = vmatprep.subr.mxu0 0.0
      %1513 = vmatpush1.msra.mxu0 0.0
      %1514 = vmatprep.subr.mxu0 0.0
      %1515 = vmatpush1.msra.mxu0 0.0
      %1516 = vmatprep.subr.mxu0 0.0
      %1517 = vmatpush1.msra.mxu0 0.0
      %1518 = vmatprep.subr.mxu0 0.0
      %1519 = vmatpush1.msra.mxu0 0.0
      %1520 = vmatprep.subr.mxu0 0.0
      %1521 = vmatpush1.msra.mxu0 0.0
      %1522 = vmatprep.subr.mxu0 0.0
      %1523 = vmatpush1.msra.mxu0 0.0
      %1524 = vmatprep.mubr.f32.mxu0 0.0
      %1525 = vmatmul.mubr.f32.gmra.mrb[0].mxu0 %v1458
      %v1526 = vpop.f32.mrb[0].mxu0
      %v1527 = vadd.f32 0.0, %v1526
      %v1528 = vpop.f32.mrb[0].mxu0
      %1529 = vdwg.mxu0
      %v1530 = vadd.f32 %v1286, %v1527
      %v1531 = vld [vmem:[%s7] sm:$0x1]
      %v1533 = vlaneseq
      %v1534 = vshrl.u32 %v1533, 7
      %v1535 = vsub.s32 0, %v1534
      %v1536 = vrot.slane %v1531, %v1535
      %v1538 = vadd.f32 %v1530, %v1536
      %v1539 = vadd.f32 %v315, %v1538
      %1540 = vst [vmem:[%s314] sm:$0xff] %v1539
      %p1541 = scmp.lt.s32.totalorder %s19, 1
      %s1542 = scalar_select %p1541, %s19, 1
      %s1543 = smul.addr %s1542, 8
      %s1544 = scalar_lea.vmem %s8, %s1543
      // Predicated region
      $region53: #{robust_text_cross_expert.16} parent=51 // pred_check
        %p1545 = pneg %p215
      $region54: #{robust_text_cross_expert.16} parent=51 // pred_check_branch
        %1547 = sbr.rel (%p1545) target = $region56
      $region55: #{robust_text_cross_expert.16} parent=51 // pred_region
        _
      $region56: #{robust_text_cross_expert.16} parent=51 // pred_fallthru
        _
    $region52: #{robust_text_cross_expert.16} parent=5 // pred_fallthru
      _
    %p1548 = scmp.le.s32.totalorder 2, %s14
    // Predicated region
    $region57: #{robust_text_cross_expert.16} parent=5 // pred_check
      %p1549 = pneg %p1548
    $region58: #{robust_text_cross_expert.16} parent=5 // pred_check_branch
      %1551 = sbr.rel (%p1549) target = $region60
    $region59: #{robust_text_cross_expert.16} parent=5 // pred_region
      %s1552 = ssub.s32 %s14, 2
      // Predicated region
      $region61: #{robust_text_cross_expert.16} parent=59 // pred_check
        %p1553 = pneg %p221
      $region62: #{robust_text_cross_expert.16} parent=59 // pred_check_branch
        %1555 = sbr.rel (%p1553) target = $region64
      $region63: #{robust_text_cross_expert.16} parent=59 // pred_region
        %p1556 = scmp.lt.s32.totalorder %s20, 1
        %s1557 = scalar_select %p1556, %s20, 1
        %s1558 = smul.addr %s1557, 8
        %s1559 = scalar_lea.vmem %s8, %s1558
      $region64: #{robust_text_cross_expert.16} parent=59 // pred_fallthru
        _
    $region60: #{robust_text_cross_expert.16} parent=5 // pred_fallthru
      _
  $region6: #{robust_text_cross_expert.16} parent=0 // loop_footer
    %s18 = sadd.s32 1, %s14
  $region7: #{robust_text_cross_expert.16} parent=0 // loop_footer_branch
    %13 = sbr.rel target = $region3
  $region8: #{robust_text_cross_expert.16} parent=0 // loop_exit
    _

// kernel: robust_text_cross_expert.18
$region0: #{robust_text_cross_expert.18}
  #allocation0 [shape = 'u32[]', space=smem, size = 0x4, offset = 0x4, fixed_abs, tag = 'smem constant byte address 0x4 - core index']
  #allocation1 [shape = 'u32[144,128]{1,0:T(1,128)}', space=vmem, size = 0x12000, scoped, tag = 'internal scratch']
  #allocation2 [shape = 'f32[1,1]{1,0:T(1,128)S(1)}', space=vmem, size = 0x200, scoped, tag = 'scoped memory for robust_text_cross_expert.18']
  %s0 = inlined_call_operand.vmem [shape: f32[2,8,128], index: 0, kind: input, shape index: {}]
  %s1 = inlined_call_operand.vmem [shape: f32[2,8,128], index: 1, kind: input, shape index: {}]
  %s2 = inlined_call_operand.vmem [shape: s32[2,1,8], index: 2, kind: input, shape index: {}]
  %s3 = inlined_call_operand.vmem [shape: f32[128,128], index: 3, kind: input, shape index: {}]
  %s4 = inlined_call_operand.vmem [shape: f32[1,128], index: 4, kind: input, shape index: {}]
  %s5 = inlined_call_operand.vmem [shape: f32[128,256], index: 5, kind: input, shape index: {}]
  %s6 = inlined_call_operand.vmem [shape: f32[1,256], index: 6, kind: input, shape index: {}]
  %s7 = inlined_call_operand.vmem [shape: f32[128,128], index: 7, kind: input, shape index: {}]
  %s8 = inlined_call_operand.vmem [shape: f32[1,128], index: 8, kind: input, shape index: {}]
  %s9 = inlined_call_operand.<no memory space> [shape: f32[1,1], index: 9, kind: input, shape index: {}]
  %s10 = inlined_call_operand.vmem [shape: f32[2,8,128], index: 10, kind: output, shape index: {}]
  %s11 = sld [smem:[#allocation0]]
  $region73: #{robust_text_cross_expert.18} parent=0
    _
  %s13 = ssub.s32 1, %s11
  %s14 = scalar_select 0, %s13, %s11
  %v15 = vstv %s9
  %16 = vst [vmem:[#allocation2] sm:$0x1] %v15
  loop: start=0, step=1, limit=4
  $region2: #{robust_text_cross_expert.18} parent=0 // loop_pre_header
    _
  $region3: #{robust_text_cross_expert.18} parent=0 // loop_header
    %s18 = sphi 0, %s22
    %p19 = scmp.ge.s32.totalorder %s18, 4
    %s28 = sphi 0, %s30
    %s31 = sphi 0, %s28
    %s32 = sphi 0, %s31
    %s48 = sphi 0, %s32
    %s54 = sphi 0, %s56
    %s57 = sphi 0, %s54
    %s58 = sphi 0, %s57
    %s74 = sphi 0, %s58
    %s80 = sphi 0, %s82
    %s83 = sphi 0, %s80
    %s84 = sphi 0, %s83
    %s100 = sphi 0, %s84
    %s104 = sphi 0, %s104
    %s106 = sphi 0, %s104
    %s107 = sphi 0, %s106
    %s121 = sphi 0, %s107
    %s125 = sphi 0, %s125
    %s127 = sphi 0, %s125
    %s128 = sphi 0, %s127
    %s142 = sphi 0, %s128
    %s146 = sphi 0, %s146
    %s148 = sphi 0, %s146
    %s149 = sphi 0, %s148
    %s163 = sphi 0, %s149
    %s167 = sphi 0, %s167
    %s169 = sphi 0, %s167
    %s170 = sphi 0, %s169
    %s184 = sphi 0, %s170
    %s188 = sphi 0, %s188
    %s190 = sphi 0, %s188
    %s191 = sphi 0, %s190
    %s205 = sphi 0, %s191
    %s209 = sphi 0, %s209
    %s211 = sphi 0, %s209
    %s212 = sphi 0, %s211
    %s226 = sphi 0, %s212
    %s230 = sphi 0, %s230
    %s232 = sphi 0, %s230
    %s233 = sphi 0, %s232
    %s247 = sphi 0, %s233
    %s253 = sphi 0, %s255
    %s256 = sphi 0, %s253
    %s257 = sphi 0, %s256
    %s273 = sphi 0, %s257
  $region4: #{robust_text_cross_expert.18} parent=0 // loop_header_branch
    %21 = sbr.rel (%p19) target = $region8
  $region5: #{robust_text_cross_expert.18} parent=0 // loop_body
    %s23 = ssub.s32 %s18, 1
    %s24 = ssub.s32 %s18, 2
    %s25 = sadd.s32 %s18, 1
    %s26 = ssub.s32 %s18, %s25
    %p27 = scmp.eq.s32.totalorder %s26, 0
    %s29 = sadd.s32 %s28, 1
    %s30 = scalar_select %p27, %s28, %s29
    %p33 = pneg %p27
    %p34 = scmp.eq.s32.totalorder %s18, 1
    %p35 = por %p33, %p34
    %p36 = scmp.ne.s32.totalorder %s28, %s31
    %p37 = scmp.eq.s32.totalorder %s18, 0
    %p38 = por %p36, %p37
    %p39 = scmp.ne.s32.totalorder %s28, %s31
    %p40 = scmp.eq.s32.totalorder %s23, 1
    %p41 = por %p39, %p40
    %p42 = scmp.ne.s32.totalorder %s31, %s32
    %p43 = scmp.eq.s32.totalorder %s23, 0
    %p44 = por %p42, %p43
    %p45 = scmp.ne.s32.totalorder %s31, %s32
    %p46 = scmp.eq.s32.totalorder %s24, 1
    %p47 = por %p45, %p46
    %p49 = scmp.ne.s32.totalorder %s32, %s48
    %p50 = scmp.eq.s32.totalorder %s24, 0
    %p51 = por %p49, %p50
    %s52 = ssub.s32 %s18, %s25
    %p53 = scmp.eq.s32.totalorder %s52, 0
    %s55 = sadd.s32 %s54, 1
    %s56 = scalar_select %p53, %s54, %s55
    %p59 = pneg %p53
    %p60 = scmp.eq.s32.totalorder %s18, 1
    %p61 = por %p59, %p60
    %p62 = scmp.ne.s32.totalorder %s54, %s57
    %p63 = scmp.eq.s32.totalorder %s18, 0
    %p64 = por %p62, %p63
    %p65 = scmp.ne.s32.totalorder %s54, %s57
    %p66 = scmp.eq.s32.totalorder %s23, 1
    %p67 = por %p65, %p66
    %p68 = scmp.ne.s32.totalorder %s57, %s58
    %p69 = scmp.eq.s32.totalorder %s23, 0
    %p70 = por %p68, %p69
    %p71 = scmp.ne.s32.totalorder %s57, %s58
    %p72 = scmp.eq.s32.totalorder %s24, 1
    %p73 = por %p71, %p72
    %p75 = scmp.ne.s32.totalorder %s58, %s74
    %p76 = scmp.eq.s32.totalorder %s24, 0
    %p77 = por %p75, %p76
    %s78 = ssub.s32 %s18, %s25
    %p79 = scmp.eq.s32.totalorder %s78, 0
    %s81 = sadd.s32 %s80, 1
    %s82 = scalar_select %p79, %s80, %s81
    %p85 = pneg %p79
    %p86 = scmp.eq.s32.totalorder %s18, 1
    %p87 = por %p85, %p86
    %p88 = scmp.ne.s32.totalorder %s80, %s83
    %p89 = scmp.eq.s32.totalorder %s18, 0
    %p90 = por %p88, %p89
    %p91 = scmp.ne.s32.totalorder %s80, %s83
    %p92 = scmp.eq.s32.totalorder %s23, 1
    %p93 = por %p91, %p92
    %p94 = scmp.ne.s32.totalorder %s83, %s84
    %p95 = scmp.eq.s32.totalorder %s23, 0
    %p96 = por %p94, %p95
    %p97 = scmp.ne.s32.totalorder %s83, %s84
    %p98 = scmp.eq.s32.totalorder %s24, 1
    %p99 = por %p97, %p98
    %p101 = scmp.ne.s32.totalorder %s84, %s100
    %p102 = scmp.eq.s32.totalorder %s24, 0
    %p103 = por %p101, %p102
    %s105 = sadd.s32 %s104, 1
    %p108 = scmp.eq.s32.totalorder %s18, 1
    %p109 = scmp.ne.s32.totalorder %s104, %s106
    %p110 = scmp.eq.s32.totalorder %s18, 0
    %p111 = por %p109, %p110
    %p112 = scmp.ne.s32.totalorder %s104, %s106
    %p113 = scmp.eq.s32.totalorder %s23, 1
    %p114 = por %p112, %p113
    %p115 = scmp.ne.s32.totalorder %s106, %s107
    %p116 = scmp.eq.s32.totalorder %s23, 0
    %p117 = por %p115, %p116
    %p118 = scmp.ne.s32.totalorder %s106, %s107
    %p119 = scmp.eq.s32.totalorder %s24, 1
    %p120 = por %p118, %p119
    %p122 = scmp.ne.s32.totalorder %s107, %s121
    %p123 = scmp.eq.s32.totalorder %s24, 0
    %p124 = por %p122, %p123
    %s126 = sadd.s32 %s125, 1
    %p129 = scmp.eq.s32.totalorder %s18, 1
    %p130 = scmp.ne.s32.totalorder %s125, %s127
    %p131 = scmp.eq.s32.totalorder %s18, 0
    %p132 = por %p130, %p131
    %p133 = scmp.ne.s32.totalorder %s125, %s127
    %p134 = scmp.eq.s32.totalorder %s23, 1
    %p135 = por %p133, %p134
    %p136 = scmp.ne.s32.totalorder %s127, %s128
    %p137 = scmp.eq.s32.totalorder %s23, 0
    %p138 = por %p136, %p137
    %p139 = scmp.ne.s32.totalorder %s127, %s128
    %p140 = scmp.eq.s32.totalorder %s24, 1
    %p141 = por %p139, %p140
    %p143 = scmp.ne.s32.totalorder %s128, %s142
    %p144 = scmp.eq.s32.totalorder %s24, 0
    %p145 = por %p143, %p144
    %s147 = sadd.s32 %s146, 1
    %p150 = scmp.eq.s32.totalorder %s18, 1
    %p151 = scmp.ne.s32.totalorder %s146, %s148
    %p152 = scmp.eq.s32.totalorder %s18, 0
    %p153 = por %p151, %p152
    %p154 = scmp.ne.s32.totalorder %s146, %s148
    %p155 = scmp.eq.s32.totalorder %s23, 1
    %p156 = por %p154, %p155
    %p157 = scmp.ne.s32.totalorder %s148, %s149
    %p158 = scmp.eq.s32.totalorder %s23, 0
    %p159 = por %p157, %p158
    %p160 = scmp.ne.s32.totalorder %s148, %s149
    %p161 = scmp.eq.s32.totalorder %s24, 1
    %p162 = por %p160, %p161
    %p164 = scmp.ne.s32.totalorder %s149, %s163
    %p165 = scmp.eq.s32.totalorder %s24, 0
    %p166 = por %p164, %p165
    %s168 = sadd.s32 %s167, 1
    %p171 = scmp.eq.s32.totalorder %s18, 1
    %p172 = scmp.ne.s32.totalorder %s167, %s169
    %p173 = scmp.eq.s32.totalorder %s18, 0
    %p174 = por %p172, %p173
    %p175 = scmp.ne.s32.totalorder %s167, %s169
    %p176 = scmp.eq.s32.totalorder %s23, 1
    %p177 = por %p175, %p176
    %p178 = scmp.ne.s32.totalorder %s169, %s170
    %p179 = scmp.eq.s32.totalorder %s23, 0
    %p180 = por %p178, %p179
    %p181 = scmp.ne.s32.totalorder %s169, %s170
    %p182 = scmp.eq.s32.totalorder %s24, 1
    %p183 = por %p181, %p182
    %p185 = scmp.ne.s32.totalorder %s170, %s184
    %p186 = scmp.eq.s32.totalorder %s24, 0
    %p187 = por %p185, %p186
    %s189 = sadd.s32 %s188, 1
    %p192 = scmp.eq.s32.totalorder %s18, 1
    %p193 = scmp.ne.s32.totalorder %s188, %s190
    %p194 = scmp.eq.s32.totalorder %s18, 0
    %p195 = por %p193, %p194
    %p196 = scmp.ne.s32.totalorder %s188, %s190
    %p197 = scmp.eq.s32.totalorder %s23, 1
    %p198 = por %p196, %p197
    %p199 = scmp.ne.s32.totalorder %s190, %s191
    %p200 = scmp.eq.s32.totalorder %s23, 0
    %p201 = por %p199, %p200
    %p202 = scmp.ne.s32.totalorder %s190, %s191
    %p203 = scmp.eq.s32.totalorder %s24, 1
    %p204 = por %p202, %p203
    %p206 = scmp.ne.s32.totalorder %s191, %s205
    %p207 = scmp.eq.s32.totalorder %s24, 0
    %p208 = por %p206, %p207
    %s210 = sadd.s32 %s209, 1
    %p213 = scmp.eq.s32.totalorder %s18, 1
    %p214 = scmp.ne.s32.totalorder %s209, %s211
    %p215 = scmp.eq.s32.totalorder %s18, 0
    %p216 = por %p214, %p215
    %p217 = scmp.ne.s32.totalorder %s209, %s211
    %p218 = scmp.eq.s32.totalorder %s23, 1
    %p219 = por %p217, %p218
    %p220 = scmp.ne.s32.totalorder %s211, %s212
    %p221 = scmp.eq.s32.totalorder %s23, 0
    %p222 = por %p220, %p221
    %p223 = scmp.ne.s32.totalorder %s211, %s212
    %p224 = scmp.eq.s32.totalorder %s24, 1
    %p225 = por %p223, %p224
    %p227 = scmp.ne.s32.totalorder %s212, %s226
    %p228 = scmp.eq.s32.totalorder %s24, 0
    %p229 = por %p227, %p228
    %s231 = sadd.s32 %s230, 1
    %p234 = scmp.eq.s32.totalorder %s18, 1
    %p235 = scmp.ne.s32.totalorder %s230, %s232
    %p236 = scmp.eq.s32.totalorder %s18, 0
    %p237 = por %p235, %p236
    %p238 = scmp.ne.s32.totalorder %s230, %s232
    %p239 = scmp.eq.s32.totalorder %s23, 1
    %p240 = por %p238, %p239
    %p241 = scmp.ne.s32.totalorder %s232, %s233
    %p242 = scmp.eq.s32.totalorder %s23, 0
    %p243 = por %p241, %p242
    %p244 = scmp.ne.s32.totalorder %s232, %s233
    %p245 = scmp.eq.s32.totalorder %s24, 1
    %p246 = por %p244, %p245
    %p248 = scmp.ne.s32.totalorder %s233, %s247
    %p249 = scmp.eq.s32.totalorder %s24, 0
    %p250 = por %p248, %p249
    %s251 = ssub.s32 %s18, %s25
    %p252 = scmp.eq.s32.totalorder %s251, 0
    %s254 = sadd.s32 %s253, 1
    %s255 = scalar_select %p252, %s253, %s254
    %p258 = pneg %p252
    %p259 = scmp.eq.s32.totalorder %s18, 1
    %p260 = por %p258, %p259
    %p261 = scmp.ne.s32.totalorder %s253, %s256
    %p262 = scmp.eq.s32.totalorder %s18, 0
    %p263 = por %p261, %p262
    %p264 = scmp.ne.s32.totalorder %s253, %s256
    %p265 = scmp.eq.s32.totalorder %s23, 1
    %p266 = por %p264, %p265
    %p267 = scmp.ne.s32.totalorder %s256, %s257
    %p268 = scmp.eq.s32.totalorder %s23, 0
    %p269 = por %p267, %p268
    %p270 = scmp.ne.s32.totalorder %s256, %s257
    %p271 = scmp.eq.s32.totalorder %s24, 1
    %p272 = por %p270, %p271
    %p274 = scmp.ne.s32.totalorder %s257, %s273
    %p275 = scmp.eq.s32.totalorder %s24, 0
    %p276 = por %p274, %p275
    %p277 = scmp.le.s32.totalorder 1, %s18
    %p278 = scmp.lt.s32.totalorder %s18, 3
    %p279 = pnand %p277, %p278
    %p280 = pneg %p279
    // Predicated region
    $region9: #{robust_text_cross_expert.18} parent=5 // pred_check
      _
    $region10: #{robust_text_cross_expert.18} parent=5 // pred_check_branch
      %282 = sbr.rel (%p279) target = $region12
    $region11: #{robust_text_cross_expert.18} parent=5 // pred_region
      %s283 = ssub.s32 %s18, 1
      // Predicated region
      $region13: #{robust_text_cross_expert.18} parent=11 // pred_check
        %p284 = pneg %p117
      $region14: #{robust_text_cross_expert.18} parent=11 // pred_check_branch
        %286 = sbr.rel (%p284) target = $region16
      $region15: #{robust_text_cross_expert.18} parent=11 // pred_region
        _
      $region16: #{robust_text_cross_expert.18} parent=11 // pred_fallthru
        _
      // Predicated region
      $region17: #{robust_text_cross_expert.18} parent=11 // pred_check
        %p287 = pneg %p138
      $region18: #{robust_text_cross_expert.18} parent=11 // pred_check_branch
        %289 = sbr.rel (%p287) target = $region20
      $region19: #{robust_text_cross_expert.18} parent=11 // pred_region
        _
      $region20: #{robust_text_cross_expert.18} parent=11 // pred_fallthru
        _
      // Predicated region
      $region21: #{robust_text_cross_expert.18} parent=11 // pred_check
        %p290 = pneg %p159
      $region22: #{robust_text_cross_expert.18} parent=11 // pred_check_branch
        %292 = sbr.rel (%p290) target = $region24
      $region23: #{robust_text_cross_expert.18} parent=11 // pred_region
        _
      $region24: #{robust_text_cross_expert.18} parent=11 // pred_fallthru
        _
      // Predicated region
      $region25: #{robust_text_cross_expert.18} parent=11 // pred_check
        %p293 = pneg %p180
      $region26: #{robust_text_cross_expert.18} parent=11 // pred_check_branch
        %295 = sbr.rel (%p293) target = $region28
      $region27: #{robust_text_cross_expert.18} parent=11 // pred_region
        _
      $region28: #{robust_text_cross_expert.18} parent=11 // pred_fallthru
        _
      // Predicated region
      $region29: #{robust_text_cross_expert.18} parent=11 // pred_check
        %p296 = pneg %p201
      $region30: #{robust_text_cross_expert.18} parent=11 // pred_check_branch
        %298 = sbr.rel (%p296) target = $region32
      $region31: #{robust_text_cross_expert.18} parent=11 // pred_region
        _
      $region32: #{robust_text_cross_expert.18} parent=11 // pred_fallthru
        _
      // Predicated region
      $region33: #{robust_text_cross_expert.18} parent=11 // pred_check
        %p299 = pneg %p222
      $region34: #{robust_text_cross_expert.18} parent=11 // pred_check_branch
        %301 = sbr.rel (%p299) target = $region36
      $region35: #{robust_text_cross_expert.18} parent=11 // pred_region
        _
      $region36: #{robust_text_cross_expert.18} parent=11 // pred_fallthru
        _
      // Predicated region
      $region37: #{robust_text_cross_expert.18} parent=11 // pred_check
        %p302 = pneg %p243
      $region38: #{robust_text_cross_expert.18} parent=11 // pred_check_branch
        %304 = sbr.rel (%p302) target = $region40
      $region39: #{robust_text_cross_expert.18} parent=11 // pred_region
        _
      $region40: #{robust_text_cross_expert.18} parent=11 // pred_fallthru
        _
    $region12: #{robust_text_cross_expert.18} parent=5 // pred_fallthru
      _
    %p305 = scmp.lt.s32.totalorder %s18, 2
    // Predicated region
    $region41: #{robust_text_cross_expert.18} parent=5 // pred_check
      %p306 = pneg %p305
    $region42: #{robust_text_cross_expert.18} parent=5 // pred_check_branch
      %308 = sbr.rel (%p306) target = $region44
    $region43: #{robust_text_cross_expert.18} parent=5 // pred_region
      // Predicated region
      $region45: #{robust_text_cross_expert.18} parent=43 // pred_check
        %p309 = pneg %p38
      $region46: #{robust_text_cross_expert.18} parent=43 // pred_check_branch
        %311 = sbr.rel (%p309) target = $region48
      $region47: #{robust_text_cross_expert.18} parent=43 // pred_region
        %p312 = scmp.lt.s32.totalorder %s18, 1
        %s313 = scalar_select %p312, %s18, 1
        %s314 = smul.addr %s313, 8
        %s315 = scalar_lea.vmem %s0, %s314
      $region48: #{robust_text_cross_expert.18} parent=43 // pred_fallthru
        _
      // Predicated region
      $region49: #{robust_text_cross_expert.18} parent=43 // pred_check
        %p316 = pneg %p64
      $region50: #{robust_text_cross_expert.18} parent=43 // pred_check_branch
        %318 = sbr.rel (%p316) target = $region52
      $region51: #{robust_text_cross_expert.18} parent=43 // pred_region
        %p319 = scmp.lt.s32.totalorder %s18, 1
        %s320 = scalar_select %p319, %s18, 1
        %s321 = smul.addr %s320, 8
        %s322 = scalar_lea.vmem %s1, %s321
      $region52: #{robust_text_cross_expert.18} parent=43 // pred_fallthru
        _
      // Predicated region
      $region53: #{robust_text_cross_expert.18} parent=43 // pred_check
        %p323 = pneg %p90
      $region54: #{robust_text_cross_expert.18} parent=43 // pred_check_branch
        %325 = sbr.rel (%p323) target = $region56
      $region55: #{robust_text_cross_expert.18} parent=43 // pred_region
        %p326 = scmp.lt.s32.totalorder %s18, 1
        %s327 = scalar_select %p326, %s18, 1
        %s328 = scalar_lea.vmem %s2, %s327
      $region56: #{robust_text_cross_expert.18} parent=43 // pred_fallthru
        _
    $region44: #{robust_text_cross_expert.18} parent=5 // pred_fallthru
      _
    %p329 = scmp.le.s32.totalorder 1, %s18
    %p330 = scmp.lt.s32.totalorder %s18, 3
    %p331 = pnand %p329, %p330
    %p332 = pneg %p331
    // Predicated region
    $region57: #{robust_text_cross_expert.18} parent=5 // pred_check
      _
    $region58: #{robust_text_cross_expert.18} parent=5 // pred_check_branch
      %334 = sbr.rel (%p331) target = $region60
    $region59: #{robust_text_cross_expert.18} parent=5 // pred_region
      %s335 = ssub.s32 %s18, 1
      %p336 = scmp.lt.s32.totalorder %s23, 1
      %s337 = scalar_select %p336, %s23, 1
      %s338 = smul.addr %s337, 8
      %s339 = scalar_lea.vmem %s0, %s338
      %p340 = pneg %p44
      %p341 = pneg %p41
      %p342 = scmp.lt.s32.totalorder %s23, 1
      %s343 = scalar_select %p342, %s23, 1
      %s344 = smul.addr %s343, 8
      %s345 = scalar_lea.vmem %s1, %s344
      %p346 = pneg %p70
      %p347 = pneg %p67
      %p348 = scmp.lt.s32.totalorder %s23, 1
      %s349 = scalar_select %p348, %s23, 1
      %s350 = scalar_lea.vmem %s2, %s349
      %p351 = pneg %p96
      %p352 = pneg %p93
      %p353 = pneg %p117
      %p354 = pneg %p114
      %p355 = pneg %p138
      %p356 = pneg %p135
      %p357 = pneg %p159
      %p358 = pneg %p156
      %p359 = pneg %p180
      %p360 = pneg %p177
      %p361 = pneg %p201
      %p362 = pneg %p198
      %p363 = pneg %p222
      %p364 = pneg %p219
      %p365 = pneg %p243
      %p366 = pneg %p240
      %p367 = pneg %p269
      %p368 = pneg %p266
      %p369 = scmp.lt.s32.totalorder %s23, 1
      %s370 = scalar_select %p369, %s23, 1
      %s371 = smul.addr %s370, 8
      %s372 = scalar_lea.vmem %s10, %s371
      %p373 = scmp.lt.s32.totalorder %s23, 1
      %s374 = scalar_select %p373, %s23, 1
      %s375 = smul.addr %s374, 8
      %s376 = scalar_lea.vmem %s0, %s375
      %p377 = scmp.lt.s32.totalorder %s23, 1
      %s378 = scalar_select %p377, %s23, 1
      %s379 = smul.addr %s378, 8
      %s380 = scalar_lea.vmem %s1, %s379
      %p381 = scmp.lt.s32.totalorder %s23, 1
      %s382 = scalar_select %p381, %s23, 1
      %s383 = scalar_lea.vmem %s2, %s382
      %p384 = scmp.lt.s32.totalorder %s23, 1
      %s385 = scalar_select %p384, %s23, 1
      %s386 = smul.addr %s385, 8
      %s387 = scalar_lea.vmem %s10, %s386
      %v388 = vld [vmem:[%s376] sm:$0xff]
      %v389 = vld [vmem:[%s380] sm:$0xff]
      %v390 = vld [vmem:[%s3] sm:$0xff]
      %v391 = vld [vmem:[%s3 + $0x8] sm:$0xff]
      %v392 = vld [vmem:[%s3 + $0x10] sm:$0xff]
      %v393 = vld [vmem:[%s3 + $0x18] sm:$0xff]
      %v394 = vld [vmem:[%s3 + $0x20] sm:$0xff]
      %v395 = vld [vmem:[%s3 + $0x28] sm:$0xff]
      %v396 = vld [vmem:[%s3 + $0x30] sm:$0xff]
      %v397 = vld [vmem:[%s3 + $0x38] sm:$0xff]
      %v398 = vld [vmem:[%s3 + $0x40] sm:$0xff]
      %v399 = vld [vmem:[%s3 + $0x48] sm:$0xff]
      %v400 = vld [vmem:[%s3 + $0x50] sm:$0xff]
      %v401 = vld [vmem:[%s3 + $0x58] sm:$0xff]
      %v402 = vld [vmem:[%s3 + $0x60] sm:$0xff]
      %v403 = vld [vmem:[%s3 + $0x68] sm:$0xff]
      %v404 = vld [vmem:[%s3 + $0x70] sm:$0xff]
      %v405 = vld [vmem:[%s3 + $0x78] sm:$0xff]
      %v406 = vld [vmem:[%s4] sm:$0x1]
      %v408 = vlaneseq
      %v409 = vshrl.u32 %v408, 7
      %v410 = vsub.s32 0, %v409
      %v411 = vrot.slane %v406, %v410
      %413 = vmatprep.subr.mxu0 0.0
      %414 = vmatpush1.msra.mxu0 %v390
      %415 = vmatprep.subr.mxu0 0.0
      %416 = vmatpush1.msra.mxu0 %v391
      %417 = vmatprep.subr.mxu0 0.0
      %418 = vmatpush1.msra.mxu0 %v392
      %419 = vmatprep.subr.mxu0 0.0
      %420 = vmatpush1.msra.mxu0 %v393
      %421 = vmatprep.subr.mxu0 0.0
      %422 = vmatpush1.msra.mxu0 %v394
      %423 = vmatprep.subr.mxu0 0.0
      %424 = vmatpush1.msra.mxu0 %v395
      %425 = vmatprep.subr.mxu0 0.0
      %426 = vmatpush1.msra.mxu0 %v396
      %427 = vmatprep.subr.mxu0 0.0
      %428 = vmatpush1.msra.mxu0 %v397
      %429 = vmatprep.subr.mxu0 0.0
      %430 = vmatpush1.msra.mxu0 %v398
      %431 = vmatprep.subr.mxu0 0.0
      %432 = vmatpush1.msra.mxu0 %v399
      %433 = vmatprep.subr.mxu0 0.0
      %434 = vmatpush1.msra.mxu0 %v400
      %435 = vmatprep.subr.mxu0 0.0
      %436 = vmatpush1.msra.mxu0 %v401
      %437 = vmatprep.subr.mxu0 0.0
      %438 = vmatpush1.msra.mxu0 %v402
      %439 = vmatprep.subr.mxu0 0.0
      %440 = vmatpush1.msra.mxu0 %v403
      %441 = vmatprep.subr.mxu0 0.0
      %442 = vmatpush1.msra.mxu0 %v404
      %443 = vmatprep.subr.mxu0 0.0
      %444 = vmatpush1.msra.mxu0 %v405
      %445 = vmatprep.subr.mxu0 0.0
      %446 = vmatpush1.msra.mxu0 0.0
      %447 = vmatprep.subr.mxu0 0.0
      %448 = vmatpush1.msra.mxu0 0.0
      %449 = vmatprep.subr.mxu0 0.0
      %450 = vmatpush1.msra.mxu0 0.0
      %451 = vmatprep.subr.mxu0 0.0
      %452 = vmatpush1.msra.mxu0 0.0
      %453 = vmatprep.subr.mxu0 0.0
      %454 = vmatpush1.msra.mxu0 0.0
      %455 = vmatprep.subr.mxu0 0.0
      %456 = vmatpush1.msra.mxu0 0.0
      %457 = vmatprep.subr.mxu0 0.0
      %458 = vmatpush1.msra.mxu0 0.0
      %459 = vmatprep.subr.mxu0 0.0
      %460 = vmatpush1.msra.mxu0 0.0
      %461 = vmatprep.subr.mxu0 0.0
      %462 = vmatpush1.msra.mxu0 0.0
      %463 = vmatprep.subr.mxu0 0.0
      %464 = vmatpush1.msra.mxu0 0.0
      %465 = vmatprep.subr.mxu0 0.0
      %466 = vmatpush1.msra.mxu0 0.0
      %467 = vmatprep.subr.mxu0 0.0
      %468 = vmatpush1.msra.mxu0 0.0
      %469 = vmatprep.subr.mxu0 0.0
      %470 = vmatpush1.msra.mxu0 0.0
      %471 = vmatprep.subr.mxu0 0.0
      %472 = vmatpush1.msra.mxu0 0.0
      %473 = vmatprep.subr.mxu0 0.0
      %474 = vmatpush1.msra.mxu0 0.0
      %475 = vmatprep.subr.mxu0 0.0
      %476 = vmatpush1.msra.mxu0 0.0
      %477 = vmatprep.mubr.f32.mxu0 0.0
      %478 = vmatmul.mubr.f32.gmra.mrb[0].mxu0 %v388
      %v479 = vpop.f32.mrb[0].mxu0
      %v480 = vadd.f32 %v411, %v479
      %v481 = vpop.f32.mrb[0].mxu0
      %482 = vdwg.mxu0
      %v483 = vld [vmem:[%s5] sm:$0xff]
      %v484 = vld [vmem:[%s5 + $0x8] sm:$0xff]
      %v485 = vld [vmem:[%s5 + $0x10] sm:$0xff]
      %v486 = vld [vmem:[%s5 + $0x18] sm:$0xff]
      %v487 = vld [vmem:[%s5 + $0x20] sm:$0xff]
      %v488 = vld [vmem:[%s5 + $0x28] sm:$0xff]
      %v489 = vld [vmem:[%s5 + $0x30] sm:$0xff]
      %v490 = vld [vmem:[%s5 + $0x38] sm:$0xff]
      %v491 = vld [vmem:[%s5 + $0x40] sm:$0xff]
      %v492 = vld [vmem:[%s5 + $0x48] sm:$0xff]
      %v493 = vld [vmem:[%s5 + $0x50] sm:$0xff]
      %v494 = vld [vmem:[%s5 + $0x58] sm:$0xff]
      %v495 = vld [vmem:[%s5 + $0x60] sm:$0xff]
      %v496 = vld [vmem:[%s5 + $0x68] sm:$0xff]
      %v497 = vld [vmem:[%s5 + $0x70] sm:$0xff]
      %v498 = vld [vmem:[%s5 + $0x78] sm:$0xff]
      %v499 = vld [vmem:[%s5 + $0x80] sm:$0xff]
      %v500 = vld [vmem:[%s5 + $0x88] sm:$0xff]
      %v501 = vld [vmem:[%s5 + $0x90] sm:$0xff]
      %v502 = vld [vmem:[%s5 + $0x98] sm:$0xff]
      %v503 = vld [vmem:[%s5 + $0xa0] sm:$0xff]
      %v504 = vld [vmem:[%s5 + $0xa8] sm:$0xff]
      %v505 = vld [vmem:[%s5 + $0xb0] sm:$0xff]
      %v506 = vld [vmem:[%s5 + $0xb8] sm:$0xff]
      %v507 = vld [vmem:[%s5 + $0xc0] sm:$0xff]
      %v508 = vld [vmem:[%s5 + $0xc8] sm:$0xff]
      %v509 = vld [vmem:[%s5 + $0xd0] sm:$0xff]
      %v510 = vld [vmem:[%s5 + $0xd8] sm:$0xff]
      %v511 = vld [vmem:[%s5 + $0xe0] sm:$0xff]
      %v512 = vld [vmem:[%s5 + $0xe8] sm:$0xff]
      %v513 = vld [vmem:[%s5 + $0xf0] sm:$0xff]
      %v514 = vld [vmem:[%s5 + $0xf8] sm:$0xff]
      %v515 = vld [vmem:[%s6] sm:$0x3]
      %v517 = vlaneseq
      %v518 = vshrl.u32 %v517, 7
      %v519 = vsub.s32 0, %v518
      %v520 = vrot.slane %v515, %v519
      %v521 = vlaneseq
      %v522 = vshrl.u32 %v521, 7
      %v523 = vsub.s32 1, %v522
      %v524 = vrot.slane %v515, %v523
      %527 = vmatprep.subr.mxu0 %v484
      %528 = vmatpush1.msra.mxu0 %v483
      %529 = vmatprep.subr.mxu0 %v486
      %530 = vmatpush1.msra.mxu0 %v485
      %531 = vmatprep.subr.mxu0 %v488
      %532 = vmatpush1.msra.mxu0 %v487
      %533 = vmatprep.subr.mxu0 %v490
      %534 = vmatpush1.msra.mxu0 %v489
      %535 = vmatprep.subr.mxu0 %v492
      %536 = vmatpush1.msra.mxu0 %v491
      %537 = vmatprep.subr.mxu0 %v494
      %538 = vmatpush1.msra.mxu0 %v493
      %539 = vmatprep.subr.mxu0 %v496
      %540 = vmatpush1.msra.mxu0 %v495
      %541 = vmatprep.subr.mxu0 %v498
      %542 = vmatpush1.msra.mxu0 %v497
      %543 = vmatprep.subr.mxu0 %v500
      %544 = vmatpush1.msra.mxu0 %v499
      %545 = vmatprep.subr.mxu0 %v502
      %546 = vmatpush1.msra.mxu0 %v501
      %547 = vmatprep.subr.mxu0 %v504
      %548 = vmatpush1.msra.mxu0 %v503
      %549 = vmatprep.subr.mxu0 %v506
      %550 = vmatpush1.msra.mxu0 %v505
      %551 = vmatprep.subr.mxu0 %v508
      %552 = vmatpush1.msra.mxu0 %v507
      %553 = vmatprep.subr.mxu0 %v510
      %554 = vmatpush1.msra.mxu0 %v509
      %555 = vmatprep.subr.mxu0 %v512
      %556 = vmatpush1.msra.mxu0 %v511
      %557 = vmatprep.subr.mxu0 %v514
      %558 = vmatpush1.msra.mxu0 %v513
      %559 = vmatprep.subr.mxu0 0.0
      %560 = vmatpush1.msra.mxu0 0.0
      %561 = vmatprep.subr.mxu0 0.0
      %562 = vmatpush1.msra.mxu0 0.0
      %563 = vmatprep.subr.mxu0 0.0
      %564 = vmatpush1.msra.mxu0 0.0
      %565 = vmatprep.subr.mxu0 0.0
      %566 = vmatpush1.msra.mxu0 0.0
      %567 = vmatprep.subr.mxu0 0.0
      %568 = vmatpush1.msra.mxu0 0.0
      %569 = vmatprep.subr.mxu0 0.0
      %570 = vmatpush1.msra.mxu0 0.0
      %571 = vmatprep.subr.mxu0 0.0
      %572 = vmatpush1.msra.mxu0 0.0
      %573 = vmatprep.subr.mxu0 0.0
      %574 = vmatpush1.msra.mxu0 0.0
      %575 = vmatprep.subr.mxu0 0.0
      %576 = vmatpush1.msra.mxu0 0.0
      %577 = vmatprep.subr.mxu0 0.0
      %578 = vmatpush1.msra.mxu0 0.0
      %579 = vmatprep.subr.mxu0 0.0
      %580 = vmatpush1.msra.mxu0 0.0
      %581 = vmatprep.subr.mxu0 0.0
      %582 = vmatpush1.msra.mxu0 0.0
      %583 = vmatprep.subr.mxu0 0.0
      %584 = vmatpush1.msra.mxu0 0.0
      %585 = vmatprep.subr.mxu0 0.0
      %586 = vmatpush1.msra.mxu0 0.0
      %587 = vmatprep.subr.mxu0 0.0
      %588 = vmatpush1.msra.mxu0 0.0
      %589 = vmatprep.subr.mxu0 0.0
      %590 = vmatpush1.msra.mxu0 0.0
      %591 = vmatprep.mubr.f32.mxu0 0.0
      %592 = vmatmul.mubr.f32.gmra.mrb[0].mxu0 %v389
      %v593 = vpop.f32.mrb[0].mxu0
      %v594 = vadd.f32 %v520, %v593
      %v595 = vpop.f32.mrb[0].mxu0
      %v596 = vadd.f32 %v524, %v595
      %597 = vdwg.mxu0
      %v598 = vld [vmem:[%s383] sm:$0x1]
      %vm599 = vcmp.ne.s32.totalorder %v598, 0
      %v600 = vmul.f32 %v480, 0.17677669
      %vm601 = vcmask 261120
      %v603 = vsel %vm601, %v600, 0
      %v606 = vsel %vm601, %v594, 0
      %608 = vmatprep.subr.mxu0 0.0
      %609 = vmatpush1.xpose.msra.mxu0 %v606
      %610 = vmatprep.subr.mxu0 0.0
      %611 = vmatpush1.xpose.msra.mxu0 0.0
      %612 = vmatprep.subr.mxu0 0.0
      %613 = vmatpush1.xpose.msra.mxu0 0.0
      %614 = vmatprep.subr.mxu0 0.0
      %615 = vmatpush1.xpose.msra.mxu0 0.0
      %616 = vmatprep.subr.mxu0 0.0
      %617 = vmatpush1.xpose.msra.mxu0 0.0
      %618 = vmatprep.subr.mxu0 0.0
      %619 = vmatpush1.xpose.msra.mxu0 0.0
      %620 = vmatprep.subr.mxu0 0.0
      %621 = vmatpush1.xpose.msra.mxu0 0.0
      %622 = vmatprep.subr.mxu0 0.0
      %623 = vmatpush1.xpose.msra.mxu0 0.0
      %624 = vmatprep.subr.mxu0 0.0
      %625 = vmatpush1.xpose.msra.mxu0 0.0
      %626 = vmatprep.subr.mxu0 0.0
      %627 = vmatpush1.xpose.msra.mxu0 0.0
      %628 = vmatprep.subr.mxu0 0.0
      %629 = vmatpush1.xpose.msra.mxu0 0.0
      %630 = vmatprep.subr.mxu0 0.0
      %631 = vmatpush1.xpose.msra.mxu0 0.0
      %632 = vmatprep.subr.mxu0 0.0
      %633 = vmatpush1.xpose.msra.mxu0 0.0
      %634 = vmatprep.subr.mxu0 0.0
      %635 = vmatpush1.xpose.msra.mxu0 0.0
      %636 = vmatprep.subr.mxu0 0.0
      %637 = vmatpush1.xpose.msra.mxu0 0.0
      %638 = vmatprep.subr.mxu0 0.0
      %639 = vmatpush1.xpose.msra.mxu0 0.0
      %640 = vmatprep.subr.mxu0 0.0
      %641 = vmatpush1.xpose.msra.mxu0 0.0
      %642 = vmatprep.subr.mxu0 0.0
      %643 = vmatpush1.xpose.msra.mxu0 0.0
      %644 = vmatprep.subr.mxu0 0.0
      %645 = vmatpush1.xpose.msra.mxu0 0.0
      %646 = vmatprep.subr.mxu0 0.0
      %647 = vmatpush1.xpose.msra.mxu0 0.0
      %648 = vmatprep.subr.mxu0 0.0
      %649 = vmatpush1.xpose.msra.mxu0 0.0
      %650 = vmatprep.subr.mxu0 0.0
      %651 = vmatpush1.xpose.msra.mxu0 0.0
      %652 = vmatprep.subr.mxu0 0.0
      %653 = vmatpush1.xpose.msra.mxu0 0.0
      %654 = vmatprep.subr.mxu0 0.0
      %655 = vmatpush1.xpose.msra.mxu0 0.0
      %656 = vmatprep.subr.mxu0 0.0
      %657 = vmatpush1.xpose.msra.mxu0 0.0
      %658 = vmatprep.subr.mxu0 0.0
      %659 = vmatpush1.xpose.msra.mxu0 0.0
      %660 = vmatprep.subr.mxu0 0.0
      %661 = vmatpush1.xpose.msra.mxu0 0.0
      %662 = vmatprep.subr.mxu0 0.0
      %663 = vmatpush1.xpose.msra.mxu0 0.0
      %664 = vmatprep.subr.mxu0 0.0
      %665 = vmatpush1.xpose.msra.mxu0 0.0
      %666 = vmatprep.subr.mxu0 0.0
      %667 = vmatpush1.xpose.msra.mxu0 0.0
      %668 = vmatprep.subr.mxu0 0.0
      %669 = vmatpush1.xpose.msra.mxu0 0.0
      %670 = vmatprep.subr.mxu0 0.0
      %671 = vmatpush1.xpose.msra.mxu0 0.0
      %672 = vmatprep.mubr.f32.mxu0 0.0
      %673 = vmatmul.mubr.f32.gmra.mrb[0].mxu0 %v603
      %v674 = vpop.f32.mrb[0].mxu0
      %v675 = vadd.f32 0.0, %v674
      %v676 = vpop.f32.mrb[0].mxu0
      %677 = vdwg.mxu0
      %v678 = vsel %vm599, 1, 0
      %v679 = vlaneseq
      %v680 = vshrl.u32 %v679, 7
      %v681 = vsub.s32 0, %v680
      %v682 = vrot.slane %v678, %v681
      %vm683 = vcmp.eq.s32.totalorder %v682, 1
      %v684 = vsel %vm683, -1e+30, %v675
      %vm685 = vcmask 64512
      %v686 = vsel %vm685, %v684, -inf
      %687 = vmax.xlane.f32.xlu0 %v686
      %v688 = vpop.xlane.xlu0 %687
      %v689 = vsub.f32 %v684, %v688
      %v690 = vmul.f32 %v689, 1.442695
      %v691 = vpow.pop %v690
      %v692 = vsel %vm685, %v691, 0.0
      %693 = vadd.xlane.f32.xlu0 %v692
      %v694 = vpop.xlane.xlu0 %693
      %v695 = vrcp.pop %v694
      %v696 = vmul.f32 %v691, %v695
      %v698 = vsel %vm685, %v696, 0
      %700 = vmatprep.subr.mxu0 0.0
      %701 = vmatpush1.msra.mxu0 %v596
      %702 = vmatprep.subr.mxu0 0.0
      %703 = vmatpush1.msra.mxu0 0.0
      %704 = vmatprep.subr.mxu0 0.0
      %705 = vmatpush1.msra.mxu0 0.0
      %706 = vmatprep.subr.mxu0 0.0
      %707 = vmatpush1.msra.mxu0 0.0
      %708 = vmatprep.subr.mxu0 0.0
      %709 = vmatpush1.msra.mxu0 0.0
      %710 = vmatprep.subr.mxu0 0.0
      %711 = vmatpush1.msra.mxu0 0.0
      %712 = vmatprep.subr.mxu0 0.0
      %713 = vmatpush1.msra.mxu0 0.0
      %714 = vmatprep.subr.mxu0 0.0
      %715 = vmatpush1.msra.mxu0 0.0
      %716 = vmatprep.subr.mxu0 0.0
      %717 = vmatpush1.msra.mxu0 0.0
      %718 = vmatprep.subr.mxu0 0.0
      %719 = vmatpush1.msra.mxu0 0.0
      %720 = vmatprep.subr.mxu0 0.0
      %721 = vmatpush1.msra.mxu0 0.0
      %722 = vmatprep.subr.mxu0 0.0
      %723 = vmatpush1.msra.mxu0 0.0
      %724 = vmatprep.subr.mxu0 0.0
      %725 = vmatpush1.msra.mxu0 0.0
      %726 = vmatprep.subr.mxu0 0.0
      %727 = vmatpush1.msra.mxu0 0.0
      %728 = vmatprep.subr.mxu0 0.0
      %729 = vmatpush1.msra.mxu0 0.0
      %730 = vmatprep.subr.mxu0 0.0
      %731 = vmatpush1.msra.mxu0 0.0
      %732 = vmatprep.subr.mxu0 0.0
      %733 = vmatpush1.msra.mxu0 0.0
      %734 = vmatprep.subr.mxu0 0.0
      %735 = vmatpush1.msra.mxu0 0.0
      %736 = vmatprep.subr.mxu0 0.0
      %737 = vmatpush1.msra.mxu0 0.0
      %738 = vmatprep.subr.mxu0 0.0
      %739 = vmatpush1.msra.mxu0 0.0
      %740 = vmatprep.subr.mxu0 0.0
      %741 = vmatpush1.msra.mxu0 0.0
      %742 = vmatprep.subr.mxu0 0.0
      %743 = vmatpush1.msra.mxu0 0.0
      %744 = vmatprep.subr.mxu0 0.0
      %745 = vmatpush1.msra.mxu0 0.0
      %746 = vmatprep.subr.mxu0 0.0
      %747 = vmatpush1.msra.mxu0 0.0
      %748 = vmatprep.subr.mxu0 0.0
      %749 = vmatpush1.msra.mxu0 0.0
      %750 = vmatprep.subr.mxu0 0.0
      %751 = vmatpush1.msra.mxu0 0.0
      %752 = vmatprep.subr.mxu0 0.0
      %753 = vmatpush1.msra.mxu0 0.0
      %754 = vmatprep.subr.mxu0 0.0
      %755 = vmatpush1.msra.mxu0 0.0
      %756 = vmatprep.subr.mxu0 0.0
      %757 = vmatpush1.msra.mxu0 0.0
      %758 = vmatprep.subr.mxu0 0.0
      %759 = vmatpush1.msra.mxu0 0.0
      %760 = vmatprep.subr.mxu0 0.0
      %761 = vmatpush1.msra.mxu0 0.0
      %762 = vmatprep.subr.mxu0 0.0
      %763 = vmatpush1.msra.mxu0 0.0
      %764 = vmatprep.mubr.f32.mxu0 0.0
      %765 = vmatmul.mubr.f32.gmra.mrb[0].mxu0 %v698
      %v766 = vpop.f32.mrb[0].mxu0
      %v767 = vadd.f32 0.0, %v766
      %v768 = vpop.f32.mrb[0].mxu0
      %769 = vdwg.mxu0
      %v770 = vld [vmem:[%s7] sm:$0xff]
      %v771 = vld [vmem:[%s7 + $0x8] sm:$0xff]
      %v772 = vld [vmem:[%s7 + $0x10] sm:$0xff]
      %v773 = vld [vmem:[%s7 + $0x18] sm:$0xff]
      %774 = vrot.lane.b32.xlu0 %v600, 96
      %v775 = vpop.permute.xlu0 %774
      %776 = vrot.lane.b32.xlu0 %v594, 96
      %v777 = vpop.permute.xlu0 %776
      %v778 = vsel %vm601, %v775, 0
      %v780 = vsel %vm601, %v777, 0
      %782 = vmatprep.subr.mxu0 0.0
      %783 = vmatpush1.xpose.msra.mxu0 %v780
      %784 = vmatprep.subr.mxu0 0.0
      %785 = vmatpush1.xpose.msra.mxu0 0.0
      %786 = vmatprep.subr.mxu0 0.0
      %787 = vmatpush1.xpose.msra.mxu0 0.0
      %788 = vmatprep.subr.mxu0 0.0
      %789 = vmatpush1.xpose.msra.mxu0 0.0
      %790 = vmatprep.subr.mxu0 0.0
      %791 = vmatpush1.xpose.msra.mxu0 0.0
      %792 = vmatprep.subr.mxu0 0.0
      %793 = vmatpush1.xpose.msra.mxu0 0.0
      %794 = vmatprep.subr.mxu0 0.0
      %795 = vmatpush1.xpose.msra.mxu0 0.0
      %796 = vmatprep.subr.mxu0 0.0
      %797 = vmatpush1.xpose.msra.mxu0 0.0
      %798 = vmatprep.subr.mxu0 0.0
      %799 = vmatpush1.xpose.msra.mxu0 0.0
      %800 = vmatprep.subr.mxu0 0.0
      %801 = vmatpush1.xpose.msra.mxu0 0.0
      %802 = vmatprep.subr.mxu0 0.0
      %803 = vmatpush1.xpose.msra.mxu0 0.0
      %804 = vmatprep.subr.mxu0 0.0
      %805 = vmatpush1.xpose.msra.mxu0 0.0
      %806 = vmatprep.subr.mxu0 0.0
      %807 = vmatpush1.xpose.msra.mxu0 0.0
      %808 = vmatprep.subr.mxu0 0.0
      %809 = vmatpush1.xpose.msra.mxu0 0.0
      %810 = vmatprep.subr.mxu0 0.0
      %811 = vmatpush1.xpose.msra.mxu0 0.0
      %812 = vmatprep.subr.mxu0 0.0
      %813 = vmatpush1.xpose.msra.mxu0 0.0
      %814 = vmatprep.subr.mxu0 0.0
      %815 = vmatpush1.xpose.msra.mxu0 0.0
      %816 = vmatprep.subr.mxu0 0.0
      %817 = vmatpush1.xpose.msra.mxu0 0.0
      %818 = vmatprep.subr.mxu0 0.0
      %819 = vmatpush1.xpose.msra.mxu0 0.0
      %820 = vmatprep.subr.mxu0 0.0
      %821 = vmatpush1.xpose.msra.mxu0 0.0
      %822 = vmatprep.subr.mxu0 0.0
      %823 = vmatpush1.xpose.msra.mxu0 0.0
      %824 = vmatprep.subr.mxu0 0.0
      %825 = vmatpush1.xpose.msra.mxu0 0.0
      %826 = vmatprep.subr.mxu0 0.0
      %827 = vmatpush1.xpose.msra.mxu0 0.0
      %828 = vmatprep.subr.mxu0 0.0
      %829 = vmatpush1.xpose.msra.mxu0 0.0
      %830 = vmatprep.subr.mxu0 0.0
      %831 = vmatpush1.xpose.msra.mxu0 0.0
      %832 = vmatprep.subr.mxu0 0.0
      %833 = vmatpush1.xpose.msra.mxu0 0.0
      %834 = vmatprep.subr.mxu0 0.0
      %835 = vmatpush1.xpose.msra.mxu0 0.0
      %836 = vmatprep.subr.mxu0 0.0
      %837 = vmatpush1.xpose.msra.mxu0 0.0
      %838 = vmatprep.subr.mxu0 0.0
      %839 = vmatpush1.xpose.msra.mxu0 0.0
      %840 = vmatprep.subr.mxu0 0.0
      %841 = vmatpush1.xpose.msra.mxu0 0.0
      %842 = vmatprep.subr.mxu0 0.0
      %843 = vmatpush1.xpose.msra.mxu0 0.0
      %844 = vmatprep.subr.mxu0 0.0
      %845 = vmatpush1.xpose.msra.mxu0 0.0
      %846 = vmatprep.mubr.f32.mxu0 0.0
      %847 = vmatmul.mubr.f32.gmra.mrb[0].mxu0 %v778
      %v848 = vpop.f32.mrb[0].mxu0
      %v849 = vadd.f32 0.0, %v848
      %v850 = vpop.f32.mrb[0].mxu0
      %851 = vdwg.mxu0
      %v852 = vsel %vm683, -1e+30, %v849
      %v853 = vsel %vm685, %v852, -inf
      %854 = vmax.xlane.f32.xlu0 %v853
      %v855 = vpop.xlane.xlu0 %854
      %v856 = vsub.f32 %v852, %v855
      %v857 = vmul.f32 %v856, 1.442695
      %v858 = vpow.pop %v857
      %v859 = vsel %vm685, %v858, 0.0
      %860 = vadd.xlane.f32.xlu0 %v859
      %v861 = vpop.xlane.xlu0 %860
      %v862 = vrcp.pop %v861
      %v863 = vmul.f32 %v858, %v862
      %865 = vrot.lane.b32.xlu0 %v596, 96
      %v866 = vpop.permute.xlu0 %865
      %v869 = vsel %vm685, %v863, 0
      %871 = vmatprep.subr.mxu0 0.0
      %872 = vmatpush1.msra.mxu0 %v866
      %873 = vmatprep.subr.mxu0 0.0
      %874 = vmatpush1.msra.mxu0 0.0
      %875 = vmatprep.subr.mxu0 0.0
      %876 = vmatpush1.msra.mxu0 0.0
      %877 = vmatprep.subr.mxu0 0.0
      %878 = vmatpush1.msra.mxu0 0.0
      %879 = vmatprep.subr.mxu0 0.0
      %880 = vmatpush1.msra.mxu0 0.0
      %881 = vmatprep.subr.mxu0 0.0
      %882 = vmatpush1.msra.mxu0 0.0
      %883 = vmatprep.subr.mxu0 0.0
      %884 = vmatpush1.msra.mxu0 0.0
      %885 = vmatprep.subr.mxu0 0.0
      %886 = vmatpush1.msra.mxu0 0.0
      %887 = vmatprep.subr.mxu0 0.0
      %888 = vmatpush1.msra.mxu0 0.0
      %889 = vmatprep.subr.mxu0 0.0
      %890 = vmatpush1.msra.mxu0 0.0
      %891 = vmatprep.subr.mxu0 0.0
      %892 = vmatpush1.msra.mxu0 0.0
      %893 = vmatprep.subr.mxu0 0.0
      %894 = vmatpush1.msra.mxu0 0.0
      %895 = vmatprep.subr.mxu0 0.0
      %896 = vmatpush1.msra.mxu0 0.0
      %897 = vmatprep.subr.mxu0 0.0
      %898 = vmatpush1.msra.mxu0 0.0
      %899 = vmatprep.subr.mxu0 0.0
      %900 = vmatpush1.msra.mxu0 0.0
      %901 = vmatprep.subr.mxu0 0.0
      %902 = vmatpush1.msra.mxu0 0.0
      %903 = vmatprep.subr.mxu0 0.0
      %904 = vmatpush1.msra.mxu0 0.0
      %905 = vmatprep.subr.mxu0 0.0
      %906 = vmatpush1.msra.mxu0 0.0
      %907 = vmatprep.subr.mxu0 0.0
      %908 = vmatpush1.msra.mxu0 0.0
      %909 = vmatprep.subr.mxu0 0.0
      %910 = vmatpush1.msra.mxu0 0.0
      %911 = vmatprep.subr.mxu0 0.0
      %912 = vmatpush1.msra.mxu0 0.0
      %913 = vmatprep.subr.mxu0 0.0
      %914 = vmatpush1.msra.mxu0 0.0
      %915 = vmatprep.subr.mxu0 0.0
      %916 = vmatpush1.msra.mxu0 0.0
      %917 = vmatprep.subr.mxu0 0.0
      %918 = vmatpush1.msra.mxu0 0.0
      %919 = vmatprep.subr.mxu0 0.0
      %920 = vmatpush1.msra.mxu0 0.0
      %921 = vmatprep.subr.mxu0 0.0
      %922 = vmatpush1.msra.mxu0 0.0
      %923 = vmatprep.subr.mxu0 0.0
      %924 = vmatpush1.msra.mxu0 0.0
      %925 = vmatprep.subr.mxu0 0.0
      %926 = vmatpush1.msra.mxu0 0.0
      %927 = vmatprep.subr.mxu0 0.0
      %928 = vmatpush1.msra.mxu0 0.0
      %929 = vmatprep.subr.mxu0 0.0
      %930 = vmatpush1.msra.mxu0 0.0
      %931 = vmatprep.subr.mxu0 0.0
      %932 = vmatpush1.msra.mxu0 0.0
      %933 = vmatprep.subr.mxu0 0.0
      %934 = vmatpush1.msra.mxu0 0.0
      %935 = vmatprep.mubr.f32.mxu0 0.0
      %936 = vmatmul.mubr.f32.gmra.mrb[0].mxu0 %v869
      %v937 = vpop.f32.mrb[0].mxu0
      %v938 = vadd.f32 0.0, %v937
      %v939 = vpop.f32.mrb[0].mxu0
      %940 = vdwg.mxu0
      %v941 = vld [vmem:[%s7 + $0x20] sm:$0xff]
      %v942 = vld [vmem:[%s7 + $0x28] sm:$0xff]
      %v943 = vld [vmem:[%s7 + $0x30] sm:$0xff]
      %v944 = vld [vmem:[%s7 + $0x38] sm:$0xff]
      %v946 = vsel %vm601, %v938, 0
      %948 = vmatprep.subr.mxu0 0.0
      %949 = vmatpush1.msra.mxu0 %v941
      %950 = vmatprep.subr.mxu0 0.0
      %951 = vmatpush1.msra.mxu0 %v942
      %952 = vmatprep.subr.mxu0 0.0
      %953 = vmatpush1.msra.mxu0 %v943
      %954 = vmatprep.subr.mxu0 0.0
      %955 = vmatpush1.msra.mxu0 %v944
      %956 = vmatprep.subr.mxu0 0.0
      %957 = vmatpush1.msra.mxu0 0.0
      %958 = vmatprep.subr.mxu0 0.0
      %959 = vmatpush1.msra.mxu0 0.0
      %960 = vmatprep.subr.mxu0 0.0
      %961 = vmatpush1.msra.mxu0 0.0
      %962 = vmatprep.subr.mxu0 0.0
      %963 = vmatpush1.msra.mxu0 0.0
      %964 = vmatprep.subr.mxu0 0.0
      %965 = vmatpush1.msra.mxu0 0.0
      %966 = vmatprep.subr.mxu0 0.0
      %967 = vmatpush1.msra.mxu0 0.0
      %968 = vmatprep.subr.mxu0 0.0
      %969 = vmatpush1.msra.mxu0 0.0
      %970 = vmatprep.subr.mxu0 0.0
      %971 = vmatpush1.msra.mxu0 0.0
      %972 = vmatprep.subr.mxu0 0.0
      %973 = vmatpush1.msra.mxu0 0.0
      %974 = vmatprep.subr.mxu0 0.0
      %975 = vmatpush1.msra.mxu0 0.0
      %976 = vmatprep.subr.mxu0 0.0
      %977 = vmatpush1.msra.mxu0 0.0
      %978 = vmatprep.subr.mxu0 0.0
      %979 = vmatpush1.msra.mxu0 0.0
      %980 = vmatprep.subr.mxu0 0.0
      %981 = vmatpush1.msra.mxu0 0.0
      %982 = vmatprep.subr.mxu0 0.0
      %983 = vmatpush1.msra.mxu0 0.0
      %984 = vmatprep.subr.mxu0 0.0
      %985 = vmatpush1.msra.mxu0 0.0
      %986 = vmatprep.subr.mxu0 0.0
      %987 = vmatpush1.msra.mxu0 0.0
      %988 = vmatprep.subr.mxu0 0.0
      %989 = vmatpush1.msra.mxu0 0.0
      %990 = vmatprep.subr.mxu0 0.0
      %991 = vmatpush1.msra.mxu0 0.0
      %992 = vmatprep.subr.mxu0 0.0
      %993 = vmatpush1.msra.mxu0 0.0
      %994 = vmatprep.subr.mxu0 0.0
      %995 = vmatpush1.msra.mxu0 0.0
      %996 = vmatprep.subr.mxu0 0.0
      %997 = vmatpush1.msra.mxu0 0.0
      %998 = vmatprep.subr.mxu0 0.0
      %999 = vmatpush1.msra.mxu0 0.0
      %1000 = vmatprep.subr.mxu0 0.0
      %1001 = vmatpush1.msra.mxu0 0.0
      %1002 = vmatprep.subr.mxu0 0.0
      %1003 = vmatpush1.msra.mxu0 0.0
      %1004 = vmatprep.subr.mxu0 0.0
      %1005 = vmatpush1.msra.mxu0 0.0
      %1006 = vmatprep.subr.mxu0 0.0
      %1007 = vmatpush1.msra.mxu0 0.0
      %1008 = vmatprep.subr.mxu0 0.0
      %1009 = vmatpush1.msra.mxu0 0.0
      %1010 = vmatprep.subr.mxu0 0.0
      %1011 = vmatpush1.msra.mxu0 0.0
      %1012 = vmatprep.mubr.f32.mxu0 0.0
      %1013 = vmatmul.mubr.f32.gmra.mrb[0].mxu0 %v946
      %v1014 = vpop.f32.mrb[0].mxu0
      %v1015 = vadd.f32 0.0, %v1014
      %v1016 = vpop.f32.mrb[0].mxu0
      %1017 = vdwg.mxu0
      %v1019 = vsel %vm601, %v767, 0
      %1021 = vmatprep.subr.mxu0 0.0
      %1022 = vmatpush1.msra.mxu0 %v770
      %1023 = vmatprep.subr.mxu0 0.0
      %1024 = vmatpush1.msra.mxu0 %v771
      %1025 = vmatprep.subr.mxu0 0.0
      %1026 = vmatpush1.msra.mxu0 %v772
      %1027 = vmatprep.subr.mxu0 0.0
      %1028 = vmatpush1.msra.mxu0 %v773
      %1029 = vmatprep.subr.mxu0 0.0
      %1030 = vmatpush1.msra.mxu0 0.0
      %1031 = vmatprep.subr.mxu0 0.0
      %1032 = vmatpush1.msra.mxu0 0.0
      %1033 = vmatprep.subr.mxu0 0.0
      %1034 = vmatpush1.msra.mxu0 0.0
      %1035 = vmatprep.subr.mxu0 0.0
      %1036 = vmatpush1.msra.mxu0 0.0
      %1037 = vmatprep.subr.mxu0 0.0
      %1038 = vmatpush1.msra.mxu0 0.0
      %1039 = vmatprep.subr.mxu0 0.0
      %1040 = vmatpush1.msra.mxu0 0.0
      %1041 = vmatprep.subr.mxu0 0.0
      %1042 = vmatpush1.msra.mxu0 0.0
      %1043 = vmatprep.subr.mxu0 0.0
      %1044 = vmatpush1.msra.mxu0 0.0
      %1045 = vmatprep.subr.mxu0 0.0
      %1046 = vmatpush1.msra.mxu0 0.0
      %1047 = vmatprep.subr.mxu0 0.0
      %1048 = vmatpush1.msra.mxu0 0.0
      %1049 = vmatprep.subr.mxu0 0.0
      %1050 = vmatpush1.msra.mxu0 0.0
      %1051 = vmatprep.subr.mxu0 0.0
      %1052 = vmatpush1.msra.mxu0 0.0
      %1053 = vmatprep.subr.mxu0 0.0
      %1054 = vmatpush1.msra.mxu0 0.0
      %1055 = vmatprep.subr.mxu0 0.0
      %1056 = vmatpush1.msra.mxu0 0.0
      %1057 = vmatprep.subr.mxu0 0.0
      %1058 = vmatpush1.msra.mxu0 0.0
      %1059 = vmatprep.subr.mxu0 0.0
      %1060 = vmatpush1.msra.mxu0 0.0
      %1061 = vmatprep.subr.mxu0 0.0
      %1062 = vmatpush1.msra.mxu0 0.0
      %1063 = vmatprep.subr.mxu0 0.0
      %1064 = vmatpush1.msra.mxu0 0.0
      %1065 = vmatprep.subr.mxu0 0.0
      %1066 = vmatpush1.msra.mxu0 0.0
      %1067 = vmatprep.subr.mxu0 0.0
      %1068 = vmatpush1.msra.mxu0 0.0
      %1069 = vmatprep.subr.mxu0 0.0
      %1070 = vmatpush1.msra.mxu0 0.0
      %1071 = vmatprep.subr.mxu0 0.0
      %1072 = vmatpush1.msra.mxu0 0.0
      %1073 = vmatprep.subr.mxu0 0.0
      %1074 = vmatpush1.msra.mxu0 0.0
      %1075 = vmatprep.subr.mxu0 0.0
      %1076 = vmatpush1.msra.mxu0 0.0
      %1077 = vmatprep.subr.mxu0 0.0
      %1078 = vmatpush1.msra.mxu0 0.0
      %1079 = vmatprep.subr.mxu0 0.0
      %1080 = vmatpush1.msra.mxu0 0.0
      %1081 = vmatprep.subr.mxu0 0.0
      %1082 = vmatpush1.msra.mxu0 0.0
      %1083 = vmatprep.subr.mxu0 0.0
      %1084 = vmatpush1.msra.mxu0 0.0
      %1085 = vmatprep.mubr.f32.mxu0 0.0
      %1086 = vmatmul.mubr.f32.gmra.mrb[0].mxu0 %v1019
      %v1087 = vpop.f32.mrb[0].mxu0
      %v1088 = vadd.f32 %v1015, %v1087
      %v1089 = vpop.f32.mrb[0].mxu0
      %1090 = vdwg.mxu0
      %1091 = vrot.lane.b32.xlu0 %v600, 64
      %v1092 = vpop.permute.xlu0 %1091
      %1093 = vrot.lane.b32.xlu0 %v594, 64
      %v1094 = vpop.permute.xlu0 %1093
      %v1095 = vsel %vm601, %v1092, 0
      %v1097 = vsel %vm601, %v1094, 0
      %1099 = vmatprep.subr.mxu0 0.0
      %1100 = vmatpush1.xpose.msra.mxu0 %v1097
      %1101 = vmatprep.subr.mxu0 0.0
      %1102 = vmatpush1.xpose.msra.mxu0 0.0
      %1103 = vmatprep.subr.mxu0 0.0
      %1104 = vmatpush1.xpose.msra.mxu0 0.0
      %1105 = vmatprep.subr.mxu0 0.0
      %1106 = vmatpush1.xpose.msra.mxu0 0.0
      %1107 = vmatprep.subr.mxu0 0.0
      %1108 = vmatpush1.xpose.msra.mxu0 0.0
      %1109 = vmatprep.subr.mxu0 0.0
      %1110 = vmatpush1.xpose.msra.mxu0 0.0
      %1111 = vmatprep.subr.mxu0 0.0
      %1112 = vmatpush1.xpose.msra.mxu0 0.0
      %1113 = vmatprep.subr.mxu0 0.0
      %1114 = vmatpush1.xpose.msra.mxu0 0.0
      %1115 = vmatprep.subr.mxu0 0.0
      %1116 = vmatpush1.xpose.msra.mxu0 0.0
      %1117 = vmatprep.subr.mxu0 0.0
      %1118 = vmatpush1.xpose.msra.mxu0 0.0
      %1119 = vmatprep.subr.mxu0 0.0
      %1120 = vmatpush1.xpose.msra.mxu0 0.0
      %1121 = vmatprep.subr.mxu0 0.0
      %1122 = vmatpush1.xpose.msra.mxu0 0.0
      %1123 = vmatprep.subr.mxu0 0.0
      %1124 = vmatpush1.xpose.msra.mxu0 0.0
      %1125 = vmatprep.subr.mxu0 0.0
      %1126 = vmatpush1.xpose.msra.mxu0 0.0
      %1127 = vmatprep.subr.mxu0 0.0
      %1128 = vmatpush1.xpose.msra.mxu0 0.0
      %1129 = vmatprep.subr.mxu0 0.0
      %1130 = vmatpush1.xpose.msra.mxu0 0.0
      %1131 = vmatprep.subr.mxu0 0.0
      %1132 = vmatpush1.xpose.msra.mxu0 0.0
      %1133 = vmatprep.subr.mxu0 0.0
      %1134 = vmatpush1.xpose.msra.mxu0 0.0
      %1135 = vmatprep.subr.mxu0 0.0
      %1136 = vmatpush1.xpose.msra.mxu0 0.0
      %1137 = vmatprep.subr.mxu0 0.0
      %1138 = vmatpush1.xpose.msra.mxu0 0.0
      %1139 = vmatprep.subr.mxu0 0.0
      %1140 = vmatpush1.xpose.msra.mxu0 0.0
      %1141 = vmatprep.subr.mxu0 0.0
      %1142 = vmatpush1.xpose.msra.mxu0 0.0
      %1143 = vmatprep.subr.mxu0 0.0
      %1144 = vmatpush1.xpose.msra.mxu0 0.0
      %1145 = vmatprep.subr.mxu0 0.0
      %1146 = vmatpush1.xpose.msra.mxu0 0.0
      %1147 = vmatprep.subr.mxu0 0.0
      %1148 = vmatpush1.xpose.msra.mxu0 0.0
      %1149 = vmatprep.subr.mxu0 0.0
      %1150 = vmatpush1.xpose.msra.mxu0 0.0
      %1151 = vmatprep.subr.mxu0 0.0
      %1152 = vmatpush1.xpose.msra.mxu0 0.0
      %1153 = vmatprep.subr.mxu0 0.0
      %1154 = vmatpush1.xpose.msra.mxu0 0.0
      %1155 = vmatprep.subr.mxu0 0.0
      %1156 = vmatpush1.xpose.msra.mxu0 0.0
      %1157 = vmatprep.subr.mxu0 0.0
      %1158 = vmatpush1.xpose.msra.mxu0 0.0
      %1159 = vmatprep.subr.mxu0 0.0
      %1160 = vmatpush1.xpose.msra.mxu0 0.0
      %1161 = vmatprep.subr.mxu0 0.0
      %1162 = vmatpush1.xpose.msra.mxu0 0.0
      %1163 = vmatprep.mubr.f32.mxu0 0.0
      %1164 = vmatmul.mubr.f32.gmra.mrb[0].mxu0 %v1095
      %v1165 = vpop.f32.mrb[0].mxu0
      %v1166 = vadd.f32 0.0, %v1165
      %v1167 = vpop.f32.mrb[0].mxu0
      %1168 = vdwg.mxu0
      %v1169 = vsel %vm683, -1e+30, %v1166
      %v1170 = vsel %vm685, %v1169, -inf
      %1171 = vmax.xlane.f32.xlu0 %v1170
      %v1172 = vpop.xlane.xlu0 %1171
      %v1173 = vsub.f32 %v1169, %v1172
      %v1174 = vmul.f32 %v1173, 1.442695
      %v1175 = vpow.pop %v1174
      %v1176 = vsel %vm685, %v1175, 0.0
      %1177 = vadd.xlane.f32.xlu0 %v1176
      %v1178 = vpop.xlane.xlu0 %1177
      %v1179 = vrcp.pop %v1178
      %v1180 = vmul.f32 %v1175, %v1179
      %1181 = vrot.lane.b32.xlu0 %v596, 64
      %v1182 = vpop.permute.xlu0 %1181
      %v1185 = vsel %vm685, %v1180, 0
      %1187 = vmatprep.subr.mxu0 0.0
      %1188 = vmatpush1.msra.mxu0 %v1182
      %1189 = vmatprep.subr.mxu0 0.0
      %1190 = vmatpush1.msra.mxu0 0.0
      %1191 = vmatprep.subr.mxu0 0.0
      %1192 = vmatpush1.msra.mxu0 0.0
      %1193 = vmatprep.subr.mxu0 0.0
      %1194 = vmatpush1.msra.mxu0 0.0
      %1195 = vmatprep.subr.mxu0 0.0
      %1196 = vmatpush1.msra.mxu0 0.0
      %1197 = vmatprep.subr.mxu0 0.0
      %1198 = vmatpush1.msra.mxu0 0.0
      %1199 = vmatprep.subr.mxu0 0.0
      %1200 = vmatpush1.msra.mxu0 0.0
      %1201 = vmatprep.subr.mxu0 0.0
      %1202 = vmatpush1.msra.mxu0 0.0
      %1203 = vmatprep.subr.mxu0 0.0
      %1204 = vmatpush1.msra.mxu0 0.0
      %1205 = vmatprep.subr.mxu0 0.0
      %1206 = vmatpush1.msra.mxu0 0.0
      %1207 = vmatprep.subr.mxu0 0.0
      %1208 = vmatpush1.msra.mxu0 0.0
      %1209 = vmatprep.subr.mxu0 0.0
      %1210 = vmatpush1.msra.mxu0 0.0
      %1211 = vmatprep.subr.mxu0 0.0
      %1212 = vmatpush1.msra.mxu0 0.0
      %1213 = vmatprep.subr.mxu0 0.0
      %1214 = vmatpush1.msra.mxu0 0.0
      %1215 = vmatprep.subr.mxu0 0.0
      %1216 = vmatpush1.msra.mxu0 0.0
      %1217 = vmatprep.subr.mxu0 0.0
      %1218 = vmatpush1.msra.mxu0 0.0
      %1219 = vmatprep.subr.mxu0 0.0
      %1220 = vmatpush1.msra.mxu0 0.0
      %1221 = vmatprep.subr.mxu0 0.0
      %1222 = vmatpush1.msra.mxu0 0.0
      %1223 = vmatprep.subr.mxu0 0.0
      %1224 = vmatpush1.msra.mxu0 0.0
      %1225 = vmatprep.subr.mxu0 0.0
      %1226 = vmatpush1.msra.mxu0 0.0
      %1227 = vmatprep.subr.mxu0 0.0
      %1228 = vmatpush1.msra.mxu0 0.0
      %1229 = vmatprep.subr.mxu0 0.0
      %1230 = vmatpush1.msra.mxu0 0.0
      %1231 = vmatprep.subr.mxu0 0.0
      %1232 = vmatpush1.msra.mxu0 0.0
      %1233 = vmatprep.subr.mxu0 0.0
      %1234 = vmatpush1.msra.mxu0 0.0
      %1235 = vmatprep.subr.mxu0 0.0
      %1236 = vmatpush1.msra.mxu0 0.0
      %1237 = vmatprep.subr.mxu0 0.0
      %1238 = vmatpush1.msra.mxu0 0.0
      %1239 = vmatprep.subr.mxu0 0.0
      %1240 = vmatpush1.msra.mxu0 0.0
      %1241 = vmatprep.subr.mxu0 0.0
      %1242 = vmatpush1.msra.mxu0 0.0
      %1243 = vmatprep.subr.mxu0 0.0
      %1244 = vmatpush1.msra.mxu0 0.0
      %1245 = vmatprep.subr.mxu0 0.0
      %1246 = vmatpush1.msra.mxu0 0.0
      %1247 = vmatprep.subr.mxu0 0.0
      %1248 = vmatpush1.msra.mxu0 0.0
      %1249 = vmatprep.subr.mxu0 0.0
      %1250 = vmatpush1.msra.mxu0 0.0
      %1251 = vmatprep.mubr.f32.mxu0 0.0
      %1252 = vmatmul.mubr.f32.gmra.mrb[0].mxu0 %v1185
      %v1253 = vpop.f32.mrb[0].mxu0
      %v1254 = vadd.f32 0.0, %v1253
      %v1255 = vpop.f32.mrb[0].mxu0
      %1256 = vdwg.mxu0
      %v1257 = vld [vmem:[%s7 + $0x40] sm:$0xff]
      %v1258 = vld [vmem:[%s7 + $0x48] sm:$0xff]
      %v1259 = vld [vmem:[%s7 + $0x50] sm:$0xff]
      %v1260 = vld [vmem:[%s7 + $0x58] sm:$0xff]
      %v1262 = vsel %vm601, %v1254, 0
      %1264 = vmatprep.subr.mxu0 0.0
      %1265 = vmatpush1.msra.mxu0 %v1257
      %1266 = vmatprep.subr.mxu0 0.0
      %1267 = vmatpush1.msra.mxu0 %v1258
      %1268 = vmatprep.subr.mxu0 0.0
      %1269 = vmatpush1.msra.mxu0 %v1259
      %1270 = vmatprep.subr.mxu0 0.0
      %1271 = vmatpush1.msra.mxu0 %v1260
      %1272 = vmatprep.subr.mxu0 0.0
      %1273 = vmatpush1.msra.mxu0 0.0
      %1274 = vmatprep.subr.mxu0 0.0
      %1275 = vmatpush1.msra.mxu0 0.0
      %1276 = vmatprep.subr.mxu0 0.0
      %1277 = vmatpush1.msra.mxu0 0.0
      %1278 = vmatprep.subr.mxu0 0.0
      %1279 = vmatpush1.msra.mxu0 0.0
      %1280 = vmatprep.subr.mxu0 0.0
      %1281 = vmatpush1.msra.mxu0 0.0
      %1282 = vmatprep.subr.mxu0 0.0
      %1283 = vmatpush1.msra.mxu0 0.0
      %1284 = vmatprep.subr.mxu0 0.0
      %1285 = vmatpush1.msra.mxu0 0.0
      %1286 = vmatprep.subr.mxu0 0.0
      %1287 = vmatpush1.msra.mxu0 0.0
      %1288 = vmatprep.subr.mxu0 0.0
      %1289 = vmatpush1.msra.mxu0 0.0
      %1290 = vmatprep.subr.mxu0 0.0
      %1291 = vmatpush1.msra.mxu0 0.0
      %1292 = vmatprep.subr.mxu0 0.0
      %1293 = vmatpush1.msra.mxu0 0.0
      %1294 = vmatprep.subr.mxu0 0.0
      %1295 = vmatpush1.msra.mxu0 0.0
      %1296 = vmatprep.subr.mxu0 0.0
      %1297 = vmatpush1.msra.mxu0 0.0
      %1298 = vmatprep.subr.mxu0 0.0
      %1299 = vmatpush1.msra.mxu0 0.0
      %1300 = vmatprep.subr.mxu0 0.0
      %1301 = vmatpush1.msra.mxu0 0.0
      %1302 = vmatprep.subr.mxu0 0.0
      %1303 = vmatpush1.msra.mxu0 0.0
      %1304 = vmatprep.subr.mxu0 0.0
      %1305 = vmatpush1.msra.mxu0 0.0
      %1306 = vmatprep.subr.mxu0 0.0
      %1307 = vmatpush1.msra.mxu0 0.0
      %1308 = vmatprep.subr.mxu0 0.0
      %1309 = vmatpush1.msra.mxu0 0.0
      %1310 = vmatprep.subr.mxu0 0.0
      %1311 = vmatpush1.msra.mxu0 0.0
      %1312 = vmatprep.subr.mxu0 0.0
      %1313 = vmatpush1.msra.mxu0 0.0
      %1314 = vmatprep.subr.mxu0 0.0
      %1315 = vmatpush1.msra.mxu0 0.0
      %1316 = vmatprep.subr.mxu0 0.0
      %1317 = vmatpush1.msra.mxu0 0.0
      %1318 = vmatprep.subr.mxu0 0.0
      %1319 = vmatpush1.msra.mxu0 0.0
      %1320 = vmatprep.subr.mxu0 0.0
      %1321 = vmatpush1.msra.mxu0 0.0
      %1322 = vmatprep.subr.mxu0 0.0
      %1323 = vmatpush1.msra.mxu0 0.0
      %1324 = vmatprep.subr.mxu0 0.0
      %1325 = vmatpush1.msra.mxu0 0.0
      %1326 = vmatprep.subr.mxu0 0.0
      %1327 = vmatpush1.msra.mxu0 0.0
      %1328 = vmatprep.mubr.f32.mxu0 0.0
      %1329 = vmatmul.mubr.f32.gmra.mrb[0].mxu0 %v1262
      %v1330 = vpop.f32.mrb[0].mxu0
      %v1331 = vadd.f32 0.0, %v1330
      %v1332 = vpop.f32.mrb[0].mxu0
      %1333 = vdwg.mxu0
      %v1334 = vadd.f32 %v1088, %v1331
      %1335 = vrot.lane.b32.xlu0 %v600, 32
      %v1336 = vpop.permute.xlu0 %1335
      %1337 = vrot.lane.b32.xlu0 %v594, 32
      %v1338 = vpop.permute.xlu0 %1337
      %v1339 = vsel %vm601, %v1336, 0
      %v1341 = vsel %vm601, %v1338, 0
      %1343 = vmatprep.subr.mxu0 0.0
      %1344 = vmatpush1.xpose.msra.mxu0 %v1341
      %1345 = vmatprep.subr.mxu0 0.0
      %1346 = vmatpush1.xpose.msra.mxu0 0.0
      %1347 = vmatprep.subr.mxu0 0.0
      %1348 = vmatpush1.xpose.msra.mxu0 0.0
      %1349 = vmatprep.subr.mxu0 0.0
      %1350 = vmatpush1.xpose.msra.mxu0 0.0
      %1351 = vmatprep.subr.mxu0 0.0
      %1352 = vmatpush1.xpose.msra.mxu0 0.0
      %1353 = vmatprep.subr.mxu0 0.0
      %1354 = vmatpush1.xpose.msra.mxu0 0.0
      %1355 = vmatprep.subr.mxu0 0.0
      %1356 = vmatpush1.xpose.msra.mxu0 0.0
      %1357 = vmatprep.subr.mxu0 0.0
      %1358 = vmatpush1.xpose.msra.mxu0 0.0
      %1359 = vmatprep.subr.mxu0 0.0
      %1360 = vmatpush1.xpose.msra.mxu0 0.0
      %1361 = vmatprep.subr.mxu0 0.0
      %1362 = vmatpush1.xpose.msra.mxu0 0.0
      %1363 = vmatprep.subr.mxu0 0.0
      %1364 = vmatpush1.xpose.msra.mxu0 0.0
      %1365 = vmatprep.subr.mxu0 0.0
      %1366 = vmatpush1.xpose.msra.mxu0 0.0
      %1367 = vmatprep.subr.mxu0 0.0
      %1368 = vmatpush1.xpose.msra.mxu0 0.0
      %1369 = vmatprep.subr.mxu0 0.0
      %1370 = vmatpush1.xpose.msra.mxu0 0.0
      %1371 = vmatprep.subr.mxu0 0.0
      %1372 = vmatpush1.xpose.msra.mxu0 0.0
      %1373 = vmatprep.subr.mxu0 0.0
      %1374 = vmatpush1.xpose.msra.mxu0 0.0
      %1375 = vmatprep.subr.mxu0 0.0
      %1376 = vmatpush1.xpose.msra.mxu0 0.0
      %1377 = vmatprep.subr.mxu0 0.0
      %1378 = vmatpush1.xpose.msra.mxu0 0.0
      %1379 = vmatprep.subr.mxu0 0.0
      %1380 = vmatpush1.xpose.msra.mxu0 0.0
      %1381 = vmatprep.subr.mxu0 0.0
      %1382 = vmatpush1.xpose.msra.mxu0 0.0
      %1383 = vmatprep.subr.mxu0 0.0
      %1384 = vmatpush1.xpose.msra.mxu0 0.0
      %1385 = vmatprep.subr.mxu0 0.0
      %1386 = vmatpush1.xpose.msra.mxu0 0.0
      %1387 = vmatprep.subr.mxu0 0.0
      %1388 = vmatpush1.xpose.msra.mxu0 0.0
      %1389 = vmatprep.subr.mxu0 0.0
      %1390 = vmatpush1.xpose.msra.mxu0 0.0
      %1391 = vmatprep.subr.mxu0 0.0
      %1392 = vmatpush1.xpose.msra.mxu0 0.0
      %1393 = vmatprep.subr.mxu0 0.0
      %1394 = vmatpush1.xpose.msra.mxu0 0.0
      %1395 = vmatprep.subr.mxu0 0.0
      %1396 = vmatpush1.xpose.msra.mxu0 0.0
      %1397 = vmatprep.subr.mxu0 0.0
      %1398 = vmatpush1.xpose.msra.mxu0 0.0
      %1399 = vmatprep.subr.mxu0 0.0
      %1400 = vmatpush1.xpose.msra.mxu0 0.0
      %1401 = vmatprep.subr.mxu0 0.0
      %1402 = vmatpush1.xpose.msra.mxu0 0.0
      %1403 = vmatprep.subr.mxu0 0.0
      %1404 = vmatpush1.xpose.msra.mxu0 0.0
      %1405 = vmatprep.subr.mxu0 0.0
      %1406 = vmatpush1.xpose.msra.mxu0 0.0
      %1407 = vmatprep.mubr.f32.mxu0 0.0
      %1408 = vmatmul.mubr.f32.gmra.mrb[0].mxu0 %v1339
      %v1409 = vpop.f32.mrb[0].mxu0
      %v1410 = vadd.f32 0.0, %v1409
      %v1411 = vpop.f32.mrb[0].mxu0
      %1412 = vdwg.mxu0
      %v1413 = vsel %vm683, -1e+30, %v1410
      %v1414 = vsel %vm685, %v1413, -inf
      %1415 = vmax.xlane.f32.xlu0 %v1414
      %v1416 = vpop.xlane.xlu0 %1415
      %v1417 = vsub.f32 %v1413, %v1416
      %v1418 = vmul.f32 %v1417, 1.442695
      %v1419 = vpow.pop %v1418
      %v1420 = vsel %vm685, %v1419, 0.0
      %1421 = vadd.xlane.f32.xlu0 %v1420
      %v1422 = vpop.xlane.xlu0 %1421
      %v1423 = vrcp.pop %v1422
      %v1424 = vmul.f32 %v1419, %v1423
      %1425 = vrot.lane.b32.xlu0 %v596, 32
      %v1426 = vpop.permute.xlu0 %1425
      %v1429 = vsel %vm685, %v1424, 0
      %1431 = vmatprep.subr.mxu0 0.0
      %1432 = vmatpush1.msra.mxu0 %v1426
      %1433 = vmatprep.subr.mxu0 0.0
      %1434 = vmatpush1.msra.mxu0 0.0
      %1435 = vmatprep.subr.mxu0 0.0
      %1436 = vmatpush1.msra.mxu0 0.0
      %1437 = vmatprep.subr.mxu0 0.0
      %1438 = vmatpush1.msra.mxu0 0.0
      %1439 = vmatprep.subr.mxu0 0.0
      %1440 = vmatpush1.msra.mxu0 0.0
      %1441 = vmatprep.subr.mxu0 0.0
      %1442 = vmatpush1.msra.mxu0 0.0
      %1443 = vmatprep.subr.mxu0 0.0
      %1444 = vmatpush1.msra.mxu0 0.0
      %1445 = vmatprep.subr.mxu0 0.0
      %1446 = vmatpush1.msra.mxu0 0.0
      %1447 = vmatprep.subr.mxu0 0.0
      %1448 = vmatpush1.msra.mxu0 0.0
      %1449 = vmatprep.subr.mxu0 0.0
      %1450 = vmatpush1.msra.mxu0 0.0
      %1451 = vmatprep.subr.mxu0 0.0
      %1452 = vmatpush1.msra.mxu0 0.0
      %1453 = vmatprep.subr.mxu0 0.0
      %1454 = vmatpush1.msra.mxu0 0.0
      %1455 = vmatprep.subr.mxu0 0.0
      %1456 = vmatpush1.msra.mxu0 0.0
      %1457 = vmatprep.subr.mxu0 0.0
      %1458 = vmatpush1.msra.mxu0 0.0
      %1459 = vmatprep.subr.mxu0 0.0
      %1460 = vmatpush1.msra.mxu0 0.0
      %1461 = vmatprep.subr.mxu0 0.0
      %1462 = vmatpush1.msra.mxu0 0.0
      %1463 = vmatprep.subr.mxu0 0.0
      %1464 = vmatpush1.msra.mxu0 0.0
      %1465 = vmatprep.subr.mxu0 0.0
      %1466 = vmatpush1.msra.mxu0 0.0
      %1467 = vmatprep.subr.mxu0 0.0
      %1468 = vmatpush1.msra.mxu0 0.0
      %1469 = vmatprep.subr.mxu0 0.0
      %1470 = vmatpush1.msra.mxu0 0.0
      %1471 = vmatprep.subr.mxu0 0.0
      %1472 = vmatpush1.msra.mxu0 0.0
      %1473 = vmatprep.subr.mxu0 0.0
      %1474 = vmatpush1.msra.mxu0 0.0
      %1475 = vmatprep.subr.mxu0 0.0
      %1476 = vmatpush1.msra.mxu0 0.0
      %1477 = vmatprep.subr.mxu0 0.0
      %1478 = vmatpush1.msra.mxu0 0.0
      %1479 = vmatprep.subr.mxu0 0.0
      %1480 = vmatpush1.msra.mxu0 0.0
      %1481 = vmatprep.subr.mxu0 0.0
      %1482 = vmatpush1.msra.mxu0 0.0
      %1483 = vmatprep.subr.mxu0 0.0
      %1484 = vmatpush1.msra.mxu0 0.0
      %1485 = vmatprep.subr.mxu0 0.0
      %1486 = vmatpush1.msra.mxu0 0.0
      %1487 = vmatprep.subr.mxu0 0.0
      %1488 = vmatpush1.msra.mxu0 0.0
      %1489 = vmatprep.subr.mxu0 0.0
      %1490 = vmatpush1.msra.mxu0 0.0
      %1491 = vmatprep.subr.mxu0 0.0
      %1492 = vmatpush1.msra.mxu0 0.0
      %1493 = vmatprep.subr.mxu0 0.0
      %1494 = vmatpush1.msra.mxu0 0.0
      %1495 = vmatprep.mubr.f32.mxu0 0.0
      %1496 = vmatmul.mubr.f32.gmra.mrb[0].mxu0 %v1429
      %v1497 = vpop.f32.mrb[0].mxu0
      %v1498 = vadd.f32 0.0, %v1497
      %v1499 = vpop.f32.mrb[0].mxu0
      %1500 = vdwg.mxu0
      %v1501 = vld [vmem:[%s7 + $0x60] sm:$0xff]
      %v1502 = vld [vmem:[%s7 + $0x68] sm:$0xff]
      %v1503 = vld [vmem:[%s7 + $0x70] sm:$0xff]
      %v1504 = vld [vmem:[%s7 + $0x78] sm:$0xff]
      %v1506 = vsel %vm601, %v1498, 0
      %1508 = vmatprep.subr.mxu0 0.0
      %1509 = vmatpush1.msra.mxu0 %v1501
      %1510 = vmatprep.subr.mxu0 0.0
      %1511 = vmatpush1.msra.mxu0 %v1502
      %1512 = vmatprep.subr.mxu0 0.0
      %1513 = vmatpush1.msra.mxu0 %v1503
      %1514 = vmatprep.subr.mxu0 0.0
      %1515 = vmatpush1.msra.mxu0 %v1504
      %1516 = vmatprep.subr.mxu0 0.0
      %1517 = vmatpush1.msra.mxu0 0.0
      %1518 = vmatprep.subr.mxu0 0.0
      %1519 = vmatpush1.msra.mxu0 0.0
      %1520 = vmatprep.subr.mxu0 0.0
      %1521 = vmatpush1.msra.mxu0 0.0
      %1522 = vmatprep.subr.mxu0 0.0
      %1523 = vmatpush1.msra.mxu0 0.0
      %1524 = vmatprep.subr.mxu0 0.0
      %1525 = vmatpush1.msra.mxu0 0.0
      %1526 = vmatprep.subr.mxu0 0.0
      %1527 = vmatpush1.msra.mxu0 0.0
      %1528 = vmatprep.subr.mxu0 0.0
      %1529 = vmatpush1.msra.mxu0 0.0
      %1530 = vmatprep.subr.mxu0 0.0
      %1531 = vmatpush1.msra.mxu0 0.0
      %1532 = vmatprep.subr.mxu0 0.0
      %1533 = vmatpush1.msra.mxu0 0.0
      %1534 = vmatprep.subr.mxu0 0.0
      %1535 = vmatpush1.msra.mxu0 0.0
      %1536 = vmatprep.subr.mxu0 0.0
      %1537 = vmatpush1.msra.mxu0 0.0
      %1538 = vmatprep.subr.mxu0 0.0
      %1539 = vmatpush1.msra.mxu0 0.0
      %1540 = vmatprep.subr.mxu0 0.0
      %1541 = vmatpush1.msra.mxu0 0.0
      %1542 = vmatprep.subr.mxu0 0.0
      %1543 = vmatpush1.msra.mxu0 0.0
      %1544 = vmatprep.subr.mxu0 0.0
      %1545 = vmatpush1.msra.mxu0 0.0
      %1546 = vmatprep.subr.mxu0 0.0
      %1547 = vmatpush1.msra.mxu0 0.0
      %1548 = vmatprep.subr.mxu0 0.0
      %1549 = vmatpush1.msra.mxu0 0.0
      %1550 = vmatprep.subr.mxu0 0.0
      %1551 = vmatpush1.msra.mxu0 0.0
      %1552 = vmatprep.subr.mxu0 0.0
      %1553 = vmatpush1.msra.mxu0 0.0
      %1554 = vmatprep.subr.mxu0 0.0
      %1555 = vmatpush1.msra.mxu0 0.0
      %1556 = vmatprep.subr.mxu0 0.0
      %1557 = vmatpush1.msra.mxu0 0.0
      %1558 = vmatprep.subr.mxu0 0.0
      %1559 = vmatpush1.msra.mxu0 0.0
      %1560 = vmatprep.subr.mxu0 0.0
      %1561 = vmatpush1.msra.mxu0 0.0
      %1562 = vmatprep.subr.mxu0 0.0
      %1563 = vmatpush1.msra.mxu0 0.0
      %1564 = vmatprep.subr.mxu0 0.0
      %1565 = vmatpush1.msra.mxu0 0.0
      %1566 = vmatprep.subr.mxu0 0.0
      %1567 = vmatpush1.msra.mxu0 0.0
      %1568 = vmatprep.subr.mxu0 0.0
      %1569 = vmatpush1.msra.mxu0 0.0
      %1570 = vmatprep.subr.mxu0 0.0
      %1571 = vmatpush1.msra.mxu0 0.0
      %1572 = vmatprep.mubr.f32.mxu0 0.0
      %1573 = vmatmul.mubr.f32.gmra.mrb[0].mxu0 %v1506
      %v1574 = vpop.f32.mrb[0].mxu0
      %v1575 = vadd.f32 0.0, %v1574
      %v1576 = vpop.f32.mrb[0].mxu0
      %1577 = vdwg.mxu0
      %v1578 = vadd.f32 %v1334, %v1575
      %v1579 = vld [vmem:[%s8] sm:$0x1]
      %v1581 = vlaneseq
      %v1582 = vshrl.u32 %v1581, 7
      %v1583 = vsub.s32 0, %v1582
      %v1584 = vrot.slane %v1579, %v1583
      %v1586 = vadd.f32 %v1578, %v1584
      %v1587 = vld [vmem:[#allocation2] sm:$0x1]
      %v1589 = vlaneseq
      %v1590 = vshrl.u32 %v1589, 7
      %v1591 = vsub.s32 0, %v1590
      %v1592 = vrot.slane %v1587, %v1591
      %1593 = vset.pattern.permute.xlu0 0
      %1594 = vperm.xlu0 %1593, %v1592
      %v1595 = vpop.permute.xlu0 %1594
      %v1597 = vmul.f32 %v1595, %v388
      %v1598 = vsub.f32 1.0, %v1587
      %v1600 = vlaneseq
      %v1601 = vshrl.u32 %v1600, 7
      %v1602 = vsub.s32 0, %v1601
      %v1603 = vrot.slane %v1598, %v1602
      %1604 = vset.pattern.permute.xlu0 0
      %1605 = vperm.xlu0 %1604, %v1603
      %v1606 = vpop.permute.xlu0 %1605
      %v1608 = vmul.f32 %v1606, %v1586
      %v1609 = vadd.f32 %v1597, %v1608
      %1610 = vst [vmem:[%s387] sm:$0xff] %v1609
      %p1611 = scmp.lt.s32.totalorder %s23, 1
      %s1612 = scalar_select %p1611, %s23, 1
      %s1613 = smul.addr %s1612, 8
      %s1614 = scalar_lea.vmem %s10, %s1613
      // Predicated region
      $region61: #{robust_text_cross_expert.18} parent=59 // pred_check
        %p1615 = pneg %p266
      $region62: #{robust_text_cross_expert.18} parent=59 // pred_check_branch
        %1617 = sbr.rel (%p1615) target = $region64
      $region63: #{robust_text_cross_expert.18} parent=59 // pred_region
        _
      $region64: #{robust_text_cross_expert.18} parent=59 // pred_fallthru
        _
    $region60: #{robust_text_cross_expert.18} parent=5 // pred_fallthru
      _
    %p1618 = scmp.le.s32.totalorder 2, %s18
    // Predicated region
    $region65: #{robust_text_cross_expert.18} parent=5 // pred_check
      %p1619 = pneg %p1618
    $region66: #{robust_text_cross_expert.18} parent=5 // pred_check_branch
      %1621 = sbr.rel (%p1619) target = $region68
    $region67: #{robust_text_cross_expert.18} parent=5 // pred_region
      %s1622 = ssub.s32 %s18, 2
      // Predicated region
      $region69: #{robust_text_cross_expert.18} parent=67 // pred_check
        %p1623 = pneg %p272
      $region70: #{robust_text_cross_expert.18} parent=67 // pred_check_branch
        %1625 = sbr.rel (%p1623) target = $region72
      $region71: #{robust_text_cross_expert.18} parent=67 // pred_region
        %p1626 = scmp.lt.s32.totalorder %s24, 1
        %s1627 = scalar_select %p1626, %s24, 1
        %s1628 = smul.addr %s1627, 8
        %s1629 = scalar_lea.vmem %s10, %s1628
      $region72: #{robust_text_cross_expert.18} parent=67 // pred_fallthru
        _
    $region68: #{robust_text_cross_expert.18} parent=5 // pred_fallthru
      _
  $region6: #{robust_text_cross_expert.18} parent=0 // loop_footer
    %s22 = sadd.s32 1, %s18
  $region7: #{robust_text_cross_expert.18} parent=0 // loop_footer_branch
    %17 = sbr.rel target = $region3
  $region8: #{robust_text_cross_expert.18} parent=0 // loop_exit
    _

// kernel: robust_text_cross_expert.19
$region0: #{robust_text_cross_expert.19}
  #allocation0 [shape = 'u32[]', space=smem, size = 0x4, offset = 0x4, fixed_abs, tag = 'smem constant byte address 0x4 - core index']
  #allocation1 [shape = 'u32[144,128]{1,0:T(1,128)}', space=vmem, size = 0x12000, scoped, tag = 'internal scratch']
  %s0 = inlined_call_operand.vmem [shape: f32[2,8,128], index: 0, kind: input, shape index: {}]
  %s1 = inlined_call_operand.vmem [shape: s32[2,1,8], index: 1, kind: input, shape index: {}]
  %s2 = inlined_call_operand.vmem [shape: f32[1,128], index: 2, kind: input, shape index: {}]
  %s3 = inlined_call_operand.vmem [shape: f32[1,128], index: 3, kind: input, shape index: {}]
  %s4 = inlined_call_operand.vmem [shape: f32[1,128], index: 4, kind: input, shape index: {}]
  %s5 = inlined_call_operand.vmem [shape: f32[128,512], index: 5, kind: input, shape index: {}]
  %s6 = inlined_call_operand.vmem [shape: f32[1,512], index: 6, kind: input, shape index: {}]
  %s7 = inlined_call_operand.vmem [shape: f32[512,128], index: 7, kind: input, shape index: {}]
  %s8 = inlined_call_operand.vmem [shape: f32[1,128], index: 8, kind: input, shape index: {}]
  %s9 = inlined_call_operand.hbm [shape: f32[2,1,128], index: 9, kind: output, shape index: {}]
  %s10 = sld [smem:[#allocation0]]
  $region69: #{robust_text_cross_expert.19} parent=0
    _
  %s12 = ssub.s32 1, %s10
  %s13 = scalar_select 0, %s12, %s10
  $region1: #{robust_text_cross_expert.19} parent=0
    #allocation2 [shape = 'u8[1024]{0}', space=vmem, size = 0x400, scoped, tag = 'output window, operand 0']
    #allocation3 [shape = 's32[2]{0}', space=sflag, size = 0x8, scoped, tag = 'scoped memory for robust_text_cross_expert.19']
    %14 = vsyncpa [#allocation3], 0
    %s15 = scalar_lea.sflag [#allocation3], 1
    %16 = vsyncpa %s15, 0
    loop: start=0, step=1, limit=4
    $region2: #{robust_text_cross_expert.19} parent=1 // loop_pre_header
      _
    $region3: #{robust_text_cross_expert.19} parent=1 // loop_header
      %s18 = sphi 0, %s22
      %p19 = scmp.ge.s32.totalorder %s18, 4
      %s28 = sphi 0, %s30
      %s31 = sphi 0, %s28
      %s32 = sphi 0, %s31
      %s48 = sphi 0, %s32
      %s54 = sphi 0, %s56
      %s57 = sphi 0, %s54
      %s58 = sphi 0, %s57
      %s74 = sphi 0, %s58
      %s78 = sphi 0, %s78
      %s80 = sphi 0, %s78
      %s81 = sphi 0, %s80
      %s95 = sphi 0, %s81
      %s99 = sphi 0, %s99
      %s101 = sphi 0, %s99
      %s102 = sphi 0, %s101
      %s116 = sphi 0, %s102
      %s120 = sphi 0, %s120
      %s122 = sphi 0, %s120
      %s123 = sphi 0, %s122
      %s137 = sphi 0, %s123
      %s141 = sphi 0, %s141
      %s143 = sphi 0, %s141
      %s144 = sphi 0, %s143
      %s158 = sphi 0, %s144
      %s162 = sphi 0, %s162
      %s164 = sphi 0, %s162
      %s165 = sphi 0, %s164
      %s179 = sphi 0, %s165
      %s183 = sphi 0, %s183
      %s185 = sphi 0, %s183
      %s186 = sphi 0, %s185
      %s200 = sphi 0, %s186
      %s204 = sphi 0, %s204
      %s206 = sphi 0, %s204
      %s207 = sphi 0, %s206
      %s221 = sphi 0, %s207
      %s227 = sphi 0, %s229
      %s230 = sphi 0, %s227
      %s231 = sphi 0, %s230
      %s247 = sphi 0, %s231
    $region4: #{robust_text_cross_expert.19} parent=1 // loop_header_branch
      %21 = sbr.rel (%p19) target = $region8
    $region5: #{robust_text_cross_expert.19} parent=1 // loop_body
      %s23 = ssub.s32 %s18, 1
      %s24 = ssub.s32 %s18, 2
      %s25 = sadd.s32 %s18, 1
      %s26 = ssub.s32 %s18, %s25
      %p27 = scmp.eq.s32.totalorder %s26, 0
      %s29 = sadd.s32 %s28, 1
      %s30 = scalar_select %p27, %s28, %s29
      %p33 = pneg %p27
      %p34 = scmp.eq.s32.totalorder %s18, 1
      %p35 = por %p33, %p34
      %p36 = scmp.ne.s32.totalorder %s28, %s31
      %p37 = scmp.eq.s32.totalorder %s18, 0
      %p38 = por %p36, %p37
      %p39 = scmp.ne.s32.totalorder %s28, %s31
      %p40 = scmp.eq.s32.totalorder %s23, 1
      %p41 = por %p39, %p40
      %p42 = scmp.ne.s32.totalorder %s31, %s32
      %p43 = scmp.eq.s32.totalorder %s23, 0
      %p44 = por %p42, %p43
      %p45 = scmp.ne.s32.totalorder %s31, %s32
      %p46 = scmp.eq.s32.totalorder %s24, 1
      %p47 = por %p45, %p46
      %p49 = scmp.ne.s32.totalorder %s32, %s48
      %p50 = scmp.eq.s32.totalorder %s24, 0
      %p51 = por %p49, %p50
      %s52 = ssub.s32 %s18, %s25
      %p53 = scmp.eq.s32.totalorder %s52, 0
      %s55 = sadd.s32 %s54, 1
      %s56 = scalar_select %p53, %s54, %s55
      %p59 = pneg %p53
      %p60 = scmp.eq.s32.totalorder %s18, 1
      %p61 = por %p59, %p60
      %p62 = scmp.ne.s32.totalorder %s54, %s57
      %p63 = scmp.eq.s32.totalorder %s18, 0
      %p64 = por %p62, %p63
      %p65 = scmp.ne.s32.totalorder %s54, %s57
      %p66 = scmp.eq.s32.totalorder %s23, 1
      %p67 = por %p65, %p66
      %p68 = scmp.ne.s32.totalorder %s57, %s58
      %p69 = scmp.eq.s32.totalorder %s23, 0
      %p70 = por %p68, %p69
      %p71 = scmp.ne.s32.totalorder %s57, %s58
      %p72 = scmp.eq.s32.totalorder %s24, 1
      %p73 = por %p71, %p72
      %p75 = scmp.ne.s32.totalorder %s58, %s74
      %p76 = scmp.eq.s32.totalorder %s24, 0
      %p77 = por %p75, %p76
      %s79 = sadd.s32 %s78, 1
      %p82 = scmp.eq.s32.totalorder %s18, 1
      %p83 = scmp.ne.s32.totalorder %s78, %s80
      %p84 = scmp.eq.s32.totalorder %s18, 0
      %p85 = por %p83, %p84
      %p86 = scmp.ne.s32.totalorder %s78, %s80
      %p87 = scmp.eq.s32.totalorder %s23, 1
      %p88 = por %p86, %p87
      %p89 = scmp.ne.s32.totalorder %s80, %s81
      %p90 = scmp.eq.s32.totalorder %s23, 0
      %p91 = por %p89, %p90
      %p92 = scmp.ne.s32.totalorder %s80, %s81
      %p93 = scmp.eq.s32.totalorder %s24, 1
      %p94 = por %p92, %p93
      %p96 = scmp.ne.s32.totalorder %s81, %s95
      %p97 = scmp.eq.s32.totalorder %s24, 0
      %p98 = por %p96, %p97
      %s100 = sadd.s32 %s99, 1
      %p103 = scmp.eq.s32.totalorder %s18, 1
      %p104 = scmp.ne.s32.totalorder %s99, %s101
      %p105 = scmp.eq.s32.totalorder %s18, 0
      %p106 = por %p104, %p105
      %p107 = scmp.ne.s32.totalorder %s99, %s101
      %p108 = scmp.eq.s32.totalorder %s23, 1
      %p109 = por %p107, %p108
      %p110 = scmp.ne.s32.totalorder %s101, %s102
      %p111 = scmp.eq.s32.totalorder %s23, 0
      %p112 = por %p110, %p111
      %p113 = scmp.ne.s32.totalorder %s101, %s102
      %p114 = scmp.eq.s32.totalorder %s24, 1
      %p115 = por %p113, %p114
      %p117 = scmp.ne.s32.totalorder %s102, %s116
      %p118 = scmp.eq.s32.totalorder %s24, 0
      %p119 = por %p117, %p118
      %s121 = sadd.s32 %s120, 1
      %p124 = scmp.eq.s32.totalorder %s18, 1
      %p125 = scmp.ne.s32.totalorder %s120, %s122
      %p126 = scmp.eq.s32.totalorder %s18, 0
      %p127 = por %p125, %p126
      %p128 = scmp.ne.s32.totalorder %s120, %s122
      %p129 = scmp.eq.s32.totalorder %s23, 1
      %p130 = por %p128, %p129
      %p131 = scmp.ne.s32.totalorder %s122, %s123
      %p132 = scmp.eq.s32.totalorder %s23, 0
      %p133 = por %p131, %p132
      %p134 = scmp.ne.s32.totalorder %s122, %s123
      %p135 = scmp.eq.s32.totalorder %s24, 1
      %p136 = por %p134, %p135
      %p138 = scmp.ne.s32.totalorder %s123, %s137
      %p139 = scmp.eq.s32.totalorder %s24, 0
      %p140 = por %p138, %p139
      %s142 = sadd.s32 %s141, 1
      %p145 = scmp.eq.s32.totalorder %s18, 1
      %p146 = scmp.ne.s32.totalorder %s141, %s143
      %p147 = scmp.eq.s32.totalorder %s18, 0
      %p148 = por %p146, %p147
      %p149 = scmp.ne.s32.totalorder %s141, %s143
      %p150 = scmp.eq.s32.totalorder %s23, 1
      %p151 = por %p149, %p150
      %p152 = scmp.ne.s32.totalorder %s143, %s144
      %p153 = scmp.eq.s32.totalorder %s23, 0
      %p154 = por %p152, %p153
      %p155 = scmp.ne.s32.totalorder %s143, %s144
      %p156 = scmp.eq.s32.totalorder %s24, 1
      %p157 = por %p155, %p156
      %p159 = scmp.ne.s32.totalorder %s144, %s158
      %p160 = scmp.eq.s32.totalorder %s24, 0
      %p161 = por %p159, %p160
      %s163 = sadd.s32 %s162, 1
      %p166 = scmp.eq.s32.totalorder %s18, 1
      %p167 = scmp.ne.s32.totalorder %s162, %s164
      %p168 = scmp.eq.s32.totalorder %s18, 0
      %p169 = por %p167, %p168
      %p170 = scmp.ne.s32.totalorder %s162, %s164
      %p171 = scmp.eq.s32.totalorder %s23, 1
      %p172 = por %p170, %p171
      %p173 = scmp.ne.s32.totalorder %s164, %s165
      %p174 = scmp.eq.s32.totalorder %s23, 0
      %p175 = por %p173, %p174
      %p176 = scmp.ne.s32.totalorder %s164, %s165
      %p177 = scmp.eq.s32.totalorder %s24, 1
      %p178 = por %p176, %p177
      %p180 = scmp.ne.s32.totalorder %s165, %s179
      %p181 = scmp.eq.s32.totalorder %s24, 0
      %p182 = por %p180, %p181
      %s184 = sadd.s32 %s183, 1
      %p187 = scmp.eq.s32.totalorder %s18, 1
      %p188 = scmp.ne.s32.totalorder %s183, %s185
      %p189 = scmp.eq.s32.totalorder %s18, 0
      %p190 = por %p188, %p189
      %p191 = scmp.ne.s32.totalorder %s183, %s185
      %p192 = scmp.eq.s32.totalorder %s23, 1
      %p193 = por %p191, %p192
      %p194 = scmp.ne.s32.totalorder %s185, %s186
      %p195 = scmp.eq.s32.totalorder %s23, 0
      %p196 = por %p194, %p195
      %p197 = scmp.ne.s32.totalorder %s185, %s186
      %p198 = scmp.eq.s32.totalorder %s24, 1
      %p199 = por %p197, %p198
      %p201 = scmp.ne.s32.totalorder %s186, %s200
      %p202 = scmp.eq.s32.totalorder %s24, 0
      %p203 = por %p201, %p202
      %s205 = sadd.s32 %s204, 1
      %p208 = scmp.eq.s32.totalorder %s18, 1
      %p209 = scmp.ne.s32.totalorder %s204, %s206
      %p210 = scmp.eq.s32.totalorder %s18, 0
      %p211 = por %p209, %p210
      %p212 = scmp.ne.s32.totalorder %s204, %s206
      %p213 = scmp.eq.s32.totalorder %s23, 1
      %p214 = por %p212, %p213
      %p215 = scmp.ne.s32.totalorder %s206, %s207
      %p216 = scmp.eq.s32.totalorder %s23, 0
      %p217 = por %p215, %p216
      %p218 = scmp.ne.s32.totalorder %s206, %s207
      %p219 = scmp.eq.s32.totalorder %s24, 1
      %p220 = por %p218, %p219
      %p222 = scmp.ne.s32.totalorder %s207, %s221
      %p223 = scmp.eq.s32.totalorder %s24, 0
      %p224 = por %p222, %p223
      %s225 = ssub.s32 %s18, %s25
      %p226 = scmp.eq.s32.totalorder %s225, 0
      %s228 = sadd.s32 %s227, 1
      %s229 = scalar_select %p226, %s227, %s228
      %p232 = pneg %p226
      %p233 = scmp.eq.s32.totalorder %s18, 1
      %p234 = por %p232, %p233
      %p235 = scmp.ne.s32.totalorder %s227, %s230
      %p236 = scmp.eq.s32.totalorder %s18, 0
      %p237 = por %p235, %p236
      %p238 = scmp.ne.s32.totalorder %s227, %s230
      %p239 = scmp.eq.s32.totalorder %s23, 1
      %p240 = por %p238, %p239
      %p241 = scmp.ne.s32.totalorder %s230, %s231
      %p242 = scmp.eq.s32.totalorder %s23, 0
      %p243 = por %p241, %p242
      %p244 = scmp.ne.s32.totalorder %s230, %s231
      %p245 = scmp.eq.s32.totalorder %s24, 1
      %p246 = por %p244, %p245
      %p248 = scmp.ne.s32.totalorder %s231, %s247
      %p249 = scmp.eq.s32.totalorder %s24, 0
      %p250 = por %p248, %p249
      %p251 = scmp.le.s32.totalorder 1, %s18
      %p252 = scmp.lt.s32.totalorder %s18, 3
      %p253 = pnand %p251, %p252
      %p254 = pneg %p253
      // Predicated region
      $region9: #{robust_text_cross_expert.19} parent=5 // pred_check
        _
      $region10: #{robust_text_cross_expert.19} parent=5 // pred_check_branch
        %256 = sbr.rel (%p253) target = $region12
      $region11: #{robust_text_cross_expert.19} parent=5 // pred_region
        %s257 = ssub.s32 %s18, 1
        // Predicated region
        $region13: #{robust_text_cross_expert.19} parent=11 // pred_check
          %p258 = pneg %p91
        $region14: #{robust_text_cross_expert.19} parent=11 // pred_check_branch
          %260 = sbr.rel (%p258) target = $region16
        $region15: #{robust_text_cross_expert.19} parent=11 // pred_region
          _
        $region16: #{robust_text_cross_expert.19} parent=11 // pred_fallthru
          _
        // Predicated region
        $region17: #{robust_text_cross_expert.19} parent=11 // pred_check
          %p261 = pneg %p112
        $region18: #{robust_text_cross_expert.19} parent=11 // pred_check_branch
          %263 = sbr.rel (%p261) target = $region20
        $region19: #{robust_text_cross_expert.19} parent=11 // pred_region
          _
        $region20: #{robust_text_cross_expert.19} parent=11 // pred_fallthru
          _
        // Predicated region
        $region21: #{robust_text_cross_expert.19} parent=11 // pred_check
          %p264 = pneg %p133
        $region22: #{robust_text_cross_expert.19} parent=11 // pred_check_branch
          %266 = sbr.rel (%p264) target = $region24
        $region23: #{robust_text_cross_expert.19} parent=11 // pred_region
          _
        $region24: #{robust_text_cross_expert.19} parent=11 // pred_fallthru
          _
        // Predicated region
        $region25: #{robust_text_cross_expert.19} parent=11 // pred_check
          %p267 = pneg %p154
        $region26: #{robust_text_cross_expert.19} parent=11 // pred_check_branch
          %269 = sbr.rel (%p267) target = $region28
        $region27: #{robust_text_cross_expert.19} parent=11 // pred_region
          _
        $region28: #{robust_text_cross_expert.19} parent=11 // pred_fallthru
          _
        // Predicated region
        $region29: #{robust_text_cross_expert.19} parent=11 // pred_check
          %p270 = pneg %p175
        $region30: #{robust_text_cross_expert.19} parent=11 // pred_check_branch
          %272 = sbr.rel (%p270) target = $region32
        $region31: #{robust_text_cross_expert.19} parent=11 // pred_region
          _
        $region32: #{robust_text_cross_expert.19} parent=11 // pred_fallthru
          _
        // Predicated region
        $region33: #{robust_text_cross_expert.19} parent=11 // pred_check
          %p273 = pneg %p196
        $region34: #{robust_text_cross_expert.19} parent=11 // pred_check_branch
          %275 = sbr.rel (%p273) target = $region36
        $region35: #{robust_text_cross_expert.19} parent=11 // pred_region
          _
        $region36: #{robust_text_cross_expert.19} parent=11 // pred_fallthru
          _
        // Predicated region
        $region37: #{robust_text_cross_expert.19} parent=11 // pred_check
          %p276 = pneg %p217
        $region38: #{robust_text_cross_expert.19} parent=11 // pred_check_branch
          %278 = sbr.rel (%p276) target = $region40
        $region39: #{robust_text_cross_expert.19} parent=11 // pred_region
          _
        $region40: #{robust_text_cross_expert.19} parent=11 // pred_fallthru
          _
      $region12: #{robust_text_cross_expert.19} parent=5 // pred_fallthru
        _
      %p279 = scmp.lt.s32.totalorder %s18, 2
      // Predicated region
      $region41: #{robust_text_cross_expert.19} parent=5 // pred_check
        %p280 = pneg %p279
      $region42: #{robust_text_cross_expert.19} parent=5 // pred_check_branch
        %282 = sbr.rel (%p280) target = $region44
      $region43: #{robust_text_cross_expert.19} parent=5 // pred_region
        // Predicated region
        $region45: #{robust_text_cross_expert.19} parent=43 // pred_check
          %p283 = pneg %p38
        $region46: #{robust_text_cross_expert.19} parent=43 // pred_check_branch
          %285 = sbr.rel (%p283) target = $region48
        $region47: #{robust_text_cross_expert.19} parent=43 // pred_region
          %p286 = scmp.lt.s32.totalorder %s18, 1
          %s287 = scalar_select %p286, %s18, 1
          %s288 = smul.addr %s287, 8
          %s289 = scalar_lea.vmem %s0, %s288
        $region48: #{robust_text_cross_expert.19} parent=43 // pred_fallthru
          _
        // Predicated region
        $region49: #{robust_text_cross_expert.19} parent=43 // pred_check
          %p290 = pneg %p64
        $region50: #{robust_text_cross_expert.19} parent=43 // pred_check_branch
          %292 = sbr.rel (%p290) target = $region52
        $region51: #{robust_text_cross_expert.19} parent=43 // pred_region
          %p293 = scmp.lt.s32.totalorder %s18, 1
          %s294 = scalar_select %p293, %s18, 1
          %s295 = scalar_lea.vmem %s1, %s294
        $region52: #{robust_text_cross_expert.19} parent=43 // pred_fallthru
          _
      $region44: #{robust_text_cross_expert.19} parent=5 // pred_fallthru
        _
      %p296 = scmp.le.s32.totalorder 1, %s18
      %p297 = scmp.lt.s32.totalorder %s18, 3
      %p298 = pnand %p296, %p297
      %p299 = pneg %p298
      // Predicated region
      $region53: #{robust_text_cross_expert.19} parent=5 // pred_check
        _
      $region54: #{robust_text_cross_expert.19} parent=5 // pred_check_branch
        %301 = sbr.rel (%p298) target = $region56
      $region55: #{robust_text_cross_expert.19} parent=5 // pred_region
        %s302 = ssub.s32 %s18, 1
        %p303 = scmp.lt.s32.totalorder %s23, 1
        %s304 = scalar_select %p303, %s23, 1
        %s305 = smul.addr %s304, 8
        %s306 = scalar_lea.vmem %s0, %s305
        %p307 = pneg %p44
        %p308 = pneg %p41
        %p309 = scmp.lt.s32.totalorder %s23, 1
        %s310 = scalar_select %p309, %s23, 1
        %s311 = scalar_lea.vmem %s1, %s310
        %p312 = pneg %p70
        %p313 = pneg %p67
        %p314 = pneg %p91
        %p315 = pneg %p88
        %p316 = pneg %p112
        %p317 = pneg %p109
        %p318 = pneg %p133
        %p319 = pneg %p130
        %p320 = pneg %p154
        %p321 = pneg %p151
        %p322 = pneg %p175
        %p323 = pneg %p172
        %p324 = pneg %p196
        %p325 = pneg %p193
        %p326 = pneg %p217
        %p327 = pneg %p214
        %p328 = pneg %p243
        %p329 = pneg %p240
        %s330 = sand.u32 %s230, 1
        %s331 = scalar_lea.sflag [#allocation3], %s330
        %s332 = sand.u32 %s230, 1
        %s333 = scalar_lea.vmem [#allocation2], %s332
        %p334 = scmp.lt.s32.totalorder %s23, 1
        %s335 = scalar_select %p334, %s23, 1
        %s336 = smul.addr %s335, 8
        %s337 = scalar_lea.vmem %s0, %s336
        %p338 = scmp.lt.s32.totalorder %s23, 1
        %s339 = scalar_select %p338, %s23, 1
        %s340 = scalar_lea.vmem %s1, %s339
        %v341 = vld [vmem:[%s337] sm:$0xff]
        %v342 = vld [vmem:[%s2] sm:$0x1]
        %343 = vmatprep.subr.mxu0 0.0
        %344 = vmatpush1.xpose.msra.mxu0 %v341
        %345 = vmatprep.subr.mxu0 0.0
        %346 = vmatpush1.xpose.msra.mxu0 0.0
        %347 = vmatprep.subr.mxu0 0.0
        %348 = vmatpush1.xpose.msra.mxu0 0.0
        %349 = vmatprep.subr.mxu0 0.0
        %350 = vmatpush1.xpose.msra.mxu0 0.0
        %351 = vmatprep.subr.mxu0 0.0
        %352 = vmatpush1.xpose.msra.mxu0 0.0
        %353 = vmatprep.subr.mxu0 0.0
        %354 = vmatpush1.xpose.msra.mxu0 0.0
        %355 = vmatprep.subr.mxu0 0.0
        %356 = vmatpush1.xpose.msra.mxu0 0.0
        %357 = vmatprep.subr.mxu0 0.0
        %358 = vmatpush1.xpose.msra.mxu0 0.0
        %359 = vmatprep.subr.mxu0 0.0
        %360 = vmatpush1.xpose.msra.mxu0 0.0
        %361 = vmatprep.subr.mxu0 0.0
        %362 = vmatpush1.xpose.msra.mxu0 0.0
        %363 = vmatprep.subr.mxu0 0.0
        %364 = vmatpush1.xpose.msra.mxu0 0.0
        %365 = vmatprep.subr.mxu0 0.0
        %366 = vmatpush1.xpose.msra.mxu0 0.0
        %367 = vmatprep.subr.mxu0 0.0
        %368 = vmatpush1.xpose.msra.mxu0 0.0
        %369 = vmatprep.subr.mxu0 0.0
        %370 = vmatpush1.xpose.msra.mxu0 0.0
        %371 = vmatprep.subr.mxu0 0.0
        %372 = vmatpush1.xpose.msra.mxu0 0.0
        %373 = vmatprep.subr.mxu0 0.0
        %374 = vmatpush1.xpose.msra.mxu0 0.0
        %375 = vmatprep.subr.mxu0 0.0
        %376 = vmatpush1.xpose.msra.mxu0 0.0
        %377 = vmatprep.subr.mxu0 0.0
        %378 = vmatpush1.xpose.msra.mxu0 0.0
        %379 = vmatprep.subr.mxu0 0.0
        %380 = vmatpush1.xpose.msra.mxu0 0.0
        %381 = vmatprep.subr.mxu0 0.0
        %382 = vmatpush1.xpose.msra.mxu0 0.0
        %383 = vmatprep.subr.mxu0 0.0
        %384 = vmatpush1.xpose.msra.mxu0 0.0
        %385 = vmatprep.subr.mxu0 0.0
        %386 = vmatpush1.xpose.msra.mxu0 0.0
        %387 = vmatprep.subr.mxu0 0.0
        %388 = vmatpush1.xpose.msra.mxu0 0.0
        %389 = vmatprep.subr.mxu0 0.0
        %390 = vmatpush1.xpose.msra.mxu0 0.0
        %391 = vmatprep.subr.mxu0 0.0
        %392 = vmatpush1.xpose.msra.mxu0 0.0
        %393 = vmatprep.subr.mxu0 0.0
        %394 = vmatpush1.xpose.msra.mxu0 0.0
        %395 = vmatprep.subr.mxu0 0.0
        %396 = vmatpush1.xpose.msra.mxu0 0.0
        %397 = vmatprep.subr.mxu0 0.0
        %398 = vmatpush1.xpose.msra.mxu0 0.0
        %399 = vmatprep.subr.mxu0 0.0
        %400 = vmatpush1.xpose.msra.mxu0 0.0
        %401 = vmatprep.subr.mxu0 0.0
        %402 = vmatpush1.xpose.msra.mxu0 0.0
        %403 = vmatprep.subr.mxu0 0.0
        %404 = vmatpush1.xpose.msra.mxu0 0.0
        %405 = vmatprep.subr.mxu0 0.0
        %406 = vmatpush1.xpose.msra.mxu0 0.0
        %407 = vmatprep.mubr.f32.mxu0 0.0
        %408 = vmatmul.mubr.f32.gmra.mrb[0].mxu0 %v342
        %v409 = vpop.f32.mrb[0].mxu0
        %v410 = vadd.f32 0.0, %v409
        %v411 = vpop.f32.mrb[0].mxu0
        %412 = vdwg.mxu0
        %v413 = vmul.f32 %v410, 0.088388346
        %v414 = vld [vmem:[%s340] sm:$0x1]
        %vm415 = vcmp.ne.s32.totalorder %v414, 0
        %v416 = vsel %vm415, -1e+30, %v413
        %vm417 = vcmask 57344
        %v418 = vsel %vm417, %v416, -inf
        %419 = vmax.xlane.f32.xlu0 %v418
        %v420 = vpop.xlane.xlu0 %419
        %v421 = vsub.f32 %v416, %v420
        %v422 = vmul.f32 %v421, 1.442695
        %v423 = vpow.pop %v422
        %v424 = vsel %vm417, %v423, 0.0
        %425 = vadd.xlane.f32.xlu0 %v424
        %v426 = vpop.xlane.xlu0 %425
        %v427 = vrcp.pop %v426
        %v428 = vmul.f32 %v423, %v427
        %vm429 = vcmask 64512
        %v431 = vsel %vm429, %v428, 0
        %433 = vmatprep.subr.mxu0 0.0
        %434 = vmatpush1.msra.mxu0 %v341
        %435 = vmatprep.subr.mxu0 0.0
        %436 = vmatpush1.msra.mxu0 0.0
        %437 = vmatprep.subr.mxu0 0.0
        %438 = vmatpush1.msra.mxu0 0.0
        %439 = vmatprep.subr.mxu0 0.0
        %440 = vmatpush1.msra.mxu0 0.0
        %441 = vmatprep.subr.mxu0 0.0
        %442 = vmatpush1.msra.mxu0 0.0
        %443 = vmatprep.subr.mxu0 0.0
        %444 = vmatpush1.msra.mxu0 0.0
        %445 = vmatprep.subr.mxu0 0.0
        %446 = vmatpush1.msra.mxu0 0.0
        %447 = vmatprep.subr.mxu0 0.0
        %448 = vmatpush1.msra.mxu0 0.0
        %449 = vmatprep.subr.mxu0 0.0
        %450 = vmatpush1.msra.mxu0 0.0
        %451 = vmatprep.subr.mxu0 0.0
        %452 = vmatpush1.msra.mxu0 0.0
        %453 = vmatprep.subr.mxu0 0.0
        %454 = vmatpush1.msra.mxu0 0.0
        %455 = vmatprep.subr.mxu0 0.0
        %456 = vmatpush1.msra.mxu0 0.0
        %457 = vmatprep.subr.mxu0 0.0
        %458 = vmatpush1.msra.mxu0 0.0
        %459 = vmatprep.subr.mxu0 0.0
        %460 = vmatpush1.msra.mxu0 0.0
        %461 = vmatprep.subr.mxu0 0.0
        %462 = vmatpush1.msra.mxu0 0.0
        %463 = vmatprep.subr.mxu0 0.0
        %464 = vmatpush1.msra.mxu0 0.0
        %465 = vmatprep.subr.mxu0 0.0
        %466 = vmatpush1.msra.mxu0 0.0
        %467 = vmatprep.subr.mxu0 0.0
        %468 = vmatpush1.msra.mxu0 0.0
        %469 = vmatprep.subr.mxu0 0.0
        %470 = vmatpush1.msra.mxu0 0.0
        %471 = vmatprep.subr.mxu0 0.0
        %472 = vmatpush1.msra.mxu0 0.0
        %473 = vmatprep.subr.mxu0 0.0
        %474 = vmatpush1.msra.mxu0 0.0
        %475 = vmatprep.subr.mxu0 0.0
        %476 = vmatpush1.msra.mxu0 0.0
        %477 = vmatprep.subr.mxu0 0.0
        %478 = vmatpush1.msra.mxu0 0.0
        %479 = vmatprep.subr.mxu0 0.0
        %480 = vmatpush1.msra.mxu0 0.0
        %481 = vmatprep.subr.mxu0 0.0
        %482 = vmatpush1.msra.mxu0 0.0
        %483 = vmatprep.subr.mxu0 0.0
        %484 = vmatpush1.msra.mxu0 0.0
        %485 = vmatprep.subr.mxu0 0.0
        %486 = vmatpush1.msra.mxu0 0.0
        %487 = vmatprep.subr.mxu0 0.0
        %488 = vmatpush1.msra.mxu0 0.0
        %489 = vmatprep.subr.mxu0 0.0
        %490 = vmatpush1.msra.mxu0 0.0
        %491 = vmatprep.subr.mxu0 0.0
        %492 = vmatpush1.msra.mxu0 0.0
        %493 = vmatprep.subr.mxu0 0.0
        %494 = vmatpush1.msra.mxu0 0.0
        %495 = vmatprep.subr.mxu0 0.0
        %496 = vmatpush1.msra.mxu0 0.0
        %497 = vmatprep.mubr.f32.mxu0 0.0
        %498 = vmatmul.mubr.f32.gmra.mrb[0].mxu0 %v431
        %v499 = vpop.f32.mrb[0].mxu0
        %v500 = vadd.f32 0.0, %v499
        %v501 = vpop.f32.mrb[0].mxu0
        %502 = vdwg.mxu0
        %v503 = vld [vmem:[%s3] sm:$0x1]
        %v504 = vld [vmem:[%s4] sm:$0x1]
        %vm505 = vcmask 1040384
        %v506 = vsel %vm505, %v500, 0.0
        %507 = vadd.xlane.f32.xlu0 %v506
        %v508 = vpop.xlane.xlu0 %507
        %v509 = vrcp.pop 128.0
        %v510 = vmul.f32 %v508, %v509
        %v511 = vsub.f32 %v500, %v510
        %v512 = vmul.f32 %v511, %v511
        %v513 = vsel %vm505, %v512, 0.0
        %514 = vadd.xlane.f32.xlu0 %v513
        %v515 = vpop.xlane.xlu0 %514
        %v516 = vmul.f32 %v515, %v509
        %v517 = vadd.f32 %v516, 1e-05
        %v518 = vrsqrt.pop %v517
        %v519 = vmul.f32 %v511, %v518
        %v520 = vmul.f32 %v519, %v503
        %v521 = vadd.f32 %v520, %v504
        %v522 = vld [vmem:[%s5] sm:$0xff]
        %v523 = vld [vmem:[%s5 + $0x8] sm:$0xff]
        %v524 = vld [vmem:[%s5 + $0x10] sm:$0xff]
        %v525 = vld [vmem:[%s5 + $0x18] sm:$0xff]
        %v526 = vld [vmem:[%s5 + $0x20] sm:$0xff]
        %v527 = vld [vmem:[%s5 + $0x28] sm:$0xff]
        %v528 = vld [vmem:[%s5 + $0x30] sm:$0xff]
        %v529 = vld [vmem:[%s5 + $0x38] sm:$0xff]
        %v530 = vld [vmem:[%s5 + $0x40] sm:$0xff]
        %v531 = vld [vmem:[%s5 + $0x48] sm:$0xff]
        %v532 = vld [vmem:[%s5 + $0x50] sm:$0xff]
        %v533 = vld [vmem:[%s5 + $0x58] sm:$0xff]
        %v534 = vld [vmem:[%s5 + $0x60] sm:$0xff]
        %v535 = vld [vmem:[%s5 + $0x68] sm:$0xff]
        %v536 = vld [vmem:[%s5 + $0x70] sm:$0xff]
        %v537 = vld [vmem:[%s5 + $0x78] sm:$0xff]
        %v538 = vld [vmem:[%s5 + $0x80] sm:$0xff]
        %v539 = vld [vmem:[%s5 + $0x88] sm:$0xff]
        %v540 = vld [vmem:[%s5 + $0x90] sm:$0xff]
        %v541 = vld [vmem:[%s5 + $0x98] sm:$0xff]
        %v542 = vld [vmem:[%s5 + $0xa0] sm:$0xff]
        %v543 = vld [vmem:[%s5 + $0xa8] sm:$0xff]
        %v544 = vld [vmem:[%s5 + $0xb0] sm:$0xff]
        %v545 = vld [vmem:[%s5 + $0xb8] sm:$0xff]
        %v546 = vld [vmem:[%s5 + $0xc0] sm:$0xff]
        %v547 = vld [vmem:[%s5 + $0xc8] sm:$0xff]
        %v548 = vld [vmem:[%s5 + $0xd0] sm:$0xff]
        %v549 = vld [vmem:[%s5 + $0xd8] sm:$0xff]
        %v550 = vld [vmem:[%s5 + $0xe0] sm:$0xff]
        %v551 = vld [vmem:[%s5 + $0xe8] sm:$0xff]
        %v552 = vld [vmem:[%s5 + $0xf0] sm:$0xff]
        %v553 = vld [vmem:[%s5 + $0xf8] sm:$0xff]
        %v554 = vld [vmem:[%s5 + $0x100] sm:$0xff]
        %v555 = vld [vmem:[%s5 + $0x108] sm:$0xff]
        %v556 = vld [vmem:[%s5 + $0x110] sm:$0xff]
        %v557 = vld [vmem:[%s5 + $0x118] sm:$0xff]
        %v558 = vld [vmem:[%s5 + $0x120] sm:$0xff]
        %v559 = vld [vmem:[%s5 + $0x128] sm:$0xff]
        %v560 = vld [vmem:[%s5 + $0x130] sm:$0xff]
        %v561 = vld [vmem:[%s5 + $0x138] sm:$0xff]
        %v562 = vld [vmem:[%s5 + $0x140] sm:$0xff]
        %v563 = vld [vmem:[%s5 + $0x148] sm:$0xff]
        %v564 = vld [vmem:[%s5 + $0x150] sm:$0xff]
        %v565 = vld [vmem:[%s5 + $0x158] sm:$0xff]
        %v566 = vld [vmem:[%s5 + $0x160] sm:$0xff]
        %v567 = vld [vmem:[%s5 + $0x168] sm:$0xff]
        %v568 = vld [vmem:[%s5 + $0x170] sm:$0xff]
        %v569 = vld [vmem:[%s5 + $0x178] sm:$0xff]
        %v570 = vld [vmem:[%s5 + $0x180] sm:$0xff]
        %v571 = vld [vmem:[%s5 + $0x188] sm:$0xff]
        %v572 = vld [vmem:[%s5 + $0x190] sm:$0xff]
        %v573 = vld [vmem:[%s5 + $0x198] sm:$0xff]
        %v574 = vld [vmem:[%s5 + $0x1a0] sm:$0xff]
        %v575 = vld [vmem:[%s5 + $0x1a8] sm:$0xff]
        %v576 = vld [vmem:[%s5 + $0x1b0] sm:$0xff]
        %v577 = vld [vmem:[%s5 + $0x1b8] sm:$0xff]
        %v578 = vld [vmem:[%s5 + $0x1c0] sm:$0xff]
        %v579 = vld [vmem:[%s5 + $0x1c8] sm:$0xff]
        %v580 = vld [vmem:[%s5 + $0x1d0] sm:$0xff]
        %v581 = vld [vmem:[%s5 + $0x1d8] sm:$0xff]
        %v582 = vld [vmem:[%s5 + $0x1e0] sm:$0xff]
        %v583 = vld [vmem:[%s5 + $0x1e8] sm:$0xff]
        %v584 = vld [vmem:[%s5 + $0x1f0] sm:$0xff]
        %v585 = vld [vmem:[%s5 + $0x1f8] sm:$0xff]
        %v586 = vld [vmem:[%s6] sm:$0xf]
        %v588 = vlaneseq
        %v589 = vshrl.u32 %v588, 7
        %v590 = vsub.s32 0, %v589
        %v591 = vrot.slane %v586, %v590
        %v592 = vlaneseq
        %v593 = vshrl.u32 %v592, 7
        %v594 = vsub.s32 1, %v593
        %v595 = vrot.slane %v586, %v594
        %v596 = vlaneseq
        %v597 = vshrl.u32 %v596, 7
        %v598 = vsub.s32 2, %v597
        %v599 = vrot.slane %v586, %v598
        %v600 = vlaneseq
        %v601 = vshrl.u32 %v600, 7
        %v602 = vsub.s32 3, %v601
        %v603 = vrot.slane %v586, %v602
        %608 = vmatprep.subr.mxu0 %v523
        %609 = vmatpush1.msra.mxu0 %v522
        %610 = vmatprep.subr.mxu0 %v527
        %611 = vmatpush1.msra.mxu0 %v526
        %612 = vmatprep.subr.mxu0 %v531
        %613 = vmatpush1.msra.mxu0 %v530
        %614 = vmatprep.subr.mxu0 %v535
        %615 = vmatpush1.msra.mxu0 %v534
        %616 = vmatprep.subr.mxu0 %v539
        %617 = vmatpush1.msra.mxu0 %v538
        %618 = vmatprep.subr.mxu0 %v543
        %619 = vmatpush1.msra.mxu0 %v542
        %620 = vmatprep.subr.mxu0 %v547
        %621 = vmatpush1.msra.mxu0 %v546
        %622 = vmatprep.subr.mxu0 %v551
        %623 = vmatpush1.msra.mxu0 %v550
        %624 = vmatprep.subr.mxu0 %v555
        %625 = vmatpush1.msra.mxu0 %v554
        %626 = vmatprep.subr.mxu0 %v559
        %627 = vmatpush1.msra.mxu0 %v558
        %628 = vmatprep.subr.mxu0 %v563
        %629 = vmatpush1.msra.mxu0 %v562
        %630 = vmatprep.subr.mxu0 %v567
        %631 = vmatpush1.msra.mxu0 %v566
        %632 = vmatprep.subr.mxu0 %v571
        %633 = vmatpush1.msra.mxu0 %v570
        %634 = vmatprep.subr.mxu0 %v575
        %635 = vmatpush1.msra.mxu0 %v574
        %636 = vmatprep.subr.mxu0 %v579
        %637 = vmatpush1.msra.mxu0 %v578
        %638 = vmatprep.subr.mxu0 %v583
        %639 = vmatpush1.msra.mxu0 %v582
        %640 = vmatprep.subr.mxu0 0.0
        %641 = vmatpush1.msra.mxu0 0.0
        %642 = vmatprep.subr.mxu0 0.0
        %643 = vmatpush1.msra.mxu0 0.0
        %644 = vmatprep.subr.mxu0 0.0
        %645 = vmatpush1.msra.mxu0 0.0
        %646 = vmatprep.subr.mxu0 0.0
        %647 = vmatpush1.msra.mxu0 0.0
        %648 = vmatprep.subr.mxu0 0.0
        %649 = vmatpush1.msra.mxu0 0.0
        %650 = vmatprep.subr.mxu0 0.0
        %651 = vmatpush1.msra.mxu0 0.0
        %652 = vmatprep.subr.mxu0 0.0
        %653 = vmatpush1.msra.mxu0 0.0
        %654 = vmatprep.subr.mxu0 0.0
        %655 = vmatpush1.msra.mxu0 0.0
        %656 = vmatprep.subr.mxu0 0.0
        %657 = vmatpush1.msra.mxu0 0.0
        %658 = vmatprep.subr.mxu0 0.0
        %659 = vmatpush1.msra.mxu0 0.0
        %660 = vmatprep.subr.mxu0 0.0
        %661 = vmatpush1.msra.mxu0 0.0
        %662 = vmatprep.subr.mxu0 0.0
        %663 = vmatpush1.msra.mxu0 0.0
        %664 = vmatprep.subr.mxu0 0.0
        %665 = vmatpush1.msra.mxu0 0.0
        %666 = vmatprep.subr.mxu0 0.0
        %667 = vmatpush1.msra.mxu0 0.0
        %668 = vmatprep.subr.mxu0 0.0
        %669 = vmatpush1.msra.mxu0 0.0
        %670 = vmatprep.subr.mxu0 0.0
        %671 = vmatpush1.msra.mxu0 0.0
        %672 = vmatprep.mubr.f32.mxu0 0.0
        %673 = vmatmul.mubr.f32.gmra.mrb[0].mxu0 %v521
        %v674 = vpop.f32.mrb[0].mxu0
        %v675 = vadd.f32 %v591, %v674
        %v676 = vpop.f32.mrb[0].mxu0
        %v677 = vadd.f32 %v595, %v676
        %678 = vdwg.mxu0
        %679 = vmatprep.subr.mxu0 %v525
        %680 = vmatpush1.msra.mxu0 %v524
        %681 = vmatprep.subr.mxu0 %v529
        %682 = vmatpush1.msra.mxu0 %v528
        %683 = vmatprep.subr.mxu0 %v533
        %684 = vmatpush1.msra.mxu0 %v532
        %685 = vmatprep.subr.mxu0 %v537
        %686 = vmatpush1.msra.mxu0 %v536
        %687 = vmatprep.subr.mxu0 %v541
        %688 = vmatpush1.msra.mxu0 %v540
        %689 = vmatprep.subr.mxu0 %v545
        %690 = vmatpush1.msra.mxu0 %v544
        %691 = vmatprep.subr.mxu0 %v549
        %692 = vmatpush1.msra.mxu0 %v548
        %693 = vmatprep.subr.mxu0 %v553
        %694 = vmatpush1.msra.mxu0 %v552
        %695 = vmatprep.subr.mxu0 %v557
        %696 = vmatpush1.msra.mxu0 %v556
        %697 = vmatprep.subr.mxu0 %v561
        %698 = vmatpush1.msra.mxu0 %v560
        %699 = vmatprep.subr.mxu0 %v565
        %700 = vmatpush1.msra.mxu0 %v564
        %701 = vmatprep.subr.mxu0 %v569
        %702 = vmatpush1.msra.mxu0 %v568
        %703 = vmatprep.subr.mxu0 %v573
        %704 = vmatpush1.msra.mxu0 %v572
        %705 = vmatprep.subr.mxu0 %v577
        %706 = vmatpush1.msra.mxu0 %v576
        %707 = vmatprep.subr.mxu0 %v581
        %708 = vmatpush1.msra.mxu0 %v580
        %709 = vmatprep.subr.mxu0 %v585
        %710 = vmatpush1.msra.mxu0 %v584
        %711 = vmatprep.subr.mxu0 0.0
        %712 = vmatpush1.msra.mxu0 0.0
        %713 = vmatprep.subr.mxu0 0.0
        %714 = vmatpush1.msra.mxu0 0.0
        %715 = vmatprep.subr.mxu0 0.0
        %716 = vmatpush1.msra.mxu0 0.0
        %717 = vmatprep.subr.mxu0 0.0
        %718 = vmatpush1.msra.mxu0 0.0
        %719 = vmatprep.subr.mxu0 0.0
        %720 = vmatpush1.msra.mxu0 0.0
        %721 = vmatprep.subr.mxu0 0.0
        %722 = vmatpush1.msra.mxu0 0.0
        %723 = vmatprep.subr.mxu0 0.0
        %724 = vmatpush1.msra.mxu0 0.0
        %725 = vmatprep.subr.mxu0 0.0
        %726 = vmatpush1.msra.mxu0 0.0
        %727 = vmatprep.subr.mxu0 0.0
        %728 = vmatpush1.msra.mxu0 0.0
        %729 = vmatprep.subr.mxu0 0.0
        %730 = vmatpush1.msra.mxu0 0.0
        %731 = vmatprep.subr.mxu0 0.0
        %732 = vmatpush1.msra.mxu0 0.0
        %733 = vmatprep.subr.mxu0 0.0
        %734 = vmatpush1.msra.mxu0 0.0
        %735 = vmatprep.subr.mxu0 0.0
        %736 = vmatpush1.msra.mxu0 0.0
        %737 = vmatprep.subr.mxu0 0.0
        %738 = vmatpush1.msra.mxu0 0.0
        %739 = vmatprep.subr.mxu0 0.0
        %740 = vmatpush1.msra.mxu0 0.0
        %741 = vmatprep.subr.mxu0 0.0
        %742 = vmatpush1.msra.mxu0 0.0
        %743 = vmatprep.mubr.f32.mxu0 0.0
        %744 = vmatmul.mubr.f32.gmra.mrb[0].mxu0 %v521
        %v745 = vpop.f32.mrb[0].mxu0
        %v746 = vadd.f32 %v599, %v745
        %v747 = vpop.f32.mrb[0].mxu0
        %v748 = vadd.f32 %v603, %v747
        %749 = vdwg.mxu0
        %v750 = vmul.f32 %v675, 0.5
        %v751 = vmul.f32 %v677, 0.5
        %v752 = vmul.f32 %v746, 0.5
        %v753 = vmul.f32 %v748, 0.5
        %v754 = vmul.f32 %v675, 0.70710677
        %v755 = vmul.f32 %v677, 0.70710677
        %v756 = vmul.f32 %v746, 0.70710677
        %v757 = vmul.f32 %v748, 0.70710677
        %v758 = vand.u32 2147483647, %v754
        %v759 = vand.u32 2147483647, %v755
        %v760 = vand.u32 2147483647, %v756
        %v761 = vand.u32 2147483647, %v757
        %v762 = vmul.f32 %v758, 0.3275911
        %v763 = vmul.f32 %v759, 0.3275911
        %v764 = vmul.f32 %v760, 0.3275911
        %v765 = vmul.f32 %v761, 0.3275911
        %v766 = vadd.f32 %v762, 1.0
        %v767 = vadd.f32 %v763, 1.0
        %v768 = vadd.f32 %v764, 1.0
        %v769 = vadd.f32 %v765, 1.0
        %v770 = vrcp.pop %v766
        %v771 = vmul.f32 1.0, %v770
        %v772 = vrcp.pop %v767
        %v773 = vmul.f32 1.0, %v772
        %v774 = vrcp.pop %v768
        %v775 = vmul.f32 1.0, %v774
        %v776 = vrcp.pop %v769
        %v777 = vmul.f32 1.0, %v776
        %v778 = vmul.f32 %v771, 1.0614054
        %v779 = vmul.f32 %v773, 1.0614054
        %v780 = vmul.f32 %v775, 1.0614054
        %v781 = vmul.f32 %v777, 1.0614054
        %v782 = vadd.f32 %v778, -1.4531521
        %v783 = vadd.f32 %v779, -1.4531521
        %v784 = vadd.f32 %v780, -1.4531521
        %v785 = vadd.f32 %v781, -1.4531521
        %v786 = vmul.f32 %v782, %v771
        %v787 = vmul.f32 %v783, %v773
        %v788 = vmul.f32 %v784, %v775
        %v789 = vmul.f32 %v785, %v777
        %v790 = vadd.f32 %v786, 1.4214138
        %v791 = vadd.f32 %v787, 1.4214138
        %v792 = vadd.f32 %v788, 1.4214138
        %v793 = vadd.f32 %v789, 1.4214138
        %v794 = vmul.f32 %v790, %v771
        %v795 = vmul.f32 %v791, %v773
        %v796 = vmul.f32 %v792, %v775
        %v797 = vmul.f32 %v793, %v777
        %v798 = vadd.f32 %v794, -0.28449672
        %v799 = vadd.f32 %v795, -0.28449672
        %v800 = vadd.f32 %v796, -0.28449672
        %v801 = vadd.f32 %v797, -0.28449672
        %v802 = vmul.f32 %v798, %v771
        %v803 = vmul.f32 %v799, %v773
        %v804 = vmul.f32 %v800, %v775
        %v805 = vmul.f32 %v801, %v777
        %v806 = vadd.f32 %v802, 0.2548296
        %v807 = vadd.f32 %v803, 0.2548296
        %v808 = vadd.f32 %v804, 0.2548296
        %v809 = vadd.f32 %v805, 0.2548296
        %v810 = vmul.f32 %v806, %v771
        %v811 = vmul.f32 %v807, %v773
        %v812 = vmul.f32 %v808, %v775
        %v813 = vmul.f32 %v809, %v777
        %v814 = vsub.f32 0.0, %v758
        %v815 = vsub.f32 0.0, %v759
        %v816 = vsub.f32 0.0, %v760
        %v817 = vsub.f32 0.0, %v761
        %v818 = vmul.f32 %v814, %v758
        %v819 = vmul.f32 %v815, %v759
        %v820 = vmul.f32 %v816, %v760
        %v821 = vmul.f32 %v817, %v761
        %v822 = vmul.f32 %v818, 1.442695
        %v823 = vpow.pop %v822
        %v824 = vmul.f32 %v819, 1.442695
        %v825 = vpow.pop %v824
        %v826 = vmul.f32 %v820, 1.442695
        %v827 = vpow.pop %v826
        %v828 = vmul.f32 %v821, 1.442695
        %v829 = vpow.pop %v828
        %v830 = vmul.f32 %v810, %v823
        %v831 = vmul.f32 %v811, %v825
        %v832 = vmul.f32 %v812, %v827
        %v833 = vmul.f32 %v813, %v829
        %v834 = vsub.f32 1.0, %v830
        %v835 = vsub.f32 1.0, %v831
        %v836 = vsub.f32 1.0, %v832
        %v837 = vsub.f32 1.0, %v833
        %vm838 = vcmp.lt.f32.partialorder %v754, 0.0
        %vm839 = vcmp.lt.f32.partialorder %v755, 0.0
        %vm840 = vcmp.lt.f32.partialorder %v756, 0.0
        %vm841 = vcmp.lt.f32.partialorder %v757, 0.0
        %v842 = vsub.f32 0.0, %v834
        %v843 = vsub.f32 0.0, %v835
        %v844 = vsub.f32 0.0, %v836
        %v845 = vsub.f32 0.0, %v837
        %v846 = vsel %vm838, %v842, %v834
        %v847 = vsel %vm839, %v843, %v835
        %v848 = vsel %vm840, %v844, %v836
        %v849 = vsel %vm841, %v845, %v837
        %v850 = vadd.f32 %v846, 1.0
        %v851 = vadd.f32 %v847, 1.0
        %v852 = vadd.f32 %v848, 1.0
        %v853 = vadd.f32 %v849, 1.0
        %v854 = vmul.f32 %v750, %v850
        %v855 = vmul.f32 %v751, %v851
        %v856 = vmul.f32 %v752, %v852
        %v857 = vmul.f32 %v753, %v853
        %v858 = vld [vmem:[%s7] sm:$0xff]
        %v859 = vld [vmem:[%s7 + $0x8] sm:$0xff]
        %v860 = vld [vmem:[%s7 + $0x10] sm:$0xff]
        %v861 = vld [vmem:[%s7 + $0x18] sm:$0xff]
        %v862 = vld [vmem:[%s7 + $0x20] sm:$0xff]
        %v863 = vld [vmem:[%s7 + $0x28] sm:$0xff]
        %v864 = vld [vmem:[%s7 + $0x30] sm:$0xff]
        %v865 = vld [vmem:[%s7 + $0x38] sm:$0xff]
        %v866 = vld [vmem:[%s7 + $0x40] sm:$0xff]
        %v867 = vld [vmem:[%s7 + $0x48] sm:$0xff]
        %v868 = vld [vmem:[%s7 + $0x50] sm:$0xff]
        %v869 = vld [vmem:[%s7 + $0x58] sm:$0xff]
        %v870 = vld [vmem:[%s7 + $0x60] sm:$0xff]
        %v871 = vld [vmem:[%s7 + $0x68] sm:$0xff]
        %v872 = vld [vmem:[%s7 + $0x70] sm:$0xff]
        %v873 = vld [vmem:[%s7 + $0x78] sm:$0xff]
        %v874 = vld [vmem:[%s7 + $0x80] sm:$0xff]
        %v875 = vld [vmem:[%s7 + $0x88] sm:$0xff]
        %v876 = vld [vmem:[%s7 + $0x90] sm:$0xff]
        %v877 = vld [vmem:[%s7 + $0x98] sm:$0xff]
        %v878 = vld [vmem:[%s7 + $0xa0] sm:$0xff]
        %v879 = vld [vmem:[%s7 + $0xa8] sm:$0xff]
        %v880 = vld [vmem:[%s7 + $0xb0] sm:$0xff]
        %v881 = vld [vmem:[%s7 + $0xb8] sm:$0xff]
        %v882 = vld [vmem:[%s7 + $0xc0] sm:$0xff]
        %v883 = vld [vmem:[%s7 + $0xc8] sm:$0xff]
        %v884 = vld [vmem:[%s7 + $0xd0] sm:$0xff]
        %v885 = vld [vmem:[%s7 + $0xd8] sm:$0xff]
        %v886 = vld [vmem:[%s7 + $0xe0] sm:$0xff]
        %v887 = vld [vmem:[%s7 + $0xe8] sm:$0xff]
        %v888 = vld [vmem:[%s7 + $0xf0] sm:$0xff]
        %v889 = vld [vmem:[%s7 + $0xf8] sm:$0xff]
        %v890 = vld [vmem:[%s7 + $0x100] sm:$0xff]
        %v891 = vld [vmem:[%s7 + $0x108] sm:$0xff]
        %v892 = vld [vmem:[%s7 + $0x110] sm:$0xff]
        %v893 = vld [vmem:[%s7 + $0x118] sm:$0xff]
        %v894 = vld [vmem:[%s7 + $0x120] sm:$0xff]
        %v895 = vld [vmem:[%s7 + $0x128] sm:$0xff]
        %v896 = vld [vmem:[%s7 + $0x130] sm:$0xff]
        %v897 = vld [vmem:[%s7 + $0x138] sm:$0xff]
        %v898 = vld [vmem:[%s7 + $0x140] sm:$0xff]
        %v899 = vld [vmem:[%s7 + $0x148] sm:$0xff]
        %v900 = vld [vmem:[%s7 + $0x150] sm:$0xff]
        %v901 = vld [vmem:[%s7 + $0x158] sm:$0xff]
        %v902 = vld [vmem:[%s7 + $0x160] sm:$0xff]
        %v903 = vld [vmem:[%s7 + $0x168] sm:$0xff]
        %v904 = vld [vmem:[%s7 + $0x170] sm:$0xff]
        %v905 = vld [vmem:[%s7 + $0x178] sm:$0xff]
        %v906 = vld [vmem:[%s7 + $0x180] sm:$0xff]
        %v907 = vld [vmem:[%s7 + $0x188] sm:$0xff]
        %v908 = vld [vmem:[%s7 + $0x190] sm:$0xff]
        %v909 = vld [vmem:[%s7 + $0x198] sm:$0xff]
        %v910 = vld [vmem:[%s7 + $0x1a0] sm:$0xff]
        %v911 = vld [vmem:[%s7 + $0x1a8] sm:$0xff]
        %v912 = vld [vmem:[%s7 + $0x1b0] sm:$0xff]
        %v913 = vld [vmem:[%s7 + $0x1b8] sm:$0xff]
        %v914 = vld [vmem:[%s7 + $0x1c0] sm:$0xff]
        %v915 = vld [vmem:[%s7 + $0x1c8] sm:$0xff]
        %v916 = vld [vmem:[%s7 + $0x1d0] sm:$0xff]
        %v917 = vld [vmem:[%s7 + $0x1d8] sm:$0xff]
        %v918 = vld [vmem:[%s7 + $0x1e0] sm:$0xff]
        %v919 = vld [vmem:[%s7 + $0x1e8] sm:$0xff]
        %v920 = vld [vmem:[%s7 + $0x1f0] sm:$0xff]
        %v921 = vld [vmem:[%s7 + $0x1f8] sm:$0xff]
        %v922 = vld [vmem:[%s8] sm:$0x1]
        %923 = vmatprep.subr.mxu0 0.0
        %924 = vmatpush1.msra.mxu0 %v858
        %925 = vmatprep.subr.mxu0 0.0
        %926 = vmatpush1.msra.mxu0 %v859
        %927 = vmatprep.subr.mxu0 0.0
        %928 = vmatpush1.msra.mxu0 %v860
        %929 = vmatprep.subr.mxu0 0.0
        %930 = vmatpush1.msra.mxu0 %v861
        %931 = vmatprep.subr.mxu0 0.0
        %932 = vmatpush1.msra.mxu0 %v862
        %933 = vmatprep.subr.mxu0 0.0
        %934 = vmatpush1.msra.mxu0 %v863
        %935 = vmatprep.subr.mxu0 0.0
        %936 = vmatpush1.msra.mxu0 %v864
        %937 = vmatprep.subr.mxu0 0.0
        %938 = vmatpush1.msra.mxu0 %v865
        %939 = vmatprep.subr.mxu0 0.0
        %940 = vmatpush1.msra.mxu0 %v866
        %941 = vmatprep.subr.mxu0 0.0
        %942 = vmatpush1.msra.mxu0 %v867
        %943 = vmatprep.subr.mxu0 0.0
        %944 = vmatpush1.msra.mxu0 %v868
        %945 = vmatprep.subr.mxu0 0.0
        %946 = vmatpush1.msra.mxu0 %v869
        %947 = vmatprep.subr.mxu0 0.0
        %948 = vmatpush1.msra.mxu0 %v870
        %949 = vmatprep.subr.mxu0 0.0
        %950 = vmatpush1.msra.mxu0 %v871
        %951 = vmatprep.subr.mxu0 0.0
        %952 = vmatpush1.msra.mxu0 %v872
        %953 = vmatprep.subr.mxu0 0.0
        %954 = vmatpush1.msra.mxu0 %v873
        %955 = vmatprep.subr.mxu0 0.0
        %956 = vmatpush1.msra.mxu0 %v874
        %957 = vmatprep.subr.mxu0 0.0
        %958 = vmatpush1.msra.mxu0 %v875
        %959 = vmatprep.subr.mxu0 0.0
        %960 = vmatpush1.msra.mxu0 %v876
        %961 = vmatprep.subr.mxu0 0.0
        %962 = vmatpush1.msra.mxu0 %v877
        %963 = vmatprep.subr.mxu0 0.0
        %964 = vmatpush1.msra.mxu0 %v878
        %965 = vmatprep.subr.mxu0 0.0
        %966 = vmatpush1.msra.mxu0 %v879
        %967 = vmatprep.subr.mxu0 0.0
        %968 = vmatpush1.msra.mxu0 %v880
        %969 = vmatprep.subr.mxu0 0.0
        %970 = vmatpush1.msra.mxu0 %v881
        %971 = vmatprep.subr.mxu0 0.0
        %972 = vmatpush1.msra.mxu0 %v882
        %973 = vmatprep.subr.mxu0 0.0
        %974 = vmatpush1.msra.mxu0 %v883
        %975 = vmatprep.subr.mxu0 0.0
        %976 = vmatpush1.msra.mxu0 %v884
        %977 = vmatprep.subr.mxu0 0.0
        %978 = vmatpush1.msra.mxu0 %v885
        %979 = vmatprep.subr.mxu0 0.0
        %980 = vmatpush1.msra.mxu0 %v886
        %981 = vmatprep.subr.mxu0 0.0
        %982 = vmatpush1.msra.mxu0 %v887
        %983 = vmatprep.subr.mxu0 0.0
        %984 = vmatpush1.msra.mxu0 %v888
        %985 = vmatprep.subr.mxu0 0.0
        %986 = vmatpush1.msra.mxu0 %v889
        %987 = vmatprep.mubr.f32.mxu0 %v855
        %988 = vmatmul.mubr.f32.gmra.mrb[0].mxu0 %v854
        %v989 = vpop.f32.mrb[0].mxu0
        %v990 = vadd.f32 %v922, %v989
        %v991 = vpop.f32.mrb[0].mxu0
        %992 = vdwg.mxu0
        %993 = vmatprep.subr.mxu0 0.0
        %994 = vmatpush1.msra.mxu0 %v890
        %995 = vmatprep.subr.mxu0 0.0
        %996 = vmatpush1.msra.mxu0 %v891
        %997 = vmatprep.subr.mxu0 0.0
        %998 = vmatpush1.msra.mxu0 %v892
        %999 = vmatprep.subr.mxu0 0.0
        %1000 = vmatpush1.msra.mxu0 %v893
        %1001 = vmatprep.subr.mxu0 0.0
        %1002 = vmatpush1.msra.mxu0 %v894
        %1003 = vmatprep.subr.mxu0 0.0
        %1004 = vmatpush1.msra.mxu0 %v895
        %1005 = vmatprep.subr.mxu0 0.0
        %1006 = vmatpush1.msra.mxu0 %v896
        %1007 = vmatprep.subr.mxu0 0.0
        %1008 = vmatpush1.msra.mxu0 %v897
        %1009 = vmatprep.subr.mxu0 0.0
        %1010 = vmatpush1.msra.mxu0 %v898
        %1011 = vmatprep.subr.mxu0 0.0
        %1012 = vmatpush1.msra.mxu0 %v899
        %1013 = vmatprep.subr.mxu0 0.0
        %1014 = vmatpush1.msra.mxu0 %v900
        %1015 = vmatprep.subr.mxu0 0.0
        %1016 = vmatpush1.msra.mxu0 %v901
        %1017 = vmatprep.subr.mxu0 0.0
        %1018 = vmatpush1.msra.mxu0 %v902
        %1019 = vmatprep.subr.mxu0 0.0
        %1020 = vmatpush1.msra.mxu0 %v903
        %1021 = vmatprep.subr.mxu0 0.0
        %1022 = vmatpush1.msra.mxu0 %v904
        %1023 = vmatprep.subr.mxu0 0.0
        %1024 = vmatpush1.msra.mxu0 %v905
        %1025 = vmatprep.subr.mxu0 0.0
        %1026 = vmatpush1.msra.mxu0 %v906
        %1027 = vmatprep.subr.mxu0 0.0
        %1028 = vmatpush1.msra.mxu0 %v907
        %1029 = vmatprep.subr.mxu0 0.0
        %1030 = vmatpush1.msra.mxu0 %v908
        %1031 = vmatprep.subr.mxu0 0.0
        %1032 = vmatpush1.msra.mxu0 %v909
        %1033 = vmatprep.subr.mxu0 0.0
        %1034 = vmatpush1.msra.mxu0 %v910
        %1035 = vmatprep.subr.mxu0 0.0
        %1036 = vmatpush1.msra.mxu0 %v911
        %1037 = vmatprep.subr.mxu0 0.0
        %1038 = vmatpush1.msra.mxu0 %v912
        %1039 = vmatprep.subr.mxu0 0.0
        %1040 = vmatpush1.msra.mxu0 %v913
        %1041 = vmatprep.subr.mxu0 0.0
        %1042 = vmatpush1.msra.mxu0 %v914
        %1043 = vmatprep.subr.mxu0 0.0
        %1044 = vmatpush1.msra.mxu0 %v915
        %1045 = vmatprep.subr.mxu0 0.0
        %1046 = vmatpush1.msra.mxu0 %v916
        %1047 = vmatprep.subr.mxu0 0.0
        %1048 = vmatpush1.msra.mxu0 %v917
        %1049 = vmatprep.subr.mxu0 0.0
        %1050 = vmatpush1.msra.mxu0 %v918
        %1051 = vmatprep.subr.mxu0 0.0
        %1052 = vmatpush1.msra.mxu0 %v919
        %1053 = vmatprep.subr.mxu0 0.0
        %1054 = vmatpush1.msra.mxu0 %v920
        %1055 = vmatprep.subr.mxu0 0.0
        %1056 = vmatpush1.msra.mxu0 %v921
        %1057 = vmatprep.mubr.f32.mxu0 %v857
        %1058 = vmatmul.mubr.f32.gmra.mrb[0].mxu0 %v856
        %v1059 = vpop.f32.mrb[0].mxu0
        %v1060 = vadd.f32 %v990, %v1059
        %v1061 = vpop.f32.mrb[0].mxu0
        %1062 = vdwg.mxu0
        %v1063 = vadd.f32 %v521, %v1060
        %1064 = vst [vmem:[%s333] sm:$0x1] %v1063
        %s1065 = sand.u32 %s230, 1
        %s1066 = scalar_lea.sflag [#allocation3], %s1065
        %s1067 = sand.u32 %s230, 1
        %s1068 = scalar_lea.vmem [#allocation2], %s1067
        // Predicated region
        $region57: #{robust_text_cross_expert.19} parent=55 // pred_check
          %p1069 = pneg %p240
        $region58: #{robust_text_cross_expert.19} parent=55 // pred_check_branch
          %1071 = sbr.rel (%p1069) target = $region60
        $region59: #{robust_text_cross_expert.19} parent=55 // pred_region
          %s1073 = ssub.s32 16, 16
          %1074 = vsyncadd %s1066, %s1073
          %s1075 = smul.addr %s23, 16
          %s1076 = scalar_lea.hbm %s9, %s1075
          %s1078 = sshll.u32 %s1068, 4
          %s1079 = int_to_ptr.vmem [resolvable:$true] %s1078
          %1081 = dma.vmem_to_hbm [thread:$0]  %s1079, 16, %s1076, %s1066
        $region60: #{robust_text_cross_expert.19} parent=55 // pred_fallthru
          _
      $region56: #{robust_text_cross_expert.19} parent=5 // pred_fallthru
        _
      %p1082 = scmp.le.s32.totalorder 2, %s18
      // Predicated region
      $region61: #{robust_text_cross_expert.19} parent=5 // pred_check
        %p1083 = pneg %p1082
      $region62: #{robust_text_cross_expert.19} parent=5 // pred_check_branch
        %1085 = sbr.rel (%p1083) target = $region64
      $region63: #{robust_text_cross_expert.19} parent=5 // pred_region
        %s1086 = ssub.s32 %s18, 2
        // Predicated region
        $region65: #{robust_text_cross_expert.19} parent=63 // pred_check
          %p1087 = pneg %p246
        $region66: #{robust_text_cross_expert.19} parent=63 // pred_check_branch
          %1089 = sbr.rel (%p1087) target = $region68
        $region67: #{robust_text_cross_expert.19} parent=63 // pred_region
          %s1090 = sand.u32 %s231, 1
          %s1091 = scalar_lea.sflag [#allocation3], %s1090
          %s1092 = sand.u32 %s231, 1
          %s1093 = scalar_lea.vmem [#allocation2], %s1092
          %1094 = dma.done %s1091, 16
        $region68: #{robust_text_cross_expert.19} parent=63 // pred_fallthru
          _
      $region64: #{robust_text_cross_expert.19} parent=5 // pred_fallthru
        _
    $region6: #{robust_text_cross_expert.19} parent=1 // loop_footer
      %s22 = sadd.s32 1, %s18
    $region7: #{robust_text_cross_expert.19} parent=1 // loop_footer_branch
      %17 = sbr.rel target = $region3
    $region8: #{robust_text_cross_expert.19} parent=1 // loop_exit
      _
    %1095 = vsyncpa [#allocation3], 1
    %s1096 = scalar_lea.sflag [#allocation3], 1
    %1097 = vsyncpa %s1096, 1

</llo_original>
